<compile_context>
chip_gen: v7x
topology: tpu7x:2x2x1
jax: 0.10.0
libtpu: 0.0.40
codegen_flags: <defaults>
</compile_context>

<pallas_src>
import math
import jax
import jax.numpy as jnp
from jax.experimental import pallas as pl
from jax.experimental.pallas import tpu as pltpu


# ---------------------------------------------------------------------------
# Fused kernel: embedding-gather + fc1(+BN1 folded) + ReLU
#               + fc2(+BN2 folded) + ReLU + fc3
# ---------------------------------------------------------------------------
def mlp_kernel(ids_ref, emb_ref, w1_ref, t1_ref, w2_ref, t2_ref,
               w3_ref, b3_ref, o_ref):
    TB, S = ids_ref.shape           # batch tile, seq len (20)
    V, E = emb_ref.shape            # vocab, embed dim
    H1 = w1_ref.shape[2]

    ids = ids_ref[...]              # (TB, S) int32
    emb = emb_ref[...]              # (V, E)  bf16

    # Embedding lookup fused as one-hot MXU matmuls; flatten fused by
    # decomposing fc1 into per-position (E, H1) blocks and accumulating.
    col = jax.lax.broadcasted_iota(jnp.int32, (TB, V), 1)
    h1 = jnp.zeros((TB, H1), jnp.float32)
    for s in range(S):              # static, unrolled (S = 20)
        onehot = jnp.where(col == ids[:, s:s + 1], 1.0, 0.0).astype(emb_ref.dtype)
        x_s = jnp.dot(onehot, emb, preferred_element_type=jnp.float32)   # (TB, E)
        h1 = h1 + jnp.dot(x_s.astype(w1_ref.dtype), w1_ref[s],
                          preferred_element_type=jnp.float32)            # (TB, H1)

    # bias + BN1 folded into w1/t1; dropout1 = identity (eval)
    h1 = jnp.maximum(h1 + t1_ref[...], 0.0)

    # fc2 (+ folded bias/BN2) + relu; dropout2 = identity (eval)
    h2 = jnp.dot(h1.astype(w2_ref.dtype), w2_ref[...],
                 preferred_element_type=jnp.float32)
    h2 = jnp.maximum(h2 + t2_ref[...], 0.0)

    # fc3 (num_class lanes < 128 -> masked store; negligible at this size)
    o_ref[...] = jnp.dot(h2.astype(w3_ref.dtype), w3_ref[...],
                         preferred_element_type=jnp.float32) + b3_ref[...]


def _pinned_spec(shape):
    """Full-array block, same block for every grid step (stays VMEM-resident)."""
    zeros = (0,) * len(shape)
    return pl.BlockSpec(shape, lambda i, _z=zeros: _z)


# ---------------------------------------------------------------------------
# One-time parameter preparation (transpose, BN/bias fold, bf16 cast, reshape)
# ---------------------------------------------------------------------------
def prepare_params(params, seq_len=20, eps=1e-5):
    s1 = params["bn1_gamma"] / jnp.sqrt(params["bn1_var"] + eps)
    t1 = s1 * (params["fc1_b"] - params["bn1_mean"]) + params["bn1_beta"]
    s2 = params["bn2_gamma"] / jnp.sqrt(params["bn2_var"] + eps)
    t2 = s2 * (params["fc2_b"] - params["bn2_mean"]) + params["bn2_beta"]

    w1 = params["fc1_w"].T * s1[None, :]          # (S*E, H1), column-scaled
    H1 = w1.shape[1]
    E = w1.shape[0] // seq_len
    w1 = w1.reshape(seq_len, E, H1).astype(jnp.bfloat16)   # per-position blocks
    w2 = (params["fc2_w"].T * s2[None, :]).astype(jnp.bfloat16)
    w3 = params["fc3_w"].T.astype(jnp.bfloat16)

    return dict(
        emb=params["embedding"].astype(jnp.bfloat16),
        w1=w1, t1=t1[None, :].astype(jnp.float32),
        w2=w2, t2=t2[None, :].astype(jnp.float32),
        w3=w3, b3=params["fc3_b"][None, :].astype(jnp.float32),
    )


def text_classification_forward(ids, prepared):
    """ids: int32 (B, 20). Returns logits (B, num_class), float32."""
    B, S = ids.shape
    emb = prepared["emb"]
    V, E = emb.shape
    w1, w2, w3 = prepared["w1"], prepared["w2"], prepared["w3"]
    H1, H2, C = w1.shape[2], w2.shape[1], w3.shape[1]
    assert w1.shape == (S, E, H1)

    # Batch tiling: weights pinned in VMEM across tiles, batch axis "parallel"
    # (uses both TensorCores on v7x when B is large).
    TB = min(B, 128)
    pad = (-B) % TB
    ids_p = jnp.pad(ids, ((0, pad), (0, 0))) if pad else ids
    Bp = B + pad

    operands = (ids_p, emb, w1, prepared["t1"], w2, prepared["t2"],
                w3, prepared["b3"])
    in_specs = [pl.BlockSpec((TB, S), lambda i: (i, 0))] + \
               [_pinned_spec(op.shape) for op in operands[1:]]

    # Note: weight blocks are grid-invariant; pipeline_mode=pl.Buffered(1)
    # would halve their VMEM footprint if the model is scaled up.
    out = pl.pallas_call(
        mlp_kernel,
        out_shape=jax.ShapeDtypeStruct((Bp, C), jnp.float32),
        grid=(Bp // TB,),
        in_specs=in_specs,
        out_specs=pl.BlockSpec((TB, C), lambda i: (i, 0)),
        compiler_params=pltpu.CompilerParams(
            dimension_semantics=("parallel",),
            # ~3.2 MiB double-buffered bf16 weights + activations + headroom;
            # well under v7x's 64 MiB / v5e's scoped default.
            vmem_limit_bytes=16 << 20),
    )(*operands)
    return out[:B] if pad else out


# ---------------------------------------------------------------------------
# Deterministic parameter init mirroring the PyTorch module's __init__
# ---------------------------------------------------------------------------
def init_params(key, vocab_size, embed_dim, num_class):
    ks = jax.random.split(key, 8)
    in1, h1, h2 = 20 * embed_dim, 1024, 128

    def linear_init(kw, kb, out_f, in_f):
        bound = 1.0 / math.sqrt(in_f)
        w = jax.random.uniform(kw, (out_f, in_f), jnp.float32, -bound, bound)
        b = jax.random.uniform(kb, (out_f,), jnp.float32, -bound, bound)
        return w, b

    fc1_w, fc1_b = linear_init(ks[0], ks[1], h1, in1)
    fc2_w, fc2_b = linear_init(ks[2], ks[3], h2, h1)
    fc3_w, fc3_b = linear_init(ks[4], ks[5], num_class, h2)

    # embedding.weight zeroed then uniform_(-0.5, 0.5) in init_weights()
    emb = jax.random.uniform(ks[6], (vocab_size, embed_dim),
                             jnp.float32, -0.5, 0.5)

    return dict(
        embedding=emb,
        fc1_w=fc1_w, fc1_b=fc1_b,
        fc2_w=fc2_w, fc2_b=fc2_b,
        fc3_w=fc3_w, fc3_b=fc3_b,
        bn1_gamma=jnp.ones((h1,), jnp.float32),
        bn1_beta=jnp.zeros((h1,), jnp.float32),
        bn1_mean=jnp.zeros((h1,), jnp.float32),
        bn1_var=jnp.ones((h1,), jnp.float32),
        bn2_gamma=jnp.ones((h2,), jnp.float32),
        bn2_beta=jnp.zeros((h2,), jnp.float32),
        bn2_mean=jnp.zeros((h2,), jnp.float32),
        bn2_var=jnp.ones((h2,), jnp.float32),
    )


def reference_forward(ids, params):
    """Pure-JAX f32 reference (original module semantics, eval mode)."""
    B, S = ids.shape
    eps = 1e-5
    x = jnp.take(params["embedding"], ids.reshape(-1), axis=0).reshape(B, -1)
    h = x @ params["fc1_w"].T + params["fc1_b"]
    h = (h - params["bn1_mean"]) / jnp.sqrt(params["bn1_var"] + eps) \
        * params["bn1_gamma"] + params["bn1_beta"]
    h = jnp.maximum(h, 0.0)
    h = h @ params["fc2_w"].T + params["fc2_b"]
    h = (h - params["bn2_mean"]) / jnp.sqrt(params["bn2_var"] + eps) \
        * params["bn2_gamma"] + params["bn2_beta"]
    h = jnp.maximum(h, 0.0)
    return h @ params["fc3_w"].T + params["fc3_b"]


if __name__ == "__main__":
    # Small shapes consistent with the module (seq fixed to 20 by TEXT field).
    vocab_size, embed_dim, num_class = 100, 32, 4
    batch, seq = 8, 20

    key = jax.random.PRNGKey(0)
    k_param, k_ids = jax.random.split(key)
    params = init_params(k_param, vocab_size, embed_dim, num_class)
    prepared = prepare_params(params, seq_len=seq)   # one-time prep
    ids = jax.random.randint(k_ids, (batch, seq), 0, vocab_size, jnp.int32)

    fwd = jax.jit(text_classification_forward)
    logits = jax.block_until_ready(fwd(ids, prepared))

    ref = reference_forward(ids, params)
    assert logits.shape == (batch, num_class)
    # bf16 weights/activations inside the kernel -> loosened tolerance.
    assert jnp.allclose(logits, ref, atol=3e-2, rtol=3e-2), "mismatch vs reference"

    print("KERNEL_OK")
</pallas_src>

<mosaic_0001>
module attributes {stable_mosaic.version = 11 : i64} {
  func.func @mlp_kernel(%arg0: i32, %arg1: memref<8x20xi32, #tpu.memory_space<vmem>>, %arg2: memref<100x32xbf16, #tpu.memory_space<vmem>>, %arg3: memref<20x32x1024xbf16, #tpu.memory_space<vmem>>, %arg4: memref<1x1024xf32, #tpu.memory_space<vmem>>, %arg5: memref<1024x128xbf16, #tpu.memory_space<vmem>>, %arg6: memref<1x128xf32, #tpu.memory_space<vmem>>, %arg7: memref<128x4xbf16, #tpu.memory_space<vmem>>, %arg8: memref<1x4xf32, #tpu.memory_space<vmem>>, %arg9: memref<8x4xf32, #tpu.memory_space<vmem>>) attributes {dimension_semantics = [#tpu.dimension_semantics<parallel>], iteration_bounds = array<i64: 1>, scalar_prefetch = 0 : i64, scratch_operands = 0 : i64, tpu.core_type = #tpu.core_type<tc>, window_params = [{transform_indices = @transform_0, window_bounds = array<i64: 8, 20>}, {pipeline_mode = #tpu.pipeline_mode<synchronous>, transform_indices = @transform_1, window_bounds = array<i64: 100, 32>}, {pipeline_mode = #tpu.pipeline_mode<synchronous>, transform_indices = @transform_2, window_bounds = array<i64: 20, 32, 1024>}, {pipeline_mode = #tpu.pipeline_mode<synchronous>, transform_indices = @transform_3, window_bounds = array<i64: 1, 1024>}, {pipeline_mode = #tpu.pipeline_mode<synchronous>, transform_indices = @transform_4, window_bounds = array<i64: 1024, 128>}, {pipeline_mode = #tpu.pipeline_mode<synchronous>, transform_indices = @transform_5, window_bounds = array<i64: 1, 128>}, {pipeline_mode = #tpu.pipeline_mode<synchronous>, transform_indices = @transform_6, window_bounds = array<i64: 128, 4>}, {pipeline_mode = #tpu.pipeline_mode<synchronous>, transform_indices = @transform_7, window_bounds = array<i64: 1, 4>}, {transform_indices = @transform_8, window_bounds = array<i64: 8, 4>}]} {
    %c0 = arith.constant 0 : index
    %c0_0 = arith.constant 0 : index
    %0 = vector.load %arg1[%c0, %c0_0] : memref<8x20xi32, #tpu.memory_space<vmem>>, vector<8x20xi32>
    %c0_1 = arith.constant 0 : index
    %c0_2 = arith.constant 0 : index
    %1 = vector.load %arg2[%c0_1, %c0_2] : memref<100x32xbf16, #tpu.memory_space<vmem>>, vector<100x32xbf16>
    %2 = tpu.iota {dimensions = array<i32: 1>} : vector<8x100xi32>
    %cst = arith.constant 0.000000e+00 : f32
    %3 = vector.broadcast %cst : f32 to vector<8x1024xf32>
    %4 = vector.extract_strided_slice %0 {offsets = [0, 0], sizes = [8, 1], strides = [1, 1]} : vector<8x20xi32> to vector<8x1xi32>
    %5 = vector.broadcast %4 : vector<8x1xi32> to vector<8x100xi32>
    %6 = arith.cmpi eq, %2, %5 : vector<8x100xi32>
    %cst_3 = arith.constant 1.000000e+00 : f32
    %cst_4 = arith.constant 0.000000e+00 : f32
    %7 = vector.broadcast %cst_3 : f32 to vector<8x100xf32>
    %8 = vector.broadcast %cst_4 : f32 to vector<8x100xf32>
    %9 = arith.select %6, %7, %8 : vector<8x100xi1>, vector<8x100xf32>
    %10 = arith.truncf %9 : vector<8x100xf32> to vector<8x100xbf16>
    %cst_5 = arith.constant dense<0.000000e+00> : vector<8x32xf32>
    %11 = tpu.matmul %10, %1, %cst_5 {dimension_numbers = #tpu.dot_dimension_numbers<[1], [0], [0], [1], [0, 0, 1, 1], [], []>} : vector<8x100xbf16>, vector<100x32xbf16>, vector<8x32xf32> -> vector<8x32xf32>
    %12 = arith.truncf %11 : vector<8x32xf32> to vector<8x32xbf16>
    %c0_6 = arith.constant 0 : index
    %c0_7 = arith.constant 0 : index
    %c0_8 = arith.constant 0 : index
    %13 = vector.load %arg3[%c0_6, %c0_7, %c0_8] : memref<20x32x1024xbf16, #tpu.memory_space<vmem>>, vector<1x32x1024xbf16>
    %14 = vector.shape_cast %13 : vector<1x32x1024xbf16> to vector<32x1024xbf16>
    %cst_9 = arith.constant dense<0.000000e+00> : vector<8x1024xf32>
    %15 = tpu.matmul %12, %14, %cst_9 {dimension_numbers = #tpu.dot_dimension_numbers<[1], [0], [0], [1], [0, 0, 1, 1], [], []>} : vector<8x32xbf16>, vector<32x1024xbf16>, vector<8x1024xf32> -> vector<8x1024xf32>
    %16 = arith.addf %3, %15 : vector<8x1024xf32>
    %17 = vector.extract_strided_slice %0 {offsets = [0, 1], sizes = [8, 1], strides = [1, 1]} : vector<8x20xi32> to vector<8x1xi32>
    %18 = vector.broadcast %17 : vector<8x1xi32> to vector<8x100xi32>
    %19 = arith.cmpi eq, %2, %18 : vector<8x100xi32>
    %cst_10 = arith.constant 1.000000e+00 : f32
    %cst_11 = arith.constant 0.000000e+00 : f32
    %20 = vector.broadcast %cst_10 : f32 to vector<8x100xf32>
    %21 = vector.broadcast %cst_11 : f32 to vector<8x100xf32>
    %22 = arith.select %19, %20, %21 : vector<8x100xi1>, vector<8x100xf32>
    %23 = arith.truncf %22 : vector<8x100xf32> to vector<8x100xbf16>
    %cst_12 = arith.constant dense<0.000000e+00> : vector<8x32xf32>
    %24 = tpu.matmul %23, %1, %cst_12 {dimension_numbers = #tpu.dot_dimension_numbers<[1], [0], [0], [1], [0, 0, 1, 1], [], []>} : vector<8x100xbf16>, vector<100x32xbf16>, vector<8x32xf32> -> vector<8x32xf32>
    %25 = arith.truncf %24 : vector<8x32xf32> to vector<8x32xbf16>
    %c1 = arith.constant 1 : index
    %c0_13 = arith.constant 0 : index
    %c0_14 = arith.constant 0 : index
    %26 = vector.load %arg3[%c1, %c0_13, %c0_14] : memref<20x32x1024xbf16, #tpu.memory_space<vmem>>, vector<1x32x1024xbf16>
    %27 = vector.shape_cast %26 : vector<1x32x1024xbf16> to vector<32x1024xbf16>
    %cst_15 = arith.constant dense<0.000000e+00> : vector<8x1024xf32>
    %28 = tpu.matmul %25, %27, %cst_15 {dimension_numbers = #tpu.dot_dimension_numbers<[1], [0], [0], [1], [0, 0, 1, 1], [], []>} : vector<8x32xbf16>, vector<32x1024xbf16>, vector<8x1024xf32> -> vector<8x1024xf32>
    %29 = arith.addf %16, %28 : vector<8x1024xf32>
    %30 = vector.extract_strided_slice %0 {offsets = [0, 2], sizes = [8, 1], strides = [1, 1]} : vector<8x20xi32> to vector<8x1xi32>
    %31 = vector.broadcast %30 : vector<8x1xi32> to vector<8x100xi32>
    %32 = arith.cmpi eq, %2, %31 : vector<8x100xi32>
    %cst_16 = arith.constant 1.000000e+00 : f32
    %cst_17 = arith.constant 0.000000e+00 : f32
    %33 = vector.broadcast %cst_16 : f32 to vector<8x100xf32>
    %34 = vector.broadcast %cst_17 : f32 to vector<8x100xf32>
    %35 = arith.select %32, %33, %34 : vector<8x100xi1>, vector<8x100xf32>
    %36 = arith.truncf %35 : vector<8x100xf32> to vector<8x100xbf16>
    %cst_18 = arith.constant dense<0.000000e+00> : vector<8x32xf32>
    %37 = tpu.matmul %36, %1, %cst_18 {dimension_numbers = #tpu.dot_dimension_numbers<[1], [0], [0], [1], [0, 0, 1, 1], [], []>} : vector<8x100xbf16>, vector<100x32xbf16>, vector<8x32xf32> -> vector<8x32xf32>
    %38 = arith.truncf %37 : vector<8x32xf32> to vector<8x32xbf16>
    %c2 = arith.constant 2 : index
    %c0_19 = arith.constant 0 : index
    %c0_20 = arith.constant 0 : index
    %39 = vector.load %arg3[%c2, %c0_19, %c0_20] : memref<20x32x1024xbf16, #tpu.memory_space<vmem>>, vector<1x32x1024xbf16>
    %40 = vector.shape_cast %39 : vector<1x32x1024xbf16> to vector<32x1024xbf16>
    %cst_21 = arith.constant dense<0.000000e+00> : vector<8x1024xf32>
    %41 = tpu.matmul %38, %40, %cst_21 {dimension_numbers = #tpu.dot_dimension_numbers<[1], [0], [0], [1], [0, 0, 1, 1], [], []>} : vector<8x32xbf16>, vector<32x1024xbf16>, vector<8x1024xf32> -> vector<8x1024xf32>
    %42 = arith.addf %29, %41 : vector<8x1024xf32>
    %43 = vector.extract_strided_slice %0 {offsets = [0, 3], sizes = [8, 1], strides = [1, 1]} : vector<8x20xi32> to vector<8x1xi32>
    %44 = vector.broadcast %43 : vector<8x1xi32> to vector<8x100xi32>
    %45 = arith.cmpi eq, %2, %44 : vector<8x100xi32>
    %cst_22 = arith.constant 1.000000e+00 : f32
    %cst_23 = arith.constant 0.000000e+00 : f32
    %46 = vector.broadcast %cst_22 : f32 to vector<8x100xf32>
    %47 = vector.broadcast %cst_23 : f32 to vector<8x100xf32>
    %48 = arith.select %45, %46, %47 : vector<8x100xi1>, vector<8x100xf32>
    %49 = arith.truncf %48 : vector<8x100xf32> to vector<8x100xbf16>
    %cst_24 = arith.constant dense<0.000000e+00> : vector<8x32xf32>
    %50 = tpu.matmul %49, %1, %cst_24 {dimension_numbers = #tpu.dot_dimension_numbers<[1], [0], [0], [1], [0, 0, 1, 1], [], []>} : vector<8x100xbf16>, vector<100x32xbf16>, vector<8x32xf32> -> vector<8x32xf32>
    %51 = arith.truncf %50 : vector<8x32xf32> to vector<8x32xbf16>
    %c3 = arith.constant 3 : index
    %c0_25 = arith.constant 0 : index
    %c0_26 = arith.constant 0 : index
    %52 = vector.load %arg3[%c3, %c0_25, %c0_26] : memref<20x32x1024xbf16, #tpu.memory_space<vmem>>, vector<1x32x1024xbf16>
    %53 = vector.shape_cast %52 : vector<1x32x1024xbf16> to vector<32x1024xbf16>
    %cst_27 = arith.constant dense<0.000000e+00> : vector<8x1024xf32>
    %54 = tpu.matmul %51, %53, %cst_27 {dimension_numbers = #tpu.dot_dimension_numbers<[1], [0], [0], [1], [0, 0, 1, 1], [], []>} : vector<8x32xbf16>, vector<32x1024xbf16>, vector<8x1024xf32> -> vector<8x1024xf32>
    %55 = arith.addf %42, %54 : vector<8x1024xf32>
    %56 = vector.extract_strided_slice %0 {offsets = [0, 4], sizes = [8, 1], strides = [1, 1]} : vector<8x20xi32> to vector<8x1xi32>
    %57 = vector.broadcast %56 : vector<8x1xi32> to vector<8x100xi32>
    %58 = arith.cmpi eq, %2, %57 : vector<8x100xi32>
    %cst_28 = arith.constant 1.000000e+00 : f32
    %cst_29 = arith.constant 0.000000e+00 : f32
    %59 = vector.broadcast %cst_28 : f32 to vector<8x100xf32>
    %60 = vector.broadcast %cst_29 : f32 to vector<8x100xf32>
    %61 = arith.select %58, %59, %60 : vector<8x100xi1>, vector<8x100xf32>
    %62 = arith.truncf %61 : vector<8x100xf32> to vector<8x100xbf16>
    %cst_30 = arith.constant dense<0.000000e+00> : vector<8x32xf32>
    %63 = tpu.matmul %62, %1, %cst_30 {dimension_numbers = #tpu.dot_dimension_numbers<[1], [0], [0], [1], [0, 0, 1, 1], [], []>} : vector<8x100xbf16>, vector<100x32xbf16>, vector<8x32xf32> -> vector<8x32xf32>
    %64 = arith.truncf %63 : vector<8x32xf32> to vector<8x32xbf16>
    %c4 = arith.constant 4 : index
    %c0_31 = arith.constant 0 : index
    %c0_32 = arith.constant 0 : index
    %65 = vector.load %arg3[%c4, %c0_31, %c0_32] : memref<20x32x1024xbf16, #tpu.memory_space<vmem>>, vector<1x32x1024xbf16>
    %66 = vector.shape_cast %65 : vector<1x32x1024xbf16> to vector<32x1024xbf16>
    %cst_33 = arith.constant dense<0.000000e+00> : vector<8x1024xf32>
    %67 = tpu.matmul %64, %66, %cst_33 {dimension_numbers = #tpu.dot_dimension_numbers<[1], [0], [0], [1], [0, 0, 1, 1], [], []>} : vector<8x32xbf16>, vector<32x1024xbf16>, vector<8x1024xf32> -> vector<8x1024xf32>
    %68 = arith.addf %55, %67 : vector<8x1024xf32>
    %69 = vector.extract_strided_slice %0 {offsets = [0, 5], sizes = [8, 1], strides = [1, 1]} : vector<8x20xi32> to vector<8x1xi32>
    %70 = vector.broadcast %69 : vector<8x1xi32> to vector<8x100xi32>
    %71 = arith.cmpi eq, %2, %70 : vector<8x100xi32>
    %cst_34 = arith.constant 1.000000e+00 : f32
    %cst_35 = arith.constant 0.000000e+00 : f32
    %72 = vector.broadcast %cst_34 : f32 to vector<8x100xf32>
    %73 = vector.broadcast %cst_35 : f32 to vector<8x100xf32>
    %74 = arith.select %71, %72, %73 : vector<8x100xi1>, vector<8x100xf32>
    %75 = arith.truncf %74 : vector<8x100xf32> to vector<8x100xbf16>
    %cst_36 = arith.constant dense<0.000000e+00> : vector<8x32xf32>
    %76 = tpu.matmul %75, %1, %cst_36 {dimension_numbers = #tpu.dot_dimension_numbers<[1], [0], [0], [1], [0, 0, 1, 1], [], []>} : vector<8x100xbf16>, vector<100x32xbf16>, vector<8x32xf32> -> vector<8x32xf32>
    %77 = arith.truncf %76 : vector<8x32xf32> to vector<8x32xbf16>
    %c5 = arith.constant 5 : index
    %c0_37 = arith.constant 0 : index
    %c0_38 = arith.constant 0 : index
    %78 = vector.load %arg3[%c5, %c0_37, %c0_38] : memref<20x32x1024xbf16, #tpu.memory_space<vmem>>, vector<1x32x1024xbf16>
    %79 = vector.shape_cast %78 : vector<1x32x1024xbf16> to vector<32x1024xbf16>
    %cst_39 = arith.constant dense<0.000000e+00> : vector<8x1024xf32>
    %80 = tpu.matmul %77, %79, %cst_39 {dimension_numbers = #tpu.dot_dimension_numbers<[1], [0], [0], [1], [0, 0, 1, 1], [], []>} : vector<8x32xbf16>, vector<32x1024xbf16>, vector<8x1024xf32> -> vector<8x1024xf32>
    %81 = arith.addf %68, %80 : vector<8x1024xf32>
    %82 = vector.extract_strided_slice %0 {offsets = [0, 6], sizes = [8, 1], strides = [1, 1]} : vector<8x20xi32> to vector<8x1xi32>
    %83 = vector.broadcast %82 : vector<8x1xi32> to vector<8x100xi32>
    %84 = arith.cmpi eq, %2, %83 : vector<8x100xi32>
    %cst_40 = arith.constant 1.000000e+00 : f32
    %cst_41 = arith.constant 0.000000e+00 : f32
    %85 = vector.broadcast %cst_40 : f32 to vector<8x100xf32>
    %86 = vector.broadcast %cst_41 : f32 to vector<8x100xf32>
    %87 = arith.select %84, %85, %86 : vector<8x100xi1>, vector<8x100xf32>
    %88 = arith.truncf %87 : vector<8x100xf32> to vector<8x100xbf16>
    %cst_42 = arith.constant dense<0.000000e+00> : vector<8x32xf32>
    %89 = tpu.matmul %88, %1, %cst_42 {dimension_numbers = #tpu.dot_dimension_numbers<[1], [0], [0], [1], [0, 0, 1, 1], [], []>} : vector<8x100xbf16>, vector<100x32xbf16>, vector<8x32xf32> -> vector<8x32xf32>
    %90 = arith.truncf %89 : vector<8x32xf32> to vector<8x32xbf16>
    %c6 = arith.constant 6 : index
    %c0_43 = arith.constant 0 : index
    %c0_44 = arith.constant 0 : index
    %91 = vector.load %arg3[%c6, %c0_43, %c0_44] : memref<20x32x1024xbf16, #tpu.memory_space<vmem>>, vector<1x32x1024xbf16>
    %92 = vector.shape_cast %91 : vector<1x32x1024xbf16> to vector<32x1024xbf16>
    %cst_45 = arith.constant dense<0.000000e+00> : vector<8x1024xf32>
    %93 = tpu.matmul %90, %92, %cst_45 {dimension_numbers = #tpu.dot_dimension_numbers<[1], [0], [0], [1], [0, 0, 1, 1], [], []>} : vector<8x32xbf16>, vector<32x1024xbf16>, vector<8x1024xf32> -> vector<8x1024xf32>
    %94 = arith.addf %81, %93 : vector<8x1024xf32>
    %95 = vector.extract_strided_slice %0 {offsets = [0, 7], sizes = [8, 1], strides = [1, 1]} : vector<8x20xi32> to vector<8x1xi32>
    %96 = vector.broadcast %95 : vector<8x1xi32> to vector<8x100xi32>
    %97 = arith.cmpi eq, %2, %96 : vector<8x100xi32>
    %cst_46 = arith.constant 1.000000e+00 : f32
    %cst_47 = arith.constant 0.000000e+00 : f32
    %98 = vector.broadcast %cst_46 : f32 to vector<8x100xf32>
    %99 = vector.broadcast %cst_47 : f32 to vector<8x100xf32>
    %100 = arith.select %97, %98, %99 : vector<8x100xi1>, vector<8x100xf32>
    %101 = arith.truncf %100 : vector<8x100xf32> to vector<8x100xbf16>
    %cst_48 = arith.constant dense<0.000000e+00> : vector<8x32xf32>
    %102 = tpu.matmul %101, %1, %cst_48 {dimension_numbers = #tpu.dot_dimension_numbers<[1], [0], [0], [1], [0, 0, 1, 1], [], []>} : vector<8x100xbf16>, vector<100x32xbf16>, vector<8x32xf32> -> vector<8x32xf32>
    %103 = arith.truncf %102 : vector<8x32xf32> to vector<8x32xbf16>
    %c7 = arith.constant 7 : index
    %c0_49 = arith.constant 0 : index
    %c0_50 = arith.constant 0 : index
    %104 = vector.load %arg3[%c7, %c0_49, %c0_50] : memref<20x32x1024xbf16, #tpu.memory_space<vmem>>, vector<1x32x1024xbf16>
    %105 = vector.shape_cast %104 : vector<1x32x1024xbf16> to vector<32x1024xbf16>
    %cst_51 = arith.constant dense<0.000000e+00> : vector<8x1024xf32>
    %106 = tpu.matmul %103, %105, %cst_51 {dimension_numbers = #tpu.dot_dimension_numbers<[1], [0], [0], [1], [0, 0, 1, 1], [], []>} : vector<8x32xbf16>, vector<32x1024xbf16>, vector<8x1024xf32> -> vector<8x1024xf32>
    %107 = arith.addf %94, %106 : vector<8x1024xf32>
    %108 = vector.extract_strided_slice %0 {offsets = [0, 8], sizes = [8, 1], strides = [1, 1]} : vector<8x20xi32> to vector<8x1xi32>
    %109 = vector.broadcast %108 : vector<8x1xi32> to vector<8x100xi32>
    %110 = arith.cmpi eq, %2, %109 : vector<8x100xi32>
    %cst_52 = arith.constant 1.000000e+00 : f32
    %cst_53 = arith.constant 0.000000e+00 : f32
    %111 = vector.broadcast %cst_52 : f32 to vector<8x100xf32>
    %112 = vector.broadcast %cst_53 : f32 to vector<8x100xf32>
    %113 = arith.select %110, %111, %112 : vector<8x100xi1>, vector<8x100xf32>
    %114 = arith.truncf %113 : vector<8x100xf32> to vector<8x100xbf16>
    %cst_54 = arith.constant dense<0.000000e+00> : vector<8x32xf32>
    %115 = tpu.matmul %114, %1, %cst_54 {dimension_numbers = #tpu.dot_dimension_numbers<[1], [0], [0], [1], [0, 0, 1, 1], [], []>} : vector<8x100xbf16>, vector<100x32xbf16>, vector<8x32xf32> -> vector<8x32xf32>
    %116 = arith.truncf %115 : vector<8x32xf32> to vector<8x32xbf16>
    %c8 = arith.constant 8 : index
    %c0_55 = arith.constant 0 : index
    %c0_56 = arith.constant 0 : index
    %117 = vector.load %arg3[%c8, %c0_55, %c0_56] : memref<20x32x1024xbf16, #tpu.memory_space<vmem>>, vector<1x32x1024xbf16>
    %118 = vector.shape_cast %117 : vector<1x32x1024xbf16> to vector<32x1024xbf16>
    %cst_57 = arith.constant dense<0.000000e+00> : vector<8x1024xf32>
    %119 = tpu.matmul %116, %118, %cst_57 {dimension_numbers = #tpu.dot_dimension_numbers<[1], [0], [0], [1], [0, 0, 1, 1], [], []>} : vector<8x32xbf16>, vector<32x1024xbf16>, vector<8x1024xf32> -> vector<8x1024xf32>
    %120 = arith.addf %107, %119 : vector<8x1024xf32>
    %121 = vector.extract_strided_slice %0 {offsets = [0, 9], sizes = [8, 1], strides = [1, 1]} : vector<8x20xi32> to vector<8x1xi32>
    %122 = vector.broadcast %121 : vector<8x1xi32> to vector<8x100xi32>
    %123 = arith.cmpi eq, %2, %122 : vector<8x100xi32>
    %cst_58 = arith.constant 1.000000e+00 : f32
    %cst_59 = arith.constant 0.000000e+00 : f32
    %124 = vector.broadcast %cst_58 : f32 to vector<8x100xf32>
    %125 = vector.broadcast %cst_59 : f32 to vector<8x100xf32>
    %126 = arith.select %123, %124, %125 : vector<8x100xi1>, vector<8x100xf32>
    %127 = arith.truncf %126 : vector<8x100xf32> to vector<8x100xbf16>
    %cst_60 = arith.constant dense<0.000000e+00> : vector<8x32xf32>
    %128 = tpu.matmul %127, %1, %cst_60 {dimension_numbers = #tpu.dot_dimension_numbers<[1], [0], [0], [1], [0, 0, 1, 1], [], []>} : vector<8x100xbf16>, vector<100x32xbf16>, vector<8x32xf32> -> vector<8x32xf32>
    %129 = arith.truncf %128 : vector<8x32xf32> to vector<8x32xbf16>
    %c9 = arith.constant 9 : index
    %c0_61 = arith.constant 0 : index
    %c0_62 = arith.constant 0 : index
    %130 = vector.load %arg3[%c9, %c0_61, %c0_62] : memref<20x32x1024xbf16, #tpu.memory_space<vmem>>, vector<1x32x1024xbf16>
    %131 = vector.shape_cast %130 : vector<1x32x1024xbf16> to vector<32x1024xbf16>
    %cst_63 = arith.constant dense<0.000000e+00> : vector<8x1024xf32>
    %132 = tpu.matmul %129, %131, %cst_63 {dimension_numbers = #tpu.dot_dimension_numbers<[1], [0], [0], [1], [0, 0, 1, 1], [], []>} : vector<8x32xbf16>, vector<32x1024xbf16>, vector<8x1024xf32> -> vector<8x1024xf32>
    %133 = arith.addf %120, %132 : vector<8x1024xf32>
    %134 = vector.extract_strided_slice %0 {offsets = [0, 10], sizes = [8, 1], strides = [1, 1]} : vector<8x20xi32> to vector<8x1xi32>
    %135 = vector.broadcast %134 : vector<8x1xi32> to vector<8x100xi32>
    %136 = arith.cmpi eq, %2, %135 : vector<8x100xi32>
    %cst_64 = arith.constant 1.000000e+00 : f32
    %cst_65 = arith.constant 0.000000e+00 : f32
    %137 = vector.broadcast %cst_64 : f32 to vector<8x100xf32>
    %138 = vector.broadcast %cst_65 : f32 to vector<8x100xf32>
    %139 = arith.select %136, %137, %138 : vector<8x100xi1>, vector<8x100xf32>
    %140 = arith.truncf %139 : vector<8x100xf32> to vector<8x100xbf16>
    %cst_66 = arith.constant dense<0.000000e+00> : vector<8x32xf32>
    %141 = tpu.matmul %140, %1, %cst_66 {dimension_numbers = #tpu.dot_dimension_numbers<[1], [0], [0], [1], [0, 0, 1, 1], [], []>} : vector<8x100xbf16>, vector<100x32xbf16>, vector<8x32xf32> -> vector<8x32xf32>
    %142 = arith.truncf %141 : vector<8x32xf32> to vector<8x32xbf16>
    %c10 = arith.constant 10 : index
    %c0_67 = arith.constant 0 : index
    %c0_68 = arith.constant 0 : index
    %143 = vector.load %arg3[%c10, %c0_67, %c0_68] : memref<20x32x1024xbf16, #tpu.memory_space<vmem>>, vector<1x32x1024xbf16>
    %144 = vector.shape_cast %143 : vector<1x32x1024xbf16> to vector<32x1024xbf16>
    %cst_69 = arith.constant dense<0.000000e+00> : vector<8x1024xf32>
    %145 = tpu.matmul %142, %144, %cst_69 {dimension_numbers = #tpu.dot_dimension_numbers<[1], [0], [0], [1], [0, 0, 1, 1], [], []>} : vector<8x32xbf16>, vector<32x1024xbf16>, vector<8x1024xf32> -> vector<8x1024xf32>
    %146 = arith.addf %133, %145 : vector<8x1024xf32>
    %147 = vector.extract_strided_slice %0 {offsets = [0, 11], sizes = [8, 1], strides = [1, 1]} : vector<8x20xi32> to vector<8x1xi32>
    %148 = vector.broadcast %147 : vector<8x1xi32> to vector<8x100xi32>
    %149 = arith.cmpi eq, %2, %148 : vector<8x100xi32>
    %cst_70 = arith.constant 1.000000e+00 : f32
    %cst_71 = arith.constant 0.000000e+00 : f32
    %150 = vector.broadcast %cst_70 : f32 to vector<8x100xf32>
    %151 = vector.broadcast %cst_71 : f32 to vector<8x100xf32>
    %152 = arith.select %149, %150, %151 : vector<8x100xi1>, vector<8x100xf32>
    %153 = arith.truncf %152 : vector<8x100xf32> to vector<8x100xbf16>
    %cst_72 = arith.constant dense<0.000000e+00> : vector<8x32xf32>
    %154 = tpu.matmul %153, %1, %cst_72 {dimension_numbers = #tpu.dot_dimension_numbers<[1], [0], [0], [1], [0, 0, 1, 1], [], []>} : vector<8x100xbf16>, vector<100x32xbf16>, vector<8x32xf32> -> vector<8x32xf32>
    %155 = arith.truncf %154 : vector<8x32xf32> to vector<8x32xbf16>
    %c11 = arith.constant 11 : index
    %c0_73 = arith.constant 0 : index
    %c0_74 = arith.constant 0 : index
    %156 = vector.load %arg3[%c11, %c0_73, %c0_74] : memref<20x32x1024xbf16, #tpu.memory_space<vmem>>, vector<1x32x1024xbf16>
    %157 = vector.shape_cast %156 : vector<1x32x1024xbf16> to vector<32x1024xbf16>
    %cst_75 = arith.constant dense<0.000000e+00> : vector<8x1024xf32>
    %158 = tpu.matmul %155, %157, %cst_75 {dimension_numbers = #tpu.dot_dimension_numbers<[1], [0], [0], [1], [0, 0, 1, 1], [], []>} : vector<8x32xbf16>, vector<32x1024xbf16>, vector<8x1024xf32> -> vector<8x1024xf32>
    %159 = arith.addf %146, %158 : vector<8x1024xf32>
    %160 = vector.extract_strided_slice %0 {offsets = [0, 12], sizes = [8, 1], strides = [1, 1]} : vector<8x20xi32> to vector<8x1xi32>
    %161 = vector.broadcast %160 : vector<8x1xi32> to vector<8x100xi32>
    %162 = arith.cmpi eq, %2, %161 : vector<8x100xi32>
    %cst_76 = arith.constant 1.000000e+00 : f32
    %cst_77 = arith.constant 0.000000e+00 : f32
    %163 = vector.broadcast %cst_76 : f32 to vector<8x100xf32>
    %164 = vector.broadcast %cst_77 : f32 to vector<8x100xf32>
    %165 = arith.select %162, %163, %164 : vector<8x100xi1>, vector<8x100xf32>
    %166 = arith.truncf %165 : vector<8x100xf32> to vector<8x100xbf16>
    %cst_78 = arith.constant dense<0.000000e+00> : vector<8x32xf32>
    %167 = tpu.matmul %166, %1, %cst_78 {dimension_numbers = #tpu.dot_dimension_numbers<[1], [0], [0], [1], [0, 0, 1, 1], [], []>} : vector<8x100xbf16>, vector<100x32xbf16>, vector<8x32xf32> -> vector<8x32xf32>
    %168 = arith.truncf %167 : vector<8x32xf32> to vector<8x32xbf16>
    %c12 = arith.constant 12 : index
    %c0_79 = arith.constant 0 : index
    %c0_80 = arith.constant 0 : index
    %169 = vector.load %arg3[%c12, %c0_79, %c0_80] : memref<20x32x1024xbf16, #tpu.memory_space<vmem>>, vector<1x32x1024xbf16>
    %170 = vector.shape_cast %169 : vector<1x32x1024xbf16> to vector<32x1024xbf16>
    %cst_81 = arith.constant dense<0.000000e+00> : vector<8x1024xf32>
    %171 = tpu.matmul %168, %170, %cst_81 {dimension_numbers = #tpu.dot_dimension_numbers<[1], [0], [0], [1], [0, 0, 1, 1], [], []>} : vector<8x32xbf16>, vector<32x1024xbf16>, vector<8x1024xf32> -> vector<8x1024xf32>
    %172 = arith.addf %159, %171 : vector<8x1024xf32>
    %173 = vector.extract_strided_slice %0 {offsets = [0, 13], sizes = [8, 1], strides = [1, 1]} : vector<8x20xi32> to vector<8x1xi32>
    %174 = vector.broadcast %173 : vector<8x1xi32> to vector<8x100xi32>
    %175 = arith.cmpi eq, %2, %174 : vector<8x100xi32>
    %cst_82 = arith.constant 1.000000e+00 : f32
    %cst_83 = arith.constant 0.000000e+00 : f32
    %176 = vector.broadcast %cst_82 : f32 to vector<8x100xf32>
    %177 = vector.broadcast %cst_83 : f32 to vector<8x100xf32>
    %178 = arith.select %175, %176, %177 : vector<8x100xi1>, vector<8x100xf32>
    %179 = arith.truncf %178 : vector<8x100xf32> to vector<8x100xbf16>
    %cst_84 = arith.constant dense<0.000000e+00> : vector<8x32xf32>
    %180 = tpu.matmul %179, %1, %cst_84 {dimension_numbers = #tpu.dot_dimension_numbers<[1], [0], [0], [1], [0, 0, 1, 1], [], []>} : vector<8x100xbf16>, vector<100x32xbf16>, vector<8x32xf32> -> vector<8x32xf32>
    %181 = arith.truncf %180 : vector<8x32xf32> to vector<8x32xbf16>
    %c13 = arith.constant 13 : index
    %c0_85 = arith.constant 0 : index
    %c0_86 = arith.constant 0 : index
    %182 = vector.load %arg3[%c13, %c0_85, %c0_86] : memref<20x32x1024xbf16, #tpu.memory_space<vmem>>, vector<1x32x1024xbf16>
    %183 = vector.shape_cast %182 : vector<1x32x1024xbf16> to vector<32x1024xbf16>
    %cst_87 = arith.constant dense<0.000000e+00> : vector<8x1024xf32>
    %184 = tpu.matmul %181, %183, %cst_87 {dimension_numbers = #tpu.dot_dimension_numbers<[1], [0], [0], [1], [0, 0, 1, 1], [], []>} : vector<8x32xbf16>, vector<32x1024xbf16>, vector<8x1024xf32> -> vector<8x1024xf32>
    %185 = arith.addf %172, %184 : vector<8x1024xf32>
    %186 = vector.extract_strided_slice %0 {offsets = [0, 14], sizes = [8, 1], strides = [1, 1]} : vector<8x20xi32> to vector<8x1xi32>
    %187 = vector.broadcast %186 : vector<8x1xi32> to vector<8x100xi32>
    %188 = arith.cmpi eq, %2, %187 : vector<8x100xi32>
    %cst_88 = arith.constant 1.000000e+00 : f32
    %cst_89 = arith.constant 0.000000e+00 : f32
    %189 = vector.broadcast %cst_88 : f32 to vector<8x100xf32>
    %190 = vector.broadcast %cst_89 : f32 to vector<8x100xf32>
    %191 = arith.select %188, %189, %190 : vector<8x100xi1>, vector<8x100xf32>
    %192 = arith.truncf %191 : vector<8x100xf32> to vector<8x100xbf16>
    %cst_90 = arith.constant dense<0.000000e+00> : vector<8x32xf32>
    %193 = tpu.matmul %192, %1, %cst_90 {dimension_numbers = #tpu.dot_dimension_numbers<[1], [0], [0], [1], [0, 0, 1, 1], [], []>} : vector<8x100xbf16>, vector<100x32xbf16>, vector<8x32xf32> -> vector<8x32xf32>
    %194 = arith.truncf %193 : vector<8x32xf32> to vector<8x32xbf16>
    %c14 = arith.constant 14 : index
    %c0_91 = arith.constant 0 : index
    %c0_92 = arith.constant 0 : index
    %195 = vector.load %arg3[%c14, %c0_91, %c0_92] : memref<20x32x1024xbf16, #tpu.memory_space<vmem>>, vector<1x32x1024xbf16>
    %196 = vector.shape_cast %195 : vector<1x32x1024xbf16> to vector<32x1024xbf16>
    %cst_93 = arith.constant dense<0.000000e+00> : vector<8x1024xf32>
    %197 = tpu.matmul %194, %196, %cst_93 {dimension_numbers = #tpu.dot_dimension_numbers<[1], [0], [0], [1], [0, 0, 1, 1], [], []>} : vector<8x32xbf16>, vector<32x1024xbf16>, vector<8x1024xf32> -> vector<8x1024xf32>
    %198 = arith.addf %185, %197 : vector<8x1024xf32>
    %199 = vector.extract_strided_slice %0 {offsets = [0, 15], sizes = [8, 1], strides = [1, 1]} : vector<8x20xi32> to vector<8x1xi32>
    %200 = vector.broadcast %199 : vector<8x1xi32> to vector<8x100xi32>
    %201 = arith.cmpi eq, %2, %200 : vector<8x100xi32>
    %cst_94 = arith.constant 1.000000e+00 : f32
    %cst_95 = arith.constant 0.000000e+00 : f32
    %202 = vector.broadcast %cst_94 : f32 to vector<8x100xf32>
    %203 = vector.broadcast %cst_95 : f32 to vector<8x100xf32>
    %204 = arith.select %201, %202, %203 : vector<8x100xi1>, vector<8x100xf32>
    %205 = arith.truncf %204 : vector<8x100xf32> to vector<8x100xbf16>
    %cst_96 = arith.constant dense<0.000000e+00> : vector<8x32xf32>
    %206 = tpu.matmul %205, %1, %cst_96 {dimension_numbers = #tpu.dot_dimension_numbers<[1], [0], [0], [1], [0, 0, 1, 1], [], []>} : vector<8x100xbf16>, vector<100x32xbf16>, vector<8x32xf32> -> vector<8x32xf32>
    %207 = arith.truncf %206 : vector<8x32xf32> to vector<8x32xbf16>
    %c15 = arith.constant 15 : index
    %c0_97 = arith.constant 0 : index
    %c0_98 = arith.constant 0 : index
    %208 = vector.load %arg3[%c15, %c0_97, %c0_98] : memref<20x32x1024xbf16, #tpu.memory_space<vmem>>, vector<1x32x1024xbf16>
    %209 = vector.shape_cast %208 : vector<1x32x1024xbf16> to vector<32x1024xbf16>
    %cst_99 = arith.constant dense<0.000000e+00> : vector<8x1024xf32>
    %210 = tpu.matmul %207, %209, %cst_99 {dimension_numbers = #tpu.dot_dimension_numbers<[1], [0], [0], [1], [0, 0, 1, 1], [], []>} : vector<8x32xbf16>, vector<32x1024xbf16>, vector<8x1024xf32> -> vector<8x1024xf32>
    %211 = arith.addf %198, %210 : vector<8x1024xf32>
    %212 = vector.extract_strided_slice %0 {offsets = [0, 16], sizes = [8, 1], strides = [1, 1]} : vector<8x20xi32> to vector<8x1xi32>
    %213 = vector.broadcast %212 : vector<8x1xi32> to vector<8x100xi32>
    %214 = arith.cmpi eq, %2, %213 : vector<8x100xi32>
    %cst_100 = arith.constant 1.000000e+00 : f32
    %cst_101 = arith.constant 0.000000e+00 : f32
    %215 = vector.broadcast %cst_100 : f32 to vector<8x100xf32>
    %216 = vector.broadcast %cst_101 : f32 to vector<8x100xf32>
    %217 = arith.select %214, %215, %216 : vector<8x100xi1>, vector<8x100xf32>
    %218 = arith.truncf %217 : vector<8x100xf32> to vector<8x100xbf16>
    %cst_102 = arith.constant dense<0.000000e+00> : vector<8x32xf32>
    %219 = tpu.matmul %218, %1, %cst_102 {dimension_numbers = #tpu.dot_dimension_numbers<[1], [0], [0], [1], [0, 0, 1, 1], [], []>} : vector<8x100xbf16>, vector<100x32xbf16>, vector<8x32xf32> -> vector<8x32xf32>
    %220 = arith.truncf %219 : vector<8x32xf32> to vector<8x32xbf16>
    %c16 = arith.constant 16 : index
    %c0_103 = arith.constant 0 : index
    %c0_104 = arith.constant 0 : index
    %221 = vector.load %arg3[%c16, %c0_103, %c0_104] : memref<20x32x1024xbf16, #tpu.memory_space<vmem>>, vector<1x32x1024xbf16>
    %222 = vector.shape_cast %221 : vector<1x32x1024xbf16> to vector<32x1024xbf16>
    %cst_105 = arith.constant dense<0.000000e+00> : vector<8x1024xf32>
    %223 = tpu.matmul %220, %222, %cst_105 {dimension_numbers = #tpu.dot_dimension_numbers<[1], [0], [0], [1], [0, 0, 1, 1], [], []>} : vector<8x32xbf16>, vector<32x1024xbf16>, vector<8x1024xf32> -> vector<8x1024xf32>
    %224 = arith.addf %211, %223 : vector<8x1024xf32>
    %225 = vector.extract_strided_slice %0 {offsets = [0, 17], sizes = [8, 1], strides = [1, 1]} : vector<8x20xi32> to vector<8x1xi32>
    %226 = vector.broadcast %225 : vector<8x1xi32> to vector<8x100xi32>
    %227 = arith.cmpi eq, %2, %226 : vector<8x100xi32>
    %cst_106 = arith.constant 1.000000e+00 : f32
    %cst_107 = arith.constant 0.000000e+00 : f32
    %228 = vector.broadcast %cst_106 : f32 to vector<8x100xf32>
    %229 = vector.broadcast %cst_107 : f32 to vector<8x100xf32>
    %230 = arith.select %227, %228, %229 : vector<8x100xi1>, vector<8x100xf32>
    %231 = arith.truncf %230 : vector<8x100xf32> to vector<8x100xbf16>
    %cst_108 = arith.constant dense<0.000000e+00> : vector<8x32xf32>
    %232 = tpu.matmul %231, %1, %cst_108 {dimension_numbers = #tpu.dot_dimension_numbers<[1], [0], [0], [1], [0, 0, 1, 1], [], []>} : vector<8x100xbf16>, vector<100x32xbf16>, vector<8x32xf32> -> vector<8x32xf32>
    %233 = arith.truncf %232 : vector<8x32xf32> to vector<8x32xbf16>
    %c17 = arith.constant 17 : index
    %c0_109 = arith.constant 0 : index
    %c0_110 = arith.constant 0 : index
    %234 = vector.load %arg3[%c17, %c0_109, %c0_110] : memref<20x32x1024xbf16, #tpu.memory_space<vmem>>, vector<1x32x1024xbf16>
    %235 = vector.shape_cast %234 : vector<1x32x1024xbf16> to vector<32x1024xbf16>
    %cst_111 = arith.constant dense<0.000000e+00> : vector<8x1024xf32>
    %236 = tpu.matmul %233, %235, %cst_111 {dimension_numbers = #tpu.dot_dimension_numbers<[1], [0], [0], [1], [0, 0, 1, 1], [], []>} : vector<8x32xbf16>, vector<32x1024xbf16>, vector<8x1024xf32> -> vector<8x1024xf32>
    %237 = arith.addf %224, %236 : vector<8x1024xf32>
    %238 = vector.extract_strided_slice %0 {offsets = [0, 18], sizes = [8, 1], strides = [1, 1]} : vector<8x20xi32> to vector<8x1xi32>
    %239 = vector.broadcast %238 : vector<8x1xi32> to vector<8x100xi32>
    %240 = arith.cmpi eq, %2, %239 : vector<8x100xi32>
    %cst_112 = arith.constant 1.000000e+00 : f32
    %cst_113 = arith.constant 0.000000e+00 : f32
    %241 = vector.broadcast %cst_112 : f32 to vector<8x100xf32>
    %242 = vector.broadcast %cst_113 : f32 to vector<8x100xf32>
    %243 = arith.select %240, %241, %242 : vector<8x100xi1>, vector<8x100xf32>
    %244 = arith.truncf %243 : vector<8x100xf32> to vector<8x100xbf16>
    %cst_114 = arith.constant dense<0.000000e+00> : vector<8x32xf32>
    %245 = tpu.matmul %244, %1, %cst_114 {dimension_numbers = #tpu.dot_dimension_numbers<[1], [0], [0], [1], [0, 0, 1, 1], [], []>} : vector<8x100xbf16>, vector<100x32xbf16>, vector<8x32xf32> -> vector<8x32xf32>
    %246 = arith.truncf %245 : vector<8x32xf32> to vector<8x32xbf16>
    %c18 = arith.constant 18 : index
    %c0_115 = arith.constant 0 : index
    %c0_116 = arith.constant 0 : index
    %247 = vector.load %arg3[%c18, %c0_115, %c0_116] : memref<20x32x1024xbf16, #tpu.memory_space<vmem>>, vector<1x32x1024xbf16>
    %248 = vector.shape_cast %247 : vector<1x32x1024xbf16> to vector<32x1024xbf16>
    %cst_117 = arith.constant dense<0.000000e+00> : vector<8x1024xf32>
    %249 = tpu.matmul %246, %248, %cst_117 {dimension_numbers = #tpu.dot_dimension_numbers<[1], [0], [0], [1], [0, 0, 1, 1], [], []>} : vector<8x32xbf16>, vector<32x1024xbf16>, vector<8x1024xf32> -> vector<8x1024xf32>
    %250 = arith.addf %237, %249 : vector<8x1024xf32>
    %251 = vector.extract_strided_slice %0 {offsets = [0, 19], sizes = [8, 1], strides = [1, 1]} : vector<8x20xi32> to vector<8x1xi32>
    %252 = vector.broadcast %251 : vector<8x1xi32> to vector<8x100xi32>
    %253 = arith.cmpi eq, %2, %252 : vector<8x100xi32>
    %cst_118 = arith.constant 1.000000e+00 : f32
    %cst_119 = arith.constant 0.000000e+00 : f32
    %254 = vector.broadcast %cst_118 : f32 to vector<8x100xf32>
    %255 = vector.broadcast %cst_119 : f32 to vector<8x100xf32>
    %256 = arith.select %253, %254, %255 : vector<8x100xi1>, vector<8x100xf32>
    %257 = arith.truncf %256 : vector<8x100xf32> to vector<8x100xbf16>
    %cst_120 = arith.constant dense<0.000000e+00> : vector<8x32xf32>
    %258 = tpu.matmul %257, %1, %cst_120 {dimension_numbers = #tpu.dot_dimension_numbers<[1], [0], [0], [1], [0, 0, 1, 1], [], []>} : vector<8x100xbf16>, vector<100x32xbf16>, vector<8x32xf32> -> vector<8x32xf32>
    %259 = arith.truncf %258 : vector<8x32xf32> to vector<8x32xbf16>
    %c19 = arith.constant 19 : index
    %c0_121 = arith.constant 0 : index
    %c0_122 = arith.constant 0 : index
    %260 = vector.load %arg3[%c19, %c0_121, %c0_122] : memref<20x32x1024xbf16, #tpu.memory_space<vmem>>, vector<1x32x1024xbf16>
    %261 = vector.shape_cast %260 : vector<1x32x1024xbf16> to vector<32x1024xbf16>
    %cst_123 = arith.constant dense<0.000000e+00> : vector<8x1024xf32>
    %262 = tpu.matmul %259, %261, %cst_123 {dimension_numbers = #tpu.dot_dimension_numbers<[1], [0], [0], [1], [0, 0, 1, 1], [], []>} : vector<8x32xbf16>, vector<32x1024xbf16>, vector<8x1024xf32> -> vector<8x1024xf32>
    %263 = arith.addf %250, %262 : vector<8x1024xf32>
    %c0_124 = arith.constant 0 : index
    %c0_125 = arith.constant 0 : index
    %264 = vector.load %arg4[%c0_124, %c0_125] : memref<1x1024xf32, #tpu.memory_space<vmem>>, vector<1x1024xf32>
    %265 = vector.broadcast %264 : vector<1x1024xf32> to vector<8x1024xf32>
    %266 = arith.addf %263, %265 : vector<8x1024xf32>
    %cst_126 = arith.constant 0.000000e+00 : f32
    %267 = vector.broadcast %cst_126 : f32 to vector<8x1024xf32>
    %268 = arith.maximumf %266, %267 : vector<8x1024xf32>
    %269 = arith.truncf %268 : vector<8x1024xf32> to vector<8x1024xbf16>
    %c0_127 = arith.constant 0 : index
    %c0_128 = arith.constant 0 : index
    %270 = vector.load %arg5[%c0_127, %c0_128] : memref<1024x128xbf16, #tpu.memory_space<vmem>>, vector<1024x128xbf16>
    %cst_129 = arith.constant dense<0.000000e+00> : vector<8x128xf32>
    %271 = tpu.matmul %269, %270, %cst_129 {dimension_numbers = #tpu.dot_dimension_numbers<[1], [0], [0], [1], [0, 0, 1, 1], [], []>} : vector<8x1024xbf16>, vector<1024x128xbf16>, vector<8x128xf32> -> vector<8x128xf32>
    %c0_130 = arith.constant 0 : index
    %c0_131 = arith.constant 0 : index
    %272 = vector.load %arg6[%c0_130, %c0_131] : memref<1x128xf32, #tpu.memory_space<vmem>>, vector<1x128xf32>
    %273 = vector.broadcast %272 : vector<1x128xf32> to vector<8x128xf32>
    %274 = arith.addf %271, %273 : vector<8x128xf32>
    %cst_132 = arith.constant 0.000000e+00 : f32
    %275 = vector.broadcast %cst_132 : f32 to vector<8x128xf32>
    %276 = arith.maximumf %274, %275 : vector<8x128xf32>
    %277 = arith.truncf %276 : vector<8x128xf32> to vector<8x128xbf16>
    %c0_133 = arith.constant 0 : index
    %c0_134 = arith.constant 0 : index
    %278 = vector.load %arg7[%c0_133, %c0_134] : memref<128x4xbf16, #tpu.memory_space<vmem>>, vector<128x4xbf16>
    %cst_135 = arith.constant dense<0.000000e+00> : vector<8x4xf32>
    %279 = tpu.matmul %277, %278, %cst_135 {dimension_numbers = #tpu.dot_dimension_numbers<[1], [0], [0], [1], [0, 0, 1, 1], [], []>} : vector<8x128xbf16>, vector<128x4xbf16>, vector<8x4xf32> -> vector<8x4xf32>
    %c0_136 = arith.constant 0 : index
    %c0_137 = arith.constant 0 : index
    %280 = vector.load %arg8[%c0_136, %c0_137] : memref<1x4xf32, #tpu.memory_space<vmem>>, vector<1x4xf32>
    %281 = vector.broadcast %280 : vector<1x4xf32> to vector<8x4xf32>
    %282 = arith.addf %279, %281 : vector<8x4xf32>
    %c0_138 = arith.constant 0 : index
    %c0_139 = arith.constant 0 : index
    %283 = vector.load %arg9[%c0_138, %c0_139] : memref<8x4xf32, #tpu.memory_space<vmem>>, vector<8x4xf32>
    tpu.vector_store %arg9[%c0_138, %c0_139], %282 {strides = array<i32>} : memref<8x4xf32, #tpu.memory_space<vmem>>, vector<8x4xf32>,
    return
  }
  func.func @transform_0(%arg0: i32) -> (i32, i32) {
    %c0_i32 = arith.constant 0 : i32
    %c0_i32_0 = arith.constant 0 : i32
    return %arg0, %c0_i32 : i32, i32
  }
  func.func @transform_1(%arg0: i32) -> (i32, i32) {
    %c0_i32 = arith.constant 0 : i32
    %c0_i32_0 = arith.constant 0 : i32
    %c0_i32_1 = arith.constant 0 : i32
    return %c0_i32, %c0_i32_0 : i32, i32
  }
  func.func @transform_2(%arg0: i32) -> (i32, i32, i32) {
    %c0_i32 = arith.constant 0 : i32
    %c0_i32_0 = arith.constant 0 : i32
    %c0_i32_1 = arith.constant 0 : i32
    %c0_i32_2 = arith.constant 0 : i32
    return %c0_i32, %c0_i32_0, %c0_i32_1 : i32, i32, i32
  }
  func.func @transform_3(%arg0: i32) -> (i32, i32) {
    %c0_i32 = arith.constant 0 : i32
    %c0_i32_0 = arith.constant 0 : i32
    %c0_i32_1 = arith.constant 0 : i32
    return %c0_i32, %c0_i32_0 : i32, i32
  }
  func.func @transform_4(%arg0: i32) -> (i32, i32) {
    %c0_i32 = arith.constant 0 : i32
    %c0_i32_0 = arith.constant 0 : i32
    %c0_i32_1 = arith.constant 0 : i32
    return %c0_i32, %c0_i32_0 : i32, i32
  }
  func.func @transform_5(%arg0: i32) -> (i32, i32) {
    %c0_i32 = arith.constant 0 : i32
    %c0_i32_0 = arith.constant 0 : i32
    %c0_i32_1 = arith.constant 0 : i32
    return %c0_i32, %c0_i32_0 : i32, i32
  }
  func.func @transform_6(%arg0: i32) -> (i32, i32) {
    %c0_i32 = arith.constant 0 : i32
    %c0_i32_0 = arith.constant 0 : i32
    %c0_i32_1 = arith.constant 0 : i32
    return %c0_i32, %c0_i32_0 : i32, i32
  }
  func.func @transform_7(%arg0: i32) -> (i32, i32) {
    %c0_i32 = arith.constant 0 : i32
    %c0_i32_0 = arith.constant 0 : i32
    %c0_i32_1 = arith.constant 0 : i32
    return %c0_i32, %c0_i32_0 : i32, i32
  }
  func.func @transform_8(%arg0: i32) -> (i32, i32) {
    %c0_i32 = arith.constant 0 : i32
    %c0_i32_0 = arith.constant 0 : i32
    return %arg0, %c0_i32 : i32, i32
  }
}

</mosaic_0001>

<llo_original>
// kernel: text_classification_forward.1
$region0: #{text_classification_forward.1}
  #allocation0 [shape = 'u32[]', space=smem, size = 0x4, offset = 0x4, fixed_abs, tag = 'smem constant byte address 0x4 - core index']
  #allocation1 [shape = 'u32[144,128]{1,0:T(1,128)}', space=vmem, size = 0x12000, scoped, tag = 'internal scratch']
  %s0 = inlined_call_operand.hbm [shape: s32[8,20], index: 0, kind: input, shape index: {}]
  %s1 = inlined_call_operand.vmem [shape: bf16[100,32], index: 1, kind: input, shape index: {}]
  %s2 = inlined_call_operand.hbm [shape: bf16[20,32,1024], index: 2, kind: input, shape index: {}]
  %s3 = inlined_call_operand.hbm [shape: f32[1,1024], index: 3, kind: input, shape index: {}]
  %s4 = inlined_call_operand.hbm [shape: bf16[1024,128], index: 4, kind: input, shape index: {}]
  %s5 = inlined_call_operand.hbm [shape: f32[1,128], index: 5, kind: input, shape index: {}]
  %s6 = inlined_call_operand.vmem [shape: bf16[128,4], index: 6, kind: input, shape index: {}]
  %s7 = inlined_call_operand.hbm [shape: f32[1,4], index: 7, kind: input, shape index: {}]
  %s8 = inlined_call_operand.vmem [shape: f32[8,4], index: 8, kind: output, shape index: {}]
  %s9 = sld [smem:[#allocation0]]
  $region66: #{text_classification_forward.1} parent=0
    _
  %s11 = ssub.s32 1, %s9
  %s12 = scalar_select 0, %s11, %s9
  $region1: #{text_classification_forward.1} parent=0
    #allocation2 [shape = 'u8[4096]{0}', space=vmem, size = 0x1000, scoped, tag = 'input window, operand 0, single buffered']
    #allocation3 [shape = 's32[1]{0}', space=sflag, size = 0x4, scoped, tag = 'scoped memory for text_classification_forward.1']
    #allocation4 [shape = 'u8[1310720]{0}', space=vmem, size = 0x140000, scoped, tag = 'input window, operand 2, single buffered']
    #allocation5 [shape = 's32[1]{0}', space=sflag, size = 0x4, scoped, tag = 'scoped memory for text_classification_forward.1']
    #allocation6 [shape = 'u8[4096]{0}', space=vmem, size = 0x1000, scoped, tag = 'input window, operand 3, single buffered']
    #allocation7 [shape = 'u8[262144]{0}', space=vmem, size = 0x40000, scoped, tag = 'input window, operand 4, single buffered']
    #allocation8 [shape = 's32[1]{0}', space=sflag, size = 0x4, scoped, tag = 'scoped memory for text_classification_forward.1']
    #allocation9 [shape = 'u8[512]{0}', space=vmem, size = 0x400, scoped, tag = 'input window, operand 5, single buffered']
    #allocation10 [shape = 'u8[512]{0}', space=vmem, size = 0x400, scoped, tag = 'input window, operand 7, single buffered']
    #allocation11 [shape = 's32[1]{0}', space=sflag, size = 0x4, scoped, tag = 'scoped memory for text_classification_forward.1']
    %13 = vsyncpa [#allocation3], 0
    %14 = vsyncpa [#allocation5], 0
    %15 = vsyncpa [#allocation8], 0
    %16 = vsyncpa [#allocation11], 0
    // Predicated region
    $region2: #{text_classification_forward.1} parent=1 // pred_check
      _
    $region3: #{text_classification_forward.1} parent=1 // pred_check_branch
      %18 = sbr.rel (0) target = $region5
    $region4: #{text_classification_forward.1} parent=1 // pred_region
      %s20 = ssub.s32 128, 128
      %21 = vsyncadd [#allocation3], %s20
      %s23 = sshll.u32 [#allocation2], 4
      %s24 = int_to_ptr.vmem [resolvable:$true] %s23
      %26 = dma.hbm_to_vmem [thread:$0]  %s0, 128, %s24, [#allocation3]
    $region5: #{text_classification_forward.1} parent=1 // pred_fallthru
      _
    // Predicated region
    $region6: #{text_classification_forward.1} parent=1 // pred_check
      _
    $region7: #{text_classification_forward.1} parent=1 // pred_check_branch
      %28 = sbr.rel (0) target = $region9
    $region8: #{text_classification_forward.1} parent=1 // pred_region
      _
    $region9: #{text_classification_forward.1} parent=1 // pred_fallthru
      _
    // Predicated region
    $region10: #{text_classification_forward.1} parent=1 // pred_check
      _
    $region11: #{text_classification_forward.1} parent=1 // pred_check_branch
      %30 = sbr.rel (0) target = $region13
    $region12: #{text_classification_forward.1} parent=1 // pred_region
      %s32 = ssub.s32 40960, 40960
      %33 = vsyncadd [#allocation5], %s32
      %s34 = sshll.u32 [#allocation4], 4
      %s35 = int_to_ptr.vmem [resolvable:$true] %s34
      %40 = dma.hbm_to_vmem [thread:$0]  %s2, 40960, %s35, [#allocation5], 512, 512, 32
    $region13: #{text_classification_forward.1} parent=1 // pred_fallthru
      _
    // Predicated region
    $region14: #{text_classification_forward.1} parent=1 // pred_check
      _
    $region15: #{text_classification_forward.1} parent=1 // pred_check_branch
      %42 = sbr.rel (0) target = $region17
    $region16: #{text_classification_forward.1} parent=1 // pred_region
      %s44 = ssub.s32 128, 128
      %45 = vsyncadd [#allocation5], %s44
      %s47 = sshll.u32 [#allocation6], 4
      %s48 = int_to_ptr.vmem [resolvable:$true] %s47
      %50 = dma.hbm_to_vmem [thread:$0]  %s3, 128, %s48, [#allocation5]
    $region17: #{text_classification_forward.1} parent=1 // pred_fallthru
      _
    // Predicated region
    $region18: #{text_classification_forward.1} parent=1 // pred_check
      _
    $region19: #{text_classification_forward.1} parent=1 // pred_check_branch
      %52 = sbr.rel (0) target = $region21
    $region20: #{text_classification_forward.1} parent=1 // pred_region
      %s54 = ssub.s32 8192, 8192
      %55 = vsyncadd [#allocation8], %s54
      %s56 = sshll.u32 [#allocation7], 4
      %s57 = int_to_ptr.vmem [resolvable:$true] %s56
      %62 = dma.hbm_to_vmem [thread:$0]  %s4, 8192, %s57, [#allocation8], 64, 64, 4
    $region21: #{text_classification_forward.1} parent=1 // pred_fallthru
      _
    // Predicated region
    $region22: #{text_classification_forward.1} parent=1 // pred_check
      _
    $region23: #{text_classification_forward.1} parent=1 // pred_check_branch
      %64 = sbr.rel (0) target = $region25
    $region24: #{text_classification_forward.1} parent=1 // pred_region
      %s66 = ssub.s32 16, 16
      %67 = vsyncadd [#allocation8], %s66
      %s69 = sshll.u32 [#allocation9], 4
      %s70 = int_to_ptr.vmem [resolvable:$true] %s69
      %72 = dma.hbm_to_vmem [thread:$0]  %s5, 16, %s70, [#allocation8]
    $region25: #{text_classification_forward.1} parent=1 // pred_fallthru
      _
    // Predicated region
    $region26: #{text_classification_forward.1} parent=1 // pred_check
      _
    $region27: #{text_classification_forward.1} parent=1 // pred_check_branch
      %74 = sbr.rel (0) target = $region29
    $region28: #{text_classification_forward.1} parent=1 // pred_region
      _
    $region29: #{text_classification_forward.1} parent=1 // pred_fallthru
      _
    // Predicated region
    $region30: #{text_classification_forward.1} parent=1 // pred_check
      _
    $region31: #{text_classification_forward.1} parent=1 // pred_check_branch
      %76 = sbr.rel (0) target = $region33
    $region32: #{text_classification_forward.1} parent=1 // pred_region
      %s78 = ssub.s32 16, 16
      %79 = vsyncadd [#allocation11], %s78
      %s81 = sshll.u32 [#allocation10], 4
      %s82 = int_to_ptr.vmem [resolvable:$true] %s81
      %84 = dma.hbm_to_vmem [thread:$0]  %s7, 16, %s82, [#allocation11]
    $region33: #{text_classification_forward.1} parent=1 // pred_fallthru
      _
    // Predicated region
    $region34: #{text_classification_forward.1} parent=1 // pred_check
      _
    $region35: #{text_classification_forward.1} parent=1 // pred_check_branch
      %86 = sbr.rel (0) target = $region37
    $region36: #{text_classification_forward.1} parent=1 // pred_region
      %87 = dma.done [#allocation3], 128
    $region37: #{text_classification_forward.1} parent=1 // pred_fallthru
      _
    // Predicated region
    $region38: #{text_classification_forward.1} parent=1 // pred_check
      _
    $region39: #{text_classification_forward.1} parent=1 // pred_check_branch
      %89 = sbr.rel (0) target = $region41
    $region40: #{text_classification_forward.1} parent=1 // pred_region
      %90 = dma.done [#allocation5], 40960
    $region41: #{text_classification_forward.1} parent=1 // pred_fallthru
      _
    // Predicated region
    $region42: #{text_classification_forward.1} parent=1 // pred_check
      _
    $region43: #{text_classification_forward.1} parent=1 // pred_check_branch
      %92 = sbr.rel (0) target = $region45
    $region44: #{text_classification_forward.1} parent=1 // pred_region
      %93 = dma.done [#allocation5], 128
    $region45: #{text_classification_forward.1} parent=1 // pred_fallthru
      _
    // Predicated region
    $region46: #{text_classification_forward.1} parent=1 // pred_check
      _
    $region47: #{text_classification_forward.1} parent=1 // pred_check_branch
      %95 = sbr.rel (0) target = $region49
    $region48: #{text_classification_forward.1} parent=1 // pred_region
      %96 = dma.done [#allocation8], 8192
    $region49: #{text_classification_forward.1} parent=1 // pred_fallthru
      _
    // Predicated region
    $region50: #{text_classification_forward.1} parent=1 // pred_check
      _
    $region51: #{text_classification_forward.1} parent=1 // pred_check_branch
      %98 = sbr.rel (0) target = $region53
    $region52: #{text_classification_forward.1} parent=1 // pred_region
      %99 = dma.done [#allocation8], 16
    $region53: #{text_classification_forward.1} parent=1 // pred_fallthru
      _
    // Predicated region
    $region54: #{text_classification_forward.1} parent=1 // pred_check
      _
    $region55: #{text_classification_forward.1} parent=1 // pred_check_branch
      %101 = sbr.rel (0) target = $region57
    $region56: #{text_classification_forward.1} parent=1 // pred_region
      %102 = dma.done [#allocation11], 16
    $region57: #{text_classification_forward.1} parent=1 // pred_fallthru
      _
    %v104 = vld [vmem:[#allocation2] sm:$0xff]
    %v105 = vld [vmem:[%s1] sm:$0xf]
    %v106 = vld [vmem:[%s1 + $0x4] sm:$0xf]
    %v107 = vld [vmem:[%s1 + $0x8] sm:$0xf]
    %v108 = vld [vmem:[%s1 + $0xc] sm:$0xf]
    %v109 = vld [vmem:[%s1 + $0x10] sm:$0xf]
    %v110 = vld [vmem:[%s1 + $0x14] sm:$0xf]
    %v111 = vld [vmem:[%s1 + $0x18] sm:$0xf]
    %v112 = vld [vmem:[%s1 + $0x1c] sm:$0xf]
    %v113 = vld [vmem:[%s1 + $0x20] sm:$0xf]
    %v114 = vld [vmem:[%s1 + $0x24] sm:$0xf]
    %v115 = vld [vmem:[%s1 + $0x28] sm:$0xf]
    %v116 = vld [vmem:[%s1 + $0x2c] sm:$0xf]
    %v117 = vld [vmem:[%s1 + $0x30] sm:$0x3]
    %v118 = vlaneseq
    %v119 = vand.u32 %v118, 127
    %120 = vset.pattern.permute.xlu0 0
    %121 = vperm.xlu0 %120, %v104
    %v122 = vpop.permute.xlu0 %121
    %vm123 = vcmp.eq.s32.totalorder %v119, %v122
    %v124 = vsel %vm123, 1.0, 0.0
    %v125 = vpack.c.bf16 %v124, %v124
    %v139 = vunpack.c.l.b16 %v105
    %v140 = vunpack.c.l.b16 %v106
    %v141 = vunpack.c.l.b16 %v107
    %v142 = vunpack.c.l.b16 %v108
    %v143 = vunpack.c.l.b16 %v109
    %v144 = vunpack.c.l.b16 %v110
    %v145 = vunpack.c.l.b16 %v111
    %v146 = vunpack.c.l.b16 %v112
    %v147 = vunpack.c.l.b16 %v113
    %v148 = vunpack.c.l.b16 %v114
    %v149 = vunpack.c.l.b16 %v115
    %v150 = vunpack.c.l.b16 %v116
    %v151 = vunpack.c.l.b16 %v117
    %v152 = vpack.c.b16 %v140, %v139
    %v153 = vpack.c.b16 %v142, %v141
    %v154 = vpack.c.b16 %v144, %v143
    %v155 = vpack.c.b16 %v146, %v145
    %v156 = vpack.c.b16 %v148, %v147
    %v157 = vpack.c.b16 %v150, %v149
    %v158 = vpack.c.b16 %v151, %v151
    %vm165 = vcmask 818176
    %v167 = vsel %vm165, %v125, 0
    %vm169 = vcmask 1041408
    %v171 = vsel %vm169, %v158, 0
    %173 = vmatprep.subr.bf16.mxu0 0
    %174 = vmatpush1.bf16.msra.mxu0 %v152
    %175 = vmatprep.subr.bf16.mxu0 0
    %176 = vmatpush1.bf16.msra.mxu0 %v153
    %177 = vmatprep.subr.bf16.mxu0 0
    %178 = vmatpush1.bf16.msra.mxu0 %v154
    %179 = vmatprep.subr.bf16.mxu0 0
    %180 = vmatpush1.bf16.msra.mxu0 %v155
    %181 = vmatprep.subr.bf16.mxu0 0
    %182 = vmatpush1.bf16.msra.mxu0 %v156
    %183 = vmatprep.subr.bf16.mxu0 0
    %184 = vmatpush1.bf16.msra.mxu0 %v157
    %185 = vmatprep.subr.bf16.mxu0 0
    %186 = vmatpush1.bf16.msra.mxu0 %v171
    %187 = vmatprep.subr.bf16.mxu0 0
    %188 = vmatpush1.bf16.msra.mxu0 0
    %189 = vmatprep.subr.bf16.mxu0 0
    %190 = vmatpush1.bf16.msra.mxu0 0
    %191 = vmatprep.subr.bf16.mxu0 0
    %192 = vmatpush1.bf16.msra.mxu0 0
    %193 = vmatprep.subr.bf16.mxu0 0
    %194 = vmatpush1.bf16.msra.mxu0 0
    %195 = vmatprep.subr.bf16.mxu0 0
    %196 = vmatpush1.bf16.msra.mxu0 0
    %197 = vmatprep.subr.bf16.mxu0 0
    %198 = vmatpush1.bf16.msra.mxu0 0
    %199 = vmatprep.subr.bf16.mxu0 0
    %200 = vmatpush1.bf16.msra.mxu0 0
    %201 = vmatprep.subr.bf16.mxu0 0
    %202 = vmatpush1.bf16.msra.mxu0 0
    %203 = vmatprep.subr.bf16.mxu0 0
    %204 = vmatpush1.bf16.msra.mxu0 0
    %205 = vmatprep.mubr.bf16.mxu0 0
    %206 = vmatmul.mubr.bf16.gmra.mrb[0].mxu0 %v167
    %v207 = vpop.f32.mrb[0].mxu0
    %v208 = vadd.f32 0.0, %v207
    %v209 = vpop.f32.mrb[0].mxu0
    %v210 = vpop.f32.mrb[0].mxu0
    %v211 = vpop.f32.mrb[0].mxu0
    %212 = vdwg.mxu0
    %v213 = vpack.c.bf16 %v208, %v208
    %v214 = vld [vmem:[#allocation4] sm:$0xff]
    %v215 = vld [vmem:[#allocation4 + $0x8] sm:$0xff]
    %v216 = vld [vmem:[#allocation4 + $0x10] sm:$0xff]
    %v217 = vld [vmem:[#allocation4 + $0x18] sm:$0xff]
    %v218 = vld [vmem:[#allocation4 + $0x20] sm:$0xff]
    %v219 = vld [vmem:[#allocation4 + $0x28] sm:$0xff]
    %v220 = vld [vmem:[#allocation4 + $0x30] sm:$0xff]
    %v221 = vld [vmem:[#allocation4 + $0x38] sm:$0xff]
    %v222 = vld [vmem:[#allocation4 + $0x40] sm:$0xff]
    %v223 = vld [vmem:[#allocation4 + $0x48] sm:$0xff]
    %v224 = vld [vmem:[#allocation4 + $0x50] sm:$0xff]
    %v225 = vld [vmem:[#allocation4 + $0x58] sm:$0xff]
    %v226 = vld [vmem:[#allocation4 + $0x60] sm:$0xff]
    %v227 = vld [vmem:[#allocation4 + $0x68] sm:$0xff]
    %v228 = vld [vmem:[#allocation4 + $0x70] sm:$0xff]
    %v229 = vld [vmem:[#allocation4 + $0x78] sm:$0xff]
    %230 = vset.pattern.permute.xlu0 1
    %231 = vperm.xlu0 %230, %v104
    %v232 = vpop.permute.xlu0 %231
    %vm233 = vcmp.eq.s32.totalorder %v119, %v232
    %v234 = vsel %vm233, 1.0, 0.0
    %v235 = vpack.c.bf16 %v234, %v234
    %v237 = vsel %vm165, %v235, 0
    %239 = vmatprep.subr.bf16.mxu0 0
    %240 = vmatpush1.bf16.msra.mxu0 %v152
    %241 = vmatprep.subr.bf16.mxu0 0
    %242 = vmatpush1.bf16.msra.mxu0 %v153
    %243 = vmatprep.subr.bf16.mxu0 0
    %244 = vmatpush1.bf16.msra.mxu0 %v154
    %245 = vmatprep.subr.bf16.mxu0 0
    %246 = vmatpush1.bf16.msra.mxu0 %v155
    %247 = vmatprep.subr.bf16.mxu0 0
    %248 = vmatpush1.bf16.msra.mxu0 %v156
    %249 = vmatprep.subr.bf16.mxu0 0
    %250 = vmatpush1.bf16.msra.mxu0 %v157
    %251 = vmatprep.subr.bf16.mxu0 0
    %252 = vmatpush1.bf16.msra.mxu0 %v171
    %253 = vmatprep.subr.bf16.mxu0 0
    %254 = vmatpush1.bf16.msra.mxu0 0
    %255 = vmatprep.subr.bf16.mxu0 0
    %256 = vmatpush1.bf16.msra.mxu0 0
    %257 = vmatprep.subr.bf16.mxu0 0
    %258 = vmatpush1.bf16.msra.mxu0 0
    %259 = vmatprep.subr.bf16.mxu0 0
    %260 = vmatpush1.bf16.msra.mxu0 0
    %261 = vmatprep.subr.bf16.mxu0 0
    %262 = vmatpush1.bf16.msra.mxu0 0
    %263 = vmatprep.subr.bf16.mxu0 0
    %264 = vmatpush1.bf16.msra.mxu0 0
    %265 = vmatprep.subr.bf16.mxu0 0
    %266 = vmatpush1.bf16.msra.mxu0 0
    %267 = vmatprep.subr.bf16.mxu0 0
    %268 = vmatpush1.bf16.msra.mxu0 0
    %269 = vmatprep.subr.bf16.mxu0 0
    %270 = vmatpush1.bf16.msra.mxu0 0
    %271 = vmatprep.mubr.bf16.mxu0 0
    %272 = vmatmul.mubr.bf16.gmra.mrb[0].mxu0 %v237
    %v273 = vpop.f32.mrb[0].mxu0
    %v274 = vadd.f32 0.0, %v273
    %v275 = vpop.f32.mrb[0].mxu0
    %v276 = vpop.f32.mrb[0].mxu0
    %v277 = vpop.f32.mrb[0].mxu0
    %278 = vdwg.mxu0
    %v279 = vpack.c.bf16 %v274, %v274
    %s280 = scalar_lea.vmem [#allocation4], 128
    %v281 = vld [vmem:[%s280] sm:$0xff]
    %v282 = vld [vmem:[%s280 + $0x8] sm:$0xff]
    %v283 = vld [vmem:[%s280 + $0x10] sm:$0xff]
    %v284 = vld [vmem:[%s280 + $0x18] sm:$0xff]
    %v285 = vld [vmem:[%s280 + $0x20] sm:$0xff]
    %v286 = vld [vmem:[%s280 + $0x28] sm:$0xff]
    %v287 = vld [vmem:[%s280 + $0x30] sm:$0xff]
    %v288 = vld [vmem:[%s280 + $0x38] sm:$0xff]
    %v289 = vld [vmem:[%s280 + $0x40] sm:$0xff]
    %v290 = vld [vmem:[%s280 + $0x48] sm:$0xff]
    %v291 = vld [vmem:[%s280 + $0x50] sm:$0xff]
    %v292 = vld [vmem:[%s280 + $0x58] sm:$0xff]
    %v293 = vld [vmem:[%s280 + $0x60] sm:$0xff]
    %v294 = vld [vmem:[%s280 + $0x68] sm:$0xff]
    %v295 = vld [vmem:[%s280 + $0x70] sm:$0xff]
    %v296 = vld [vmem:[%s280 + $0x78] sm:$0xff]
    %v313 = vunpack.c.l.b16 %v281
    %v314 = vunpack.c.h.b16 %v281
    %v315 = vunpack.c.l.b16 %v282
    %v316 = vunpack.c.h.b16 %v282
    %v317 = vunpack.c.l.b16 %v283
    %v318 = vunpack.c.h.b16 %v283
    %v319 = vunpack.c.l.b16 %v284
    %v320 = vunpack.c.h.b16 %v284
    %v321 = vunpack.c.l.b16 %v285
    %v322 = vunpack.c.h.b16 %v285
    %v323 = vunpack.c.l.b16 %v286
    %v324 = vunpack.c.h.b16 %v286
    %v325 = vunpack.c.l.b16 %v287
    %v326 = vunpack.c.h.b16 %v287
    %v327 = vunpack.c.l.b16 %v288
    %v328 = vunpack.c.h.b16 %v288
    %v329 = vunpack.c.l.b16 %v289
    %v330 = vunpack.c.h.b16 %v289
    %v331 = vunpack.c.l.b16 %v290
    %v332 = vunpack.c.h.b16 %v290
    %v333 = vunpack.c.l.b16 %v291
    %v334 = vunpack.c.h.b16 %v291
    %v335 = vunpack.c.l.b16 %v292
    %v336 = vunpack.c.h.b16 %v292
    %v337 = vunpack.c.l.b16 %v293
    %v338 = vunpack.c.h.b16 %v293
    %v339 = vunpack.c.l.b16 %v294
    %v340 = vunpack.c.h.b16 %v294
    %v341 = vunpack.c.l.b16 %v295
    %v342 = vunpack.c.h.b16 %v295
    %v343 = vunpack.c.l.b16 %v296
    %v344 = vunpack.c.h.b16 %v296
    %v345 = vpack.c.b16 %v321, %v313
    %v346 = vpack.c.b16 %v322, %v314
    %v347 = vpack.c.b16 %v323, %v315
    %v348 = vpack.c.b16 %v324, %v316
    %v349 = vpack.c.b16 %v325, %v317
    %v350 = vpack.c.b16 %v326, %v318
    %v351 = vpack.c.b16 %v327, %v319
    %v352 = vpack.c.b16 %v328, %v320
    %v353 = vpack.c.b16 %v337, %v329
    %v354 = vpack.c.b16 %v338, %v330
    %v355 = vpack.c.b16 %v339, %v331
    %v356 = vpack.c.b16 %v340, %v332
    %v357 = vpack.c.b16 %v341, %v333
    %v358 = vpack.c.b16 %v342, %v334
    %v359 = vpack.c.b16 %v343, %v335
    %v360 = vpack.c.b16 %v344, %v336
    %vm377 = vcmask 261120
    %v379 = vsel %vm377, %v279, 0
    %381 = vmatprep.subr.bf16.mxu0 %v346
    %382 = vmatpush1.bf16.msra.mxu0 %v345
    %383 = vmatprep.subr.bf16.mxu0 %v354
    %384 = vmatpush1.bf16.msra.mxu0 %v353
    %385 = vmatprep.subr.bf16.mxu0 0
    %386 = vmatpush1.bf16.msra.mxu0 0
    %387 = vmatprep.subr.bf16.mxu0 0
    %388 = vmatpush1.bf16.msra.mxu0 0
    %389 = vmatprep.subr.bf16.mxu0 0
    %390 = vmatpush1.bf16.msra.mxu0 0
    %391 = vmatprep.subr.bf16.mxu0 0
    %392 = vmatpush1.bf16.msra.mxu0 0
    %393 = vmatprep.subr.bf16.mxu0 0
    %394 = vmatpush1.bf16.msra.mxu0 0
    %395 = vmatprep.subr.bf16.mxu0 0
    %396 = vmatpush1.bf16.msra.mxu0 0
    %397 = vmatprep.subr.bf16.mxu0 0
    %398 = vmatpush1.bf16.msra.mxu0 0
    %399 = vmatprep.subr.bf16.mxu0 0
    %400 = vmatpush1.bf16.msra.mxu0 0
    %401 = vmatprep.subr.bf16.mxu0 0
    %402 = vmatpush1.bf16.msra.mxu0 0
    %403 = vmatprep.subr.bf16.mxu0 0
    %404 = vmatpush1.bf16.msra.mxu0 0
    %405 = vmatprep.subr.bf16.mxu0 0
    %406 = vmatpush1.bf16.msra.mxu0 0
    %407 = vmatprep.subr.bf16.mxu0 0
    %408 = vmatpush1.bf16.msra.mxu0 0
    %409 = vmatprep.subr.bf16.mxu0 0
    %410 = vmatpush1.bf16.msra.mxu0 0
    %411 = vmatprep.subr.bf16.mxu0 0
    %412 = vmatpush1.bf16.msra.mxu0 0
    %413 = vmatprep.mubr.bf16.mxu0 0
    %414 = vmatmul.mubr.bf16.gmra.mrb[0].mxu0 %v379
    %v415 = vpop.f32.mrb[0].mxu0
    %v416 = vadd.f32 0.0, %v415
    %v417 = vpop.f32.mrb[0].mxu0
    %v418 = vadd.f32 0.0, %v417
    %v419 = vpop.f32.mrb[0].mxu0
    %v420 = vpop.f32.mrb[0].mxu0
    %421 = vdwg.mxu0
    %422 = vmatprep.subr.bf16.mxu0 %v348
    %423 = vmatpush1.bf16.msra.mxu0 %v347
    %424 = vmatprep.subr.bf16.mxu0 %v356
    %425 = vmatpush1.bf16.msra.mxu0 %v355
    %426 = vmatprep.subr.bf16.mxu0 0
    %427 = vmatpush1.bf16.msra.mxu0 0
    %428 = vmatprep.subr.bf16.mxu0 0
    %429 = vmatpush1.bf16.msra.mxu0 0
    %430 = vmatprep.subr.bf16.mxu0 0
    %431 = vmatpush1.bf16.msra.mxu0 0
    %432 = vmatprep.subr.bf16.mxu0 0
    %433 = vmatpush1.bf16.msra.mxu0 0
    %434 = vmatprep.subr.bf16.mxu0 0
    %435 = vmatpush1.bf16.msra.mxu0 0
    %436 = vmatprep.subr.bf16.mxu0 0
    %437 = vmatpush1.bf16.msra.mxu0 0
    %438 = vmatprep.subr.bf16.mxu0 0
    %439 = vmatpush1.bf16.msra.mxu0 0
    %440 = vmatprep.subr.bf16.mxu0 0
    %441 = vmatpush1.bf16.msra.mxu0 0
    %442 = vmatprep.subr.bf16.mxu0 0
    %443 = vmatpush1.bf16.msra.mxu0 0
    %444 = vmatprep.subr.bf16.mxu0 0
    %445 = vmatpush1.bf16.msra.mxu0 0
    %446 = vmatprep.subr.bf16.mxu0 0
    %447 = vmatpush1.bf16.msra.mxu0 0
    %448 = vmatprep.subr.bf16.mxu0 0
    %449 = vmatpush1.bf16.msra.mxu0 0
    %450 = vmatprep.subr.bf16.mxu0 0
    %451 = vmatpush1.bf16.msra.mxu0 0
    %452 = vmatprep.subr.bf16.mxu0 0
    %453 = vmatpush1.bf16.msra.mxu0 0
    %454 = vmatprep.mubr.bf16.mxu0 0
    %455 = vmatmul.mubr.bf16.gmra.mrb[0].mxu0 %v379
    %v456 = vpop.f32.mrb[0].mxu0
    %v457 = vadd.f32 0.0, %v456
    %v458 = vpop.f32.mrb[0].mxu0
    %v459 = vadd.f32 0.0, %v458
    %v460 = vpop.f32.mrb[0].mxu0
    %v461 = vpop.f32.mrb[0].mxu0
    %462 = vdwg.mxu0
    %463 = vmatprep.subr.bf16.mxu0 %v350
    %464 = vmatpush1.bf16.msra.mxu0 %v349
    %465 = vmatprep.subr.bf16.mxu0 %v358
    %466 = vmatpush1.bf16.msra.mxu0 %v357
    %467 = vmatprep.subr.bf16.mxu0 0
    %468 = vmatpush1.bf16.msra.mxu0 0
    %469 = vmatprep.subr.bf16.mxu0 0
    %470 = vmatpush1.bf16.msra.mxu0 0
    %471 = vmatprep.subr.bf16.mxu0 0
    %472 = vmatpush1.bf16.msra.mxu0 0
    %473 = vmatprep.subr.bf16.mxu0 0
    %474 = vmatpush1.bf16.msra.mxu0 0
    %475 = vmatprep.subr.bf16.mxu0 0
    %476 = vmatpush1.bf16.msra.mxu0 0
    %477 = vmatprep.subr.bf16.mxu0 0
    %478 = vmatpush1.bf16.msra.mxu0 0
    %479 = vmatprep.subr.bf16.mxu0 0
    %480 = vmatpush1.bf16.msra.mxu0 0
    %481 = vmatprep.subr.bf16.mxu0 0
    %482 = vmatpush1.bf16.msra.mxu0 0
    %483 = vmatprep.subr.bf16.mxu0 0
    %484 = vmatpush1.bf16.msra.mxu0 0
    %485 = vmatprep.subr.bf16.mxu0 0
    %486 = vmatpush1.bf16.msra.mxu0 0
    %487 = vmatprep.subr.bf16.mxu0 0
    %488 = vmatpush1.bf16.msra.mxu0 0
    %489 = vmatprep.subr.bf16.mxu0 0
    %490 = vmatpush1.bf16.msra.mxu0 0
    %491 = vmatprep.subr.bf16.mxu0 0
    %492 = vmatpush1.bf16.msra.mxu0 0
    %493 = vmatprep.subr.bf16.mxu0 0
    %494 = vmatpush1.bf16.msra.mxu0 0
    %495 = vmatprep.mubr.bf16.mxu0 0
    %496 = vmatmul.mubr.bf16.gmra.mrb[0].mxu0 %v379
    %v497 = vpop.f32.mrb[0].mxu0
    %v498 = vadd.f32 0.0, %v497
    %v499 = vpop.f32.mrb[0].mxu0
    %v500 = vadd.f32 0.0, %v499
    %v501 = vpop.f32.mrb[0].mxu0
    %v502 = vpop.f32.mrb[0].mxu0
    %503 = vdwg.mxu0
    %504 = vmatprep.subr.bf16.mxu0 %v352
    %505 = vmatpush1.bf16.msra.mxu0 %v351
    %506 = vmatprep.subr.bf16.mxu0 %v360
    %507 = vmatpush1.bf16.msra.mxu0 %v359
    %508 = vmatprep.subr.bf16.mxu0 0
    %509 = vmatpush1.bf16.msra.mxu0 0
    %510 = vmatprep.subr.bf16.mxu0 0
    %511 = vmatpush1.bf16.msra.mxu0 0
    %512 = vmatprep.subr.bf16.mxu0 0
    %513 = vmatpush1.bf16.msra.mxu0 0
    %514 = vmatprep.subr.bf16.mxu0 0
    %515 = vmatpush1.bf16.msra.mxu0 0
    %516 = vmatprep.subr.bf16.mxu0 0
    %517 = vmatpush1.bf16.msra.mxu0 0
    %518 = vmatprep.subr.bf16.mxu0 0
    %519 = vmatpush1.bf16.msra.mxu0 0
    %520 = vmatprep.subr.bf16.mxu0 0
    %521 = vmatpush1.bf16.msra.mxu0 0
    %522 = vmatprep.subr.bf16.mxu0 0
    %523 = vmatpush1.bf16.msra.mxu0 0
    %524 = vmatprep.subr.bf16.mxu0 0
    %525 = vmatpush1.bf16.msra.mxu0 0
    %526 = vmatprep.subr.bf16.mxu0 0
    %527 = vmatpush1.bf16.msra.mxu0 0
    %528 = vmatprep.subr.bf16.mxu0 0
    %529 = vmatpush1.bf16.msra.mxu0 0
    %530 = vmatprep.subr.bf16.mxu0 0
    %531 = vmatpush1.bf16.msra.mxu0 0
    %532 = vmatprep.subr.bf16.mxu0 0
    %533 = vmatpush1.bf16.msra.mxu0 0
    %534 = vmatprep.subr.bf16.mxu0 0
    %535 = vmatpush1.bf16.msra.mxu0 0
    %536 = vmatprep.mubr.bf16.mxu0 0
    %537 = vmatmul.mubr.bf16.gmra.mrb[0].mxu0 %v379
    %v538 = vpop.f32.mrb[0].mxu0
    %v539 = vadd.f32 0.0, %v538
    %v540 = vpop.f32.mrb[0].mxu0
    %v541 = vadd.f32 0.0, %v540
    %v542 = vpop.f32.mrb[0].mxu0
    %v543 = vpop.f32.mrb[0].mxu0
    %544 = vdwg.mxu0
    %v561 = vunpack.c.l.b16 %v214
    %v562 = vunpack.c.h.b16 %v214
    %v563 = vunpack.c.l.b16 %v215
    %v564 = vunpack.c.h.b16 %v215
    %v565 = vunpack.c.l.b16 %v216
    %v566 = vunpack.c.h.b16 %v216
    %v567 = vunpack.c.l.b16 %v217
    %v568 = vunpack.c.h.b16 %v217
    %v569 = vunpack.c.l.b16 %v218
    %v570 = vunpack.c.h.b16 %v218
    %v571 = vunpack.c.l.b16 %v219
    %v572 = vunpack.c.h.b16 %v219
    %v573 = vunpack.c.l.b16 %v220
    %v574 = vunpack.c.h.b16 %v220
    %v575 = vunpack.c.l.b16 %v221
    %v576 = vunpack.c.h.b16 %v221
    %v577 = vunpack.c.l.b16 %v222
    %v578 = vunpack.c.h.b16 %v222
    %v579 = vunpack.c.l.b16 %v223
    %v580 = vunpack.c.h.b16 %v223
    %v581 = vunpack.c.l.b16 %v224
    %v582 = vunpack.c.h.b16 %v224
    %v583 = vunpack.c.l.b16 %v225
    %v584 = vunpack.c.h.b16 %v225
    %v585 = vunpack.c.l.b16 %v226
    %v586 = vunpack.c.h.b16 %v226
    %v587 = vunpack.c.l.b16 %v227
    %v588 = vunpack.c.h.b16 %v227
    %v589 = vunpack.c.l.b16 %v228
    %v590 = vunpack.c.h.b16 %v228
    %v591 = vunpack.c.l.b16 %v229
    %v592 = vunpack.c.h.b16 %v229
    %v593 = vpack.c.b16 %v569, %v561
    %v594 = vpack.c.b16 %v570, %v562
    %v595 = vpack.c.b16 %v571, %v563
    %v596 = vpack.c.b16 %v572, %v564
    %v597 = vpack.c.b16 %v573, %v565
    %v598 = vpack.c.b16 %v574, %v566
    %v599 = vpack.c.b16 %v575, %v567
    %v600 = vpack.c.b16 %v576, %v568
    %v601 = vpack.c.b16 %v585, %v577
    %v602 = vpack.c.b16 %v586, %v578
    %v603 = vpack.c.b16 %v587, %v579
    %v604 = vpack.c.b16 %v588, %v580
    %v605 = vpack.c.b16 %v589, %v581
    %v606 = vpack.c.b16 %v590, %v582
    %v607 = vpack.c.b16 %v591, %v583
    %v608 = vpack.c.b16 %v592, %v584
    %v626 = vsel %vm377, %v213, 0
    %628 = vmatprep.subr.bf16.mxu0 %v594
    %629 = vmatpush1.bf16.msra.mxu0 %v593
    %630 = vmatprep.subr.bf16.mxu0 %v602
    %631 = vmatpush1.bf16.msra.mxu0 %v601
    %632 = vmatprep.subr.bf16.mxu0 0
    %633 = vmatpush1.bf16.msra.mxu0 0
    %634 = vmatprep.subr.bf16.mxu0 0
    %635 = vmatpush1.bf16.msra.mxu0 0
    %636 = vmatprep.subr.bf16.mxu0 0
    %637 = vmatpush1.bf16.msra.mxu0 0
    %638 = vmatprep.subr.bf16.mxu0 0
    %639 = vmatpush1.bf16.msra.mxu0 0
    %640 = vmatprep.subr.bf16.mxu0 0
    %641 = vmatpush1.bf16.msra.mxu0 0
    %642 = vmatprep.subr.bf16.mxu0 0
    %643 = vmatpush1.bf16.msra.mxu0 0
    %644 = vmatprep.subr.bf16.mxu0 0
    %645 = vmatpush1.bf16.msra.mxu0 0
    %646 = vmatprep.subr.bf16.mxu0 0
    %647 = vmatpush1.bf16.msra.mxu0 0
    %648 = vmatprep.subr.bf16.mxu0 0
    %649 = vmatpush1.bf16.msra.mxu0 0
    %650 = vmatprep.subr.bf16.mxu0 0
    %651 = vmatpush1.bf16.msra.mxu0 0
    %652 = vmatprep.subr.bf16.mxu0 0
    %653 = vmatpush1.bf16.msra.mxu0 0
    %654 = vmatprep.subr.bf16.mxu0 0
    %655 = vmatpush1.bf16.msra.mxu0 0
    %656 = vmatprep.subr.bf16.mxu0 0
    %657 = vmatpush1.bf16.msra.mxu0 0
    %658 = vmatprep.subr.bf16.mxu0 0
    %659 = vmatpush1.bf16.msra.mxu0 0
    %660 = vmatprep.mubr.bf16.mxu0 0
    %661 = vmatmul.mubr.bf16.gmra.mrb[0].mxu0 %v626
    %v662 = vpop.f32.mrb[0].mxu0
    %v663 = vadd.f32 %v416, %v662
    %v664 = vpop.f32.mrb[0].mxu0
    %v665 = vadd.f32 %v418, %v664
    %v666 = vpop.f32.mrb[0].mxu0
    %v667 = vpop.f32.mrb[0].mxu0
    %668 = vdwg.mxu0
    %669 = vmatprep.subr.bf16.mxu0 %v596
    %670 = vmatpush1.bf16.msra.mxu0 %v595
    %671 = vmatprep.subr.bf16.mxu0 %v604
    %672 = vmatpush1.bf16.msra.mxu0 %v603
    %673 = vmatprep.subr.bf16.mxu0 0
    %674 = vmatpush1.bf16.msra.mxu0 0
    %675 = vmatprep.subr.bf16.mxu0 0
    %676 = vmatpush1.bf16.msra.mxu0 0
    %677 = vmatprep.subr.bf16.mxu0 0
    %678 = vmatpush1.bf16.msra.mxu0 0
    %679 = vmatprep.subr.bf16.mxu0 0
    %680 = vmatpush1.bf16.msra.mxu0 0
    %681 = vmatprep.subr.bf16.mxu0 0
    %682 = vmatpush1.bf16.msra.mxu0 0
    %683 = vmatprep.subr.bf16.mxu0 0
    %684 = vmatpush1.bf16.msra.mxu0 0
    %685 = vmatprep.subr.bf16.mxu0 0
    %686 = vmatpush1.bf16.msra.mxu0 0
    %687 = vmatprep.subr.bf16.mxu0 0
    %688 = vmatpush1.bf16.msra.mxu0 0
    %689 = vmatprep.subr.bf16.mxu0 0
    %690 = vmatpush1.bf16.msra.mxu0 0
    %691 = vmatprep.subr.bf16.mxu0 0
    %692 = vmatpush1.bf16.msra.mxu0 0
    %693 = vmatprep.subr.bf16.mxu0 0
    %694 = vmatpush1.bf16.msra.mxu0 0
    %695 = vmatprep.subr.bf16.mxu0 0
    %696 = vmatpush1.bf16.msra.mxu0 0
    %697 = vmatprep.subr.bf16.mxu0 0
    %698 = vmatpush1.bf16.msra.mxu0 0
    %699 = vmatprep.subr.bf16.mxu0 0
    %700 = vmatpush1.bf16.msra.mxu0 0
    %701 = vmatprep.mubr.bf16.mxu0 0
    %702 = vmatmul.mubr.bf16.gmra.mrb[0].mxu0 %v626
    %v703 = vpop.f32.mrb[0].mxu0
    %v704 = vadd.f32 %v457, %v703
    %v705 = vpop.f32.mrb[0].mxu0
    %v706 = vadd.f32 %v459, %v705
    %v707 = vpop.f32.mrb[0].mxu0
    %v708 = vpop.f32.mrb[0].mxu0
    %709 = vdwg.mxu0
    %710 = vmatprep.subr.bf16.mxu0 %v598
    %711 = vmatpush1.bf16.msra.mxu0 %v597
    %712 = vmatprep.subr.bf16.mxu0 %v606
    %713 = vmatpush1.bf16.msra.mxu0 %v605
    %714 = vmatprep.subr.bf16.mxu0 0
    %715 = vmatpush1.bf16.msra.mxu0 0
    %716 = vmatprep.subr.bf16.mxu0 0
    %717 = vmatpush1.bf16.msra.mxu0 0
    %718 = vmatprep.subr.bf16.mxu0 0
    %719 = vmatpush1.bf16.msra.mxu0 0
    %720 = vmatprep.subr.bf16.mxu0 0
    %721 = vmatpush1.bf16.msra.mxu0 0
    %722 = vmatprep.subr.bf16.mxu0 0
    %723 = vmatpush1.bf16.msra.mxu0 0
    %724 = vmatprep.subr.bf16.mxu0 0
    %725 = vmatpush1.bf16.msra.mxu0 0
    %726 = vmatprep.subr.bf16.mxu0 0
    %727 = vmatpush1.bf16.msra.mxu0 0
    %728 = vmatprep.subr.bf16.mxu0 0
    %729 = vmatpush1.bf16.msra.mxu0 0
    %730 = vmatprep.subr.bf16.mxu0 0
    %731 = vmatpush1.bf16.msra.mxu0 0
    %732 = vmatprep.subr.bf16.mxu0 0
    %733 = vmatpush1.bf16.msra.mxu0 0
    %734 = vmatprep.subr.bf16.mxu0 0
    %735 = vmatpush1.bf16.msra.mxu0 0
    %736 = vmatprep.subr.bf16.mxu0 0
    %737 = vmatpush1.bf16.msra.mxu0 0
    %738 = vmatprep.subr.bf16.mxu0 0
    %739 = vmatpush1.bf16.msra.mxu0 0
    %740 = vmatprep.subr.bf16.mxu0 0
    %741 = vmatpush1.bf16.msra.mxu0 0
    %742 = vmatprep.mubr.bf16.mxu0 0
    %743 = vmatmul.mubr.bf16.gmra.mrb[0].mxu0 %v626
    %v744 = vpop.f32.mrb[0].mxu0
    %v745 = vadd.f32 %v498, %v744
    %v746 = vpop.f32.mrb[0].mxu0
    %v747 = vadd.f32 %v500, %v746
    %v748 = vpop.f32.mrb[0].mxu0
    %v749 = vpop.f32.mrb[0].mxu0
    %750 = vdwg.mxu0
    %751 = vmatprep.subr.bf16.mxu0 %v600
    %752 = vmatpush1.bf16.msra.mxu0 %v599
    %753 = vmatprep.subr.bf16.mxu0 %v608
    %754 = vmatpush1.bf16.msra.mxu0 %v607
    %755 = vmatprep.subr.bf16.mxu0 0
    %756 = vmatpush1.bf16.msra.mxu0 0
    %757 = vmatprep.subr.bf16.mxu0 0
    %758 = vmatpush1.bf16.msra.mxu0 0
    %759 = vmatprep.subr.bf16.mxu0 0
    %760 = vmatpush1.bf16.msra.mxu0 0
    %761 = vmatprep.subr.bf16.mxu0 0
    %762 = vmatpush1.bf16.msra.mxu0 0
    %763 = vmatprep.subr.bf16.mxu0 0
    %764 = vmatpush1.bf16.msra.mxu0 0
    %765 = vmatprep.subr.bf16.mxu0 0
    %766 = vmatpush1.bf16.msra.mxu0 0
    %767 = vmatprep.subr.bf16.mxu0 0
    %768 = vmatpush1.bf16.msra.mxu0 0
    %769 = vmatprep.subr.bf16.mxu0 0
    %770 = vmatpush1.bf16.msra.mxu0 0
    %771 = vmatprep.subr.bf16.mxu0 0
    %772 = vmatpush1.bf16.msra.mxu0 0
    %773 = vmatprep.subr.bf16.mxu0 0
    %774 = vmatpush1.bf16.msra.mxu0 0
    %775 = vmatprep.subr.bf16.mxu0 0
    %776 = vmatpush1.bf16.msra.mxu0 0
    %777 = vmatprep.subr.bf16.mxu0 0
    %778 = vmatpush1.bf16.msra.mxu0 0
    %779 = vmatprep.subr.bf16.mxu0 0
    %780 = vmatpush1.bf16.msra.mxu0 0
    %781 = vmatprep.subr.bf16.mxu0 0
    %782 = vmatpush1.bf16.msra.mxu0 0
    %783 = vmatprep.mubr.bf16.mxu0 0
    %784 = vmatmul.mubr.bf16.gmra.mrb[0].mxu0 %v626
    %v785 = vpop.f32.mrb[0].mxu0
    %v786 = vadd.f32 %v539, %v785
    %v787 = vpop.f32.mrb[0].mxu0
    %v788 = vadd.f32 %v541, %v787
    %v789 = vpop.f32.mrb[0].mxu0
    %v790 = vpop.f32.mrb[0].mxu0
    %791 = vdwg.mxu0
    %792 = vset.pattern.permute.xlu0 2
    %793 = vperm.xlu0 %792, %v104
    %v794 = vpop.permute.xlu0 %793
    %vm795 = vcmp.eq.s32.totalorder %v119, %v794
    %v796 = vsel %vm795, 1.0, 0.0
    %v797 = vpack.c.bf16 %v796, %v796
    %v799 = vsel %vm165, %v797, 0
    %801 = vmatprep.subr.bf16.mxu0 0
    %802 = vmatpush1.bf16.msra.mxu0 %v152
    %803 = vmatprep.subr.bf16.mxu0 0
    %804 = vmatpush1.bf16.msra.mxu0 %v153
    %805 = vmatprep.subr.bf16.mxu0 0
    %806 = vmatpush1.bf16.msra.mxu0 %v154
    %807 = vmatprep.subr.bf16.mxu0 0
    %808 = vmatpush1.bf16.msra.mxu0 %v155
    %809 = vmatprep.subr.bf16.mxu0 0
    %810 = vmatpush1.bf16.msra.mxu0 %v156
    %811 = vmatprep.subr.bf16.mxu0 0
    %812 = vmatpush1.bf16.msra.mxu0 %v157
    %813 = vmatprep.subr.bf16.mxu0 0
    %814 = vmatpush1.bf16.msra.mxu0 %v171
    %815 = vmatprep.subr.bf16.mxu0 0
    %816 = vmatpush1.bf16.msra.mxu0 0
    %817 = vmatprep.subr.bf16.mxu0 0
    %818 = vmatpush1.bf16.msra.mxu0 0
    %819 = vmatprep.subr.bf16.mxu0 0
    %820 = vmatpush1.bf16.msra.mxu0 0
    %821 = vmatprep.subr.bf16.mxu0 0
    %822 = vmatpush1.bf16.msra.mxu0 0
    %823 = vmatprep.subr.bf16.mxu0 0
    %824 = vmatpush1.bf16.msra.mxu0 0
    %825 = vmatprep.subr.bf16.mxu0 0
    %826 = vmatpush1.bf16.msra.mxu0 0
    %827 = vmatprep.subr.bf16.mxu0 0
    %828 = vmatpush1.bf16.msra.mxu0 0
    %829 = vmatprep.subr.bf16.mxu0 0
    %830 = vmatpush1.bf16.msra.mxu0 0
    %831 = vmatprep.subr.bf16.mxu0 0
    %832 = vmatpush1.bf16.msra.mxu0 0
    %833 = vmatprep.mubr.bf16.mxu0 0
    %834 = vmatmul.mubr.bf16.gmra.mrb[0].mxu0 %v799
    %v835 = vpop.f32.mrb[0].mxu0
    %v836 = vadd.f32 0.0, %v835
    %v837 = vpop.f32.mrb[0].mxu0
    %v838 = vpop.f32.mrb[0].mxu0
    %v839 = vpop.f32.mrb[0].mxu0
    %840 = vdwg.mxu0
    %v841 = vpack.c.bf16 %v836, %v836
    %s842 = scalar_lea.vmem [#allocation4], 256
    %v843 = vld [vmem:[%s842] sm:$0xff]
    %v844 = vld [vmem:[%s842 + $0x8] sm:$0xff]
    %v845 = vld [vmem:[%s842 + $0x10] sm:$0xff]
    %v846 = vld [vmem:[%s842 + $0x18] sm:$0xff]
    %v847 = vld [vmem:[%s842 + $0x20] sm:$0xff]
    %v848 = vld [vmem:[%s842 + $0x28] sm:$0xff]
    %v849 = vld [vmem:[%s842 + $0x30] sm:$0xff]
    %v850 = vld [vmem:[%s842 + $0x38] sm:$0xff]
    %v851 = vld [vmem:[%s842 + $0x40] sm:$0xff]
    %v852 = vld [vmem:[%s842 + $0x48] sm:$0xff]
    %v853 = vld [vmem:[%s842 + $0x50] sm:$0xff]
    %v854 = vld [vmem:[%s842 + $0x58] sm:$0xff]
    %v855 = vld [vmem:[%s842 + $0x60] sm:$0xff]
    %v856 = vld [vmem:[%s842 + $0x68] sm:$0xff]
    %v857 = vld [vmem:[%s842 + $0x70] sm:$0xff]
    %v858 = vld [vmem:[%s842 + $0x78] sm:$0xff]
    %v875 = vunpack.c.l.b16 %v843
    %v876 = vunpack.c.h.b16 %v843
    %v877 = vunpack.c.l.b16 %v844
    %v878 = vunpack.c.h.b16 %v844
    %v879 = vunpack.c.l.b16 %v845
    %v880 = vunpack.c.h.b16 %v845
    %v881 = vunpack.c.l.b16 %v846
    %v882 = vunpack.c.h.b16 %v846
    %v883 = vunpack.c.l.b16 %v847
    %v884 = vunpack.c.h.b16 %v847
    %v885 = vunpack.c.l.b16 %v848
    %v886 = vunpack.c.h.b16 %v848
    %v887 = vunpack.c.l.b16 %v849
    %v888 = vunpack.c.h.b16 %v849
    %v889 = vunpack.c.l.b16 %v850
    %v890 = vunpack.c.h.b16 %v850
    %v891 = vunpack.c.l.b16 %v851
    %v892 = vunpack.c.h.b16 %v851
    %v893 = vunpack.c.l.b16 %v852
    %v894 = vunpack.c.h.b16 %v852
    %v895 = vunpack.c.l.b16 %v853
    %v896 = vunpack.c.h.b16 %v853
    %v897 = vunpack.c.l.b16 %v854
    %v898 = vunpack.c.h.b16 %v854
    %v899 = vunpack.c.l.b16 %v855
    %v900 = vunpack.c.h.b16 %v855
    %v901 = vunpack.c.l.b16 %v856
    %v902 = vunpack.c.h.b16 %v856
    %v903 = vunpack.c.l.b16 %v857
    %v904 = vunpack.c.h.b16 %v857
    %v905 = vunpack.c.l.b16 %v858
    %v906 = vunpack.c.h.b16 %v858
    %v907 = vpack.c.b16 %v883, %v875
    %v908 = vpack.c.b16 %v884, %v876
    %v909 = vpack.c.b16 %v885, %v877
    %v910 = vpack.c.b16 %v886, %v878
    %v911 = vpack.c.b16 %v887, %v879
    %v912 = vpack.c.b16 %v888, %v880
    %v913 = vpack.c.b16 %v889, %v881
    %v914 = vpack.c.b16 %v890, %v882
    %v915 = vpack.c.b16 %v899, %v891
    %v916 = vpack.c.b16 %v900, %v892
    %v917 = vpack.c.b16 %v901, %v893
    %v918 = vpack.c.b16 %v902, %v894
    %v919 = vpack.c.b16 %v903, %v895
    %v920 = vpack.c.b16 %v904, %v896
    %v921 = vpack.c.b16 %v905, %v897
    %v922 = vpack.c.b16 %v906, %v898
    %v940 = vsel %vm377, %v841, 0
    %942 = vmatprep.subr.bf16.mxu0 %v908
    %943 = vmatpush1.bf16.msra.mxu0 %v907
    %944 = vmatprep.subr.bf16.mxu0 %v916
    %945 = vmatpush1.bf16.msra.mxu0 %v915
    %946 = vmatprep.subr.bf16.mxu0 0
    %947 = vmatpush1.bf16.msra.mxu0 0
    %948 = vmatprep.subr.bf16.mxu0 0
    %949 = vmatpush1.bf16.msra.mxu0 0
    %950 = vmatprep.subr.bf16.mxu0 0
    %951 = vmatpush1.bf16.msra.mxu0 0
    %952 = vmatprep.subr.bf16.mxu0 0
    %953 = vmatpush1.bf16.msra.mxu0 0
    %954 = vmatprep.subr.bf16.mxu0 0
    %955 = vmatpush1.bf16.msra.mxu0 0
    %956 = vmatprep.subr.bf16.mxu0 0
    %957 = vmatpush1.bf16.msra.mxu0 0
    %958 = vmatprep.subr.bf16.mxu0 0
    %959 = vmatpush1.bf16.msra.mxu0 0
    %960 = vmatprep.subr.bf16.mxu0 0
    %961 = vmatpush1.bf16.msra.mxu0 0
    %962 = vmatprep.subr.bf16.mxu0 0
    %963 = vmatpush1.bf16.msra.mxu0 0
    %964 = vmatprep.subr.bf16.mxu0 0
    %965 = vmatpush1.bf16.msra.mxu0 0
    %966 = vmatprep.subr.bf16.mxu0 0
    %967 = vmatpush1.bf16.msra.mxu0 0
    %968 = vmatprep.subr.bf16.mxu0 0
    %969 = vmatpush1.bf16.msra.mxu0 0
    %970 = vmatprep.subr.bf16.mxu0 0
    %971 = vmatpush1.bf16.msra.mxu0 0
    %972 = vmatprep.subr.bf16.mxu0 0
    %973 = vmatpush1.bf16.msra.mxu0 0
    %974 = vmatprep.mubr.bf16.mxu0 0
    %975 = vmatmul.mubr.bf16.gmra.mrb[0].mxu0 %v940
    %v976 = vpop.f32.mrb[0].mxu0
    %v977 = vadd.f32 0.0, %v976
    %v978 = vpop.f32.mrb[0].mxu0
    %v979 = vadd.f32 0.0, %v978
    %v980 = vpop.f32.mrb[0].mxu0
    %v981 = vpop.f32.mrb[0].mxu0
    %982 = vdwg.mxu0
    %983 = vmatprep.subr.bf16.mxu0 %v910
    %984 = vmatpush1.bf16.msra.mxu0 %v909
    %985 = vmatprep.subr.bf16.mxu0 %v918
    %986 = vmatpush1.bf16.msra.mxu0 %v917
    %987 = vmatprep.subr.bf16.mxu0 0
    %988 = vmatpush1.bf16.msra.mxu0 0
    %989 = vmatprep.subr.bf16.mxu0 0
    %990 = vmatpush1.bf16.msra.mxu0 0
    %991 = vmatprep.subr.bf16.mxu0 0
    %992 = vmatpush1.bf16.msra.mxu0 0
    %993 = vmatprep.subr.bf16.mxu0 0
    %994 = vmatpush1.bf16.msra.mxu0 0
    %995 = vmatprep.subr.bf16.mxu0 0
    %996 = vmatpush1.bf16.msra.mxu0 0
    %997 = vmatprep.subr.bf16.mxu0 0
    %998 = vmatpush1.bf16.msra.mxu0 0
    %999 = vmatprep.subr.bf16.mxu0 0
    %1000 = vmatpush1.bf16.msra.mxu0 0
    %1001 = vmatprep.subr.bf16.mxu0 0
    %1002 = vmatpush1.bf16.msra.mxu0 0
    %1003 = vmatprep.subr.bf16.mxu0 0
    %1004 = vmatpush1.bf16.msra.mxu0 0
    %1005 = vmatprep.subr.bf16.mxu0 0
    %1006 = vmatpush1.bf16.msra.mxu0 0
    %1007 = vmatprep.subr.bf16.mxu0 0
    %1008 = vmatpush1.bf16.msra.mxu0 0
    %1009 = vmatprep.subr.bf16.mxu0 0
    %1010 = vmatpush1.bf16.msra.mxu0 0
    %1011 = vmatprep.subr.bf16.mxu0 0
    %1012 = vmatpush1.bf16.msra.mxu0 0
    %1013 = vmatprep.subr.bf16.mxu0 0
    %1014 = vmatpush1.bf16.msra.mxu0 0
    %1015 = vmatprep.mubr.bf16.mxu0 0
    %1016 = vmatmul.mubr.bf16.gmra.mrb[0].mxu0 %v940
    %v1017 = vpop.f32.mrb[0].mxu0
    %v1018 = vadd.f32 0.0, %v1017
    %v1019 = vpop.f32.mrb[0].mxu0
    %v1020 = vadd.f32 0.0, %v1019
    %v1021 = vpop.f32.mrb[0].mxu0
    %v1022 = vpop.f32.mrb[0].mxu0
    %1023 = vdwg.mxu0
    %1024 = vmatprep.subr.bf16.mxu0 %v912
    %1025 = vmatpush1.bf16.msra.mxu0 %v911
    %1026 = vmatprep.subr.bf16.mxu0 %v920
    %1027 = vmatpush1.bf16.msra.mxu0 %v919
    %1028 = vmatprep.subr.bf16.mxu0 0
    %1029 = vmatpush1.bf16.msra.mxu0 0
    %1030 = vmatprep.subr.bf16.mxu0 0
    %1031 = vmatpush1.bf16.msra.mxu0 0
    %1032 = vmatprep.subr.bf16.mxu0 0
    %1033 = vmatpush1.bf16.msra.mxu0 0
    %1034 = vmatprep.subr.bf16.mxu0 0
    %1035 = vmatpush1.bf16.msra.mxu0 0
    %1036 = vmatprep.subr.bf16.mxu0 0
    %1037 = vmatpush1.bf16.msra.mxu0 0
    %1038 = vmatprep.subr.bf16.mxu0 0
    %1039 = vmatpush1.bf16.msra.mxu0 0
    %1040 = vmatprep.subr.bf16.mxu0 0
    %1041 = vmatpush1.bf16.msra.mxu0 0
    %1042 = vmatprep.subr.bf16.mxu0 0
    %1043 = vmatpush1.bf16.msra.mxu0 0
    %1044 = vmatprep.subr.bf16.mxu0 0
    %1045 = vmatpush1.bf16.msra.mxu0 0
    %1046 = vmatprep.subr.bf16.mxu0 0
    %1047 = vmatpush1.bf16.msra.mxu0 0
    %1048 = vmatprep.subr.bf16.mxu0 0
    %1049 = vmatpush1.bf16.msra.mxu0 0
    %1050 = vmatprep.subr.bf16.mxu0 0
    %1051 = vmatpush1.bf16.msra.mxu0 0
    %1052 = vmatprep.subr.bf16.mxu0 0
    %1053 = vmatpush1.bf16.msra.mxu0 0
    %1054 = vmatprep.subr.bf16.mxu0 0
    %1055 = vmatpush1.bf16.msra.mxu0 0
    %1056 = vmatprep.mubr.bf16.mxu0 0
    %1057 = vmatmul.mubr.bf16.gmra.mrb[0].mxu0 %v940
    %v1058 = vpop.f32.mrb[0].mxu0
    %v1059 = vadd.f32 0.0, %v1058
    %v1060 = vpop.f32.mrb[0].mxu0
    %v1061 = vadd.f32 0.0, %v1060
    %v1062 = vpop.f32.mrb[0].mxu0
    %v1063 = vpop.f32.mrb[0].mxu0
    %1064 = vdwg.mxu0
    %1065 = vmatprep.subr.bf16.mxu0 %v914
    %1066 = vmatpush1.bf16.msra.mxu0 %v913
    %1067 = vmatprep.subr.bf16.mxu0 %v922
    %1068 = vmatpush1.bf16.msra.mxu0 %v921
    %1069 = vmatprep.subr.bf16.mxu0 0
    %1070 = vmatpush1.bf16.msra.mxu0 0
    %1071 = vmatprep.subr.bf16.mxu0 0
    %1072 = vmatpush1.bf16.msra.mxu0 0
    %1073 = vmatprep.subr.bf16.mxu0 0
    %1074 = vmatpush1.bf16.msra.mxu0 0
    %1075 = vmatprep.subr.bf16.mxu0 0
    %1076 = vmatpush1.bf16.msra.mxu0 0
    %1077 = vmatprep.subr.bf16.mxu0 0
    %1078 = vmatpush1.bf16.msra.mxu0 0
    %1079 = vmatprep.subr.bf16.mxu0 0
    %1080 = vmatpush1.bf16.msra.mxu0 0
    %1081 = vmatprep.subr.bf16.mxu0 0
    %1082 = vmatpush1.bf16.msra.mxu0 0
    %1083 = vmatprep.subr.bf16.mxu0 0
    %1084 = vmatpush1.bf16.msra.mxu0 0
    %1085 = vmatprep.subr.bf16.mxu0 0
    %1086 = vmatpush1.bf16.msra.mxu0 0
    %1087 = vmatprep.subr.bf16.mxu0 0
    %1088 = vmatpush1.bf16.msra.mxu0 0
    %1089 = vmatprep.subr.bf16.mxu0 0
    %1090 = vmatpush1.bf16.msra.mxu0 0
    %1091 = vmatprep.subr.bf16.mxu0 0
    %1092 = vmatpush1.bf16.msra.mxu0 0
    %1093 = vmatprep.subr.bf16.mxu0 0
    %1094 = vmatpush1.bf16.msra.mxu0 0
    %1095 = vmatprep.subr.bf16.mxu0 0
    %1096 = vmatpush1.bf16.msra.mxu0 0
    %1097 = vmatprep.mubr.bf16.mxu0 0
    %1098 = vmatmul.mubr.bf16.gmra.mrb[0].mxu0 %v940
    %v1099 = vpop.f32.mrb[0].mxu0
    %v1100 = vadd.f32 0.0, %v1099
    %v1101 = vpop.f32.mrb[0].mxu0
    %v1102 = vadd.f32 0.0, %v1101
    %v1103 = vpop.f32.mrb[0].mxu0
    %v1104 = vpop.f32.mrb[0].mxu0
    %1105 = vdwg.mxu0
    %v1106 = vadd.f32 %v663, %v977
    %v1107 = vadd.f32 %v665, %v979
    %v1108 = vadd.f32 %v704, %v1018
    %v1109 = vadd.f32 %v706, %v1020
    %v1110 = vadd.f32 %v745, %v1059
    %v1111 = vadd.f32 %v747, %v1061
    %v1112 = vadd.f32 %v786, %v1100
    %v1113 = vadd.f32 %v788, %v1102
    %1114 = vset.pattern.permute.xlu0 3
    %1115 = vperm.xlu0 %1114, %v104
    %v1116 = vpop.permute.xlu0 %1115
    %vm1117 = vcmp.eq.s32.totalorder %v119, %v1116
    %v1118 = vsel %vm1117, 1.0, 0.0
    %v1119 = vpack.c.bf16 %v1118, %v1118
    %v1121 = vsel %vm165, %v1119, 0
    %1123 = vmatprep.subr.bf16.mxu0 0
    %1124 = vmatpush1.bf16.msra.mxu0 %v152
    %1125 = vmatprep.subr.bf16.mxu0 0
    %1126 = vmatpush1.bf16.msra.mxu0 %v153
    %1127 = vmatprep.subr.bf16.mxu0 0
    %1128 = vmatpush1.bf16.msra.mxu0 %v154
    %1129 = vmatprep.subr.bf16.mxu0 0
    %1130 = vmatpush1.bf16.msra.mxu0 %v155
    %1131 = vmatprep.subr.bf16.mxu0 0
    %1132 = vmatpush1.bf16.msra.mxu0 %v156
    %1133 = vmatprep.subr.bf16.mxu0 0
    %1134 = vmatpush1.bf16.msra.mxu0 %v157
    %1135 = vmatprep.subr.bf16.mxu0 0
    %1136 = vmatpush1.bf16.msra.mxu0 %v171
    %1137 = vmatprep.subr.bf16.mxu0 0
    %1138 = vmatpush1.bf16.msra.mxu0 0
    %1139 = vmatprep.subr.bf16.mxu0 0
    %1140 = vmatpush1.bf16.msra.mxu0 0
    %1141 = vmatprep.subr.bf16.mxu0 0
    %1142 = vmatpush1.bf16.msra.mxu0 0
    %1143 = vmatprep.subr.bf16.mxu0 0
    %1144 = vmatpush1.bf16.msra.mxu0 0
    %1145 = vmatprep.subr.bf16.mxu0 0
    %1146 = vmatpush1.bf16.msra.mxu0 0
    %1147 = vmatprep.subr.bf16.mxu0 0
    %1148 = vmatpush1.bf16.msra.mxu0 0
    %1149 = vmatprep.subr.bf16.mxu0 0
    %1150 = vmatpush1.bf16.msra.mxu0 0
    %1151 = vmatprep.subr.bf16.mxu0 0
    %1152 = vmatpush1.bf16.msra.mxu0 0
    %1153 = vmatprep.subr.bf16.mxu0 0
    %1154 = vmatpush1.bf16.msra.mxu0 0
    %1155 = vmatprep.mubr.bf16.mxu0 0
    %1156 = vmatmul.mubr.bf16.gmra.mrb[0].mxu0 %v1121
    %v1157 = vpop.f32.mrb[0].mxu0
    %v1158 = vadd.f32 0.0, %v1157
    %v1159 = vpop.f32.mrb[0].mxu0
    %v1160 = vpop.f32.mrb[0].mxu0
    %v1161 = vpop.f32.mrb[0].mxu0
    %1162 = vdwg.mxu0
    %v1163 = vpack.c.bf16 %v1158, %v1158
    %s1164 = scalar_lea.vmem [#allocation4], 384
    %v1165 = vld [vmem:[%s1164] sm:$0xff]
    %v1166 = vld [vmem:[%s1164 + $0x8] sm:$0xff]
    %v1167 = vld [vmem:[%s1164 + $0x10] sm:$0xff]
    %v1168 = vld [vmem:[%s1164 + $0x18] sm:$0xff]
    %v1169 = vld [vmem:[%s1164 + $0x20] sm:$0xff]
    %v1170 = vld [vmem:[%s1164 + $0x28] sm:$0xff]
    %v1171 = vld [vmem:[%s1164 + $0x30] sm:$0xff]
    %v1172 = vld [vmem:[%s1164 + $0x38] sm:$0xff]
    %v1173 = vld [vmem:[%s1164 + $0x40] sm:$0xff]
    %v1174 = vld [vmem:[%s1164 + $0x48] sm:$0xff]
    %v1175 = vld [vmem:[%s1164 + $0x50] sm:$0xff]
    %v1176 = vld [vmem:[%s1164 + $0x58] sm:$0xff]
    %v1177 = vld [vmem:[%s1164 + $0x60] sm:$0xff]
    %v1178 = vld [vmem:[%s1164 + $0x68] sm:$0xff]
    %v1179 = vld [vmem:[%s1164 + $0x70] sm:$0xff]
    %v1180 = vld [vmem:[%s1164 + $0x78] sm:$0xff]
    %v1197 = vunpack.c.l.b16 %v1165
    %v1198 = vunpack.c.h.b16 %v1165
    %v1199 = vunpack.c.l.b16 %v1166
    %v1200 = vunpack.c.h.b16 %v1166
    %v1201 = vunpack.c.l.b16 %v1167
    %v1202 = vunpack.c.h.b16 %v1167
    %v1203 = vunpack.c.l.b16 %v1168
    %v1204 = vunpack.c.h.b16 %v1168
    %v1205 = vunpack.c.l.b16 %v1169
    %v1206 = vunpack.c.h.b16 %v1169
    %v1207 = vunpack.c.l.b16 %v1170
    %v1208 = vunpack.c.h.b16 %v1170
    %v1209 = vunpack.c.l.b16 %v1171
    %v1210 = vunpack.c.h.b16 %v1171
    %v1211 = vunpack.c.l.b16 %v1172
    %v1212 = vunpack.c.h.b16 %v1172
    %v1213 = vunpack.c.l.b16 %v1173
    %v1214 = vunpack.c.h.b16 %v1173
    %v1215 = vunpack.c.l.b16 %v1174
    %v1216 = vunpack.c.h.b16 %v1174
    %v1217 = vunpack.c.l.b16 %v1175
    %v1218 = vunpack.c.h.b16 %v1175
    %v1219 = vunpack.c.l.b16 %v1176
    %v1220 = vunpack.c.h.b16 %v1176
    %v1221 = vunpack.c.l.b16 %v1177
    %v1222 = vunpack.c.h.b16 %v1177
    %v1223 = vunpack.c.l.b16 %v1178
    %v1224 = vunpack.c.h.b16 %v1178
    %v1225 = vunpack.c.l.b16 %v1179
    %v1226 = vunpack.c.h.b16 %v1179
    %v1227 = vunpack.c.l.b16 %v1180
    %v1228 = vunpack.c.h.b16 %v1180
    %v1229 = vpack.c.b16 %v1205, %v1197
    %v1230 = vpack.c.b16 %v1206, %v1198
    %v1231 = vpack.c.b16 %v1207, %v1199
    %v1232 = vpack.c.b16 %v1208, %v1200
    %v1233 = vpack.c.b16 %v1209, %v1201
    %v1234 = vpack.c.b16 %v1210, %v1202
    %v1235 = vpack.c.b16 %v1211, %v1203
    %v1236 = vpack.c.b16 %v1212, %v1204
    %v1237 = vpack.c.b16 %v1221, %v1213
    %v1238 = vpack.c.b16 %v1222, %v1214
    %v1239 = vpack.c.b16 %v1223, %v1215
    %v1240 = vpack.c.b16 %v1224, %v1216
    %v1241 = vpack.c.b16 %v1225, %v1217
    %v1242 = vpack.c.b16 %v1226, %v1218
    %v1243 = vpack.c.b16 %v1227, %v1219
    %v1244 = vpack.c.b16 %v1228, %v1220
    %v1262 = vsel %vm377, %v1163, 0
    %1264 = vmatprep.subr.bf16.mxu0 %v1230
    %1265 = vmatpush1.bf16.msra.mxu0 %v1229
    %1266 = vmatprep.subr.bf16.mxu0 %v1238
    %1267 = vmatpush1.bf16.msra.mxu0 %v1237
    %1268 = vmatprep.subr.bf16.mxu0 0
    %1269 = vmatpush1.bf16.msra.mxu0 0
    %1270 = vmatprep.subr.bf16.mxu0 0
    %1271 = vmatpush1.bf16.msra.mxu0 0
    %1272 = vmatprep.subr.bf16.mxu0 0
    %1273 = vmatpush1.bf16.msra.mxu0 0
    %1274 = vmatprep.subr.bf16.mxu0 0
    %1275 = vmatpush1.bf16.msra.mxu0 0
    %1276 = vmatprep.subr.bf16.mxu0 0
    %1277 = vmatpush1.bf16.msra.mxu0 0
    %1278 = vmatprep.subr.bf16.mxu0 0
    %1279 = vmatpush1.bf16.msra.mxu0 0
    %1280 = vmatprep.subr.bf16.mxu0 0
    %1281 = vmatpush1.bf16.msra.mxu0 0
    %1282 = vmatprep.subr.bf16.mxu0 0
    %1283 = vmatpush1.bf16.msra.mxu0 0
    %1284 = vmatprep.subr.bf16.mxu0 0
    %1285 = vmatpush1.bf16.msra.mxu0 0
    %1286 = vmatprep.subr.bf16.mxu0 0
    %1287 = vmatpush1.bf16.msra.mxu0 0
    %1288 = vmatprep.subr.bf16.mxu0 0
    %1289 = vmatpush1.bf16.msra.mxu0 0
    %1290 = vmatprep.subr.bf16.mxu0 0
    %1291 = vmatpush1.bf16.msra.mxu0 0
    %1292 = vmatprep.subr.bf16.mxu0 0
    %1293 = vmatpush1.bf16.msra.mxu0 0
    %1294 = vmatprep.subr.bf16.mxu0 0
    %1295 = vmatpush1.bf16.msra.mxu0 0
    %1296 = vmatprep.mubr.bf16.mxu0 0
    %1297 = vmatmul.mubr.bf16.gmra.mrb[0].mxu0 %v1262
    %v1298 = vpop.f32.mrb[0].mxu0
    %v1299 = vadd.f32 0.0, %v1298
    %v1300 = vpop.f32.mrb[0].mxu0
    %v1301 = vadd.f32 0.0, %v1300
    %v1302 = vpop.f32.mrb[0].mxu0
    %v1303 = vpop.f32.mrb[0].mxu0
    %1304 = vdwg.mxu0
    %1305 = vmatprep.subr.bf16.mxu0 %v1232
    %1306 = vmatpush1.bf16.msra.mxu0 %v1231
    %1307 = vmatprep.subr.bf16.mxu0 %v1240
    %1308 = vmatpush1.bf16.msra.mxu0 %v1239
    %1309 = vmatprep.subr.bf16.mxu0 0
    %1310 = vmatpush1.bf16.msra.mxu0 0
    %1311 = vmatprep.subr.bf16.mxu0 0
    %1312 = vmatpush1.bf16.msra.mxu0 0
    %1313 = vmatprep.subr.bf16.mxu0 0
    %1314 = vmatpush1.bf16.msra.mxu0 0
    %1315 = vmatprep.subr.bf16.mxu0 0
    %1316 = vmatpush1.bf16.msra.mxu0 0
    %1317 = vmatprep.subr.bf16.mxu0 0
    %1318 = vmatpush1.bf16.msra.mxu0 0
    %1319 = vmatprep.subr.bf16.mxu0 0
    %1320 = vmatpush1.bf16.msra.mxu0 0
    %1321 = vmatprep.subr.bf16.mxu0 0
    %1322 = vmatpush1.bf16.msra.mxu0 0
    %1323 = vmatprep.subr.bf16.mxu0 0
    %1324 = vmatpush1.bf16.msra.mxu0 0
    %1325 = vmatprep.subr.bf16.mxu0 0
    %1326 = vmatpush1.bf16.msra.mxu0 0
    %1327 = vmatprep.subr.bf16.mxu0 0
    %1328 = vmatpush1.bf16.msra.mxu0 0
    %1329 = vmatprep.subr.bf16.mxu0 0
    %1330 = vmatpush1.bf16.msra.mxu0 0
    %1331 = vmatprep.subr.bf16.mxu0 0
    %1332 = vmatpush1.bf16.msra.mxu0 0
    %1333 = vmatprep.subr.bf16.mxu0 0
    %1334 = vmatpush1.bf16.msra.mxu0 0
    %1335 = vmatprep.subr.bf16.mxu0 0
    %1336 = vmatpush1.bf16.msra.mxu0 0
    %1337 = vmatprep.mubr.bf16.mxu0 0
    %1338 = vmatmul.mubr.bf16.gmra.mrb[0].mxu0 %v1262
    %v1339 = vpop.f32.mrb[0].mxu0
    %v1340 = vadd.f32 0.0, %v1339
    %v1341 = vpop.f32.mrb[0].mxu0
    %v1342 = vadd.f32 0.0, %v1341
    %v1343 = vpop.f32.mrb[0].mxu0
    %v1344 = vpop.f32.mrb[0].mxu0
    %1345 = vdwg.mxu0
    %1346 = vmatprep.subr.bf16.mxu0 %v1234
    %1347 = vmatpush1.bf16.msra.mxu0 %v1233
    %1348 = vmatprep.subr.bf16.mxu0 %v1242
    %1349 = vmatpush1.bf16.msra.mxu0 %v1241
    %1350 = vmatprep.subr.bf16.mxu0 0
    %1351 = vmatpush1.bf16.msra.mxu0 0
    %1352 = vmatprep.subr.bf16.mxu0 0
    %1353 = vmatpush1.bf16.msra.mxu0 0
    %1354 = vmatprep.subr.bf16.mxu0 0
    %1355 = vmatpush1.bf16.msra.mxu0 0
    %1356 = vmatprep.subr.bf16.mxu0 0
    %1357 = vmatpush1.bf16.msra.mxu0 0
    %1358 = vmatprep.subr.bf16.mxu0 0
    %1359 = vmatpush1.bf16.msra.mxu0 0
    %1360 = vmatprep.subr.bf16.mxu0 0
    %1361 = vmatpush1.bf16.msra.mxu0 0
    %1362 = vmatprep.subr.bf16.mxu0 0
    %1363 = vmatpush1.bf16.msra.mxu0 0
    %1364 = vmatprep.subr.bf16.mxu0 0
    %1365 = vmatpush1.bf16.msra.mxu0 0
    %1366 = vmatprep.subr.bf16.mxu0 0
    %1367 = vmatpush1.bf16.msra.mxu0 0
    %1368 = vmatprep.subr.bf16.mxu0 0
    %1369 = vmatpush1.bf16.msra.mxu0 0
    %1370 = vmatprep.subr.bf16.mxu0 0
    %1371 = vmatpush1.bf16.msra.mxu0 0
    %1372 = vmatprep.subr.bf16.mxu0 0
    %1373 = vmatpush1.bf16.msra.mxu0 0
    %1374 = vmatprep.subr.bf16.mxu0 0
    %1375 = vmatpush1.bf16.msra.mxu0 0
    %1376 = vmatprep.subr.bf16.mxu0 0
    %1377 = vmatpush1.bf16.msra.mxu0 0
    %1378 = vmatprep.mubr.bf16.mxu0 0
    %1379 = vmatmul.mubr.bf16.gmra.mrb[0].mxu0 %v1262
    %v1380 = vpop.f32.mrb[0].mxu0
    %v1381 = vadd.f32 0.0, %v1380
    %v1382 = vpop.f32.mrb[0].mxu0
    %v1383 = vadd.f32 0.0, %v1382
    %v1384 = vpop.f32.mrb[0].mxu0
    %v1385 = vpop.f32.mrb[0].mxu0
    %1386 = vdwg.mxu0
    %1387 = vmatprep.subr.bf16.mxu0 %v1236
    %1388 = vmatpush1.bf16.msra.mxu0 %v1235
    %1389 = vmatprep.subr.bf16.mxu0 %v1244
    %1390 = vmatpush1.bf16.msra.mxu0 %v1243
    %1391 = vmatprep.subr.bf16.mxu0 0
    %1392 = vmatpush1.bf16.msra.mxu0 0
    %1393 = vmatprep.subr.bf16.mxu0 0
    %1394 = vmatpush1.bf16.msra.mxu0 0
    %1395 = vmatprep.subr.bf16.mxu0 0
    %1396 = vmatpush1.bf16.msra.mxu0 0
    %1397 = vmatprep.subr.bf16.mxu0 0
    %1398 = vmatpush1.bf16.msra.mxu0 0
    %1399 = vmatprep.subr.bf16.mxu0 0
    %1400 = vmatpush1.bf16.msra.mxu0 0
    %1401 = vmatprep.subr.bf16.mxu0 0
    %1402 = vmatpush1.bf16.msra.mxu0 0
    %1403 = vmatprep.subr.bf16.mxu0 0
    %1404 = vmatpush1.bf16.msra.mxu0 0
    %1405 = vmatprep.subr.bf16.mxu0 0
    %1406 = vmatpush1.bf16.msra.mxu0 0
    %1407 = vmatprep.subr.bf16.mxu0 0
    %1408 = vmatpush1.bf16.msra.mxu0 0
    %1409 = vmatprep.subr.bf16.mxu0 0
    %1410 = vmatpush1.bf16.msra.mxu0 0
    %1411 = vmatprep.subr.bf16.mxu0 0
    %1412 = vmatpush1.bf16.msra.mxu0 0
    %1413 = vmatprep.subr.bf16.mxu0 0
    %1414 = vmatpush1.bf16.msra.mxu0 0
    %1415 = vmatprep.subr.bf16.mxu0 0
    %1416 = vmatpush1.bf16.msra.mxu0 0
    %1417 = vmatprep.subr.bf16.mxu0 0
    %1418 = vmatpush1.bf16.msra.mxu0 0
    %1419 = vmatprep.mubr.bf16.mxu0 0
    %1420 = vmatmul.mubr.bf16.gmra.mrb[0].mxu0 %v1262
    %v1421 = vpop.f32.mrb[0].mxu0
    %v1422 = vadd.f32 0.0, %v1421
    %v1423 = vpop.f32.mrb[0].mxu0
    %v1424 = vadd.f32 0.0, %v1423
    %v1425 = vpop.f32.mrb[0].mxu0
    %v1426 = vpop.f32.mrb[0].mxu0
    %1427 = vdwg.mxu0
    %v1428 = vadd.f32 %v1106, %v1299
    %v1429 = vadd.f32 %v1107, %v1301
    %v1430 = vadd.f32 %v1108, %v1340
    %v1431 = vadd.f32 %v1109, %v1342
    %v1432 = vadd.f32 %v1110, %v1381
    %v1433 = vadd.f32 %v1111, %v1383
    %v1434 = vadd.f32 %v1112, %v1422
    %v1435 = vadd.f32 %v1113, %v1424
    %1436 = vset.pattern.permute.xlu0 4
    %1437 = vperm.xlu0 %1436, %v104
    %v1438 = vpop.permute.xlu0 %1437
    %vm1439 = vcmp.eq.s32.totalorder %v119, %v1438
    %v1440 = vsel %vm1439, 1.0, 0.0
    %v1441 = vpack.c.bf16 %v1440, %v1440
    %v1443 = vsel %vm165, %v1441, 0
    %1445 = vmatprep.subr.bf16.mxu0 0
    %1446 = vmatpush1.bf16.msra.mxu0 %v152
    %1447 = vmatprep.subr.bf16.mxu0 0
    %1448 = vmatpush1.bf16.msra.mxu0 %v153
    %1449 = vmatprep.subr.bf16.mxu0 0
    %1450 = vmatpush1.bf16.msra.mxu0 %v154
    %1451 = vmatprep.subr.bf16.mxu0 0
    %1452 = vmatpush1.bf16.msra.mxu0 %v155
    %1453 = vmatprep.subr.bf16.mxu0 0
    %1454 = vmatpush1.bf16.msra.mxu0 %v156
    %1455 = vmatprep.subr.bf16.mxu0 0
    %1456 = vmatpush1.bf16.msra.mxu0 %v157
    %1457 = vmatprep.subr.bf16.mxu0 0
    %1458 = vmatpush1.bf16.msra.mxu0 %v171
    %1459 = vmatprep.subr.bf16.mxu0 0
    %1460 = vmatpush1.bf16.msra.mxu0 0
    %1461 = vmatprep.subr.bf16.mxu0 0
    %1462 = vmatpush1.bf16.msra.mxu0 0
    %1463 = vmatprep.subr.bf16.mxu0 0
    %1464 = vmatpush1.bf16.msra.mxu0 0
    %1465 = vmatprep.subr.bf16.mxu0 0
    %1466 = vmatpush1.bf16.msra.mxu0 0
    %1467 = vmatprep.subr.bf16.mxu0 0
    %1468 = vmatpush1.bf16.msra.mxu0 0
    %1469 = vmatprep.subr.bf16.mxu0 0
    %1470 = vmatpush1.bf16.msra.mxu0 0
    %1471 = vmatprep.subr.bf16.mxu0 0
    %1472 = vmatpush1.bf16.msra.mxu0 0
    %1473 = vmatprep.subr.bf16.mxu0 0
    %1474 = vmatpush1.bf16.msra.mxu0 0
    %1475 = vmatprep.subr.bf16.mxu0 0
    %1476 = vmatpush1.bf16.msra.mxu0 0
    %1477 = vmatprep.mubr.bf16.mxu0 0
    %1478 = vmatmul.mubr.bf16.gmra.mrb[0].mxu0 %v1443
    %v1479 = vpop.f32.mrb[0].mxu0
    %v1480 = vadd.f32 0.0, %v1479
    %v1481 = vpop.f32.mrb[0].mxu0
    %v1482 = vpop.f32.mrb[0].mxu0
    %v1483 = vpop.f32.mrb[0].mxu0
    %1484 = vdwg.mxu0
    %v1485 = vpack.c.bf16 %v1480, %v1480
    %s1486 = scalar_lea.vmem [#allocation4], 512
    %v1487 = vld [vmem:[%s1486] sm:$0xff]
    %v1488 = vld [vmem:[%s1486 + $0x8] sm:$0xff]
    %v1489 = vld [vmem:[%s1486 + $0x10] sm:$0xff]
    %v1490 = vld [vmem:[%s1486 + $0x18] sm:$0xff]
    %v1491 = vld [vmem:[%s1486 + $0x20] sm:$0xff]
    %v1492 = vld [vmem:[%s1486 + $0x28] sm:$0xff]
    %v1493 = vld [vmem:[%s1486 + $0x30] sm:$0xff]
    %v1494 = vld [vmem:[%s1486 + $0x38] sm:$0xff]
    %v1495 = vld [vmem:[%s1486 + $0x40] sm:$0xff]
    %v1496 = vld [vmem:[%s1486 + $0x48] sm:$0xff]
    %v1497 = vld [vmem:[%s1486 + $0x50] sm:$0xff]
    %v1498 = vld [vmem:[%s1486 + $0x58] sm:$0xff]
    %v1499 = vld [vmem:[%s1486 + $0x60] sm:$0xff]
    %v1500 = vld [vmem:[%s1486 + $0x68] sm:$0xff]
    %v1501 = vld [vmem:[%s1486 + $0x70] sm:$0xff]
    %v1502 = vld [vmem:[%s1486 + $0x78] sm:$0xff]
    %v1519 = vunpack.c.l.b16 %v1487
    %v1520 = vunpack.c.h.b16 %v1487
    %v1521 = vunpack.c.l.b16 %v1488
    %v1522 = vunpack.c.h.b16 %v1488
    %v1523 = vunpack.c.l.b16 %v1489
    %v1524 = vunpack.c.h.b16 %v1489
    %v1525 = vunpack.c.l.b16 %v1490
    %v1526 = vunpack.c.h.b16 %v1490
    %v1527 = vunpack.c.l.b16 %v1491
    %v1528 = vunpack.c.h.b16 %v1491
    %v1529 = vunpack.c.l.b16 %v1492
    %v1530 = vunpack.c.h.b16 %v1492
    %v1531 = vunpack.c.l.b16 %v1493
    %v1532 = vunpack.c.h.b16 %v1493
    %v1533 = vunpack.c.l.b16 %v1494
    %v1534 = vunpack.c.h.b16 %v1494
    %v1535 = vunpack.c.l.b16 %v1495
    %v1536 = vunpack.c.h.b16 %v1495
    %v1537 = vunpack.c.l.b16 %v1496
    %v1538 = vunpack.c.h.b16 %v1496
    %v1539 = vunpack.c.l.b16 %v1497
    %v1540 = vunpack.c.h.b16 %v1497
    %v1541 = vunpack.c.l.b16 %v1498
    %v1542 = vunpack.c.h.b16 %v1498
    %v1543 = vunpack.c.l.b16 %v1499
    %v1544 = vunpack.c.h.b16 %v1499
    %v1545 = vunpack.c.l.b16 %v1500
    %v1546 = vunpack.c.h.b16 %v1500
    %v1547 = vunpack.c.l.b16 %v1501
    %v1548 = vunpack.c.h.b16 %v1501
    %v1549 = vunpack.c.l.b16 %v1502
    %v1550 = vunpack.c.h.b16 %v1502
    %v1551 = vpack.c.b16 %v1527, %v1519
    %v1552 = vpack.c.b16 %v1528, %v1520
    %v1553 = vpack.c.b16 %v1529, %v1521
    %v1554 = vpack.c.b16 %v1530, %v1522
    %v1555 = vpack.c.b16 %v1531, %v1523
    %v1556 = vpack.c.b16 %v1532, %v1524
    %v1557 = vpack.c.b16 %v1533, %v1525
    %v1558 = vpack.c.b16 %v1534, %v1526
    %v1559 = vpack.c.b16 %v1543, %v1535
    %v1560 = vpack.c.b16 %v1544, %v1536
    %v1561 = vpack.c.b16 %v1545, %v1537
    %v1562 = vpack.c.b16 %v1546, %v1538
    %v1563 = vpack.c.b16 %v1547, %v1539
    %v1564 = vpack.c.b16 %v1548, %v1540
    %v1565 = vpack.c.b16 %v1549, %v1541
    %v1566 = vpack.c.b16 %v1550, %v1542
    %v1584 = vsel %vm377, %v1485, 0
    %1586 = vmatprep.subr.bf16.mxu0 %v1552
    %1587 = vmatpush1.bf16.msra.mxu0 %v1551
    %1588 = vmatprep.subr.bf16.mxu0 %v1560
    %1589 = vmatpush1.bf16.msra.mxu0 %v1559
    %1590 = vmatprep.subr.bf16.mxu0 0
    %1591 = vmatpush1.bf16.msra.mxu0 0
    %1592 = vmatprep.subr.bf16.mxu0 0
    %1593 = vmatpush1.bf16.msra.mxu0 0
    %1594 = vmatprep.subr.bf16.mxu0 0
    %1595 = vmatpush1.bf16.msra.mxu0 0
    %1596 = vmatprep.subr.bf16.mxu0 0
    %1597 = vmatpush1.bf16.msra.mxu0 0
    %1598 = vmatprep.subr.bf16.mxu0 0
    %1599 = vmatpush1.bf16.msra.mxu0 0
    %1600 = vmatprep.subr.bf16.mxu0 0
    %1601 = vmatpush1.bf16.msra.mxu0 0
    %1602 = vmatprep.subr.bf16.mxu0 0
    %1603 = vmatpush1.bf16.msra.mxu0 0
    %1604 = vmatprep.subr.bf16.mxu0 0
    %1605 = vmatpush1.bf16.msra.mxu0 0
    %1606 = vmatprep.subr.bf16.mxu0 0
    %1607 = vmatpush1.bf16.msra.mxu0 0
    %1608 = vmatprep.subr.bf16.mxu0 0
    %1609 = vmatpush1.bf16.msra.mxu0 0
    %1610 = vmatprep.subr.bf16.mxu0 0
    %1611 = vmatpush1.bf16.msra.mxu0 0
    %1612 = vmatprep.subr.bf16.mxu0 0
    %1613 = vmatpush1.bf16.msra.mxu0 0
    %1614 = vmatprep.subr.bf16.mxu0 0
    %1615 = vmatpush1.bf16.msra.mxu0 0
    %1616 = vmatprep.subr.bf16.mxu0 0
    %1617 = vmatpush1.bf16.msra.mxu0 0
    %1618 = vmatprep.mubr.bf16.mxu0 0
    %1619 = vmatmul.mubr.bf16.gmra.mrb[0].mxu0 %v1584
    %v1620 = vpop.f32.mrb[0].mxu0
    %v1621 = vadd.f32 0.0, %v1620
    %v1622 = vpop.f32.mrb[0].mxu0
    %v1623 = vadd.f32 0.0, %v1622
    %v1624 = vpop.f32.mrb[0].mxu0
    %v1625 = vpop.f32.mrb[0].mxu0
    %1626 = vdwg.mxu0
    %1627 = vmatprep.subr.bf16.mxu0 %v1554
    %1628 = vmatpush1.bf16.msra.mxu0 %v1553
    %1629 = vmatprep.subr.bf16.mxu0 %v1562
    %1630 = vmatpush1.bf16.msra.mxu0 %v1561
    %1631 = vmatprep.subr.bf16.mxu0 0
    %1632 = vmatpush1.bf16.msra.mxu0 0
    %1633 = vmatprep.subr.bf16.mxu0 0
    %1634 = vmatpush1.bf16.msra.mxu0 0
    %1635 = vmatprep.subr.bf16.mxu0 0
    %1636 = vmatpush1.bf16.msra.mxu0 0
    %1637 = vmatprep.subr.bf16.mxu0 0
    %1638 = vmatpush1.bf16.msra.mxu0 0
    %1639 = vmatprep.subr.bf16.mxu0 0
    %1640 = vmatpush1.bf16.msra.mxu0 0
    %1641 = vmatprep.subr.bf16.mxu0 0
    %1642 = vmatpush1.bf16.msra.mxu0 0
    %1643 = vmatprep.subr.bf16.mxu0 0
    %1644 = vmatpush1.bf16.msra.mxu0 0
    %1645 = vmatprep.subr.bf16.mxu0 0
    %1646 = vmatpush1.bf16.msra.mxu0 0
    %1647 = vmatprep.subr.bf16.mxu0 0
    %1648 = vmatpush1.bf16.msra.mxu0 0
    %1649 = vmatprep.subr.bf16.mxu0 0
    %1650 = vmatpush1.bf16.msra.mxu0 0
    %1651 = vmatprep.subr.bf16.mxu0 0
    %1652 = vmatpush1.bf16.msra.mxu0 0
    %1653 = vmatprep.subr.bf16.mxu0 0
    %1654 = vmatpush1.bf16.msra.mxu0 0
    %1655 = vmatprep.subr.bf16.mxu0 0
    %1656 = vmatpush1.bf16.msra.mxu0 0
    %1657 = vmatprep.subr.bf16.mxu0 0
    %1658 = vmatpush1.bf16.msra.mxu0 0
    %1659 = vmatprep.mubr.bf16.mxu0 0
    %1660 = vmatmul.mubr.bf16.gmra.mrb[0].mxu0 %v1584
    %v1661 = vpop.f32.mrb[0].mxu0
    %v1662 = vadd.f32 0.0, %v1661
    %v1663 = vpop.f32.mrb[0].mxu0
    %v1664 = vadd.f32 0.0, %v1663
    %v1665 = vpop.f32.mrb[0].mxu0
    %v1666 = vpop.f32.mrb[0].mxu0
    %1667 = vdwg.mxu0
    %1668 = vmatprep.subr.bf16.mxu0 %v1556
    %1669 = vmatpush1.bf16.msra.mxu0 %v1555
    %1670 = vmatprep.subr.bf16.mxu0 %v1564
    %1671 = vmatpush1.bf16.msra.mxu0 %v1563
    %1672 = vmatprep.subr.bf16.mxu0 0
    %1673 = vmatpush1.bf16.msra.mxu0 0
    %1674 = vmatprep.subr.bf16.mxu0 0
    %1675 = vmatpush1.bf16.msra.mxu0 0
    %1676 = vmatprep.subr.bf16.mxu0 0
    %1677 = vmatpush1.bf16.msra.mxu0 0
    %1678 = vmatprep.subr.bf16.mxu0 0
    %1679 = vmatpush1.bf16.msra.mxu0 0
    %1680 = vmatprep.subr.bf16.mxu0 0
    %1681 = vmatpush1.bf16.msra.mxu0 0
    %1682 = vmatprep.subr.bf16.mxu0 0
    %1683 = vmatpush1.bf16.msra.mxu0 0
    %1684 = vmatprep.subr.bf16.mxu0 0
    %1685 = vmatpush1.bf16.msra.mxu0 0
    %1686 = vmatprep.subr.bf16.mxu0 0
    %1687 = vmatpush1.bf16.msra.mxu0 0
    %1688 = vmatprep.subr.bf16.mxu0 0
    %1689 = vmatpush1.bf16.msra.mxu0 0
    %1690 = vmatprep.subr.bf16.mxu0 0
    %1691 = vmatpush1.bf16.msra.mxu0 0
    %1692 = vmatprep.subr.bf16.mxu0 0
    %1693 = vmatpush1.bf16.msra.mxu0 0
    %1694 = vmatprep.subr.bf16.mxu0 0
    %1695 = vmatpush1.bf16.msra.mxu0 0
    %1696 = vmatprep.subr.bf16.mxu0 0
    %1697 = vmatpush1.bf16.msra.mxu0 0
    %1698 = vmatprep.subr.bf16.mxu0 0
    %1699 = vmatpush1.bf16.msra.mxu0 0
    %1700 = vmatprep.mubr.bf16.mxu0 0
    %1701 = vmatmul.mubr.bf16.gmra.mrb[0].mxu0 %v1584
    %v1702 = vpop.f32.mrb[0].mxu0
    %v1703 = vadd.f32 0.0, %v1702
    %v1704 = vpop.f32.mrb[0].mxu0
    %v1705 = vadd.f32 0.0, %v1704
    %v1706 = vpop.f32.mrb[0].mxu0
    %v1707 = vpop.f32.mrb[0].mxu0
    %1708 = vdwg.mxu0
    %1709 = vmatprep.subr.bf16.mxu0 %v1558
    %1710 = vmatpush1.bf16.msra.mxu0 %v1557
    %1711 = vmatprep.subr.bf16.mxu0 %v1566
    %1712 = vmatpush1.bf16.msra.mxu0 %v1565
    %1713 = vmatprep.subr.bf16.mxu0 0
    %1714 = vmatpush1.bf16.msra.mxu0 0
    %1715 = vmatprep.subr.bf16.mxu0 0
    %1716 = vmatpush1.bf16.msra.mxu0 0
    %1717 = vmatprep.subr.bf16.mxu0 0
    %1718 = vmatpush1.bf16.msra.mxu0 0
    %1719 = vmatprep.subr.bf16.mxu0 0
    %1720 = vmatpush1.bf16.msra.mxu0 0
    %1721 = vmatprep.subr.bf16.mxu0 0
    %1722 = vmatpush1.bf16.msra.mxu0 0
    %1723 = vmatprep.subr.bf16.mxu0 0
    %1724 = vmatpush1.bf16.msra.mxu0 0
    %1725 = vmatprep.subr.bf16.mxu0 0
    %1726 = vmatpush1.bf16.msra.mxu0 0
    %1727 = vmatprep.subr.bf16.mxu0 0
    %1728 = vmatpush1.bf16.msra.mxu0 0
    %1729 = vmatprep.subr.bf16.mxu0 0
    %1730 = vmatpush1.bf16.msra.mxu0 0
    %1731 = vmatprep.subr.bf16.mxu0 0
    %1732 = vmatpush1.bf16.msra.mxu0 0
    %1733 = vmatprep.subr.bf16.mxu0 0
    %1734 = vmatpush1.bf16.msra.mxu0 0
    %1735 = vmatprep.subr.bf16.mxu0 0
    %1736 = vmatpush1.bf16.msra.mxu0 0
    %1737 = vmatprep.subr.bf16.mxu0 0
    %1738 = vmatpush1.bf16.msra.mxu0 0
    %1739 = vmatprep.subr.bf16.mxu0 0
    %1740 = vmatpush1.bf16.msra.mxu0 0
    %1741 = vmatprep.mubr.bf16.mxu0 0
    %1742 = vmatmul.mubr.bf16.gmra.mrb[0].mxu0 %v1584
    %v1743 = vpop.f32.mrb[0].mxu0
    %v1744 = vadd.f32 0.0, %v1743
    %v1745 = vpop.f32.mrb[0].mxu0
    %v1746 = vadd.f32 0.0, %v1745
    %v1747 = vpop.f32.mrb[0].mxu0
    %v1748 = vpop.f32.mrb[0].mxu0
    %1749 = vdwg.mxu0
    %v1750 = vadd.f32 %v1428, %v1621
    %v1751 = vadd.f32 %v1429, %v1623
    %v1752 = vadd.f32 %v1430, %v1662
    %v1753 = vadd.f32 %v1431, %v1664
    %v1754 = vadd.f32 %v1432, %v1703
    %v1755 = vadd.f32 %v1433, %v1705
    %v1756 = vadd.f32 %v1434, %v1744
    %v1757 = vadd.f32 %v1435, %v1746
    %1758 = vset.pattern.permute.xlu0 5
    %1759 = vperm.xlu0 %1758, %v104
    %v1760 = vpop.permute.xlu0 %1759
    %vm1761 = vcmp.eq.s32.totalorder %v119, %v1760
    %v1762 = vsel %vm1761, 1.0, 0.0
    %v1763 = vpack.c.bf16 %v1762, %v1762
    %v1765 = vsel %vm165, %v1763, 0
    %1767 = vmatprep.subr.bf16.mxu0 0
    %1768 = vmatpush1.bf16.msra.mxu0 %v152
    %1769 = vmatprep.subr.bf16.mxu0 0
    %1770 = vmatpush1.bf16.msra.mxu0 %v153
    %1771 = vmatprep.subr.bf16.mxu0 0
    %1772 = vmatpush1.bf16.msra.mxu0 %v154
    %1773 = vmatprep.subr.bf16.mxu0 0
    %1774 = vmatpush1.bf16.msra.mxu0 %v155
    %1775 = vmatprep.subr.bf16.mxu0 0
    %1776 = vmatpush1.bf16.msra.mxu0 %v156
    %1777 = vmatprep.subr.bf16.mxu0 0
    %1778 = vmatpush1.bf16.msra.mxu0 %v157
    %1779 = vmatprep.subr.bf16.mxu0 0
    %1780 = vmatpush1.bf16.msra.mxu0 %v171
    %1781 = vmatprep.subr.bf16.mxu0 0
    %1782 = vmatpush1.bf16.msra.mxu0 0
    %1783 = vmatprep.subr.bf16.mxu0 0
    %1784 = vmatpush1.bf16.msra.mxu0 0
    %1785 = vmatprep.subr.bf16.mxu0 0
    %1786 = vmatpush1.bf16.msra.mxu0 0
    %1787 = vmatprep.subr.bf16.mxu0 0
    %1788 = vmatpush1.bf16.msra.mxu0 0
    %1789 = vmatprep.subr.bf16.mxu0 0
    %1790 = vmatpush1.bf16.msra.mxu0 0
    %1791 = vmatprep.subr.bf16.mxu0 0
    %1792 = vmatpush1.bf16.msra.mxu0 0
    %1793 = vmatprep.subr.bf16.mxu0 0
    %1794 = vmatpush1.bf16.msra.mxu0 0
    %1795 = vmatprep.subr.bf16.mxu0 0
    %1796 = vmatpush1.bf16.msra.mxu0 0
    %1797 = vmatprep.subr.bf16.mxu0 0
    %1798 = vmatpush1.bf16.msra.mxu0 0
    %1799 = vmatprep.mubr.bf16.mxu0 0
    %1800 = vmatmul.mubr.bf16.gmra.mrb[0].mxu0 %v1765
    %v1801 = vpop.f32.mrb[0].mxu0
    %v1802 = vadd.f32 0.0, %v1801
    %v1803 = vpop.f32.mrb[0].mxu0
    %v1804 = vpop.f32.mrb[0].mxu0
    %v1805 = vpop.f32.mrb[0].mxu0
    %1806 = vdwg.mxu0
    %v1807 = vpack.c.bf16 %v1802, %v1802
    %s1808 = scalar_lea.vmem [#allocation4], 640
    %v1809 = vld [vmem:[%s1808] sm:$0xff]
    %v1810 = vld [vmem:[%s1808 + $0x8] sm:$0xff]
    %v1811 = vld [vmem:[%s1808 + $0x10] sm:$0xff]
    %v1812 = vld [vmem:[%s1808 + $0x18] sm:$0xff]
    %v1813 = vld [vmem:[%s1808 + $0x20] sm:$0xff]
    %v1814 = vld [vmem:[%s1808 + $0x28] sm:$0xff]
    %v1815 = vld [vmem:[%s1808 + $0x30] sm:$0xff]
    %v1816 = vld [vmem:[%s1808 + $0x38] sm:$0xff]
    %v1817 = vld [vmem:[%s1808 + $0x40] sm:$0xff]
    %v1818 = vld [vmem:[%s1808 + $0x48] sm:$0xff]
    %v1819 = vld [vmem:[%s1808 + $0x50] sm:$0xff]
    %v1820 = vld [vmem:[%s1808 + $0x58] sm:$0xff]
    %v1821 = vld [vmem:[%s1808 + $0x60] sm:$0xff]
    %v1822 = vld [vmem:[%s1808 + $0x68] sm:$0xff]
    %v1823 = vld [vmem:[%s1808 + $0x70] sm:$0xff]
    %v1824 = vld [vmem:[%s1808 + $0x78] sm:$0xff]
    %v1841 = vunpack.c.l.b16 %v1809
    %v1842 = vunpack.c.h.b16 %v1809
    %v1843 = vunpack.c.l.b16 %v1810
    %v1844 = vunpack.c.h.b16 %v1810
    %v1845 = vunpack.c.l.b16 %v1811
    %v1846 = vunpack.c.h.b16 %v1811
    %v1847 = vunpack.c.l.b16 %v1812
    %v1848 = vunpack.c.h.b16 %v1812
    %v1849 = vunpack.c.l.b16 %v1813
    %v1850 = vunpack.c.h.b16 %v1813
    %v1851 = vunpack.c.l.b16 %v1814
    %v1852 = vunpack.c.h.b16 %v1814
    %v1853 = vunpack.c.l.b16 %v1815
    %v1854 = vunpack.c.h.b16 %v1815
    %v1855 = vunpack.c.l.b16 %v1816
    %v1856 = vunpack.c.h.b16 %v1816
    %v1857 = vunpack.c.l.b16 %v1817
    %v1858 = vunpack.c.h.b16 %v1817
    %v1859 = vunpack.c.l.b16 %v1818
    %v1860 = vunpack.c.h.b16 %v1818
    %v1861 = vunpack.c.l.b16 %v1819
    %v1862 = vunpack.c.h.b16 %v1819
    %v1863 = vunpack.c.l.b16 %v1820
    %v1864 = vunpack.c.h.b16 %v1820
    %v1865 = vunpack.c.l.b16 %v1821
    %v1866 = vunpack.c.h.b16 %v1821
    %v1867 = vunpack.c.l.b16 %v1822
    %v1868 = vunpack.c.h.b16 %v1822
    %v1869 = vunpack.c.l.b16 %v1823
    %v1870 = vunpack.c.h.b16 %v1823
    %v1871 = vunpack.c.l.b16 %v1824
    %v1872 = vunpack.c.h.b16 %v1824
    %v1873 = vpack.c.b16 %v1849, %v1841
    %v1874 = vpack.c.b16 %v1850, %v1842
    %v1875 = vpack.c.b16 %v1851, %v1843
    %v1876 = vpack.c.b16 %v1852, %v1844
    %v1877 = vpack.c.b16 %v1853, %v1845
    %v1878 = vpack.c.b16 %v1854, %v1846
    %v1879 = vpack.c.b16 %v1855, %v1847
    %v1880 = vpack.c.b16 %v1856, %v1848
    %v1881 = vpack.c.b16 %v1865, %v1857
    %v1882 = vpack.c.b16 %v1866, %v1858
    %v1883 = vpack.c.b16 %v1867, %v1859
    %v1884 = vpack.c.b16 %v1868, %v1860
    %v1885 = vpack.c.b16 %v1869, %v1861
    %v1886 = vpack.c.b16 %v1870, %v1862
    %v1887 = vpack.c.b16 %v1871, %v1863
    %v1888 = vpack.c.b16 %v1872, %v1864
    %v1906 = vsel %vm377, %v1807, 0
    %1908 = vmatprep.subr.bf16.mxu0 %v1874
    %1909 = vmatpush1.bf16.msra.mxu0 %v1873
    %1910 = vmatprep.subr.bf16.mxu0 %v1882
    %1911 = vmatpush1.bf16.msra.mxu0 %v1881
    %1912 = vmatprep.subr.bf16.mxu0 0
    %1913 = vmatpush1.bf16.msra.mxu0 0
    %1914 = vmatprep.subr.bf16.mxu0 0
    %1915 = vmatpush1.bf16.msra.mxu0 0
    %1916 = vmatprep.subr.bf16.mxu0 0
    %1917 = vmatpush1.bf16.msra.mxu0 0
    %1918 = vmatprep.subr.bf16.mxu0 0
    %1919 = vmatpush1.bf16.msra.mxu0 0
    %1920 = vmatprep.subr.bf16.mxu0 0
    %1921 = vmatpush1.bf16.msra.mxu0 0
    %1922 = vmatprep.subr.bf16.mxu0 0
    %1923 = vmatpush1.bf16.msra.mxu0 0
    %1924 = vmatprep.subr.bf16.mxu0 0
    %1925 = vmatpush1.bf16.msra.mxu0 0
    %1926 = vmatprep.subr.bf16.mxu0 0
    %1927 = vmatpush1.bf16.msra.mxu0 0
    %1928 = vmatprep.subr.bf16.mxu0 0
    %1929 = vmatpush1.bf16.msra.mxu0 0
    %1930 = vmatprep.subr.bf16.mxu0 0
    %1931 = vmatpush1.bf16.msra.mxu0 0
    %1932 = vmatprep.subr.bf16.mxu0 0
    %1933 = vmatpush1.bf16.msra.mxu0 0
    %1934 = vmatprep.subr.bf16.mxu0 0
    %1935 = vmatpush1.bf16.msra.mxu0 0
    %1936 = vmatprep.subr.bf16.mxu0 0
    %1937 = vmatpush1.bf16.msra.mxu0 0
    %1938 = vmatprep.subr.bf16.mxu0 0
    %1939 = vmatpush1.bf16.msra.mxu0 0
    %1940 = vmatprep.mubr.bf16.mxu0 0
    %1941 = vmatmul.mubr.bf16.gmra.mrb[0].mxu0 %v1906
    %v1942 = vpop.f32.mrb[0].mxu0
    %v1943 = vadd.f32 0.0, %v1942
    %v1944 = vpop.f32.mrb[0].mxu0
    %v1945 = vadd.f32 0.0, %v1944
    %v1946 = vpop.f32.mrb[0].mxu0
    %v1947 = vpop.f32.mrb[0].mxu0
    %1948 = vdwg.mxu0
    %1949 = vmatprep.subr.bf16.mxu0 %v1876
    %1950 = vmatpush1.bf16.msra.mxu0 %v1875
    %1951 = vmatprep.subr.bf16.mxu0 %v1884
    %1952 = vmatpush1.bf16.msra.mxu0 %v1883
    %1953 = vmatprep.subr.bf16.mxu0 0
    %1954 = vmatpush1.bf16.msra.mxu0 0
    %1955 = vmatprep.subr.bf16.mxu0 0
    %1956 = vmatpush1.bf16.msra.mxu0 0
    %1957 = vmatprep.subr.bf16.mxu0 0
    %1958 = vmatpush1.bf16.msra.mxu0 0
    %1959 = vmatprep.subr.bf16.mxu0 0
    %1960 = vmatpush1.bf16.msra.mxu0 0
    %1961 = vmatprep.subr.bf16.mxu0 0
    %1962 = vmatpush1.bf16.msra.mxu0 0
    %1963 = vmatprep.subr.bf16.mxu0 0
    %1964 = vmatpush1.bf16.msra.mxu0 0
    %1965 = vmatprep.subr.bf16.mxu0 0
    %1966 = vmatpush1.bf16.msra.mxu0 0
    %1967 = vmatprep.subr.bf16.mxu0 0
    %1968 = vmatpush1.bf16.msra.mxu0 0
    %1969 = vmatprep.subr.bf16.mxu0 0
    %1970 = vmatpush1.bf16.msra.mxu0 0
    %1971 = vmatprep.subr.bf16.mxu0 0
    %1972 = vmatpush1.bf16.msra.mxu0 0
    %1973 = vmatprep.subr.bf16.mxu0 0
    %1974 = vmatpush1.bf16.msra.mxu0 0
    %1975 = vmatprep.subr.bf16.mxu0 0
    %1976 = vmatpush1.bf16.msra.mxu0 0
    %1977 = vmatprep.subr.bf16.mxu0 0
    %1978 = vmatpush1.bf16.msra.mxu0 0
    %1979 = vmatprep.subr.bf16.mxu0 0
    %1980 = vmatpush1.bf16.msra.mxu0 0
    %1981 = vmatprep.mubr.bf16.mxu0 0
    %1982 = vmatmul.mubr.bf16.gmra.mrb[0].mxu0 %v1906
    %v1983 = vpop.f32.mrb[0].mxu0
    %v1984 = vadd.f32 0.0, %v1983
    %v1985 = vpop.f32.mrb[0].mxu0
    %v1986 = vadd.f32 0.0, %v1985
    %v1987 = vpop.f32.mrb[0].mxu0
    %v1988 = vpop.f32.mrb[0].mxu0
    %1989 = vdwg.mxu0
    %1990 = vmatprep.subr.bf16.mxu0 %v1878
    %1991 = vmatpush1.bf16.msra.mxu0 %v1877
    %1992 = vmatprep.subr.bf16.mxu0 %v1886
    %1993 = vmatpush1.bf16.msra.mxu0 %v1885
    %1994 = vmatprep.subr.bf16.mxu0 0
    %1995 = vmatpush1.bf16.msra.mxu0 0
    %1996 = vmatprep.subr.bf16.mxu0 0
    %1997 = vmatpush1.bf16.msra.mxu0 0
    %1998 = vmatprep.subr.bf16.mxu0 0
    %1999 = vmatpush1.bf16.msra.mxu0 0
    %2000 = vmatprep.subr.bf16.mxu0 0
    %2001 = vmatpush1.bf16.msra.mxu0 0
    %2002 = vmatprep.subr.bf16.mxu0 0
    %2003 = vmatpush1.bf16.msra.mxu0 0
    %2004 = vmatprep.subr.bf16.mxu0 0
    %2005 = vmatpush1.bf16.msra.mxu0 0
    %2006 = vmatprep.subr.bf16.mxu0 0
    %2007 = vmatpush1.bf16.msra.mxu0 0
    %2008 = vmatprep.subr.bf16.mxu0 0
    %2009 = vmatpush1.bf16.msra.mxu0 0
    %2010 = vmatprep.subr.bf16.mxu0 0
    %2011 = vmatpush1.bf16.msra.mxu0 0
    %2012 = vmatprep.subr.bf16.mxu0 0
    %2013 = vmatpush1.bf16.msra.mxu0 0
    %2014 = vmatprep.subr.bf16.mxu0 0
    %2015 = vmatpush1.bf16.msra.mxu0 0
    %2016 = vmatprep.subr.bf16.mxu0 0
    %2017 = vmatpush1.bf16.msra.mxu0 0
    %2018 = vmatprep.subr.bf16.mxu0 0
    %2019 = vmatpush1.bf16.msra.mxu0 0
    %2020 = vmatprep.subr.bf16.mxu0 0
    %2021 = vmatpush1.bf16.msra.mxu0 0
    %2022 = vmatprep.mubr.bf16.mxu0 0
    %2023 = vmatmul.mubr.bf16.gmra.mrb[0].mxu0 %v1906
    %v2024 = vpop.f32.mrb[0].mxu0
    %v2025 = vadd.f32 0.0, %v2024
    %v2026 = vpop.f32.mrb[0].mxu0
    %v2027 = vadd.f32 0.0, %v2026
    %v2028 = vpop.f32.mrb[0].mxu0
    %v2029 = vpop.f32.mrb[0].mxu0
    %2030 = vdwg.mxu0
    %2031 = vmatprep.subr.bf16.mxu0 %v1880
    %2032 = vmatpush1.bf16.msra.mxu0 %v1879
    %2033 = vmatprep.subr.bf16.mxu0 %v1888
    %2034 = vmatpush1.bf16.msra.mxu0 %v1887
    %2035 = vmatprep.subr.bf16.mxu0 0
    %2036 = vmatpush1.bf16.msra.mxu0 0
    %2037 = vmatprep.subr.bf16.mxu0 0
    %2038 = vmatpush1.bf16.msra.mxu0 0
    %2039 = vmatprep.subr.bf16.mxu0 0
    %2040 = vmatpush1.bf16.msra.mxu0 0
    %2041 = vmatprep.subr.bf16.mxu0 0
    %2042 = vmatpush1.bf16.msra.mxu0 0
    %2043 = vmatprep.subr.bf16.mxu0 0
    %2044 = vmatpush1.bf16.msra.mxu0 0
    %2045 = vmatprep.subr.bf16.mxu0 0
    %2046 = vmatpush1.bf16.msra.mxu0 0
    %2047 = vmatprep.subr.bf16.mxu0 0
    %2048 = vmatpush1.bf16.msra.mxu0 0
    %2049 = vmatprep.subr.bf16.mxu0 0
    %2050 = vmatpush1.bf16.msra.mxu0 0
    %2051 = vmatprep.subr.bf16.mxu0 0
    %2052 = vmatpush1.bf16.msra.mxu0 0
    %2053 = vmatprep.subr.bf16.mxu0 0
    %2054 = vmatpush1.bf16.msra.mxu0 0
    %2055 = vmatprep.subr.bf16.mxu0 0
    %2056 = vmatpush1.bf16.msra.mxu0 0
    %2057 = vmatprep.subr.bf16.mxu0 0
    %2058 = vmatpush1.bf16.msra.mxu0 0
    %2059 = vmatprep.subr.bf16.mxu0 0
    %2060 = vmatpush1.bf16.msra.mxu0 0
    %2061 = vmatprep.subr.bf16.mxu0 0
    %2062 = vmatpush1.bf16.msra.mxu0 0
    %2063 = vmatprep.mubr.bf16.mxu0 0
    %2064 = vmatmul.mubr.bf16.gmra.mrb[0].mxu0 %v1906
    %v2065 = vpop.f32.mrb[0].mxu0
    %v2066 = vadd.f32 0.0, %v2065
    %v2067 = vpop.f32.mrb[0].mxu0
    %v2068 = vadd.f32 0.0, %v2067
    %v2069 = vpop.f32.mrb[0].mxu0
    %v2070 = vpop.f32.mrb[0].mxu0
    %2071 = vdwg.mxu0
    %v2072 = vadd.f32 %v1750, %v1943
    %v2073 = vadd.f32 %v1751, %v1945
    %v2074 = vadd.f32 %v1752, %v1984
    %v2075 = vadd.f32 %v1753, %v1986
    %v2076 = vadd.f32 %v1754, %v2025
    %v2077 = vadd.f32 %v1755, %v2027
    %v2078 = vadd.f32 %v1756, %v2066
    %v2079 = vadd.f32 %v1757, %v2068
    %2080 = vset.pattern.permute.xlu0 6
    %2081 = vperm.xlu0 %2080, %v104
    %v2082 = vpop.permute.xlu0 %2081
    %vm2083 = vcmp.eq.s32.totalorder %v119, %v2082
    %v2084 = vsel %vm2083, 1.0, 0.0
    %v2085 = vpack.c.bf16 %v2084, %v2084
    %v2087 = vsel %vm165, %v2085, 0
    %2089 = vmatprep.subr.bf16.mxu0 0
    %2090 = vmatpush1.bf16.msra.mxu0 %v152
    %2091 = vmatprep.subr.bf16.mxu0 0
    %2092 = vmatpush1.bf16.msra.mxu0 %v153
    %2093 = vmatprep.subr.bf16.mxu0 0
    %2094 = vmatpush1.bf16.msra.mxu0 %v154
    %2095 = vmatprep.subr.bf16.mxu0 0
    %2096 = vmatpush1.bf16.msra.mxu0 %v155
    %2097 = vmatprep.subr.bf16.mxu0 0
    %2098 = vmatpush1.bf16.msra.mxu0 %v156
    %2099 = vmatprep.subr.bf16.mxu0 0
    %2100 = vmatpush1.bf16.msra.mxu0 %v157
    %2101 = vmatprep.subr.bf16.mxu0 0
    %2102 = vmatpush1.bf16.msra.mxu0 %v171
    %2103 = vmatprep.subr.bf16.mxu0 0
    %2104 = vmatpush1.bf16.msra.mxu0 0
    %2105 = vmatprep.subr.bf16.mxu0 0
    %2106 = vmatpush1.bf16.msra.mxu0 0
    %2107 = vmatprep.subr.bf16.mxu0 0
    %2108 = vmatpush1.bf16.msra.mxu0 0
    %2109 = vmatprep.subr.bf16.mxu0 0
    %2110 = vmatpush1.bf16.msra.mxu0 0
    %2111 = vmatprep.subr.bf16.mxu0 0
    %2112 = vmatpush1.bf16.msra.mxu0 0
    %2113 = vmatprep.subr.bf16.mxu0 0
    %2114 = vmatpush1.bf16.msra.mxu0 0
    %2115 = vmatprep.subr.bf16.mxu0 0
    %2116 = vmatpush1.bf16.msra.mxu0 0
    %2117 = vmatprep.subr.bf16.mxu0 0
    %2118 = vmatpush1.bf16.msra.mxu0 0
    %2119 = vmatprep.subr.bf16.mxu0 0
    %2120 = vmatpush1.bf16.msra.mxu0 0
    %2121 = vmatprep.mubr.bf16.mxu0 0
    %2122 = vmatmul.mubr.bf16.gmra.mrb[0].mxu0 %v2087
    %v2123 = vpop.f32.mrb[0].mxu0
    %v2124 = vadd.f32 0.0, %v2123
    %v2125 = vpop.f32.mrb[0].mxu0
    %v2126 = vpop.f32.mrb[0].mxu0
    %v2127 = vpop.f32.mrb[0].mxu0
    %2128 = vdwg.mxu0
    %v2129 = vpack.c.bf16 %v2124, %v2124
    %s2130 = scalar_lea.vmem [#allocation4], 768
    %v2131 = vld [vmem:[%s2130] sm:$0xff]
    %v2132 = vld [vmem:[%s2130 + $0x8] sm:$0xff]
    %v2133 = vld [vmem:[%s2130 + $0x10] sm:$0xff]
    %v2134 = vld [vmem:[%s2130 + $0x18] sm:$0xff]
    %v2135 = vld [vmem:[%s2130 + $0x20] sm:$0xff]
    %v2136 = vld [vmem:[%s2130 + $0x28] sm:$0xff]
    %v2137 = vld [vmem:[%s2130 + $0x30] sm:$0xff]
    %v2138 = vld [vmem:[%s2130 + $0x38] sm:$0xff]
    %v2139 = vld [vmem:[%s2130 + $0x40] sm:$0xff]
    %v2140 = vld [vmem:[%s2130 + $0x48] sm:$0xff]
    %v2141 = vld [vmem:[%s2130 + $0x50] sm:$0xff]
    %v2142 = vld [vmem:[%s2130 + $0x58] sm:$0xff]
    %v2143 = vld [vmem:[%s2130 + $0x60] sm:$0xff]
    %v2144 = vld [vmem:[%s2130 + $0x68] sm:$0xff]
    %v2145 = vld [vmem:[%s2130 + $0x70] sm:$0xff]
    %v2146 = vld [vmem:[%s2130 + $0x78] sm:$0xff]
    %v2163 = vunpack.c.l.b16 %v2131
    %v2164 = vunpack.c.h.b16 %v2131
    %v2165 = vunpack.c.l.b16 %v2132
    %v2166 = vunpack.c.h.b16 %v2132
    %v2167 = vunpack.c.l.b16 %v2133
    %v2168 = vunpack.c.h.b16 %v2133
    %v2169 = vunpack.c.l.b16 %v2134
    %v2170 = vunpack.c.h.b16 %v2134
    %v2171 = vunpack.c.l.b16 %v2135
    %v2172 = vunpack.c.h.b16 %v2135
    %v2173 = vunpack.c.l.b16 %v2136
    %v2174 = vunpack.c.h.b16 %v2136
    %v2175 = vunpack.c.l.b16 %v2137
    %v2176 = vunpack.c.h.b16 %v2137
    %v2177 = vunpack.c.l.b16 %v2138
    %v2178 = vunpack.c.h.b16 %v2138
    %v2179 = vunpack.c.l.b16 %v2139
    %v2180 = vunpack.c.h.b16 %v2139
    %v2181 = vunpack.c.l.b16 %v2140
    %v2182 = vunpack.c.h.b16 %v2140
    %v2183 = vunpack.c.l.b16 %v2141
    %v2184 = vunpack.c.h.b16 %v2141
    %v2185 = vunpack.c.l.b16 %v2142
    %v2186 = vunpack.c.h.b16 %v2142
    %v2187 = vunpack.c.l.b16 %v2143
    %v2188 = vunpack.c.h.b16 %v2143
    %v2189 = vunpack.c.l.b16 %v2144
    %v2190 = vunpack.c.h.b16 %v2144
    %v2191 = vunpack.c.l.b16 %v2145
    %v2192 = vunpack.c.h.b16 %v2145
    %v2193 = vunpack.c.l.b16 %v2146
    %v2194 = vunpack.c.h.b16 %v2146
    %v2195 = vpack.c.b16 %v2171, %v2163
    %v2196 = vpack.c.b16 %v2172, %v2164
    %v2197 = vpack.c.b16 %v2173, %v2165
    %v2198 = vpack.c.b16 %v2174, %v2166
    %v2199 = vpack.c.b16 %v2175, %v2167
    %v2200 = vpack.c.b16 %v2176, %v2168
    %v2201 = vpack.c.b16 %v2177, %v2169
    %v2202 = vpack.c.b16 %v2178, %v2170
    %v2203 = vpack.c.b16 %v2187, %v2179
    %v2204 = vpack.c.b16 %v2188, %v2180
    %v2205 = vpack.c.b16 %v2189, %v2181
    %v2206 = vpack.c.b16 %v2190, %v2182
    %v2207 = vpack.c.b16 %v2191, %v2183
    %v2208 = vpack.c.b16 %v2192, %v2184
    %v2209 = vpack.c.b16 %v2193, %v2185
    %v2210 = vpack.c.b16 %v2194, %v2186
    %v2228 = vsel %vm377, %v2129, 0
    %2230 = vmatprep.subr.bf16.mxu0 %v2196
    %2231 = vmatpush1.bf16.msra.mxu0 %v2195
    %2232 = vmatprep.subr.bf16.mxu0 %v2204
    %2233 = vmatpush1.bf16.msra.mxu0 %v2203
    %2234 = vmatprep.subr.bf16.mxu0 0
    %2235 = vmatpush1.bf16.msra.mxu0 0
    %2236 = vmatprep.subr.bf16.mxu0 0
    %2237 = vmatpush1.bf16.msra.mxu0 0
    %2238 = vmatprep.subr.bf16.mxu0 0
    %2239 = vmatpush1.bf16.msra.mxu0 0
    %2240 = vmatprep.subr.bf16.mxu0 0
    %2241 = vmatpush1.bf16.msra.mxu0 0
    %2242 = vmatprep.subr.bf16.mxu0 0
    %2243 = vmatpush1.bf16.msra.mxu0 0
    %2244 = vmatprep.subr.bf16.mxu0 0
    %2245 = vmatpush1.bf16.msra.mxu0 0
    %2246 = vmatprep.subr.bf16.mxu0 0
    %2247 = vmatpush1.bf16.msra.mxu0 0
    %2248 = vmatprep.subr.bf16.mxu0 0
    %2249 = vmatpush1.bf16.msra.mxu0 0
    %2250 = vmatprep.subr.bf16.mxu0 0
    %2251 = vmatpush1.bf16.msra.mxu0 0
    %2252 = vmatprep.subr.bf16.mxu0 0
    %2253 = vmatpush1.bf16.msra.mxu0 0
    %2254 = vmatprep.subr.bf16.mxu0 0
    %2255 = vmatpush1.bf16.msra.mxu0 0
    %2256 = vmatprep.subr.bf16.mxu0 0
    %2257 = vmatpush1.bf16.msra.mxu0 0
    %2258 = vmatprep.subr.bf16.mxu0 0
    %2259 = vmatpush1.bf16.msra.mxu0 0
    %2260 = vmatprep.subr.bf16.mxu0 0
    %2261 = vmatpush1.bf16.msra.mxu0 0
    %2262 = vmatprep.mubr.bf16.mxu0 0
    %2263 = vmatmul.mubr.bf16.gmra.mrb[0].mxu0 %v2228
    %v2264 = vpop.f32.mrb[0].mxu0
    %v2265 = vadd.f32 0.0, %v2264
    %v2266 = vpop.f32.mrb[0].mxu0
    %v2267 = vadd.f32 0.0, %v2266
    %v2268 = vpop.f32.mrb[0].mxu0
    %v2269 = vpop.f32.mrb[0].mxu0
    %2270 = vdwg.mxu0
    %2271 = vmatprep.subr.bf16.mxu0 %v2198
    %2272 = vmatpush1.bf16.msra.mxu0 %v2197
    %2273 = vmatprep.subr.bf16.mxu0 %v2206
    %2274 = vmatpush1.bf16.msra.mxu0 %v2205
    %2275 = vmatprep.subr.bf16.mxu0 0
    %2276 = vmatpush1.bf16.msra.mxu0 0
    %2277 = vmatprep.subr.bf16.mxu0 0
    %2278 = vmatpush1.bf16.msra.mxu0 0
    %2279 = vmatprep.subr.bf16.mxu0 0
    %2280 = vmatpush1.bf16.msra.mxu0 0
    %2281 = vmatprep.subr.bf16.mxu0 0
    %2282 = vmatpush1.bf16.msra.mxu0 0
    %2283 = vmatprep.subr.bf16.mxu0 0
    %2284 = vmatpush1.bf16.msra.mxu0 0
    %2285 = vmatprep.subr.bf16.mxu0 0
    %2286 = vmatpush1.bf16.msra.mxu0 0
    %2287 = vmatprep.subr.bf16.mxu0 0
    %2288 = vmatpush1.bf16.msra.mxu0 0
    %2289 = vmatprep.subr.bf16.mxu0 0
    %2290 = vmatpush1.bf16.msra.mxu0 0
    %2291 = vmatprep.subr.bf16.mxu0 0
    %2292 = vmatpush1.bf16.msra.mxu0 0
    %2293 = vmatprep.subr.bf16.mxu0 0
    %2294 = vmatpush1.bf16.msra.mxu0 0
    %2295 = vmatprep.subr.bf16.mxu0 0
    %2296 = vmatpush1.bf16.msra.mxu0 0
    %2297 = vmatprep.subr.bf16.mxu0 0
    %2298 = vmatpush1.bf16.msra.mxu0 0
    %2299 = vmatprep.subr.bf16.mxu0 0
    %2300 = vmatpush1.bf16.msra.mxu0 0
    %2301 = vmatprep.subr.bf16.mxu0 0
    %2302 = vmatpush1.bf16.msra.mxu0 0
    %2303 = vmatprep.mubr.bf16.mxu0 0
    %2304 = vmatmul.mubr.bf16.gmra.mrb[0].mxu0 %v2228
    %v2305 = vpop.f32.mrb[0].mxu0
    %v2306 = vadd.f32 0.0, %v2305
    %v2307 = vpop.f32.mrb[0].mxu0
    %v2308 = vadd.f32 0.0, %v2307
    %v2309 = vpop.f32.mrb[0].mxu0
    %v2310 = vpop.f32.mrb[0].mxu0
    %2311 = vdwg.mxu0
    %2312 = vmatprep.subr.bf16.mxu0 %v2200
    %2313 = vmatpush1.bf16.msra.mxu0 %v2199
    %2314 = vmatprep.subr.bf16.mxu0 %v2208
    %2315 = vmatpush1.bf16.msra.mxu0 %v2207
    %2316 = vmatprep.subr.bf16.mxu0 0
    %2317 = vmatpush1.bf16.msra.mxu0 0
    %2318 = vmatprep.subr.bf16.mxu0 0
    %2319 = vmatpush1.bf16.msra.mxu0 0
    %2320 = vmatprep.subr.bf16.mxu0 0
    %2321 = vmatpush1.bf16.msra.mxu0 0
    %2322 = vmatprep.subr.bf16.mxu0 0
    %2323 = vmatpush1.bf16.msra.mxu0 0
    %2324 = vmatprep.subr.bf16.mxu0 0
    %2325 = vmatpush1.bf16.msra.mxu0 0
    %2326 = vmatprep.subr.bf16.mxu0 0
    %2327 = vmatpush1.bf16.msra.mxu0 0
    %2328 = vmatprep.subr.bf16.mxu0 0
    %2329 = vmatpush1.bf16.msra.mxu0 0
    %2330 = vmatprep.subr.bf16.mxu0 0
    %2331 = vmatpush1.bf16.msra.mxu0 0
    %2332 = vmatprep.subr.bf16.mxu0 0
    %2333 = vmatpush1.bf16.msra.mxu0 0
    %2334 = vmatprep.subr.bf16.mxu0 0
    %2335 = vmatpush1.bf16.msra.mxu0 0
    %2336 = vmatprep.subr.bf16.mxu0 0
    %2337 = vmatpush1.bf16.msra.mxu0 0
    %2338 = vmatprep.subr.bf16.mxu0 0
    %2339 = vmatpush1.bf16.msra.mxu0 0
    %2340 = vmatprep.subr.bf16.mxu0 0
    %2341 = vmatpush1.bf16.msra.mxu0 0
    %2342 = vmatprep.subr.bf16.mxu0 0
    %2343 = vmatpush1.bf16.msra.mxu0 0
    %2344 = vmatprep.mubr.bf16.mxu0 0
    %2345 = vmatmul.mubr.bf16.gmra.mrb[0].mxu0 %v2228
    %v2346 = vpop.f32.mrb[0].mxu0
    %v2347 = vadd.f32 0.0, %v2346
    %v2348 = vpop.f32.mrb[0].mxu0
    %v2349 = vadd.f32 0.0, %v2348
    %v2350 = vpop.f32.mrb[0].mxu0
    %v2351 = vpop.f32.mrb[0].mxu0
    %2352 = vdwg.mxu0
    %2353 = vmatprep.subr.bf16.mxu0 %v2202
    %2354 = vmatpush1.bf16.msra.mxu0 %v2201
    %2355 = vmatprep.subr.bf16.mxu0 %v2210
    %2356 = vmatpush1.bf16.msra.mxu0 %v2209
    %2357 = vmatprep.subr.bf16.mxu0 0
    %2358 = vmatpush1.bf16.msra.mxu0 0
    %2359 = vmatprep.subr.bf16.mxu0 0
    %2360 = vmatpush1.bf16.msra.mxu0 0
    %2361 = vmatprep.subr.bf16.mxu0 0
    %2362 = vmatpush1.bf16.msra.mxu0 0
    %2363 = vmatprep.subr.bf16.mxu0 0
    %2364 = vmatpush1.bf16.msra.mxu0 0
    %2365 = vmatprep.subr.bf16.mxu0 0
    %2366 = vmatpush1.bf16.msra.mxu0 0
    %2367 = vmatprep.subr.bf16.mxu0 0
    %2368 = vmatpush1.bf16.msra.mxu0 0
    %2369 = vmatprep.subr.bf16.mxu0 0
    %2370 = vmatpush1.bf16.msra.mxu0 0
    %2371 = vmatprep.subr.bf16.mxu0 0
    %2372 = vmatpush1.bf16.msra.mxu0 0
    %2373 = vmatprep.subr.bf16.mxu0 0
    %2374 = vmatpush1.bf16.msra.mxu0 0
    %2375 = vmatprep.subr.bf16.mxu0 0
    %2376 = vmatpush1.bf16.msra.mxu0 0
    %2377 = vmatprep.subr.bf16.mxu0 0
    %2378 = vmatpush1.bf16.msra.mxu0 0
    %2379 = vmatprep.subr.bf16.mxu0 0
    %2380 = vmatpush1.bf16.msra.mxu0 0
    %2381 = vmatprep.subr.bf16.mxu0 0
    %2382 = vmatpush1.bf16.msra.mxu0 0
    %2383 = vmatprep.subr.bf16.mxu0 0
    %2384 = vmatpush1.bf16.msra.mxu0 0
    %2385 = vmatprep.mubr.bf16.mxu0 0
    %2386 = vmatmul.mubr.bf16.gmra.mrb[0].mxu0 %v2228
    %v2387 = vpop.f32.mrb[0].mxu0
    %v2388 = vadd.f32 0.0, %v2387
    %v2389 = vpop.f32.mrb[0].mxu0
    %v2390 = vadd.f32 0.0, %v2389
    %v2391 = vpop.f32.mrb[0].mxu0
    %v2392 = vpop.f32.mrb[0].mxu0
    %2393 = vdwg.mxu0
    %v2394 = vadd.f32 %v2072, %v2265
    %v2395 = vadd.f32 %v2073, %v2267
    %v2396 = vadd.f32 %v2074, %v2306
    %v2397 = vadd.f32 %v2075, %v2308
    %v2398 = vadd.f32 %v2076, %v2347
    %v2399 = vadd.f32 %v2077, %v2349
    %v2400 = vadd.f32 %v2078, %v2388
    %v2401 = vadd.f32 %v2079, %v2390
    %2402 = vset.pattern.permute.xlu0 7
    %2403 = vperm.xlu0 %2402, %v104
    %v2404 = vpop.permute.xlu0 %2403
    %vm2405 = vcmp.eq.s32.totalorder %v119, %v2404
    %v2406 = vsel %vm2405, 1.0, 0.0
    %v2407 = vpack.c.bf16 %v2406, %v2406
    %v2409 = vsel %vm165, %v2407, 0
    %2411 = vmatprep.subr.bf16.mxu0 0
    %2412 = vmatpush1.bf16.msra.mxu0 %v152
    %2413 = vmatprep.subr.bf16.mxu0 0
    %2414 = vmatpush1.bf16.msra.mxu0 %v153
    %2415 = vmatprep.subr.bf16.mxu0 0
    %2416 = vmatpush1.bf16.msra.mxu0 %v154
    %2417 = vmatprep.subr.bf16.mxu0 0
    %2418 = vmatpush1.bf16.msra.mxu0 %v155
    %2419 = vmatprep.subr.bf16.mxu0 0
    %2420 = vmatpush1.bf16.msra.mxu0 %v156
    %2421 = vmatprep.subr.bf16.mxu0 0
    %2422 = vmatpush1.bf16.msra.mxu0 %v157
    %2423 = vmatprep.subr.bf16.mxu0 0
    %2424 = vmatpush1.bf16.msra.mxu0 %v171
    %2425 = vmatprep.subr.bf16.mxu0 0
    %2426 = vmatpush1.bf16.msra.mxu0 0
    %2427 = vmatprep.subr.bf16.mxu0 0
    %2428 = vmatpush1.bf16.msra.mxu0 0
    %2429 = vmatprep.subr.bf16.mxu0 0
    %2430 = vmatpush1.bf16.msra.mxu0 0
    %2431 = vmatprep.subr.bf16.mxu0 0
    %2432 = vmatpush1.bf16.msra.mxu0 0
    %2433 = vmatprep.subr.bf16.mxu0 0
    %2434 = vmatpush1.bf16.msra.mxu0 0
    %2435 = vmatprep.subr.bf16.mxu0 0
    %2436 = vmatpush1.bf16.msra.mxu0 0
    %2437 = vmatprep.subr.bf16.mxu0 0
    %2438 = vmatpush1.bf16.msra.mxu0 0
    %2439 = vmatprep.subr.bf16.mxu0 0
    %2440 = vmatpush1.bf16.msra.mxu0 0
    %2441 = vmatprep.subr.bf16.mxu0 0
    %2442 = vmatpush1.bf16.msra.mxu0 0
    %2443 = vmatprep.mubr.bf16.mxu0 0
    %2444 = vmatmul.mubr.bf16.gmra.mrb[0].mxu0 %v2409
    %v2445 = vpop.f32.mrb[0].mxu0
    %v2446 = vadd.f32 0.0, %v2445
    %v2447 = vpop.f32.mrb[0].mxu0
    %v2448 = vpop.f32.mrb[0].mxu0
    %v2449 = vpop.f32.mrb[0].mxu0
    %2450 = vdwg.mxu0
    %v2451 = vpack.c.bf16 %v2446, %v2446
    %s2452 = scalar_lea.vmem [#allocation4], 896
    %v2453 = vld [vmem:[%s2452] sm:$0xff]
    %v2454 = vld [vmem:[%s2452 + $0x8] sm:$0xff]
    %v2455 = vld [vmem:[%s2452 + $0x10] sm:$0xff]
    %v2456 = vld [vmem:[%s2452 + $0x18] sm:$0xff]
    %v2457 = vld [vmem:[%s2452 + $0x20] sm:$0xff]
    %v2458 = vld [vmem:[%s2452 + $0x28] sm:$0xff]
    %v2459 = vld [vmem:[%s2452 + $0x30] sm:$0xff]
    %v2460 = vld [vmem:[%s2452 + $0x38] sm:$0xff]
    %v2461 = vld [vmem:[%s2452 + $0x40] sm:$0xff]
    %v2462 = vld [vmem:[%s2452 + $0x48] sm:$0xff]
    %v2463 = vld [vmem:[%s2452 + $0x50] sm:$0xff]
    %v2464 = vld [vmem:[%s2452 + $0x58] sm:$0xff]
    %v2465 = vld [vmem:[%s2452 + $0x60] sm:$0xff]
    %v2466 = vld [vmem:[%s2452 + $0x68] sm:$0xff]
    %v2467 = vld [vmem:[%s2452 + $0x70] sm:$0xff]
    %v2468 = vld [vmem:[%s2452 + $0x78] sm:$0xff]
    %v2485 = vunpack.c.l.b16 %v2453
    %v2486 = vunpack.c.h.b16 %v2453
    %v2487 = vunpack.c.l.b16 %v2454
    %v2488 = vunpack.c.h.b16 %v2454
    %v2489 = vunpack.c.l.b16 %v2455
    %v2490 = vunpack.c.h.b16 %v2455
    %v2491 = vunpack.c.l.b16 %v2456
    %v2492 = vunpack.c.h.b16 %v2456
    %v2493 = vunpack.c.l.b16 %v2457
    %v2494 = vunpack.c.h.b16 %v2457
    %v2495 = vunpack.c.l.b16 %v2458
    %v2496 = vunpack.c.h.b16 %v2458
    %v2497 = vunpack.c.l.b16 %v2459
    %v2498 = vunpack.c.h.b16 %v2459
    %v2499 = vunpack.c.l.b16 %v2460
    %v2500 = vunpack.c.h.b16 %v2460
    %v2501 = vunpack.c.l.b16 %v2461
    %v2502 = vunpack.c.h.b16 %v2461
    %v2503 = vunpack.c.l.b16 %v2462
    %v2504 = vunpack.c.h.b16 %v2462
    %v2505 = vunpack.c.l.b16 %v2463
    %v2506 = vunpack.c.h.b16 %v2463
    %v2507 = vunpack.c.l.b16 %v2464
    %v2508 = vunpack.c.h.b16 %v2464
    %v2509 = vunpack.c.l.b16 %v2465
    %v2510 = vunpack.c.h.b16 %v2465
    %v2511 = vunpack.c.l.b16 %v2466
    %v2512 = vunpack.c.h.b16 %v2466
    %v2513 = vunpack.c.l.b16 %v2467
    %v2514 = vunpack.c.h.b16 %v2467
    %v2515 = vunpack.c.l.b16 %v2468
    %v2516 = vunpack.c.h.b16 %v2468
    %v2517 = vpack.c.b16 %v2493, %v2485
    %v2518 = vpack.c.b16 %v2494, %v2486
    %v2519 = vpack.c.b16 %v2495, %v2487
    %v2520 = vpack.c.b16 %v2496, %v2488
    %v2521 = vpack.c.b16 %v2497, %v2489
    %v2522 = vpack.c.b16 %v2498, %v2490
    %v2523 = vpack.c.b16 %v2499, %v2491
    %v2524 = vpack.c.b16 %v2500, %v2492
    %v2525 = vpack.c.b16 %v2509, %v2501
    %v2526 = vpack.c.b16 %v2510, %v2502
    %v2527 = vpack.c.b16 %v2511, %v2503
    %v2528 = vpack.c.b16 %v2512, %v2504
    %v2529 = vpack.c.b16 %v2513, %v2505
    %v2530 = vpack.c.b16 %v2514, %v2506
    %v2531 = vpack.c.b16 %v2515, %v2507
    %v2532 = vpack.c.b16 %v2516, %v2508
    %v2550 = vsel %vm377, %v2451, 0
    %2552 = vmatprep.subr.bf16.mxu0 %v2518
    %2553 = vmatpush1.bf16.msra.mxu0 %v2517
    %2554 = vmatprep.subr.bf16.mxu0 %v2526
    %2555 = vmatpush1.bf16.msra.mxu0 %v2525
    %2556 = vmatprep.subr.bf16.mxu0 0
    %2557 = vmatpush1.bf16.msra.mxu0 0
    %2558 = vmatprep.subr.bf16.mxu0 0
    %2559 = vmatpush1.bf16.msra.mxu0 0
    %2560 = vmatprep.subr.bf16.mxu0 0
    %2561 = vmatpush1.bf16.msra.mxu0 0
    %2562 = vmatprep.subr.bf16.mxu0 0
    %2563 = vmatpush1.bf16.msra.mxu0 0
    %2564 = vmatprep.subr.bf16.mxu0 0
    %2565 = vmatpush1.bf16.msra.mxu0 0
    %2566 = vmatprep.subr.bf16.mxu0 0
    %2567 = vmatpush1.bf16.msra.mxu0 0
    %2568 = vmatprep.subr.bf16.mxu0 0
    %2569 = vmatpush1.bf16.msra.mxu0 0
    %2570 = vmatprep.subr.bf16.mxu0 0
    %2571 = vmatpush1.bf16.msra.mxu0 0
    %2572 = vmatprep.subr.bf16.mxu0 0
    %2573 = vmatpush1.bf16.msra.mxu0 0
    %2574 = vmatprep.subr.bf16.mxu0 0
    %2575 = vmatpush1.bf16.msra.mxu0 0
    %2576 = vmatprep.subr.bf16.mxu0 0
    %2577 = vmatpush1.bf16.msra.mxu0 0
    %2578 = vmatprep.subr.bf16.mxu0 0
    %2579 = vmatpush1.bf16.msra.mxu0 0
    %2580 = vmatprep.subr.bf16.mxu0 0
    %2581 = vmatpush1.bf16.msra.mxu0 0
    %2582 = vmatprep.subr.bf16.mxu0 0
    %2583 = vmatpush1.bf16.msra.mxu0 0
    %2584 = vmatprep.mubr.bf16.mxu0 0
    %2585 = vmatmul.mubr.bf16.gmra.mrb[0].mxu0 %v2550
    %v2586 = vpop.f32.mrb[0].mxu0
    %v2587 = vadd.f32 0.0, %v2586
    %v2588 = vpop.f32.mrb[0].mxu0
    %v2589 = vadd.f32 0.0, %v2588
    %v2590 = vpop.f32.mrb[0].mxu0
    %v2591 = vpop.f32.mrb[0].mxu0
    %2592 = vdwg.mxu0
    %2593 = vmatprep.subr.bf16.mxu0 %v2520
    %2594 = vmatpush1.bf16.msra.mxu0 %v2519
    %2595 = vmatprep.subr.bf16.mxu0 %v2528
    %2596 = vmatpush1.bf16.msra.mxu0 %v2527
    %2597 = vmatprep.subr.bf16.mxu0 0
    %2598 = vmatpush1.bf16.msra.mxu0 0
    %2599 = vmatprep.subr.bf16.mxu0 0
    %2600 = vmatpush1.bf16.msra.mxu0 0
    %2601 = vmatprep.subr.bf16.mxu0 0
    %2602 = vmatpush1.bf16.msra.mxu0 0
    %2603 = vmatprep.subr.bf16.mxu0 0
    %2604 = vmatpush1.bf16.msra.mxu0 0
    %2605 = vmatprep.subr.bf16.mxu0 0
    %2606 = vmatpush1.bf16.msra.mxu0 0
    %2607 = vmatprep.subr.bf16.mxu0 0
    %2608 = vmatpush1.bf16.msra.mxu0 0
    %2609 = vmatprep.subr.bf16.mxu0 0
    %2610 = vmatpush1.bf16.msra.mxu0 0
    %2611 = vmatprep.subr.bf16.mxu0 0
    %2612 = vmatpush1.bf16.msra.mxu0 0
    %2613 = vmatprep.subr.bf16.mxu0 0
    %2614 = vmatpush1.bf16.msra.mxu0 0
    %2615 = vmatprep.subr.bf16.mxu0 0
    %2616 = vmatpush1.bf16.msra.mxu0 0
    %2617 = vmatprep.subr.bf16.mxu0 0
    %2618 = vmatpush1.bf16.msra.mxu0 0
    %2619 = vmatprep.subr.bf16.mxu0 0
    %2620 = vmatpush1.bf16.msra.mxu0 0
    %2621 = vmatprep.subr.bf16.mxu0 0
    %2622 = vmatpush1.bf16.msra.mxu0 0
    %2623 = vmatprep.subr.bf16.mxu0 0
    %2624 = vmatpush1.bf16.msra.mxu0 0
    %2625 = vmatprep.mubr.bf16.mxu0 0
    %2626 = vmatmul.mubr.bf16.gmra.mrb[0].mxu0 %v2550
    %v2627 = vpop.f32.mrb[0].mxu0
    %v2628 = vadd.f32 0.0, %v2627
    %v2629 = vpop.f32.mrb[0].mxu0
    %v2630 = vadd.f32 0.0, %v2629
    %v2631 = vpop.f32.mrb[0].mxu0
    %v2632 = vpop.f32.mrb[0].mxu0
    %2633 = vdwg.mxu0
    %2634 = vmatprep.subr.bf16.mxu0 %v2522
    %2635 = vmatpush1.bf16.msra.mxu0 %v2521
    %2636 = vmatprep.subr.bf16.mxu0 %v2530
    %2637 = vmatpush1.bf16.msra.mxu0 %v2529
    %2638 = vmatprep.subr.bf16.mxu0 0
    %2639 = vmatpush1.bf16.msra.mxu0 0
    %2640 = vmatprep.subr.bf16.mxu0 0
    %2641 = vmatpush1.bf16.msra.mxu0 0
    %2642 = vmatprep.subr.bf16.mxu0 0
    %2643 = vmatpush1.bf16.msra.mxu0 0
    %2644 = vmatprep.subr.bf16.mxu0 0
    %2645 = vmatpush1.bf16.msra.mxu0 0
    %2646 = vmatprep.subr.bf16.mxu0 0
    %2647 = vmatpush1.bf16.msra.mxu0 0
    %2648 = vmatprep.subr.bf16.mxu0 0
    %2649 = vmatpush1.bf16.msra.mxu0 0
    %2650 = vmatprep.subr.bf16.mxu0 0
    %2651 = vmatpush1.bf16.msra.mxu0 0
    %2652 = vmatprep.subr.bf16.mxu0 0
    %2653 = vmatpush1.bf16.msra.mxu0 0
    %2654 = vmatprep.subr.bf16.mxu0 0
    %2655 = vmatpush1.bf16.msra.mxu0 0
    %2656 = vmatprep.subr.bf16.mxu0 0
    %2657 = vmatpush1.bf16.msra.mxu0 0
    %2658 = vmatprep.subr.bf16.mxu0 0
    %2659 = vmatpush1.bf16.msra.mxu0 0
    %2660 = vmatprep.subr.bf16.mxu0 0
    %2661 = vmatpush1.bf16.msra.mxu0 0
    %2662 = vmatprep.subr.bf16.mxu0 0
    %2663 = vmatpush1.bf16.msra.mxu0 0
    %2664 = vmatprep.subr.bf16.mxu0 0
    %2665 = vmatpush1.bf16.msra.mxu0 0
    %2666 = vmatprep.mubr.bf16.mxu0 0
    %2667 = vmatmul.mubr.bf16.gmra.mrb[0].mxu0 %v2550
    %v2668 = vpop.f32.mrb[0].mxu0
    %v2669 = vadd.f32 0.0, %v2668
    %v2670 = vpop.f32.mrb[0].mxu0
    %v2671 = vadd.f32 0.0, %v2670
    %v2672 = vpop.f32.mrb[0].mxu0
    %v2673 = vpop.f32.mrb[0].mxu0
    %2674 = vdwg.mxu0
    %2675 = vmatprep.subr.bf16.mxu0 %v2524
    %2676 = vmatpush1.bf16.msra.mxu0 %v2523
    %2677 = vmatprep.subr.bf16.mxu0 %v2532
    %2678 = vmatpush1.bf16.msra.mxu0 %v2531
    %2679 = vmatprep.subr.bf16.mxu0 0
    %2680 = vmatpush1.bf16.msra.mxu0 0
    %2681 = vmatprep.subr.bf16.mxu0 0
    %2682 = vmatpush1.bf16.msra.mxu0 0
    %2683 = vmatprep.subr.bf16.mxu0 0
    %2684 = vmatpush1.bf16.msra.mxu0 0
    %2685 = vmatprep.subr.bf16.mxu0 0
    %2686 = vmatpush1.bf16.msra.mxu0 0
    %2687 = vmatprep.subr.bf16.mxu0 0
    %2688 = vmatpush1.bf16.msra.mxu0 0
    %2689 = vmatprep.subr.bf16.mxu0 0
    %2690 = vmatpush1.bf16.msra.mxu0 0
    %2691 = vmatprep.subr.bf16.mxu0 0
    %2692 = vmatpush1.bf16.msra.mxu0 0
    %2693 = vmatprep.subr.bf16.mxu0 0
    %2694 = vmatpush1.bf16.msra.mxu0 0
    %2695 = vmatprep.subr.bf16.mxu0 0
    %2696 = vmatpush1.bf16.msra.mxu0 0
    %2697 = vmatprep.subr.bf16.mxu0 0
    %2698 = vmatpush1.bf16.msra.mxu0 0
    %2699 = vmatprep.subr.bf16.mxu0 0
    %2700 = vmatpush1.bf16.msra.mxu0 0
    %2701 = vmatprep.subr.bf16.mxu0 0
    %2702 = vmatpush1.bf16.msra.mxu0 0
    %2703 = vmatprep.subr.bf16.mxu0 0
    %2704 = vmatpush1.bf16.msra.mxu0 0
    %2705 = vmatprep.subr.bf16.mxu0 0
    %2706 = vmatpush1.bf16.msra.mxu0 0
    %2707 = vmatprep.mubr.bf16.mxu0 0
    %2708 = vmatmul.mubr.bf16.gmra.mrb[0].mxu0 %v2550
    %v2709 = vpop.f32.mrb[0].mxu0
    %v2710 = vadd.f32 0.0, %v2709
    %v2711 = vpop.f32.mrb[0].mxu0
    %v2712 = vadd.f32 0.0, %v2711
    %v2713 = vpop.f32.mrb[0].mxu0
    %v2714 = vpop.f32.mrb[0].mxu0
    %2715 = vdwg.mxu0
    %v2716 = vadd.f32 %v2394, %v2587
    %v2717 = vadd.f32 %v2395, %v2589
    %v2718 = vadd.f32 %v2396, %v2628
    %v2719 = vadd.f32 %v2397, %v2630
    %v2720 = vadd.f32 %v2398, %v2669
    %v2721 = vadd.f32 %v2399, %v2671
    %v2722 = vadd.f32 %v2400, %v2710
    %v2723 = vadd.f32 %v2401, %v2712
    %2724 = vset.pattern.permute.xlu0 8
    %2725 = vperm.xlu0 %2724, %v104
    %v2726 = vpop.permute.xlu0 %2725
    %vm2727 = vcmp.eq.s32.totalorder %v119, %v2726
    %v2728 = vsel %vm2727, 1.0, 0.0
    %v2729 = vpack.c.bf16 %v2728, %v2728
    %v2731 = vsel %vm165, %v2729, 0
    %2733 = vmatprep.subr.bf16.mxu0 0
    %2734 = vmatpush1.bf16.msra.mxu0 %v152
    %2735 = vmatprep.subr.bf16.mxu0 0
    %2736 = vmatpush1.bf16.msra.mxu0 %v153
    %2737 = vmatprep.subr.bf16.mxu0 0
    %2738 = vmatpush1.bf16.msra.mxu0 %v154
    %2739 = vmatprep.subr.bf16.mxu0 0
    %2740 = vmatpush1.bf16.msra.mxu0 %v155
    %2741 = vmatprep.subr.bf16.mxu0 0
    %2742 = vmatpush1.bf16.msra.mxu0 %v156
    %2743 = vmatprep.subr.bf16.mxu0 0
    %2744 = vmatpush1.bf16.msra.mxu0 %v157
    %2745 = vmatprep.subr.bf16.mxu0 0
    %2746 = vmatpush1.bf16.msra.mxu0 %v171
    %2747 = vmatprep.subr.bf16.mxu0 0
    %2748 = vmatpush1.bf16.msra.mxu0 0
    %2749 = vmatprep.subr.bf16.mxu0 0
    %2750 = vmatpush1.bf16.msra.mxu0 0
    %2751 = vmatprep.subr.bf16.mxu0 0
    %2752 = vmatpush1.bf16.msra.mxu0 0
    %2753 = vmatprep.subr.bf16.mxu0 0
    %2754 = vmatpush1.bf16.msra.mxu0 0
    %2755 = vmatprep.subr.bf16.mxu0 0
    %2756 = vmatpush1.bf16.msra.mxu0 0
    %2757 = vmatprep.subr.bf16.mxu0 0
    %2758 = vmatpush1.bf16.msra.mxu0 0
    %2759 = vmatprep.subr.bf16.mxu0 0
    %2760 = vmatpush1.bf16.msra.mxu0 0
    %2761 = vmatprep.subr.bf16.mxu0 0
    %2762 = vmatpush1.bf16.msra.mxu0 0
    %2763 = vmatprep.subr.bf16.mxu0 0
    %2764 = vmatpush1.bf16.msra.mxu0 0
    %2765 = vmatprep.mubr.bf16.mxu0 0
    %2766 = vmatmul.mubr.bf16.gmra.mrb[0].mxu0 %v2731
    %v2767 = vpop.f32.mrb[0].mxu0
    %v2768 = vadd.f32 0.0, %v2767
    %v2769 = vpop.f32.mrb[0].mxu0
    %v2770 = vpop.f32.mrb[0].mxu0
    %v2771 = vpop.f32.mrb[0].mxu0
    %2772 = vdwg.mxu0
    %v2773 = vpack.c.bf16 %v2768, %v2768
    %s2774 = scalar_lea.vmem [#allocation4], 1024
    %v2775 = vld [vmem:[%s2774] sm:$0xff]
    %v2776 = vld [vmem:[%s2774 + $0x8] sm:$0xff]
    %v2777 = vld [vmem:[%s2774 + $0x10] sm:$0xff]
    %v2778 = vld [vmem:[%s2774 + $0x18] sm:$0xff]
    %v2779 = vld [vmem:[%s2774 + $0x20] sm:$0xff]
    %v2780 = vld [vmem:[%s2774 + $0x28] sm:$0xff]
    %v2781 = vld [vmem:[%s2774 + $0x30] sm:$0xff]
    %v2782 = vld [vmem:[%s2774 + $0x38] sm:$0xff]
    %v2783 = vld [vmem:[%s2774 + $0x40] sm:$0xff]
    %v2784 = vld [vmem:[%s2774 + $0x48] sm:$0xff]
    %v2785 = vld [vmem:[%s2774 + $0x50] sm:$0xff]
    %v2786 = vld [vmem:[%s2774 + $0x58] sm:$0xff]
    %v2787 = vld [vmem:[%s2774 + $0x60] sm:$0xff]
    %v2788 = vld [vmem:[%s2774 + $0x68] sm:$0xff]
    %v2789 = vld [vmem:[%s2774 + $0x70] sm:$0xff]
    %v2790 = vld [vmem:[%s2774 + $0x78] sm:$0xff]
    %v2807 = vunpack.c.l.b16 %v2775
    %v2808 = vunpack.c.h.b16 %v2775
    %v2809 = vunpack.c.l.b16 %v2776
    %v2810 = vunpack.c.h.b16 %v2776
    %v2811 = vunpack.c.l.b16 %v2777
    %v2812 = vunpack.c.h.b16 %v2777
    %v2813 = vunpack.c.l.b16 %v2778
    %v2814 = vunpack.c.h.b16 %v2778
    %v2815 = vunpack.c.l.b16 %v2779
    %v2816 = vunpack.c.h.b16 %v2779
    %v2817 = vunpack.c.l.b16 %v2780
    %v2818 = vunpack.c.h.b16 %v2780
    %v2819 = vunpack.c.l.b16 %v2781
    %v2820 = vunpack.c.h.b16 %v2781
    %v2821 = vunpack.c.l.b16 %v2782
    %v2822 = vunpack.c.h.b16 %v2782
    %v2823 = vunpack.c.l.b16 %v2783
    %v2824 = vunpack.c.h.b16 %v2783
    %v2825 = vunpack.c.l.b16 %v2784
    %v2826 = vunpack.c.h.b16 %v2784
    %v2827 = vunpack.c.l.b16 %v2785
    %v2828 = vunpack.c.h.b16 %v2785
    %v2829 = vunpack.c.l.b16 %v2786
    %v2830 = vunpack.c.h.b16 %v2786
    %v2831 = vunpack.c.l.b16 %v2787
    %v2832 = vunpack.c.h.b16 %v2787
    %v2833 = vunpack.c.l.b16 %v2788
    %v2834 = vunpack.c.h.b16 %v2788
    %v2835 = vunpack.c.l.b16 %v2789
    %v2836 = vunpack.c.h.b16 %v2789
    %v2837 = vunpack.c.l.b16 %v2790
    %v2838 = vunpack.c.h.b16 %v2790
    %v2839 = vpack.c.b16 %v2815, %v2807
    %v2840 = vpack.c.b16 %v2816, %v2808
    %v2841 = vpack.c.b16 %v2817, %v2809
    %v2842 = vpack.c.b16 %v2818, %v2810
    %v2843 = vpack.c.b16 %v2819, %v2811
    %v2844 = vpack.c.b16 %v2820, %v2812
    %v2845 = vpack.c.b16 %v2821, %v2813
    %v2846 = vpack.c.b16 %v2822, %v2814
    %v2847 = vpack.c.b16 %v2831, %v2823
    %v2848 = vpack.c.b16 %v2832, %v2824
    %v2849 = vpack.c.b16 %v2833, %v2825
    %v2850 = vpack.c.b16 %v2834, %v2826
    %v2851 = vpack.c.b16 %v2835, %v2827
    %v2852 = vpack.c.b16 %v2836, %v2828
    %v2853 = vpack.c.b16 %v2837, %v2829
    %v2854 = vpack.c.b16 %v2838, %v2830
    %v2872 = vsel %vm377, %v2773, 0
    %2874 = vmatprep.subr.bf16.mxu0 %v2840
    %2875 = vmatpush1.bf16.msra.mxu0 %v2839
    %2876 = vmatprep.subr.bf16.mxu0 %v2848
    %2877 = vmatpush1.bf16.msra.mxu0 %v2847
    %2878 = vmatprep.subr.bf16.mxu0 0
    %2879 = vmatpush1.bf16.msra.mxu0 0
    %2880 = vmatprep.subr.bf16.mxu0 0
    %2881 = vmatpush1.bf16.msra.mxu0 0
    %2882 = vmatprep.subr.bf16.mxu0 0
    %2883 = vmatpush1.bf16.msra.mxu0 0
    %2884 = vmatprep.subr.bf16.mxu0 0
    %2885 = vmatpush1.bf16.msra.mxu0 0
    %2886 = vmatprep.subr.bf16.mxu0 0
    %2887 = vmatpush1.bf16.msra.mxu0 0
    %2888 = vmatprep.subr.bf16.mxu0 0
    %2889 = vmatpush1.bf16.msra.mxu0 0
    %2890 = vmatprep.subr.bf16.mxu0 0
    %2891 = vmatpush1.bf16.msra.mxu0 0
    %2892 = vmatprep.subr.bf16.mxu0 0
    %2893 = vmatpush1.bf16.msra.mxu0 0
    %2894 = vmatprep.subr.bf16.mxu0 0
    %2895 = vmatpush1.bf16.msra.mxu0 0
    %2896 = vmatprep.subr.bf16.mxu0 0
    %2897 = vmatpush1.bf16.msra.mxu0 0
    %2898 = vmatprep.subr.bf16.mxu0 0
    %2899 = vmatpush1.bf16.msra.mxu0 0
    %2900 = vmatprep.subr.bf16.mxu0 0
    %2901 = vmatpush1.bf16.msra.mxu0 0
    %2902 = vmatprep.subr.bf16.mxu0 0
    %2903 = vmatpush1.bf16.msra.mxu0 0
    %2904 = vmatprep.subr.bf16.mxu0 0
    %2905 = vmatpush1.bf16.msra.mxu0 0
    %2906 = vmatprep.mubr.bf16.mxu0 0
    %2907 = vmatmul.mubr.bf16.gmra.mrb[0].mxu0 %v2872
    %v2908 = vpop.f32.mrb[0].mxu0
    %v2909 = vadd.f32 0.0, %v2908
    %v2910 = vpop.f32.mrb[0].mxu0
    %v2911 = vadd.f32 0.0, %v2910
    %v2912 = vpop.f32.mrb[0].mxu0
    %v2913 = vpop.f32.mrb[0].mxu0
    %2914 = vdwg.mxu0
    %2915 = vmatprep.subr.bf16.mxu0 %v2842
    %2916 = vmatpush1.bf16.msra.mxu0 %v2841
    %2917 = vmatprep.subr.bf16.mxu0 %v2850
    %2918 = vmatpush1.bf16.msra.mxu0 %v2849
    %2919 = vmatprep.subr.bf16.mxu0 0
    %2920 = vmatpush1.bf16.msra.mxu0 0
    %2921 = vmatprep.subr.bf16.mxu0 0
    %2922 = vmatpush1.bf16.msra.mxu0 0
    %2923 = vmatprep.subr.bf16.mxu0 0
    %2924 = vmatpush1.bf16.msra.mxu0 0
    %2925 = vmatprep.subr.bf16.mxu0 0
    %2926 = vmatpush1.bf16.msra.mxu0 0
    %2927 = vmatprep.subr.bf16.mxu0 0
    %2928 = vmatpush1.bf16.msra.mxu0 0
    %2929 = vmatprep.subr.bf16.mxu0 0
    %2930 = vmatpush1.bf16.msra.mxu0 0
    %2931 = vmatprep.subr.bf16.mxu0 0
    %2932 = vmatpush1.bf16.msra.mxu0 0
    %2933 = vmatprep.subr.bf16.mxu0 0
    %2934 = vmatpush1.bf16.msra.mxu0 0
    %2935 = vmatprep.subr.bf16.mxu0 0
    %2936 = vmatpush1.bf16.msra.mxu0 0
    %2937 = vmatprep.subr.bf16.mxu0 0
    %2938 = vmatpush1.bf16.msra.mxu0 0
    %2939 = vmatprep.subr.bf16.mxu0 0
    %2940 = vmatpush1.bf16.msra.mxu0 0
    %2941 = vmatprep.subr.bf16.mxu0 0
    %2942 = vmatpush1.bf16.msra.mxu0 0
    %2943 = vmatprep.subr.bf16.mxu0 0
    %2944 = vmatpush1.bf16.msra.mxu0 0
    %2945 = vmatprep.subr.bf16.mxu0 0
    %2946 = vmatpush1.bf16.msra.mxu0 0
    %2947 = vmatprep.mubr.bf16.mxu0 0
    %2948 = vmatmul.mubr.bf16.gmra.mrb[0].mxu0 %v2872
    %v2949 = vpop.f32.mrb[0].mxu0
    %v2950 = vadd.f32 0.0, %v2949
    %v2951 = vpop.f32.mrb[0].mxu0
    %v2952 = vadd.f32 0.0, %v2951
    %v2953 = vpop.f32.mrb[0].mxu0
    %v2954 = vpop.f32.mrb[0].mxu0
    %2955 = vdwg.mxu0
    %2956 = vmatprep.subr.bf16.mxu0 %v2844
    %2957 = vmatpush1.bf16.msra.mxu0 %v2843
    %2958 = vmatprep.subr.bf16.mxu0 %v2852
    %2959 = vmatpush1.bf16.msra.mxu0 %v2851
    %2960 = vmatprep.subr.bf16.mxu0 0
    %2961 = vmatpush1.bf16.msra.mxu0 0
    %2962 = vmatprep.subr.bf16.mxu0 0
    %2963 = vmatpush1.bf16.msra.mxu0 0
    %2964 = vmatprep.subr.bf16.mxu0 0
    %2965 = vmatpush1.bf16.msra.mxu0 0
    %2966 = vmatprep.subr.bf16.mxu0 0
    %2967 = vmatpush1.bf16.msra.mxu0 0
    %2968 = vmatprep.subr.bf16.mxu0 0
    %2969 = vmatpush1.bf16.msra.mxu0 0
    %2970 = vmatprep.subr.bf16.mxu0 0
    %2971 = vmatpush1.bf16.msra.mxu0 0
    %2972 = vmatprep.subr.bf16.mxu0 0
    %2973 = vmatpush1.bf16.msra.mxu0 0
    %2974 = vmatprep.subr.bf16.mxu0 0
    %2975 = vmatpush1.bf16.msra.mxu0 0
    %2976 = vmatprep.subr.bf16.mxu0 0
    %2977 = vmatpush1.bf16.msra.mxu0 0
    %2978 = vmatprep.subr.bf16.mxu0 0
    %2979 = vmatpush1.bf16.msra.mxu0 0
    %2980 = vmatprep.subr.bf16.mxu0 0
    %2981 = vmatpush1.bf16.msra.mxu0 0
    %2982 = vmatprep.subr.bf16.mxu0 0
    %2983 = vmatpush1.bf16.msra.mxu0 0
    %2984 = vmatprep.subr.bf16.mxu0 0
    %2985 = vmatpush1.bf16.msra.mxu0 0
    %2986 = vmatprep.subr.bf16.mxu0 0
    %2987 = vmatpush1.bf16.msra.mxu0 0
    %2988 = vmatprep.mubr.bf16.mxu0 0
    %2989 = vmatmul.mubr.bf16.gmra.mrb[0].mxu0 %v2872
    %v2990 = vpop.f32.mrb[0].mxu0
    %v2991 = vadd.f32 0.0, %v2990
    %v2992 = vpop.f32.mrb[0].mxu0
    %v2993 = vadd.f32 0.0, %v2992
    %v2994 = vpop.f32.mrb[0].mxu0
    %v2995 = vpop.f32.mrb[0].mxu0
    %2996 = vdwg.mxu0
    %2997 = vmatprep.subr.bf16.mxu0 %v2846
    %2998 = vmatpush1.bf16.msra.mxu0 %v2845
    %2999 = vmatprep.subr.bf16.mxu0 %v2854
    %3000 = vmatpush1.bf16.msra.mxu0 %v2853
    %3001 = vmatprep.subr.bf16.mxu0 0
    %3002 = vmatpush1.bf16.msra.mxu0 0
    %3003 = vmatprep.subr.bf16.mxu0 0
    %3004 = vmatpush1.bf16.msra.mxu0 0
    %3005 = vmatprep.subr.bf16.mxu0 0
    %3006 = vmatpush1.bf16.msra.mxu0 0
    %3007 = vmatprep.subr.bf16.mxu0 0
    %3008 = vmatpush1.bf16.msra.mxu0 0
    %3009 = vmatprep.subr.bf16.mxu0 0
    %3010 = vmatpush1.bf16.msra.mxu0 0
    %3011 = vmatprep.subr.bf16.mxu0 0
    %3012 = vmatpush1.bf16.msra.mxu0 0
    %3013 = vmatprep.subr.bf16.mxu0 0
    %3014 = vmatpush1.bf16.msra.mxu0 0
    %3015 = vmatprep.subr.bf16.mxu0 0
    %3016 = vmatpush1.bf16.msra.mxu0 0
    %3017 = vmatprep.subr.bf16.mxu0 0
    %3018 = vmatpush1.bf16.msra.mxu0 0
    %3019 = vmatprep.subr.bf16.mxu0 0
    %3020 = vmatpush1.bf16.msra.mxu0 0
    %3021 = vmatprep.subr.bf16.mxu0 0
    %3022 = vmatpush1.bf16.msra.mxu0 0
    %3023 = vmatprep.subr.bf16.mxu0 0
    %3024 = vmatpush1.bf16.msra.mxu0 0
    %3025 = vmatprep.subr.bf16.mxu0 0
    %3026 = vmatpush1.bf16.msra.mxu0 0
    %3027 = vmatprep.subr.bf16.mxu0 0
    %3028 = vmatpush1.bf16.msra.mxu0 0
    %3029 = vmatprep.mubr.bf16.mxu0 0
    %3030 = vmatmul.mubr.bf16.gmra.mrb[0].mxu0 %v2872
    %v3031 = vpop.f32.mrb[0].mxu0
    %v3032 = vadd.f32 0.0, %v3031
    %v3033 = vpop.f32.mrb[0].mxu0
    %v3034 = vadd.f32 0.0, %v3033
    %v3035 = vpop.f32.mrb[0].mxu0
    %v3036 = vpop.f32.mrb[0].mxu0
    %3037 = vdwg.mxu0
    %v3038 = vadd.f32 %v2716, %v2909
    %v3039 = vadd.f32 %v2717, %v2911
    %v3040 = vadd.f32 %v2718, %v2950
    %v3041 = vadd.f32 %v2719, %v2952
    %v3042 = vadd.f32 %v2720, %v2991
    %v3043 = vadd.f32 %v2721, %v2993
    %v3044 = vadd.f32 %v2722, %v3032
    %v3045 = vadd.f32 %v2723, %v3034
    %3046 = vset.pattern.permute.xlu0 9
    %3047 = vperm.xlu0 %3046, %v104
    %v3048 = vpop.permute.xlu0 %3047
    %vm3049 = vcmp.eq.s32.totalorder %v119, %v3048
    %v3050 = vsel %vm3049, 1.0, 0.0
    %v3051 = vpack.c.bf16 %v3050, %v3050
    %v3053 = vsel %vm165, %v3051, 0
    %3055 = vmatprep.subr.bf16.mxu0 0
    %3056 = vmatpush1.bf16.msra.mxu0 %v152
    %3057 = vmatprep.subr.bf16.mxu0 0
    %3058 = vmatpush1.bf16.msra.mxu0 %v153
    %3059 = vmatprep.subr.bf16.mxu0 0
    %3060 = vmatpush1.bf16.msra.mxu0 %v154
    %3061 = vmatprep.subr.bf16.mxu0 0
    %3062 = vmatpush1.bf16.msra.mxu0 %v155
    %3063 = vmatprep.subr.bf16.mxu0 0
    %3064 = vmatpush1.bf16.msra.mxu0 %v156
    %3065 = vmatprep.subr.bf16.mxu0 0
    %3066 = vmatpush1.bf16.msra.mxu0 %v157
    %3067 = vmatprep.subr.bf16.mxu0 0
    %3068 = vmatpush1.bf16.msra.mxu0 %v171
    %3069 = vmatprep.subr.bf16.mxu0 0
    %3070 = vmatpush1.bf16.msra.mxu0 0
    %3071 = vmatprep.subr.bf16.mxu0 0
    %3072 = vmatpush1.bf16.msra.mxu0 0
    %3073 = vmatprep.subr.bf16.mxu0 0
    %3074 = vmatpush1.bf16.msra.mxu0 0
    %3075 = vmatprep.subr.bf16.mxu0 0
    %3076 = vmatpush1.bf16.msra.mxu0 0
    %3077 = vmatprep.subr.bf16.mxu0 0
    %3078 = vmatpush1.bf16.msra.mxu0 0
    %3079 = vmatprep.subr.bf16.mxu0 0
    %3080 = vmatpush1.bf16.msra.mxu0 0
    %3081 = vmatprep.subr.bf16.mxu0 0
    %3082 = vmatpush1.bf16.msra.mxu0 0
    %3083 = vmatprep.subr.bf16.mxu0 0
    %3084 = vmatpush1.bf16.msra.mxu0 0
    %3085 = vmatprep.subr.bf16.mxu0 0
    %3086 = vmatpush1.bf16.msra.mxu0 0
    %3087 = vmatprep.mubr.bf16.mxu0 0
    %3088 = vmatmul.mubr.bf16.gmra.mrb[0].mxu0 %v3053
    %v3089 = vpop.f32.mrb[0].mxu0
    %v3090 = vadd.f32 0.0, %v3089
    %v3091 = vpop.f32.mrb[0].mxu0
    %v3092 = vpop.f32.mrb[0].mxu0
    %v3093 = vpop.f32.mrb[0].mxu0
    %3094 = vdwg.mxu0
    %v3095 = vpack.c.bf16 %v3090, %v3090
    %s3096 = scalar_lea.vmem [#allocation4], 1152
    %v3097 = vld [vmem:[%s3096] sm:$0xff]
    %v3098 = vld [vmem:[%s3096 + $0x8] sm:$0xff]
    %v3099 = vld [vmem:[%s3096 + $0x10] sm:$0xff]
    %v3100 = vld [vmem:[%s3096 + $0x18] sm:$0xff]
    %v3101 = vld [vmem:[%s3096 + $0x20] sm:$0xff]
    %v3102 = vld [vmem:[%s3096 + $0x28] sm:$0xff]
    %v3103 = vld [vmem:[%s3096 + $0x30] sm:$0xff]
    %v3104 = vld [vmem:[%s3096 + $0x38] sm:$0xff]
    %v3105 = vld [vmem:[%s3096 + $0x40] sm:$0xff]
    %v3106 = vld [vmem:[%s3096 + $0x48] sm:$0xff]
    %v3107 = vld [vmem:[%s3096 + $0x50] sm:$0xff]
    %v3108 = vld [vmem:[%s3096 + $0x58] sm:$0xff]
    %v3109 = vld [vmem:[%s3096 + $0x60] sm:$0xff]
    %v3110 = vld [vmem:[%s3096 + $0x68] sm:$0xff]
    %v3111 = vld [vmem:[%s3096 + $0x70] sm:$0xff]
    %v3112 = vld [vmem:[%s3096 + $0x78] sm:$0xff]
    %v3129 = vunpack.c.l.b16 %v3097
    %v3130 = vunpack.c.h.b16 %v3097
    %v3131 = vunpack.c.l.b16 %v3098
    %v3132 = vunpack.c.h.b16 %v3098
    %v3133 = vunpack.c.l.b16 %v3099
    %v3134 = vunpack.c.h.b16 %v3099
    %v3135 = vunpack.c.l.b16 %v3100
    %v3136 = vunpack.c.h.b16 %v3100
    %v3137 = vunpack.c.l.b16 %v3101
    %v3138 = vunpack.c.h.b16 %v3101
    %v3139 = vunpack.c.l.b16 %v3102
    %v3140 = vunpack.c.h.b16 %v3102
    %v3141 = vunpack.c.l.b16 %v3103
    %v3142 = vunpack.c.h.b16 %v3103
    %v3143 = vunpack.c.l.b16 %v3104
    %v3144 = vunpack.c.h.b16 %v3104
    %v3145 = vunpack.c.l.b16 %v3105
    %v3146 = vunpack.c.h.b16 %v3105
    %v3147 = vunpack.c.l.b16 %v3106
    %v3148 = vunpack.c.h.b16 %v3106
    %v3149 = vunpack.c.l.b16 %v3107
    %v3150 = vunpack.c.h.b16 %v3107
    %v3151 = vunpack.c.l.b16 %v3108
    %v3152 = vunpack.c.h.b16 %v3108
    %v3153 = vunpack.c.l.b16 %v3109
    %v3154 = vunpack.c.h.b16 %v3109
    %v3155 = vunpack.c.l.b16 %v3110
    %v3156 = vunpack.c.h.b16 %v3110
    %v3157 = vunpack.c.l.b16 %v3111
    %v3158 = vunpack.c.h.b16 %v3111
    %v3159 = vunpack.c.l.b16 %v3112
    %v3160 = vunpack.c.h.b16 %v3112
    %v3161 = vpack.c.b16 %v3137, %v3129
    %v3162 = vpack.c.b16 %v3138, %v3130
    %v3163 = vpack.c.b16 %v3139, %v3131
    %v3164 = vpack.c.b16 %v3140, %v3132
    %v3165 = vpack.c.b16 %v3141, %v3133
    %v3166 = vpack.c.b16 %v3142, %v3134
    %v3167 = vpack.c.b16 %v3143, %v3135
    %v3168 = vpack.c.b16 %v3144, %v3136
    %v3169 = vpack.c.b16 %v3153, %v3145
    %v3170 = vpack.c.b16 %v3154, %v3146
    %v3171 = vpack.c.b16 %v3155, %v3147
    %v3172 = vpack.c.b16 %v3156, %v3148
    %v3173 = vpack.c.b16 %v3157, %v3149
    %v3174 = vpack.c.b16 %v3158, %v3150
    %v3175 = vpack.c.b16 %v3159, %v3151
    %v3176 = vpack.c.b16 %v3160, %v3152
    %v3194 = vsel %vm377, %v3095, 0
    %3196 = vmatprep.subr.bf16.mxu0 %v3162
    %3197 = vmatpush1.bf16.msra.mxu0 %v3161
    %3198 = vmatprep.subr.bf16.mxu0 %v3170
    %3199 = vmatpush1.bf16.msra.mxu0 %v3169
    %3200 = vmatprep.subr.bf16.mxu0 0
    %3201 = vmatpush1.bf16.msra.mxu0 0
    %3202 = vmatprep.subr.bf16.mxu0 0
    %3203 = vmatpush1.bf16.msra.mxu0 0
    %3204 = vmatprep.subr.bf16.mxu0 0
    %3205 = vmatpush1.bf16.msra.mxu0 0
    %3206 = vmatprep.subr.bf16.mxu0 0
    %3207 = vmatpush1.bf16.msra.mxu0 0
    %3208 = vmatprep.subr.bf16.mxu0 0
    %3209 = vmatpush1.bf16.msra.mxu0 0
    %3210 = vmatprep.subr.bf16.mxu0 0
    %3211 = vmatpush1.bf16.msra.mxu0 0
    %3212 = vmatprep.subr.bf16.mxu0 0
    %3213 = vmatpush1.bf16.msra.mxu0 0
    %3214 = vmatprep.subr.bf16.mxu0 0
    %3215 = vmatpush1.bf16.msra.mxu0 0
    %3216 = vmatprep.subr.bf16.mxu0 0
    %3217 = vmatpush1.bf16.msra.mxu0 0
    %3218 = vmatprep.subr.bf16.mxu0 0
    %3219 = vmatpush1.bf16.msra.mxu0 0
    %3220 = vmatprep.subr.bf16.mxu0 0
    %3221 = vmatpush1.bf16.msra.mxu0 0
    %3222 = vmatprep.subr.bf16.mxu0 0
    %3223 = vmatpush1.bf16.msra.mxu0 0
    %3224 = vmatprep.subr.bf16.mxu0 0
    %3225 = vmatpush1.bf16.msra.mxu0 0
    %3226 = vmatprep.subr.bf16.mxu0 0
    %3227 = vmatpush1.bf16.msra.mxu0 0
    %3228 = vmatprep.mubr.bf16.mxu0 0
    %3229 = vmatmul.mubr.bf16.gmra.mrb[0].mxu0 %v3194
    %v3230 = vpop.f32.mrb[0].mxu0
    %v3231 = vadd.f32 0.0, %v3230
    %v3232 = vpop.f32.mrb[0].mxu0
    %v3233 = vadd.f32 0.0, %v3232
    %v3234 = vpop.f32.mrb[0].mxu0
    %v3235 = vpop.f32.mrb[0].mxu0
    %3236 = vdwg.mxu0
    %3237 = vmatprep.subr.bf16.mxu0 %v3164
    %3238 = vmatpush1.bf16.msra.mxu0 %v3163
    %3239 = vmatprep.subr.bf16.mxu0 %v3172
    %3240 = vmatpush1.bf16.msra.mxu0 %v3171
    %3241 = vmatprep.subr.bf16.mxu0 0
    %3242 = vmatpush1.bf16.msra.mxu0 0
    %3243 = vmatprep.subr.bf16.mxu0 0
    %3244 = vmatpush1.bf16.msra.mxu0 0
    %3245 = vmatprep.subr.bf16.mxu0 0
    %3246 = vmatpush1.bf16.msra.mxu0 0
    %3247 = vmatprep.subr.bf16.mxu0 0
    %3248 = vmatpush1.bf16.msra.mxu0 0
    %3249 = vmatprep.subr.bf16.mxu0 0
    %3250 = vmatpush1.bf16.msra.mxu0 0
    %3251 = vmatprep.subr.bf16.mxu0 0
    %3252 = vmatpush1.bf16.msra.mxu0 0
    %3253 = vmatprep.subr.bf16.mxu0 0
    %3254 = vmatpush1.bf16.msra.mxu0 0
    %3255 = vmatprep.subr.bf16.mxu0 0
    %3256 = vmatpush1.bf16.msra.mxu0 0
    %3257 = vmatprep.subr.bf16.mxu0 0
    %3258 = vmatpush1.bf16.msra.mxu0 0
    %3259 = vmatprep.subr.bf16.mxu0 0
    %3260 = vmatpush1.bf16.msra.mxu0 0
    %3261 = vmatprep.subr.bf16.mxu0 0
    %3262 = vmatpush1.bf16.msra.mxu0 0
    %3263 = vmatprep.subr.bf16.mxu0 0
    %3264 = vmatpush1.bf16.msra.mxu0 0
    %3265 = vmatprep.subr.bf16.mxu0 0
    %3266 = vmatpush1.bf16.msra.mxu0 0
    %3267 = vmatprep.subr.bf16.mxu0 0
    %3268 = vmatpush1.bf16.msra.mxu0 0
    %3269 = vmatprep.mubr.bf16.mxu0 0
    %3270 = vmatmul.mubr.bf16.gmra.mrb[0].mxu0 %v3194
    %v3271 = vpop.f32.mrb[0].mxu0
    %v3272 = vadd.f32 0.0, %v3271
    %v3273 = vpop.f32.mrb[0].mxu0
    %v3274 = vadd.f32 0.0, %v3273
    %v3275 = vpop.f32.mrb[0].mxu0
    %v3276 = vpop.f32.mrb[0].mxu0
    %3277 = vdwg.mxu0
    %3278 = vmatprep.subr.bf16.mxu0 %v3166
    %3279 = vmatpush1.bf16.msra.mxu0 %v3165
    %3280 = vmatprep.subr.bf16.mxu0 %v3174
    %3281 = vmatpush1.bf16.msra.mxu0 %v3173
    %3282 = vmatprep.subr.bf16.mxu0 0
    %3283 = vmatpush1.bf16.msra.mxu0 0
    %3284 = vmatprep.subr.bf16.mxu0 0
    %3285 = vmatpush1.bf16.msra.mxu0 0
    %3286 = vmatprep.subr.bf16.mxu0 0
    %3287 = vmatpush1.bf16.msra.mxu0 0
    %3288 = vmatprep.subr.bf16.mxu0 0
    %3289 = vmatpush1.bf16.msra.mxu0 0
    %3290 = vmatprep.subr.bf16.mxu0 0
    %3291 = vmatpush1.bf16.msra.mxu0 0
    %3292 = vmatprep.subr.bf16.mxu0 0
    %3293 = vmatpush1.bf16.msra.mxu0 0
    %3294 = vmatprep.subr.bf16.mxu0 0
    %3295 = vmatpush1.bf16.msra.mxu0 0
    %3296 = vmatprep.subr.bf16.mxu0 0
    %3297 = vmatpush1.bf16.msra.mxu0 0
    %3298 = vmatprep.subr.bf16.mxu0 0
    %3299 = vmatpush1.bf16.msra.mxu0 0
    %3300 = vmatprep.subr.bf16.mxu0 0
    %3301 = vmatpush1.bf16.msra.mxu0 0
    %3302 = vmatprep.subr.bf16.mxu0 0
    %3303 = vmatpush1.bf16.msra.mxu0 0
    %3304 = vmatprep.subr.bf16.mxu0 0
    %3305 = vmatpush1.bf16.msra.mxu0 0
    %3306 = vmatprep.subr.bf16.mxu0 0
    %3307 = vmatpush1.bf16.msra.mxu0 0
    %3308 = vmatprep.subr.bf16.mxu0 0
    %3309 = vmatpush1.bf16.msra.mxu0 0
    %3310 = vmatprep.mubr.bf16.mxu0 0
    %3311 = vmatmul.mubr.bf16.gmra.mrb[0].mxu0 %v3194
    %v3312 = vpop.f32.mrb[0].mxu0
    %v3313 = vadd.f32 0.0, %v3312
    %v3314 = vpop.f32.mrb[0].mxu0
    %v3315 = vadd.f32 0.0, %v3314
    %v3316 = vpop.f32.mrb[0].mxu0
    %v3317 = vpop.f32.mrb[0].mxu0
    %3318 = vdwg.mxu0
    %3319 = vmatprep.subr.bf16.mxu0 %v3168
    %3320 = vmatpush1.bf16.msra.mxu0 %v3167
    %3321 = vmatprep.subr.bf16.mxu0 %v3176
    %3322 = vmatpush1.bf16.msra.mxu0 %v3175
    %3323 = vmatprep.subr.bf16.mxu0 0
    %3324 = vmatpush1.bf16.msra.mxu0 0
    %3325 = vmatprep.subr.bf16.mxu0 0
    %3326 = vmatpush1.bf16.msra.mxu0 0
    %3327 = vmatprep.subr.bf16.mxu0 0
    %3328 = vmatpush1.bf16.msra.mxu0 0
    %3329 = vmatprep.subr.bf16.mxu0 0
    %3330 = vmatpush1.bf16.msra.mxu0 0
    %3331 = vmatprep.subr.bf16.mxu0 0
    %3332 = vmatpush1.bf16.msra.mxu0 0
    %3333 = vmatprep.subr.bf16.mxu0 0
    %3334 = vmatpush1.bf16.msra.mxu0 0
    %3335 = vmatprep.subr.bf16.mxu0 0
    %3336 = vmatpush1.bf16.msra.mxu0 0
    %3337 = vmatprep.subr.bf16.mxu0 0
    %3338 = vmatpush1.bf16.msra.mxu0 0
    %3339 = vmatprep.subr.bf16.mxu0 0
    %3340 = vmatpush1.bf16.msra.mxu0 0
    %3341 = vmatprep.subr.bf16.mxu0 0
    %3342 = vmatpush1.bf16.msra.mxu0 0
    %3343 = vmatprep.subr.bf16.mxu0 0
    %3344 = vmatpush1.bf16.msra.mxu0 0
    %3345 = vmatprep.subr.bf16.mxu0 0
    %3346 = vmatpush1.bf16.msra.mxu0 0
    %3347 = vmatprep.subr.bf16.mxu0 0
    %3348 = vmatpush1.bf16.msra.mxu0 0
    %3349 = vmatprep.subr.bf16.mxu0 0
    %3350 = vmatpush1.bf16.msra.mxu0 0
    %3351 = vmatprep.mubr.bf16.mxu0 0
    %3352 = vmatmul.mubr.bf16.gmra.mrb[0].mxu0 %v3194
    %v3353 = vpop.f32.mrb[0].mxu0
    %v3354 = vadd.f32 0.0, %v3353
    %v3355 = vpop.f32.mrb[0].mxu0
    %v3356 = vadd.f32 0.0, %v3355
    %v3357 = vpop.f32.mrb[0].mxu0
    %v3358 = vpop.f32.mrb[0].mxu0
    %3359 = vdwg.mxu0
    %v3360 = vadd.f32 %v3038, %v3231
    %v3361 = vadd.f32 %v3039, %v3233
    %v3362 = vadd.f32 %v3040, %v3272
    %v3363 = vadd.f32 %v3041, %v3274
    %v3364 = vadd.f32 %v3042, %v3313
    %v3365 = vadd.f32 %v3043, %v3315
    %v3366 = vadd.f32 %v3044, %v3354
    %v3367 = vadd.f32 %v3045, %v3356
    %3368 = vset.pattern.permute.xlu0 10
    %3369 = vperm.xlu0 %3368, %v104
    %v3370 = vpop.permute.xlu0 %3369
    %vm3371 = vcmp.eq.s32.totalorder %v119, %v3370
    %v3372 = vsel %vm3371, 1.0, 0.0
    %v3373 = vpack.c.bf16 %v3372, %v3372
    %v3375 = vsel %vm165, %v3373, 0
    %3377 = vmatprep.subr.bf16.mxu0 0
    %3378 = vmatpush1.bf16.msra.mxu0 %v152
    %3379 = vmatprep.subr.bf16.mxu0 0
    %3380 = vmatpush1.bf16.msra.mxu0 %v153
    %3381 = vmatprep.subr.bf16.mxu0 0
    %3382 = vmatpush1.bf16.msra.mxu0 %v154
    %3383 = vmatprep.subr.bf16.mxu0 0
    %3384 = vmatpush1.bf16.msra.mxu0 %v155
    %3385 = vmatprep.subr.bf16.mxu0 0
    %3386 = vmatpush1.bf16.msra.mxu0 %v156
    %3387 = vmatprep.subr.bf16.mxu0 0
    %3388 = vmatpush1.bf16.msra.mxu0 %v157
    %3389 = vmatprep.subr.bf16.mxu0 0
    %3390 = vmatpush1.bf16.msra.mxu0 %v171
    %3391 = vmatprep.subr.bf16.mxu0 0
    %3392 = vmatpush1.bf16.msra.mxu0 0
    %3393 = vmatprep.subr.bf16.mxu0 0
    %3394 = vmatpush1.bf16.msra.mxu0 0
    %3395 = vmatprep.subr.bf16.mxu0 0
    %3396 = vmatpush1.bf16.msra.mxu0 0
    %3397 = vmatprep.subr.bf16.mxu0 0
    %3398 = vmatpush1.bf16.msra.mxu0 0
    %3399 = vmatprep.subr.bf16.mxu0 0
    %3400 = vmatpush1.bf16.msra.mxu0 0
    %3401 = vmatprep.subr.bf16.mxu0 0
    %3402 = vmatpush1.bf16.msra.mxu0 0
    %3403 = vmatprep.subr.bf16.mxu0 0
    %3404 = vmatpush1.bf16.msra.mxu0 0
    %3405 = vmatprep.subr.bf16.mxu0 0
    %3406 = vmatpush1.bf16.msra.mxu0 0
    %3407 = vmatprep.subr.bf16.mxu0 0
    %3408 = vmatpush1.bf16.msra.mxu0 0
    %3409 = vmatprep.mubr.bf16.mxu0 0
    %3410 = vmatmul.mubr.bf16.gmra.mrb[0].mxu0 %v3375
    %v3411 = vpop.f32.mrb[0].mxu0
    %v3412 = vadd.f32 0.0, %v3411
    %v3413 = vpop.f32.mrb[0].mxu0
    %v3414 = vpop.f32.mrb[0].mxu0
    %v3415 = vpop.f32.mrb[0].mxu0
    %3416 = vdwg.mxu0
    %v3417 = vpack.c.bf16 %v3412, %v3412
    %s3418 = scalar_lea.vmem [#allocation4], 1280
    %v3419 = vld [vmem:[%s3418] sm:$0xff]
    %v3420 = vld [vmem:[%s3418 + $0x8] sm:$0xff]
    %v3421 = vld [vmem:[%s3418 + $0x10] sm:$0xff]
    %v3422 = vld [vmem:[%s3418 + $0x18] sm:$0xff]
    %v3423 = vld [vmem:[%s3418 + $0x20] sm:$0xff]
    %v3424 = vld [vmem:[%s3418 + $0x28] sm:$0xff]
    %v3425 = vld [vmem:[%s3418 + $0x30] sm:$0xff]
    %v3426 = vld [vmem:[%s3418 + $0x38] sm:$0xff]
    %v3427 = vld [vmem:[%s3418 + $0x40] sm:$0xff]
    %v3428 = vld [vmem:[%s3418 + $0x48] sm:$0xff]
    %v3429 = vld [vmem:[%s3418 + $0x50] sm:$0xff]
    %v3430 = vld [vmem:[%s3418 + $0x58] sm:$0xff]
    %v3431 = vld [vmem:[%s3418 + $0x60] sm:$0xff]
    %v3432 = vld [vmem:[%s3418 + $0x68] sm:$0xff]
    %v3433 = vld [vmem:[%s3418 + $0x70] sm:$0xff]
    %v3434 = vld [vmem:[%s3418 + $0x78] sm:$0xff]
    %v3451 = vunpack.c.l.b16 %v3419
    %v3452 = vunpack.c.h.b16 %v3419
    %v3453 = vunpack.c.l.b16 %v3420
    %v3454 = vunpack.c.h.b16 %v3420
    %v3455 = vunpack.c.l.b16 %v3421
    %v3456 = vunpack.c.h.b16 %v3421
    %v3457 = vunpack.c.l.b16 %v3422
    %v3458 = vunpack.c.h.b16 %v3422
    %v3459 = vunpack.c.l.b16 %v3423
    %v3460 = vunpack.c.h.b16 %v3423
    %v3461 = vunpack.c.l.b16 %v3424
    %v3462 = vunpack.c.h.b16 %v3424
    %v3463 = vunpack.c.l.b16 %v3425
    %v3464 = vunpack.c.h.b16 %v3425
    %v3465 = vunpack.c.l.b16 %v3426
    %v3466 = vunpack.c.h.b16 %v3426
    %v3467 = vunpack.c.l.b16 %v3427
    %v3468 = vunpack.c.h.b16 %v3427
    %v3469 = vunpack.c.l.b16 %v3428
    %v3470 = vunpack.c.h.b16 %v3428
    %v3471 = vunpack.c.l.b16 %v3429
    %v3472 = vunpack.c.h.b16 %v3429
    %v3473 = vunpack.c.l.b16 %v3430
    %v3474 = vunpack.c.h.b16 %v3430
    %v3475 = vunpack.c.l.b16 %v3431
    %v3476 = vunpack.c.h.b16 %v3431
    %v3477 = vunpack.c.l.b16 %v3432
    %v3478 = vunpack.c.h.b16 %v3432
    %v3479 = vunpack.c.l.b16 %v3433
    %v3480 = vunpack.c.h.b16 %v3433
    %v3481 = vunpack.c.l.b16 %v3434
    %v3482 = vunpack.c.h.b16 %v3434
    %v3483 = vpack.c.b16 %v3459, %v3451
    %v3484 = vpack.c.b16 %v3460, %v3452
    %v3485 = vpack.c.b16 %v3461, %v3453
    %v3486 = vpack.c.b16 %v3462, %v3454
    %v3487 = vpack.c.b16 %v3463, %v3455
    %v3488 = vpack.c.b16 %v3464, %v3456
    %v3489 = vpack.c.b16 %v3465, %v3457
    %v3490 = vpack.c.b16 %v3466, %v3458
    %v3491 = vpack.c.b16 %v3475, %v3467
    %v3492 = vpack.c.b16 %v3476, %v3468
    %v3493 = vpack.c.b16 %v3477, %v3469
    %v3494 = vpack.c.b16 %v3478, %v3470
    %v3495 = vpack.c.b16 %v3479, %v3471
    %v3496 = vpack.c.b16 %v3480, %v3472
    %v3497 = vpack.c.b16 %v3481, %v3473
    %v3498 = vpack.c.b16 %v3482, %v3474
    %v3516 = vsel %vm377, %v3417, 0
    %3518 = vmatprep.subr.bf16.mxu0 %v3484
    %3519 = vmatpush1.bf16.msra.mxu0 %v3483
    %3520 = vmatprep.subr.bf16.mxu0 %v3492
    %3521 = vmatpush1.bf16.msra.mxu0 %v3491
    %3522 = vmatprep.subr.bf16.mxu0 0
    %3523 = vmatpush1.bf16.msra.mxu0 0
    %3524 = vmatprep.subr.bf16.mxu0 0
    %3525 = vmatpush1.bf16.msra.mxu0 0
    %3526 = vmatprep.subr.bf16.mxu0 0
    %3527 = vmatpush1.bf16.msra.mxu0 0
    %3528 = vmatprep.subr.bf16.mxu0 0
    %3529 = vmatpush1.bf16.msra.mxu0 0
    %3530 = vmatprep.subr.bf16.mxu0 0
    %3531 = vmatpush1.bf16.msra.mxu0 0
    %3532 = vmatprep.subr.bf16.mxu0 0
    %3533 = vmatpush1.bf16.msra.mxu0 0
    %3534 = vmatprep.subr.bf16.mxu0 0
    %3535 = vmatpush1.bf16.msra.mxu0 0
    %3536 = vmatprep.subr.bf16.mxu0 0
    %3537 = vmatpush1.bf16.msra.mxu0 0
    %3538 = vmatprep.subr.bf16.mxu0 0
    %3539 = vmatpush1.bf16.msra.mxu0 0
    %3540 = vmatprep.subr.bf16.mxu0 0
    %3541 = vmatpush1.bf16.msra.mxu0 0
    %3542 = vmatprep.subr.bf16.mxu0 0
    %3543 = vmatpush1.bf16.msra.mxu0 0
    %3544 = vmatprep.subr.bf16.mxu0 0
    %3545 = vmatpush1.bf16.msra.mxu0 0
    %3546 = vmatprep.subr.bf16.mxu0 0
    %3547 = vmatpush1.bf16.msra.mxu0 0
    %3548 = vmatprep.subr.bf16.mxu0 0
    %3549 = vmatpush1.bf16.msra.mxu0 0
    %3550 = vmatprep.mubr.bf16.mxu0 0
    %3551 = vmatmul.mubr.bf16.gmra.mrb[0].mxu0 %v3516
    %v3552 = vpop.f32.mrb[0].mxu0
    %v3553 = vadd.f32 0.0, %v3552
    %v3554 = vpop.f32.mrb[0].mxu0
    %v3555 = vadd.f32 0.0, %v3554
    %v3556 = vpop.f32.mrb[0].mxu0
    %v3557 = vpop.f32.mrb[0].mxu0
    %3558 = vdwg.mxu0
    %3559 = vmatprep.subr.bf16.mxu0 %v3486
    %3560 = vmatpush1.bf16.msra.mxu0 %v3485
    %3561 = vmatprep.subr.bf16.mxu0 %v3494
    %3562 = vmatpush1.bf16.msra.mxu0 %v3493
    %3563 = vmatprep.subr.bf16.mxu0 0
    %3564 = vmatpush1.bf16.msra.mxu0 0
    %3565 = vmatprep.subr.bf16.mxu0 0
    %3566 = vmatpush1.bf16.msra.mxu0 0
    %3567 = vmatprep.subr.bf16.mxu0 0
    %3568 = vmatpush1.bf16.msra.mxu0 0
    %3569 = vmatprep.subr.bf16.mxu0 0
    %3570 = vmatpush1.bf16.msra.mxu0 0
    %3571 = vmatprep.subr.bf16.mxu0 0
    %3572 = vmatpush1.bf16.msra.mxu0 0
    %3573 = vmatprep.subr.bf16.mxu0 0
    %3574 = vmatpush1.bf16.msra.mxu0 0
    %3575 = vmatprep.subr.bf16.mxu0 0
    %3576 = vmatpush1.bf16.msra.mxu0 0
    %3577 = vmatprep.subr.bf16.mxu0 0
    %3578 = vmatpush1.bf16.msra.mxu0 0
    %3579 = vmatprep.subr.bf16.mxu0 0
    %3580 = vmatpush1.bf16.msra.mxu0 0
    %3581 = vmatprep.subr.bf16.mxu0 0
    %3582 = vmatpush1.bf16.msra.mxu0 0
    %3583 = vmatprep.subr.bf16.mxu0 0
    %3584 = vmatpush1.bf16.msra.mxu0 0
    %3585 = vmatprep.subr.bf16.mxu0 0
    %3586 = vmatpush1.bf16.msra.mxu0 0
    %3587 = vmatprep.subr.bf16.mxu0 0
    %3588 = vmatpush1.bf16.msra.mxu0 0
    %3589 = vmatprep.subr.bf16.mxu0 0
    %3590 = vmatpush1.bf16.msra.mxu0 0
    %3591 = vmatprep.mubr.bf16.mxu0 0
    %3592 = vmatmul.mubr.bf16.gmra.mrb[0].mxu0 %v3516
    %v3593 = vpop.f32.mrb[0].mxu0
    %v3594 = vadd.f32 0.0, %v3593
    %v3595 = vpop.f32.mrb[0].mxu0
    %v3596 = vadd.f32 0.0, %v3595
    %v3597 = vpop.f32.mrb[0].mxu0
    %v3598 = vpop.f32.mrb[0].mxu0
    %3599 = vdwg.mxu0
    %3600 = vmatprep.subr.bf16.mxu0 %v3488
    %3601 = vmatpush1.bf16.msra.mxu0 %v3487
    %3602 = vmatprep.subr.bf16.mxu0 %v3496
    %3603 = vmatpush1.bf16.msra.mxu0 %v3495
    %3604 = vmatprep.subr.bf16.mxu0 0
    %3605 = vmatpush1.bf16.msra.mxu0 0
    %3606 = vmatprep.subr.bf16.mxu0 0
    %3607 = vmatpush1.bf16.msra.mxu0 0
    %3608 = vmatprep.subr.bf16.mxu0 0
    %3609 = vmatpush1.bf16.msra.mxu0 0
    %3610 = vmatprep.subr.bf16.mxu0 0
    %3611 = vmatpush1.bf16.msra.mxu0 0
    %3612 = vmatprep.subr.bf16.mxu0 0
    %3613 = vmatpush1.bf16.msra.mxu0 0
    %3614 = vmatprep.subr.bf16.mxu0 0
    %3615 = vmatpush1.bf16.msra.mxu0 0
    %3616 = vmatprep.subr.bf16.mxu0 0
    %3617 = vmatpush1.bf16.msra.mxu0 0
    %3618 = vmatprep.subr.bf16.mxu0 0
    %3619 = vmatpush1.bf16.msra.mxu0 0
    %3620 = vmatprep.subr.bf16.mxu0 0
    %3621 = vmatpush1.bf16.msra.mxu0 0
    %3622 = vmatprep.subr.bf16.mxu0 0
    %3623 = vmatpush1.bf16.msra.mxu0 0
    %3624 = vmatprep.subr.bf16.mxu0 0
    %3625 = vmatpush1.bf16.msra.mxu0 0
    %3626 = vmatprep.subr.bf16.mxu0 0
    %3627 = vmatpush1.bf16.msra.mxu0 0
    %3628 = vmatprep.subr.bf16.mxu0 0
    %3629 = vmatpush1.bf16.msra.mxu0 0
    %3630 = vmatprep.subr.bf16.mxu0 0
    %3631 = vmatpush1.bf16.msra.mxu0 0
    %3632 = vmatprep.mubr.bf16.mxu0 0
    %3633 = vmatmul.mubr.bf16.gmra.mrb[0].mxu0 %v3516
    %v3634 = vpop.f32.mrb[0].mxu0
    %v3635 = vadd.f32 0.0, %v3634
    %v3636 = vpop.f32.mrb[0].mxu0
    %v3637 = vadd.f32 0.0, %v3636
    %v3638 = vpop.f32.mrb[0].mxu0
    %v3639 = vpop.f32.mrb[0].mxu0
    %3640 = vdwg.mxu0
    %3641 = vmatprep.subr.bf16.mxu0 %v3490
    %3642 = vmatpush1.bf16.msra.mxu0 %v3489
    %3643 = vmatprep.subr.bf16.mxu0 %v3498
    %3644 = vmatpush1.bf16.msra.mxu0 %v3497
    %3645 = vmatprep.subr.bf16.mxu0 0
    %3646 = vmatpush1.bf16.msra.mxu0 0
    %3647 = vmatprep.subr.bf16.mxu0 0
    %3648 = vmatpush1.bf16.msra.mxu0 0
    %3649 = vmatprep.subr.bf16.mxu0 0
    %3650 = vmatpush1.bf16.msra.mxu0 0
    %3651 = vmatprep.subr.bf16.mxu0 0
    %3652 = vmatpush1.bf16.msra.mxu0 0
    %3653 = vmatprep.subr.bf16.mxu0 0
    %3654 = vmatpush1.bf16.msra.mxu0 0
    %3655 = vmatprep.subr.bf16.mxu0 0
    %3656 = vmatpush1.bf16.msra.mxu0 0
    %3657 = vmatprep.subr.bf16.mxu0 0
    %3658 = vmatpush1.bf16.msra.mxu0 0
    %3659 = vmatprep.subr.bf16.mxu0 0
    %3660 = vmatpush1.bf16.msra.mxu0 0
    %3661 = vmatprep.subr.bf16.mxu0 0
    %3662 = vmatpush1.bf16.msra.mxu0 0
    %3663 = vmatprep.subr.bf16.mxu0 0
    %3664 = vmatpush1.bf16.msra.mxu0 0
    %3665 = vmatprep.subr.bf16.mxu0 0
    %3666 = vmatpush1.bf16.msra.mxu0 0
    %3667 = vmatprep.subr.bf16.mxu0 0
    %3668 = vmatpush1.bf16.msra.mxu0 0
    %3669 = vmatprep.subr.bf16.mxu0 0
    %3670 = vmatpush1.bf16.msra.mxu0 0
    %3671 = vmatprep.subr.bf16.mxu0 0
    %3672 = vmatpush1.bf16.msra.mxu0 0
    %3673 = vmatprep.mubr.bf16.mxu0 0
    %3674 = vmatmul.mubr.bf16.gmra.mrb[0].mxu0 %v3516
    %v3675 = vpop.f32.mrb[0].mxu0
    %v3676 = vadd.f32 0.0, %v3675
    %v3677 = vpop.f32.mrb[0].mxu0
    %v3678 = vadd.f32 0.0, %v3677
    %v3679 = vpop.f32.mrb[0].mxu0
    %v3680 = vpop.f32.mrb[0].mxu0
    %3681 = vdwg.mxu0
    %v3682 = vadd.f32 %v3360, %v3553
    %v3683 = vadd.f32 %v3361, %v3555
    %v3684 = vadd.f32 %v3362, %v3594
    %v3685 = vadd.f32 %v3363, %v3596
    %v3686 = vadd.f32 %v3364, %v3635
    %v3687 = vadd.f32 %v3365, %v3637
    %v3688 = vadd.f32 %v3366, %v3676
    %v3689 = vadd.f32 %v3367, %v3678
    %3690 = vset.pattern.permute.xlu0 11
    %3691 = vperm.xlu0 %3690, %v104
    %v3692 = vpop.permute.xlu0 %3691
    %vm3693 = vcmp.eq.s32.totalorder %v119, %v3692
    %v3694 = vsel %vm3693, 1.0, 0.0
    %v3695 = vpack.c.bf16 %v3694, %v3694
    %v3697 = vsel %vm165, %v3695, 0
    %3699 = vmatprep.subr.bf16.mxu0 0
    %3700 = vmatpush1.bf16.msra.mxu0 %v152
    %3701 = vmatprep.subr.bf16.mxu0 0
    %3702 = vmatpush1.bf16.msra.mxu0 %v153
    %3703 = vmatprep.subr.bf16.mxu0 0
    %3704 = vmatpush1.bf16.msra.mxu0 %v154
    %3705 = vmatprep.subr.bf16.mxu0 0
    %3706 = vmatpush1.bf16.msra.mxu0 %v155
    %3707 = vmatprep.subr.bf16.mxu0 0
    %3708 = vmatpush1.bf16.msra.mxu0 %v156
    %3709 = vmatprep.subr.bf16.mxu0 0
    %3710 = vmatpush1.bf16.msra.mxu0 %v157
    %3711 = vmatprep.subr.bf16.mxu0 0
    %3712 = vmatpush1.bf16.msra.mxu0 %v171
    %3713 = vmatprep.subr.bf16.mxu0 0
    %3714 = vmatpush1.bf16.msra.mxu0 0
    %3715 = vmatprep.subr.bf16.mxu0 0
    %3716 = vmatpush1.bf16.msra.mxu0 0
    %3717 = vmatprep.subr.bf16.mxu0 0
    %3718 = vmatpush1.bf16.msra.mxu0 0
    %3719 = vmatprep.subr.bf16.mxu0 0
    %3720 = vmatpush1.bf16.msra.mxu0 0
    %3721 = vmatprep.subr.bf16.mxu0 0
    %3722 = vmatpush1.bf16.msra.mxu0 0
    %3723 = vmatprep.subr.bf16.mxu0 0
    %3724 = vmatpush1.bf16.msra.mxu0 0
    %3725 = vmatprep.subr.bf16.mxu0 0
    %3726 = vmatpush1.bf16.msra.mxu0 0
    %3727 = vmatprep.subr.bf16.mxu0 0
    %3728 = vmatpush1.bf16.msra.mxu0 0
    %3729 = vmatprep.subr.bf16.mxu0 0
    %3730 = vmatpush1.bf16.msra.mxu0 0
    %3731 = vmatprep.mubr.bf16.mxu0 0
    %3732 = vmatmul.mubr.bf16.gmra.mrb[0].mxu0 %v3697
    %v3733 = vpop.f32.mrb[0].mxu0
    %v3734 = vadd.f32 0.0, %v3733
    %v3735 = vpop.f32.mrb[0].mxu0
    %v3736 = vpop.f32.mrb[0].mxu0
    %v3737 = vpop.f32.mrb[0].mxu0
    %3738 = vdwg.mxu0
    %v3739 = vpack.c.bf16 %v3734, %v3734
    %s3740 = scalar_lea.vmem [#allocation4], 1408
    %v3741 = vld [vmem:[%s3740] sm:$0xff]
    %v3742 = vld [vmem:[%s3740 + $0x8] sm:$0xff]
    %v3743 = vld [vmem:[%s3740 + $0x10] sm:$0xff]
    %v3744 = vld [vmem:[%s3740 + $0x18] sm:$0xff]
    %v3745 = vld [vmem:[%s3740 + $0x20] sm:$0xff]
    %v3746 = vld [vmem:[%s3740 + $0x28] sm:$0xff]
    %v3747 = vld [vmem:[%s3740 + $0x30] sm:$0xff]
    %v3748 = vld [vmem:[%s3740 + $0x38] sm:$0xff]
    %v3749 = vld [vmem:[%s3740 + $0x40] sm:$0xff]
    %v3750 = vld [vmem:[%s3740 + $0x48] sm:$0xff]
    %v3751 = vld [vmem:[%s3740 + $0x50] sm:$0xff]
    %v3752 = vld [vmem:[%s3740 + $0x58] sm:$0xff]
    %v3753 = vld [vmem:[%s3740 + $0x60] sm:$0xff]
    %v3754 = vld [vmem:[%s3740 + $0x68] sm:$0xff]
    %v3755 = vld [vmem:[%s3740 + $0x70] sm:$0xff]
    %v3756 = vld [vmem:[%s3740 + $0x78] sm:$0xff]
    %v3773 = vunpack.c.l.b16 %v3741
    %v3774 = vunpack.c.h.b16 %v3741
    %v3775 = vunpack.c.l.b16 %v3742
    %v3776 = vunpack.c.h.b16 %v3742
    %v3777 = vunpack.c.l.b16 %v3743
    %v3778 = vunpack.c.h.b16 %v3743
    %v3779 = vunpack.c.l.b16 %v3744
    %v3780 = vunpack.c.h.b16 %v3744
    %v3781 = vunpack.c.l.b16 %v3745
    %v3782 = vunpack.c.h.b16 %v3745
    %v3783 = vunpack.c.l.b16 %v3746
    %v3784 = vunpack.c.h.b16 %v3746
    %v3785 = vunpack.c.l.b16 %v3747
    %v3786 = vunpack.c.h.b16 %v3747
    %v3787 = vunpack.c.l.b16 %v3748
    %v3788 = vunpack.c.h.b16 %v3748
    %v3789 = vunpack.c.l.b16 %v3749
    %v3790 = vunpack.c.h.b16 %v3749
    %v3791 = vunpack.c.l.b16 %v3750
    %v3792 = vunpack.c.h.b16 %v3750
    %v3793 = vunpack.c.l.b16 %v3751
    %v3794 = vunpack.c.h.b16 %v3751
    %v3795 = vunpack.c.l.b16 %v3752
    %v3796 = vunpack.c.h.b16 %v3752
    %v3797 = vunpack.c.l.b16 %v3753
    %v3798 = vunpack.c.h.b16 %v3753
    %v3799 = vunpack.c.l.b16 %v3754
    %v3800 = vunpack.c.h.b16 %v3754
    %v3801 = vunpack.c.l.b16 %v3755
    %v3802 = vunpack.c.h.b16 %v3755
    %v3803 = vunpack.c.l.b16 %v3756
    %v3804 = vunpack.c.h.b16 %v3756
    %v3805 = vpack.c.b16 %v3781, %v3773
    %v3806 = vpack.c.b16 %v3782, %v3774
    %v3807 = vpack.c.b16 %v3783, %v3775
    %v3808 = vpack.c.b16 %v3784, %v3776
    %v3809 = vpack.c.b16 %v3785, %v3777
    %v3810 = vpack.c.b16 %v3786, %v3778
    %v3811 = vpack.c.b16 %v3787, %v3779
    %v3812 = vpack.c.b16 %v3788, %v3780
    %v3813 = vpack.c.b16 %v3797, %v3789
    %v3814 = vpack.c.b16 %v3798, %v3790
    %v3815 = vpack.c.b16 %v3799, %v3791
    %v3816 = vpack.c.b16 %v3800, %v3792
    %v3817 = vpack.c.b16 %v3801, %v3793
    %v3818 = vpack.c.b16 %v3802, %v3794
    %v3819 = vpack.c.b16 %v3803, %v3795
    %v3820 = vpack.c.b16 %v3804, %v3796
    %v3838 = vsel %vm377, %v3739, 0
    %3840 = vmatprep.subr.bf16.mxu0 %v3806
    %3841 = vmatpush1.bf16.msra.mxu0 %v3805
    %3842 = vmatprep.subr.bf16.mxu0 %v3814
    %3843 = vmatpush1.bf16.msra.mxu0 %v3813
    %3844 = vmatprep.subr.bf16.mxu0 0
    %3845 = vmatpush1.bf16.msra.mxu0 0
    %3846 = vmatprep.subr.bf16.mxu0 0
    %3847 = vmatpush1.bf16.msra.mxu0 0
    %3848 = vmatprep.subr.bf16.mxu0 0
    %3849 = vmatpush1.bf16.msra.mxu0 0
    %3850 = vmatprep.subr.bf16.mxu0 0
    %3851 = vmatpush1.bf16.msra.mxu0 0
    %3852 = vmatprep.subr.bf16.mxu0 0
    %3853 = vmatpush1.bf16.msra.mxu0 0
    %3854 = vmatprep.subr.bf16.mxu0 0
    %3855 = vmatpush1.bf16.msra.mxu0 0
    %3856 = vmatprep.subr.bf16.mxu0 0
    %3857 = vmatpush1.bf16.msra.mxu0 0
    %3858 = vmatprep.subr.bf16.mxu0 0
    %3859 = vmatpush1.bf16.msra.mxu0 0
    %3860 = vmatprep.subr.bf16.mxu0 0
    %3861 = vmatpush1.bf16.msra.mxu0 0
    %3862 = vmatprep.subr.bf16.mxu0 0
    %3863 = vmatpush1.bf16.msra.mxu0 0
    %3864 = vmatprep.subr.bf16.mxu0 0
    %3865 = vmatpush1.bf16.msra.mxu0 0
    %3866 = vmatprep.subr.bf16.mxu0 0
    %3867 = vmatpush1.bf16.msra.mxu0 0
    %3868 = vmatprep.subr.bf16.mxu0 0
    %3869 = vmatpush1.bf16.msra.mxu0 0
    %3870 = vmatprep.subr.bf16.mxu0 0
    %3871 = vmatpush1.bf16.msra.mxu0 0
    %3872 = vmatprep.mubr.bf16.mxu0 0
    %3873 = vmatmul.mubr.bf16.gmra.mrb[0].mxu0 %v3838
    %v3874 = vpop.f32.mrb[0].mxu0
    %v3875 = vadd.f32 0.0, %v3874
    %v3876 = vpop.f32.mrb[0].mxu0
    %v3877 = vadd.f32 0.0, %v3876
    %v3878 = vpop.f32.mrb[0].mxu0
    %v3879 = vpop.f32.mrb[0].mxu0
    %3880 = vdwg.mxu0
    %3881 = vmatprep.subr.bf16.mxu0 %v3808
    %3882 = vmatpush1.bf16.msra.mxu0 %v3807
    %3883 = vmatprep.subr.bf16.mxu0 %v3816
    %3884 = vmatpush1.bf16.msra.mxu0 %v3815
    %3885 = vmatprep.subr.bf16.mxu0 0
    %3886 = vmatpush1.bf16.msra.mxu0 0
    %3887 = vmatprep.subr.bf16.mxu0 0
    %3888 = vmatpush1.bf16.msra.mxu0 0
    %3889 = vmatprep.subr.bf16.mxu0 0
    %3890 = vmatpush1.bf16.msra.mxu0 0
    %3891 = vmatprep.subr.bf16.mxu0 0
    %3892 = vmatpush1.bf16.msra.mxu0 0
    %3893 = vmatprep.subr.bf16.mxu0 0
    %3894 = vmatpush1.bf16.msra.mxu0 0
    %3895 = vmatprep.subr.bf16.mxu0 0
    %3896 = vmatpush1.bf16.msra.mxu0 0
    %3897 = vmatprep.subr.bf16.mxu0 0
    %3898 = vmatpush1.bf16.msra.mxu0 0
    %3899 = vmatprep.subr.bf16.mxu0 0
    %3900 = vmatpush1.bf16.msra.mxu0 0
    %3901 = vmatprep.subr.bf16.mxu0 0
    %3902 = vmatpush1.bf16.msra.mxu0 0
    %3903 = vmatprep.subr.bf16.mxu0 0
    %3904 = vmatpush1.bf16.msra.mxu0 0
    %3905 = vmatprep.subr.bf16.mxu0 0
    %3906 = vmatpush1.bf16.msra.mxu0 0
    %3907 = vmatprep.subr.bf16.mxu0 0
    %3908 = vmatpush1.bf16.msra.mxu0 0
    %3909 = vmatprep.subr.bf16.mxu0 0
    %3910 = vmatpush1.bf16.msra.mxu0 0
    %3911 = vmatprep.subr.bf16.mxu0 0
    %3912 = vmatpush1.bf16.msra.mxu0 0
    %3913 = vmatprep.mubr.bf16.mxu0 0
    %3914 = vmatmul.mubr.bf16.gmra.mrb[0].mxu0 %v3838
    %v3915 = vpop.f32.mrb[0].mxu0
    %v3916 = vadd.f32 0.0, %v3915
    %v3917 = vpop.f32.mrb[0].mxu0
    %v3918 = vadd.f32 0.0, %v3917
    %v3919 = vpop.f32.mrb[0].mxu0
    %v3920 = vpop.f32.mrb[0].mxu0
    %3921 = vdwg.mxu0
    %3922 = vmatprep.subr.bf16.mxu0 %v3810
    %3923 = vmatpush1.bf16.msra.mxu0 %v3809
    %3924 = vmatprep.subr.bf16.mxu0 %v3818
    %3925 = vmatpush1.bf16.msra.mxu0 %v3817
    %3926 = vmatprep.subr.bf16.mxu0 0
    %3927 = vmatpush1.bf16.msra.mxu0 0
    %3928 = vmatprep.subr.bf16.mxu0 0
    %3929 = vmatpush1.bf16.msra.mxu0 0
    %3930 = vmatprep.subr.bf16.mxu0 0
    %3931 = vmatpush1.bf16.msra.mxu0 0
    %3932 = vmatprep.subr.bf16.mxu0 0
    %3933 = vmatpush1.bf16.msra.mxu0 0
    %3934 = vmatprep.subr.bf16.mxu0 0
    %3935 = vmatpush1.bf16.msra.mxu0 0
    %3936 = vmatprep.subr.bf16.mxu0 0
    %3937 = vmatpush1.bf16.msra.mxu0 0
    %3938 = vmatprep.subr.bf16.mxu0 0
    %3939 = vmatpush1.bf16.msra.mxu0 0
    %3940 = vmatprep.subr.bf16.mxu0 0
    %3941 = vmatpush1.bf16.msra.mxu0 0
    %3942 = vmatprep.subr.bf16.mxu0 0
    %3943 = vmatpush1.bf16.msra.mxu0 0
    %3944 = vmatprep.subr.bf16.mxu0 0
    %3945 = vmatpush1.bf16.msra.mxu0 0
    %3946 = vmatprep.subr.bf16.mxu0 0
    %3947 = vmatpush1.bf16.msra.mxu0 0
    %3948 = vmatprep.subr.bf16.mxu0 0
    %3949 = vmatpush1.bf16.msra.mxu0 0
    %3950 = vmatprep.subr.bf16.mxu0 0
    %3951 = vmatpush1.bf16.msra.mxu0 0
    %3952 = vmatprep.subr.bf16.mxu0 0
    %3953 = vmatpush1.bf16.msra.mxu0 0
    %3954 = vmatprep.mubr.bf16.mxu0 0
    %3955 = vmatmul.mubr.bf16.gmra.mrb[0].mxu0 %v3838
    %v3956 = vpop.f32.mrb[0].mxu0
    %v3957 = vadd.f32 0.0, %v3956
    %v3958 = vpop.f32.mrb[0].mxu0
    %v3959 = vadd.f32 0.0, %v3958
    %v3960 = vpop.f32.mrb[0].mxu0
    %v3961 = vpop.f32.mrb[0].mxu0
    %3962 = vdwg.mxu0
    %3963 = vmatprep.subr.bf16.mxu0 %v3812
    %3964 = vmatpush1.bf16.msra.mxu0 %v3811
    %3965 = vmatprep.subr.bf16.mxu0 %v3820
    %3966 = vmatpush1.bf16.msra.mxu0 %v3819
    %3967 = vmatprep.subr.bf16.mxu0 0
    %3968 = vmatpush1.bf16.msra.mxu0 0
    %3969 = vmatprep.subr.bf16.mxu0 0
    %3970 = vmatpush1.bf16.msra.mxu0 0
    %3971 = vmatprep.subr.bf16.mxu0 0
    %3972 = vmatpush1.bf16.msra.mxu0 0
    %3973 = vmatprep.subr.bf16.mxu0 0
    %3974 = vmatpush1.bf16.msra.mxu0 0
    %3975 = vmatprep.subr.bf16.mxu0 0
    %3976 = vmatpush1.bf16.msra.mxu0 0
    %3977 = vmatprep.subr.bf16.mxu0 0
    %3978 = vmatpush1.bf16.msra.mxu0 0
    %3979 = vmatprep.subr.bf16.mxu0 0
    %3980 = vmatpush1.bf16.msra.mxu0 0
    %3981 = vmatprep.subr.bf16.mxu0 0
    %3982 = vmatpush1.bf16.msra.mxu0 0
    %3983 = vmatprep.subr.bf16.mxu0 0
    %3984 = vmatpush1.bf16.msra.mxu0 0
    %3985 = vmatprep.subr.bf16.mxu0 0
    %3986 = vmatpush1.bf16.msra.mxu0 0
    %3987 = vmatprep.subr.bf16.mxu0 0
    %3988 = vmatpush1.bf16.msra.mxu0 0
    %3989 = vmatprep.subr.bf16.mxu0 0
    %3990 = vmatpush1.bf16.msra.mxu0 0
    %3991 = vmatprep.subr.bf16.mxu0 0
    %3992 = vmatpush1.bf16.msra.mxu0 0
    %3993 = vmatprep.subr.bf16.mxu0 0
    %3994 = vmatpush1.bf16.msra.mxu0 0
    %3995 = vmatprep.mubr.bf16.mxu0 0
    %3996 = vmatmul.mubr.bf16.gmra.mrb[0].mxu0 %v3838
    %v3997 = vpop.f32.mrb[0].mxu0
    %v3998 = vadd.f32 0.0, %v3997
    %v3999 = vpop.f32.mrb[0].mxu0
    %v4000 = vadd.f32 0.0, %v3999
    %v4001 = vpop.f32.mrb[0].mxu0
    %v4002 = vpop.f32.mrb[0].mxu0
    %4003 = vdwg.mxu0
    %v4004 = vadd.f32 %v3682, %v3875
    %v4005 = vadd.f32 %v3683, %v3877
    %v4006 = vadd.f32 %v3684, %v3916
    %v4007 = vadd.f32 %v3685, %v3918
    %v4008 = vadd.f32 %v3686, %v3957
    %v4009 = vadd.f32 %v3687, %v3959
    %v4010 = vadd.f32 %v3688, %v3998
    %v4011 = vadd.f32 %v3689, %v4000
    %4012 = vset.pattern.permute.xlu0 12
    %4013 = vperm.xlu0 %4012, %v104
    %v4014 = vpop.permute.xlu0 %4013
    %vm4015 = vcmp.eq.s32.totalorder %v119, %v4014
    %v4016 = vsel %vm4015, 1.0, 0.0
    %v4017 = vpack.c.bf16 %v4016, %v4016
    %v4019 = vsel %vm165, %v4017, 0
    %4021 = vmatprep.subr.bf16.mxu0 0
    %4022 = vmatpush1.bf16.msra.mxu0 %v152
    %4023 = vmatprep.subr.bf16.mxu0 0
    %4024 = vmatpush1.bf16.msra.mxu0 %v153
    %4025 = vmatprep.subr.bf16.mxu0 0
    %4026 = vmatpush1.bf16.msra.mxu0 %v154
    %4027 = vmatprep.subr.bf16.mxu0 0
    %4028 = vmatpush1.bf16.msra.mxu0 %v155
    %4029 = vmatprep.subr.bf16.mxu0 0
    %4030 = vmatpush1.bf16.msra.mxu0 %v156
    %4031 = vmatprep.subr.bf16.mxu0 0
    %4032 = vmatpush1.bf16.msra.mxu0 %v157
    %4033 = vmatprep.subr.bf16.mxu0 0
    %4034 = vmatpush1.bf16.msra.mxu0 %v171
    %4035 = vmatprep.subr.bf16.mxu0 0
    %4036 = vmatpush1.bf16.msra.mxu0 0
    %4037 = vmatprep.subr.bf16.mxu0 0
    %4038 = vmatpush1.bf16.msra.mxu0 0
    %4039 = vmatprep.subr.bf16.mxu0 0
    %4040 = vmatpush1.bf16.msra.mxu0 0
    %4041 = vmatprep.subr.bf16.mxu0 0
    %4042 = vmatpush1.bf16.msra.mxu0 0
    %4043 = vmatprep.subr.bf16.mxu0 0
    %4044 = vmatpush1.bf16.msra.mxu0 0
    %4045 = vmatprep.subr.bf16.mxu0 0
    %4046 = vmatpush1.bf16.msra.mxu0 0
    %4047 = vmatprep.subr.bf16.mxu0 0
    %4048 = vmatpush1.bf16.msra.mxu0 0
    %4049 = vmatprep.subr.bf16.mxu0 0
    %4050 = vmatpush1.bf16.msra.mxu0 0
    %4051 = vmatprep.subr.bf16.mxu0 0
    %4052 = vmatpush1.bf16.msra.mxu0 0
    %4053 = vmatprep.mubr.bf16.mxu0 0
    %4054 = vmatmul.mubr.bf16.gmra.mrb[0].mxu0 %v4019
    %v4055 = vpop.f32.mrb[0].mxu0
    %v4056 = vadd.f32 0.0, %v4055
    %v4057 = vpop.f32.mrb[0].mxu0
    %v4058 = vpop.f32.mrb[0].mxu0
    %v4059 = vpop.f32.mrb[0].mxu0
    %4060 = vdwg.mxu0
    %v4061 = vpack.c.bf16 %v4056, %v4056
    %s4062 = scalar_lea.vmem [#allocation4], 1536
    %v4063 = vld [vmem:[%s4062] sm:$0xff]
    %v4064 = vld [vmem:[%s4062 + $0x8] sm:$0xff]
    %v4065 = vld [vmem:[%s4062 + $0x10] sm:$0xff]
    %v4066 = vld [vmem:[%s4062 + $0x18] sm:$0xff]
    %v4067 = vld [vmem:[%s4062 + $0x20] sm:$0xff]
    %v4068 = vld [vmem:[%s4062 + $0x28] sm:$0xff]
    %v4069 = vld [vmem:[%s4062 + $0x30] sm:$0xff]
    %v4070 = vld [vmem:[%s4062 + $0x38] sm:$0xff]
    %v4071 = vld [vmem:[%s4062 + $0x40] sm:$0xff]
    %v4072 = vld [vmem:[%s4062 + $0x48] sm:$0xff]
    %v4073 = vld [vmem:[%s4062 + $0x50] sm:$0xff]
    %v4074 = vld [vmem:[%s4062 + $0x58] sm:$0xff]
    %v4075 = vld [vmem:[%s4062 + $0x60] sm:$0xff]
    %v4076 = vld [vmem:[%s4062 + $0x68] sm:$0xff]
    %v4077 = vld [vmem:[%s4062 + $0x70] sm:$0xff]
    %v4078 = vld [vmem:[%s4062 + $0x78] sm:$0xff]
    %v4095 = vunpack.c.l.b16 %v4063
    %v4096 = vunpack.c.h.b16 %v4063
    %v4097 = vunpack.c.l.b16 %v4064
    %v4098 = vunpack.c.h.b16 %v4064
    %v4099 = vunpack.c.l.b16 %v4065
    %v4100 = vunpack.c.h.b16 %v4065
    %v4101 = vunpack.c.l.b16 %v4066
    %v4102 = vunpack.c.h.b16 %v4066
    %v4103 = vunpack.c.l.b16 %v4067
    %v4104 = vunpack.c.h.b16 %v4067
    %v4105 = vunpack.c.l.b16 %v4068
    %v4106 = vunpack.c.h.b16 %v4068
    %v4107 = vunpack.c.l.b16 %v4069
    %v4108 = vunpack.c.h.b16 %v4069
    %v4109 = vunpack.c.l.b16 %v4070
    %v4110 = vunpack.c.h.b16 %v4070
    %v4111 = vunpack.c.l.b16 %v4071
    %v4112 = vunpack.c.h.b16 %v4071
    %v4113 = vunpack.c.l.b16 %v4072
    %v4114 = vunpack.c.h.b16 %v4072
    %v4115 = vunpack.c.l.b16 %v4073
    %v4116 = vunpack.c.h.b16 %v4073
    %v4117 = vunpack.c.l.b16 %v4074
    %v4118 = vunpack.c.h.b16 %v4074
    %v4119 = vunpack.c.l.b16 %v4075
    %v4120 = vunpack.c.h.b16 %v4075
    %v4121 = vunpack.c.l.b16 %v4076
    %v4122 = vunpack.c.h.b16 %v4076
    %v4123 = vunpack.c.l.b16 %v4077
    %v4124 = vunpack.c.h.b16 %v4077
    %v4125 = vunpack.c.l.b16 %v4078
    %v4126 = vunpack.c.h.b16 %v4078
    %v4127 = vpack.c.b16 %v4103, %v4095
    %v4128 = vpack.c.b16 %v4104, %v4096
    %v4129 = vpack.c.b16 %v4105, %v4097
    %v4130 = vpack.c.b16 %v4106, %v4098
    %v4131 = vpack.c.b16 %v4107, %v4099
    %v4132 = vpack.c.b16 %v4108, %v4100
    %v4133 = vpack.c.b16 %v4109, %v4101
    %v4134 = vpack.c.b16 %v4110, %v4102
    %v4135 = vpack.c.b16 %v4119, %v4111
    %v4136 = vpack.c.b16 %v4120, %v4112
    %v4137 = vpack.c.b16 %v4121, %v4113
    %v4138 = vpack.c.b16 %v4122, %v4114
    %v4139 = vpack.c.b16 %v4123, %v4115
    %v4140 = vpack.c.b16 %v4124, %v4116
    %v4141 = vpack.c.b16 %v4125, %v4117
    %v4142 = vpack.c.b16 %v4126, %v4118
    %v4160 = vsel %vm377, %v4061, 0
    %4162 = vmatprep.subr.bf16.mxu0 %v4128
    %4163 = vmatpush1.bf16.msra.mxu0 %v4127
    %4164 = vmatprep.subr.bf16.mxu0 %v4136
    %4165 = vmatpush1.bf16.msra.mxu0 %v4135
    %4166 = vmatprep.subr.bf16.mxu0 0
    %4167 = vmatpush1.bf16.msra.mxu0 0
    %4168 = vmatprep.subr.bf16.mxu0 0
    %4169 = vmatpush1.bf16.msra.mxu0 0
    %4170 = vmatprep.subr.bf16.mxu0 0
    %4171 = vmatpush1.bf16.msra.mxu0 0
    %4172 = vmatprep.subr.bf16.mxu0 0
    %4173 = vmatpush1.bf16.msra.mxu0 0
    %4174 = vmatprep.subr.bf16.mxu0 0
    %4175 = vmatpush1.bf16.msra.mxu0 0
    %4176 = vmatprep.subr.bf16.mxu0 0
    %4177 = vmatpush1.bf16.msra.mxu0 0
    %4178 = vmatprep.subr.bf16.mxu0 0
    %4179 = vmatpush1.bf16.msra.mxu0 0
    %4180 = vmatprep.subr.bf16.mxu0 0
    %4181 = vmatpush1.bf16.msra.mxu0 0
    %4182 = vmatprep.subr.bf16.mxu0 0
    %4183 = vmatpush1.bf16.msra.mxu0 0
    %4184 = vmatprep.subr.bf16.mxu0 0
    %4185 = vmatpush1.bf16.msra.mxu0 0
    %4186 = vmatprep.subr.bf16.mxu0 0
    %4187 = vmatpush1.bf16.msra.mxu0 0
    %4188 = vmatprep.subr.bf16.mxu0 0
    %4189 = vmatpush1.bf16.msra.mxu0 0
    %4190 = vmatprep.subr.bf16.mxu0 0
    %4191 = vmatpush1.bf16.msra.mxu0 0
    %4192 = vmatprep.subr.bf16.mxu0 0
    %4193 = vmatpush1.bf16.msra.mxu0 0
    %4194 = vmatprep.mubr.bf16.mxu0 0
    %4195 = vmatmul.mubr.bf16.gmra.mrb[0].mxu0 %v4160
    %v4196 = vpop.f32.mrb[0].mxu0
    %v4197 = vadd.f32 0.0, %v4196
    %v4198 = vpop.f32.mrb[0].mxu0
    %v4199 = vadd.f32 0.0, %v4198
    %v4200 = vpop.f32.mrb[0].mxu0
    %v4201 = vpop.f32.mrb[0].mxu0
    %4202 = vdwg.mxu0
    %4203 = vmatprep.subr.bf16.mxu0 %v4130
    %4204 = vmatpush1.bf16.msra.mxu0 %v4129
    %4205 = vmatprep.subr.bf16.mxu0 %v4138
    %4206 = vmatpush1.bf16.msra.mxu0 %v4137
    %4207 = vmatprep.subr.bf16.mxu0 0
    %4208 = vmatpush1.bf16.msra.mxu0 0
    %4209 = vmatprep.subr.bf16.mxu0 0
    %4210 = vmatpush1.bf16.msra.mxu0 0
    %4211 = vmatprep.subr.bf16.mxu0 0
    %4212 = vmatpush1.bf16.msra.mxu0 0
    %4213 = vmatprep.subr.bf16.mxu0 0
    %4214 = vmatpush1.bf16.msra.mxu0 0
    %4215 = vmatprep.subr.bf16.mxu0 0
    %4216 = vmatpush1.bf16.msra.mxu0 0
    %4217 = vmatprep.subr.bf16.mxu0 0
    %4218 = vmatpush1.bf16.msra.mxu0 0
    %4219 = vmatprep.subr.bf16.mxu0 0
    %4220 = vmatpush1.bf16.msra.mxu0 0
    %4221 = vmatprep.subr.bf16.mxu0 0
    %4222 = vmatpush1.bf16.msra.mxu0 0
    %4223 = vmatprep.subr.bf16.mxu0 0
    %4224 = vmatpush1.bf16.msra.mxu0 0
    %4225 = vmatprep.subr.bf16.mxu0 0
    %4226 = vmatpush1.bf16.msra.mxu0 0
    %4227 = vmatprep.subr.bf16.mxu0 0
    %4228 = vmatpush1.bf16.msra.mxu0 0
    %4229 = vmatprep.subr.bf16.mxu0 0
    %4230 = vmatpush1.bf16.msra.mxu0 0
    %4231 = vmatprep.subr.bf16.mxu0 0
    %4232 = vmatpush1.bf16.msra.mxu0 0
    %4233 = vmatprep.subr.bf16.mxu0 0
    %4234 = vmatpush1.bf16.msra.mxu0 0
    %4235 = vmatprep.mubr.bf16.mxu0 0
    %4236 = vmatmul.mubr.bf16.gmra.mrb[0].mxu0 %v4160
    %v4237 = vpop.f32.mrb[0].mxu0
    %v4238 = vadd.f32 0.0, %v4237
    %v4239 = vpop.f32.mrb[0].mxu0
    %v4240 = vadd.f32 0.0, %v4239
    %v4241 = vpop.f32.mrb[0].mxu0
    %v4242 = vpop.f32.mrb[0].mxu0
    %4243 = vdwg.mxu0
    %4244 = vmatprep.subr.bf16.mxu0 %v4132
    %4245 = vmatpush1.bf16.msra.mxu0 %v4131
    %4246 = vmatprep.subr.bf16.mxu0 %v4140
    %4247 = vmatpush1.bf16.msra.mxu0 %v4139
    %4248 = vmatprep.subr.bf16.mxu0 0
    %4249 = vmatpush1.bf16.msra.mxu0 0
    %4250 = vmatprep.subr.bf16.mxu0 0
    %4251 = vmatpush1.bf16.msra.mxu0 0
    %4252 = vmatprep.subr.bf16.mxu0 0
    %4253 = vmatpush1.bf16.msra.mxu0 0
    %4254 = vmatprep.subr.bf16.mxu0 0
    %4255 = vmatpush1.bf16.msra.mxu0 0
    %4256 = vmatprep.subr.bf16.mxu0 0
    %4257 = vmatpush1.bf16.msra.mxu0 0
    %4258 = vmatprep.subr.bf16.mxu0 0
    %4259 = vmatpush1.bf16.msra.mxu0 0
    %4260 = vmatprep.subr.bf16.mxu0 0
    %4261 = vmatpush1.bf16.msra.mxu0 0
    %4262 = vmatprep.subr.bf16.mxu0 0
    %4263 = vmatpush1.bf16.msra.mxu0 0
    %4264 = vmatprep.subr.bf16.mxu0 0
    %4265 = vmatpush1.bf16.msra.mxu0 0
    %4266 = vmatprep.subr.bf16.mxu0 0
    %4267 = vmatpush1.bf16.msra.mxu0 0
    %4268 = vmatprep.subr.bf16.mxu0 0
    %4269 = vmatpush1.bf16.msra.mxu0 0
    %4270 = vmatprep.subr.bf16.mxu0 0
    %4271 = vmatpush1.bf16.msra.mxu0 0
    %4272 = vmatprep.subr.bf16.mxu0 0
    %4273 = vmatpush1.bf16.msra.mxu0 0
    %4274 = vmatprep.subr.bf16.mxu0 0
    %4275 = vmatpush1.bf16.msra.mxu0 0
    %4276 = vmatprep.mubr.bf16.mxu0 0
    %4277 = vmatmul.mubr.bf16.gmra.mrb[0].mxu0 %v4160
    %v4278 = vpop.f32.mrb[0].mxu0
    %v4279 = vadd.f32 0.0, %v4278
    %v4280 = vpop.f32.mrb[0].mxu0
    %v4281 = vadd.f32 0.0, %v4280
    %v4282 = vpop.f32.mrb[0].mxu0
    %v4283 = vpop.f32.mrb[0].mxu0
    %4284 = vdwg.mxu0
    %4285 = vmatprep.subr.bf16.mxu0 %v4134
    %4286 = vmatpush1.bf16.msra.mxu0 %v4133
    %4287 = vmatprep.subr.bf16.mxu0 %v4142
    %4288 = vmatpush1.bf16.msra.mxu0 %v4141
    %4289 = vmatprep.subr.bf16.mxu0 0
    %4290 = vmatpush1.bf16.msra.mxu0 0
    %4291 = vmatprep.subr.bf16.mxu0 0
    %4292 = vmatpush1.bf16.msra.mxu0 0
    %4293 = vmatprep.subr.bf16.mxu0 0
    %4294 = vmatpush1.bf16.msra.mxu0 0
    %4295 = vmatprep.subr.bf16.mxu0 0
    %4296 = vmatpush1.bf16.msra.mxu0 0
    %4297 = vmatprep.subr.bf16.mxu0 0
    %4298 = vmatpush1.bf16.msra.mxu0 0
    %4299 = vmatprep.subr.bf16.mxu0 0
    %4300 = vmatpush1.bf16.msra.mxu0 0
    %4301 = vmatprep.subr.bf16.mxu0 0
    %4302 = vmatpush1.bf16.msra.mxu0 0
    %4303 = vmatprep.subr.bf16.mxu0 0
    %4304 = vmatpush1.bf16.msra.mxu0 0
    %4305 = vmatprep.subr.bf16.mxu0 0
    %4306 = vmatpush1.bf16.msra.mxu0 0
    %4307 = vmatprep.subr.bf16.mxu0 0
    %4308 = vmatpush1.bf16.msra.mxu0 0
    %4309 = vmatprep.subr.bf16.mxu0 0
    %4310 = vmatpush1.bf16.msra.mxu0 0
    %4311 = vmatprep.subr.bf16.mxu0 0
    %4312 = vmatpush1.bf16.msra.mxu0 0
    %4313 = vmatprep.subr.bf16.mxu0 0
    %4314 = vmatpush1.bf16.msra.mxu0 0
    %4315 = vmatprep.subr.bf16.mxu0 0
    %4316 = vmatpush1.bf16.msra.mxu0 0
    %4317 = vmatprep.mubr.bf16.mxu0 0
    %4318 = vmatmul.mubr.bf16.gmra.mrb[0].mxu0 %v4160
    %v4319 = vpop.f32.mrb[0].mxu0
    %v4320 = vadd.f32 0.0, %v4319
    %v4321 = vpop.f32.mrb[0].mxu0
    %v4322 = vadd.f32 0.0, %v4321
    %v4323 = vpop.f32.mrb[0].mxu0
    %v4324 = vpop.f32.mrb[0].mxu0
    %4325 = vdwg.mxu0
    %v4326 = vadd.f32 %v4004, %v4197
    %v4327 = vadd.f32 %v4005, %v4199
    %v4328 = vadd.f32 %v4006, %v4238
    %v4329 = vadd.f32 %v4007, %v4240
    %v4330 = vadd.f32 %v4008, %v4279
    %v4331 = vadd.f32 %v4009, %v4281
    %v4332 = vadd.f32 %v4010, %v4320
    %v4333 = vadd.f32 %v4011, %v4322
    %4334 = vset.pattern.permute.xlu0 13
    %4335 = vperm.xlu0 %4334, %v104
    %v4336 = vpop.permute.xlu0 %4335
    %vm4337 = vcmp.eq.s32.totalorder %v119, %v4336
    %v4338 = vsel %vm4337, 1.0, 0.0
    %v4339 = vpack.c.bf16 %v4338, %v4338
    %v4341 = vsel %vm165, %v4339, 0
    %4343 = vmatprep.subr.bf16.mxu0 0
    %4344 = vmatpush1.bf16.msra.mxu0 %v152
    %4345 = vmatprep.subr.bf16.mxu0 0
    %4346 = vmatpush1.bf16.msra.mxu0 %v153
    %4347 = vmatprep.subr.bf16.mxu0 0
    %4348 = vmatpush1.bf16.msra.mxu0 %v154
    %4349 = vmatprep.subr.bf16.mxu0 0
    %4350 = vmatpush1.bf16.msra.mxu0 %v155
    %4351 = vmatprep.subr.bf16.mxu0 0
    %4352 = vmatpush1.bf16.msra.mxu0 %v156
    %4353 = vmatprep.subr.bf16.mxu0 0
    %4354 = vmatpush1.bf16.msra.mxu0 %v157
    %4355 = vmatprep.subr.bf16.mxu0 0
    %4356 = vmatpush1.bf16.msra.mxu0 %v171
    %4357 = vmatprep.subr.bf16.mxu0 0
    %4358 = vmatpush1.bf16.msra.mxu0 0
    %4359 = vmatprep.subr.bf16.mxu0 0
    %4360 = vmatpush1.bf16.msra.mxu0 0
    %4361 = vmatprep.subr.bf16.mxu0 0
    %4362 = vmatpush1.bf16.msra.mxu0 0
    %4363 = vmatprep.subr.bf16.mxu0 0
    %4364 = vmatpush1.bf16.msra.mxu0 0
    %4365 = vmatprep.subr.bf16.mxu0 0
    %4366 = vmatpush1.bf16.msra.mxu0 0
    %4367 = vmatprep.subr.bf16.mxu0 0
    %4368 = vmatpush1.bf16.msra.mxu0 0
    %4369 = vmatprep.subr.bf16.mxu0 0
    %4370 = vmatpush1.bf16.msra.mxu0 0
    %4371 = vmatprep.subr.bf16.mxu0 0
    %4372 = vmatpush1.bf16.msra.mxu0 0
    %4373 = vmatprep.subr.bf16.mxu0 0
    %4374 = vmatpush1.bf16.msra.mxu0 0
    %4375 = vmatprep.mubr.bf16.mxu0 0
    %4376 = vmatmul.mubr.bf16.gmra.mrb[0].mxu0 %v4341
    %v4377 = vpop.f32.mrb[0].mxu0
    %v4378 = vadd.f32 0.0, %v4377
    %v4379 = vpop.f32.mrb[0].mxu0
    %v4380 = vpop.f32.mrb[0].mxu0
    %v4381 = vpop.f32.mrb[0].mxu0
    %4382 = vdwg.mxu0
    %v4383 = vpack.c.bf16 %v4378, %v4378
    %s4384 = scalar_lea.vmem [#allocation4], 1664
    %v4385 = vld [vmem:[%s4384] sm:$0xff]
    %v4386 = vld [vmem:[%s4384 + $0x8] sm:$0xff]
    %v4387 = vld [vmem:[%s4384 + $0x10] sm:$0xff]
    %v4388 = vld [vmem:[%s4384 + $0x18] sm:$0xff]
    %v4389 = vld [vmem:[%s4384 + $0x20] sm:$0xff]
    %v4390 = vld [vmem:[%s4384 + $0x28] sm:$0xff]
    %v4391 = vld [vmem:[%s4384 + $0x30] sm:$0xff]
    %v4392 = vld [vmem:[%s4384 + $0x38] sm:$0xff]
    %v4393 = vld [vmem:[%s4384 + $0x40] sm:$0xff]
    %v4394 = vld [vmem:[%s4384 + $0x48] sm:$0xff]
    %v4395 = vld [vmem:[%s4384 + $0x50] sm:$0xff]
    %v4396 = vld [vmem:[%s4384 + $0x58] sm:$0xff]
    %v4397 = vld [vmem:[%s4384 + $0x60] sm:$0xff]
    %v4398 = vld [vmem:[%s4384 + $0x68] sm:$0xff]
    %v4399 = vld [vmem:[%s4384 + $0x70] sm:$0xff]
    %v4400 = vld [vmem:[%s4384 + $0x78] sm:$0xff]
    %v4417 = vunpack.c.l.b16 %v4385
    %v4418 = vunpack.c.h.b16 %v4385
    %v4419 = vunpack.c.l.b16 %v4386
    %v4420 = vunpack.c.h.b16 %v4386
    %v4421 = vunpack.c.l.b16 %v4387
    %v4422 = vunpack.c.h.b16 %v4387
    %v4423 = vunpack.c.l.b16 %v4388
    %v4424 = vunpack.c.h.b16 %v4388
    %v4425 = vunpack.c.l.b16 %v4389
    %v4426 = vunpack.c.h.b16 %v4389
    %v4427 = vunpack.c.l.b16 %v4390
    %v4428 = vunpack.c.h.b16 %v4390
    %v4429 = vunpack.c.l.b16 %v4391
    %v4430 = vunpack.c.h.b16 %v4391
    %v4431 = vunpack.c.l.b16 %v4392
    %v4432 = vunpack.c.h.b16 %v4392
    %v4433 = vunpack.c.l.b16 %v4393
    %v4434 = vunpack.c.h.b16 %v4393
    %v4435 = vunpack.c.l.b16 %v4394
    %v4436 = vunpack.c.h.b16 %v4394
    %v4437 = vunpack.c.l.b16 %v4395
    %v4438 = vunpack.c.h.b16 %v4395
    %v4439 = vunpack.c.l.b16 %v4396
    %v4440 = vunpack.c.h.b16 %v4396
    %v4441 = vunpack.c.l.b16 %v4397
    %v4442 = vunpack.c.h.b16 %v4397
    %v4443 = vunpack.c.l.b16 %v4398
    %v4444 = vunpack.c.h.b16 %v4398
    %v4445 = vunpack.c.l.b16 %v4399
    %v4446 = vunpack.c.h.b16 %v4399
    %v4447 = vunpack.c.l.b16 %v4400
    %v4448 = vunpack.c.h.b16 %v4400
    %v4449 = vpack.c.b16 %v4425, %v4417
    %v4450 = vpack.c.b16 %v4426, %v4418
    %v4451 = vpack.c.b16 %v4427, %v4419
    %v4452 = vpack.c.b16 %v4428, %v4420
    %v4453 = vpack.c.b16 %v4429, %v4421
    %v4454 = vpack.c.b16 %v4430, %v4422
    %v4455 = vpack.c.b16 %v4431, %v4423
    %v4456 = vpack.c.b16 %v4432, %v4424
    %v4457 = vpack.c.b16 %v4441, %v4433
    %v4458 = vpack.c.b16 %v4442, %v4434
    %v4459 = vpack.c.b16 %v4443, %v4435
    %v4460 = vpack.c.b16 %v4444, %v4436
    %v4461 = vpack.c.b16 %v4445, %v4437
    %v4462 = vpack.c.b16 %v4446, %v4438
    %v4463 = vpack.c.b16 %v4447, %v4439
    %v4464 = vpack.c.b16 %v4448, %v4440
    %v4482 = vsel %vm377, %v4383, 0
    %4484 = vmatprep.subr.bf16.mxu0 %v4450
    %4485 = vmatpush1.bf16.msra.mxu0 %v4449
    %4486 = vmatprep.subr.bf16.mxu0 %v4458
    %4487 = vmatpush1.bf16.msra.mxu0 %v4457
    %4488 = vmatprep.subr.bf16.mxu0 0
    %4489 = vmatpush1.bf16.msra.mxu0 0
    %4490 = vmatprep.subr.bf16.mxu0 0
    %4491 = vmatpush1.bf16.msra.mxu0 0
    %4492 = vmatprep.subr.bf16.mxu0 0
    %4493 = vmatpush1.bf16.msra.mxu0 0
    %4494 = vmatprep.subr.bf16.mxu0 0
    %4495 = vmatpush1.bf16.msra.mxu0 0
    %4496 = vmatprep.subr.bf16.mxu0 0
    %4497 = vmatpush1.bf16.msra.mxu0 0
    %4498 = vmatprep.subr.bf16.mxu0 0
    %4499 = vmatpush1.bf16.msra.mxu0 0
    %4500 = vmatprep.subr.bf16.mxu0 0
    %4501 = vmatpush1.bf16.msra.mxu0 0
    %4502 = vmatprep.subr.bf16.mxu0 0
    %4503 = vmatpush1.bf16.msra.mxu0 0
    %4504 = vmatprep.subr.bf16.mxu0 0
    %4505 = vmatpush1.bf16.msra.mxu0 0
    %4506 = vmatprep.subr.bf16.mxu0 0
    %4507 = vmatpush1.bf16.msra.mxu0 0
    %4508 = vmatprep.subr.bf16.mxu0 0
    %4509 = vmatpush1.bf16.msra.mxu0 0
    %4510 = vmatprep.subr.bf16.mxu0 0
    %4511 = vmatpush1.bf16.msra.mxu0 0
    %4512 = vmatprep.subr.bf16.mxu0 0
    %4513 = vmatpush1.bf16.msra.mxu0 0
    %4514 = vmatprep.subr.bf16.mxu0 0
    %4515 = vmatpush1.bf16.msra.mxu0 0
    %4516 = vmatprep.mubr.bf16.mxu0 0
    %4517 = vmatmul.mubr.bf16.gmra.mrb[0].mxu0 %v4482
    %v4518 = vpop.f32.mrb[0].mxu0
    %v4519 = vadd.f32 0.0, %v4518
    %v4520 = vpop.f32.mrb[0].mxu0
    %v4521 = vadd.f32 0.0, %v4520
    %v4522 = vpop.f32.mrb[0].mxu0
    %v4523 = vpop.f32.mrb[0].mxu0
    %4524 = vdwg.mxu0
    %4525 = vmatprep.subr.bf16.mxu0 %v4452
    %4526 = vmatpush1.bf16.msra.mxu0 %v4451
    %4527 = vmatprep.subr.bf16.mxu0 %v4460
    %4528 = vmatpush1.bf16.msra.mxu0 %v4459
    %4529 = vmatprep.subr.bf16.mxu0 0
    %4530 = vmatpush1.bf16.msra.mxu0 0
    %4531 = vmatprep.subr.bf16.mxu0 0
    %4532 = vmatpush1.bf16.msra.mxu0 0
    %4533 = vmatprep.subr.bf16.mxu0 0
    %4534 = vmatpush1.bf16.msra.mxu0 0
    %4535 = vmatprep.subr.bf16.mxu0 0
    %4536 = vmatpush1.bf16.msra.mxu0 0
    %4537 = vmatprep.subr.bf16.mxu0 0
    %4538 = vmatpush1.bf16.msra.mxu0 0
    %4539 = vmatprep.subr.bf16.mxu0 0
    %4540 = vmatpush1.bf16.msra.mxu0 0
    %4541 = vmatprep.subr.bf16.mxu0 0
    %4542 = vmatpush1.bf16.msra.mxu0 0
    %4543 = vmatprep.subr.bf16.mxu0 0
    %4544 = vmatpush1.bf16.msra.mxu0 0
    %4545 = vmatprep.subr.bf16.mxu0 0
    %4546 = vmatpush1.bf16.msra.mxu0 0
    %4547 = vmatprep.subr.bf16.mxu0 0
    %4548 = vmatpush1.bf16.msra.mxu0 0
    %4549 = vmatprep.subr.bf16.mxu0 0
    %4550 = vmatpush1.bf16.msra.mxu0 0
    %4551 = vmatprep.subr.bf16.mxu0 0
    %4552 = vmatpush1.bf16.msra.mxu0 0
    %4553 = vmatprep.subr.bf16.mxu0 0
    %4554 = vmatpush1.bf16.msra.mxu0 0
    %4555 = vmatprep.subr.bf16.mxu0 0
    %4556 = vmatpush1.bf16.msra.mxu0 0
    %4557 = vmatprep.mubr.bf16.mxu0 0
    %4558 = vmatmul.mubr.bf16.gmra.mrb[0].mxu0 %v4482
    %v4559 = vpop.f32.mrb[0].mxu0
    %v4560 = vadd.f32 0.0, %v4559
    %v4561 = vpop.f32.mrb[0].mxu0
    %v4562 = vadd.f32 0.0, %v4561
    %v4563 = vpop.f32.mrb[0].mxu0
    %v4564 = vpop.f32.mrb[0].mxu0
    %4565 = vdwg.mxu0
    %4566 = vmatprep.subr.bf16.mxu0 %v4454
    %4567 = vmatpush1.bf16.msra.mxu0 %v4453
    %4568 = vmatprep.subr.bf16.mxu0 %v4462
    %4569 = vmatpush1.bf16.msra.mxu0 %v4461
    %4570 = vmatprep.subr.bf16.mxu0 0
    %4571 = vmatpush1.bf16.msra.mxu0 0
    %4572 = vmatprep.subr.bf16.mxu0 0
    %4573 = vmatpush1.bf16.msra.mxu0 0
    %4574 = vmatprep.subr.bf16.mxu0 0
    %4575 = vmatpush1.bf16.msra.mxu0 0
    %4576 = vmatprep.subr.bf16.mxu0 0
    %4577 = vmatpush1.bf16.msra.mxu0 0
    %4578 = vmatprep.subr.bf16.mxu0 0
    %4579 = vmatpush1.bf16.msra.mxu0 0
    %4580 = vmatprep.subr.bf16.mxu0 0
    %4581 = vmatpush1.bf16.msra.mxu0 0
    %4582 = vmatprep.subr.bf16.mxu0 0
    %4583 = vmatpush1.bf16.msra.mxu0 0
    %4584 = vmatprep.subr.bf16.mxu0 0
    %4585 = vmatpush1.bf16.msra.mxu0 0
    %4586 = vmatprep.subr.bf16.mxu0 0
    %4587 = vmatpush1.bf16.msra.mxu0 0
    %4588 = vmatprep.subr.bf16.mxu0 0
    %4589 = vmatpush1.bf16.msra.mxu0 0
    %4590 = vmatprep.subr.bf16.mxu0 0
    %4591 = vmatpush1.bf16.msra.mxu0 0
    %4592 = vmatprep.subr.bf16.mxu0 0
    %4593 = vmatpush1.bf16.msra.mxu0 0
    %4594 = vmatprep.subr.bf16.mxu0 0
    %4595 = vmatpush1.bf16.msra.mxu0 0
    %4596 = vmatprep.subr.bf16.mxu0 0
    %4597 = vmatpush1.bf16.msra.mxu0 0
    %4598 = vmatprep.mubr.bf16.mxu0 0
    %4599 = vmatmul.mubr.bf16.gmra.mrb[0].mxu0 %v4482
    %v4600 = vpop.f32.mrb[0].mxu0
    %v4601 = vadd.f32 0.0, %v4600
    %v4602 = vpop.f32.mrb[0].mxu0
    %v4603 = vadd.f32 0.0, %v4602
    %v4604 = vpop.f32.mrb[0].mxu0
    %v4605 = vpop.f32.mrb[0].mxu0
    %4606 = vdwg.mxu0
    %4607 = vmatprep.subr.bf16.mxu0 %v4456
    %4608 = vmatpush1.bf16.msra.mxu0 %v4455
    %4609 = vmatprep.subr.bf16.mxu0 %v4464
    %4610 = vmatpush1.bf16.msra.mxu0 %v4463
    %4611 = vmatprep.subr.bf16.mxu0 0
    %4612 = vmatpush1.bf16.msra.mxu0 0
    %4613 = vmatprep.subr.bf16.mxu0 0
    %4614 = vmatpush1.bf16.msra.mxu0 0
    %4615 = vmatprep.subr.bf16.mxu0 0
    %4616 = vmatpush1.bf16.msra.mxu0 0
    %4617 = vmatprep.subr.bf16.mxu0 0
    %4618 = vmatpush1.bf16.msra.mxu0 0
    %4619 = vmatprep.subr.bf16.mxu0 0
    %4620 = vmatpush1.bf16.msra.mxu0 0
    %4621 = vmatprep.subr.bf16.mxu0 0
    %4622 = vmatpush1.bf16.msra.mxu0 0
    %4623 = vmatprep.subr.bf16.mxu0 0
    %4624 = vmatpush1.bf16.msra.mxu0 0
    %4625 = vmatprep.subr.bf16.mxu0 0
    %4626 = vmatpush1.bf16.msra.mxu0 0
    %4627 = vmatprep.subr.bf16.mxu0 0
    %4628 = vmatpush1.bf16.msra.mxu0 0
    %4629 = vmatprep.subr.bf16.mxu0 0
    %4630 = vmatpush1.bf16.msra.mxu0 0
    %4631 = vmatprep.subr.bf16.mxu0 0
    %4632 = vmatpush1.bf16.msra.mxu0 0
    %4633 = vmatprep.subr.bf16.mxu0 0
    %4634 = vmatpush1.bf16.msra.mxu0 0
    %4635 = vmatprep.subr.bf16.mxu0 0
    %4636 = vmatpush1.bf16.msra.mxu0 0
    %4637 = vmatprep.subr.bf16.mxu0 0
    %4638 = vmatpush1.bf16.msra.mxu0 0
    %4639 = vmatprep.mubr.bf16.mxu0 0
    %4640 = vmatmul.mubr.bf16.gmra.mrb[0].mxu0 %v4482
    %v4641 = vpop.f32.mrb[0].mxu0
    %v4642 = vadd.f32 0.0, %v4641
    %v4643 = vpop.f32.mrb[0].mxu0
    %v4644 = vadd.f32 0.0, %v4643
    %v4645 = vpop.f32.mrb[0].mxu0
    %v4646 = vpop.f32.mrb[0].mxu0
    %4647 = vdwg.mxu0
    %v4648 = vadd.f32 %v4326, %v4519
    %v4649 = vadd.f32 %v4327, %v4521
    %v4650 = vadd.f32 %v4328, %v4560
    %v4651 = vadd.f32 %v4329, %v4562
    %v4652 = vadd.f32 %v4330, %v4601
    %v4653 = vadd.f32 %v4331, %v4603
    %v4654 = vadd.f32 %v4332, %v4642
    %v4655 = vadd.f32 %v4333, %v4644
    %4656 = vset.pattern.permute.xlu0 14
    %4657 = vperm.xlu0 %4656, %v104
    %v4658 = vpop.permute.xlu0 %4657
    %vm4659 = vcmp.eq.s32.totalorder %v119, %v4658
    %v4660 = vsel %vm4659, 1.0, 0.0
    %v4661 = vpack.c.bf16 %v4660, %v4660
    %v4663 = vsel %vm165, %v4661, 0
    %4665 = vmatprep.subr.bf16.mxu0 0
    %4666 = vmatpush1.bf16.msra.mxu0 %v152
    %4667 = vmatprep.subr.bf16.mxu0 0
    %4668 = vmatpush1.bf16.msra.mxu0 %v153
    %4669 = vmatprep.subr.bf16.mxu0 0
    %4670 = vmatpush1.bf16.msra.mxu0 %v154
    %4671 = vmatprep.subr.bf16.mxu0 0
    %4672 = vmatpush1.bf16.msra.mxu0 %v155
    %4673 = vmatprep.subr.bf16.mxu0 0
    %4674 = vmatpush1.bf16.msra.mxu0 %v156
    %4675 = vmatprep.subr.bf16.mxu0 0
    %4676 = vmatpush1.bf16.msra.mxu0 %v157
    %4677 = vmatprep.subr.bf16.mxu0 0
    %4678 = vmatpush1.bf16.msra.mxu0 %v171
    %4679 = vmatprep.subr.bf16.mxu0 0
    %4680 = vmatpush1.bf16.msra.mxu0 0
    %4681 = vmatprep.subr.bf16.mxu0 0
    %4682 = vmatpush1.bf16.msra.mxu0 0
    %4683 = vmatprep.subr.bf16.mxu0 0
    %4684 = vmatpush1.bf16.msra.mxu0 0
    %4685 = vmatprep.subr.bf16.mxu0 0
    %4686 = vmatpush1.bf16.msra.mxu0 0
    %4687 = vmatprep.subr.bf16.mxu0 0
    %4688 = vmatpush1.bf16.msra.mxu0 0
    %4689 = vmatprep.subr.bf16.mxu0 0
    %4690 = vmatpush1.bf16.msra.mxu0 0
    %4691 = vmatprep.subr.bf16.mxu0 0
    %4692 = vmatpush1.bf16.msra.mxu0 0
    %4693 = vmatprep.subr.bf16.mxu0 0
    %4694 = vmatpush1.bf16.msra.mxu0 0
    %4695 = vmatprep.subr.bf16.mxu0 0
    %4696 = vmatpush1.bf16.msra.mxu0 0
    %4697 = vmatprep.mubr.bf16.mxu0 0
    %4698 = vmatmul.mubr.bf16.gmra.mrb[0].mxu0 %v4663
    %v4699 = vpop.f32.mrb[0].mxu0
    %v4700 = vadd.f32 0.0, %v4699
    %v4701 = vpop.f32.mrb[0].mxu0
    %v4702 = vpop.f32.mrb[0].mxu0
    %v4703 = vpop.f32.mrb[0].mxu0
    %4704 = vdwg.mxu0
    %v4705 = vpack.c.bf16 %v4700, %v4700
    %s4706 = scalar_lea.vmem [#allocation4], 1792
    %v4707 = vld [vmem:[%s4706] sm:$0xff]
    %v4708 = vld [vmem:[%s4706 + $0x8] sm:$0xff]
    %v4709 = vld [vmem:[%s4706 + $0x10] sm:$0xff]
    %v4710 = vld [vmem:[%s4706 + $0x18] sm:$0xff]
    %v4711 = vld [vmem:[%s4706 + $0x20] sm:$0xff]
    %v4712 = vld [vmem:[%s4706 + $0x28] sm:$0xff]
    %v4713 = vld [vmem:[%s4706 + $0x30] sm:$0xff]
    %v4714 = vld [vmem:[%s4706 + $0x38] sm:$0xff]
    %v4715 = vld [vmem:[%s4706 + $0x40] sm:$0xff]
    %v4716 = vld [vmem:[%s4706 + $0x48] sm:$0xff]
    %v4717 = vld [vmem:[%s4706 + $0x50] sm:$0xff]
    %v4718 = vld [vmem:[%s4706 + $0x58] sm:$0xff]
    %v4719 = vld [vmem:[%s4706 + $0x60] sm:$0xff]
    %v4720 = vld [vmem:[%s4706 + $0x68] sm:$0xff]
    %v4721 = vld [vmem:[%s4706 + $0x70] sm:$0xff]
    %v4722 = vld [vmem:[%s4706 + $0x78] sm:$0xff]
    %v4739 = vunpack.c.l.b16 %v4707
    %v4740 = vunpack.c.h.b16 %v4707
    %v4741 = vunpack.c.l.b16 %v4708
    %v4742 = vunpack.c.h.b16 %v4708
    %v4743 = vunpack.c.l.b16 %v4709
    %v4744 = vunpack.c.h.b16 %v4709
    %v4745 = vunpack.c.l.b16 %v4710
    %v4746 = vunpack.c.h.b16 %v4710
    %v4747 = vunpack.c.l.b16 %v4711
    %v4748 = vunpack.c.h.b16 %v4711
    %v4749 = vunpack.c.l.b16 %v4712
    %v4750 = vunpack.c.h.b16 %v4712
    %v4751 = vunpack.c.l.b16 %v4713
    %v4752 = vunpack.c.h.b16 %v4713
    %v4753 = vunpack.c.l.b16 %v4714
    %v4754 = vunpack.c.h.b16 %v4714
    %v4755 = vunpack.c.l.b16 %v4715
    %v4756 = vunpack.c.h.b16 %v4715
    %v4757 = vunpack.c.l.b16 %v4716
    %v4758 = vunpack.c.h.b16 %v4716
    %v4759 = vunpack.c.l.b16 %v4717
    %v4760 = vunpack.c.h.b16 %v4717
    %v4761 = vunpack.c.l.b16 %v4718
    %v4762 = vunpack.c.h.b16 %v4718
    %v4763 = vunpack.c.l.b16 %v4719
    %v4764 = vunpack.c.h.b16 %v4719
    %v4765 = vunpack.c.l.b16 %v4720
    %v4766 = vunpack.c.h.b16 %v4720
    %v4767 = vunpack.c.l.b16 %v4721
    %v4768 = vunpack.c.h.b16 %v4721
    %v4769 = vunpack.c.l.b16 %v4722
    %v4770 = vunpack.c.h.b16 %v4722
    %v4771 = vpack.c.b16 %v4747, %v4739
    %v4772 = vpack.c.b16 %v4748, %v4740
    %v4773 = vpack.c.b16 %v4749, %v4741
    %v4774 = vpack.c.b16 %v4750, %v4742
    %v4775 = vpack.c.b16 %v4751, %v4743
    %v4776 = vpack.c.b16 %v4752, %v4744
    %v4777 = vpack.c.b16 %v4753, %v4745
    %v4778 = vpack.c.b16 %v4754, %v4746
    %v4779 = vpack.c.b16 %v4763, %v4755
    %v4780 = vpack.c.b16 %v4764, %v4756
    %v4781 = vpack.c.b16 %v4765, %v4757
    %v4782 = vpack.c.b16 %v4766, %v4758
    %v4783 = vpack.c.b16 %v4767, %v4759
    %v4784 = vpack.c.b16 %v4768, %v4760
    %v4785 = vpack.c.b16 %v4769, %v4761
    %v4786 = vpack.c.b16 %v4770, %v4762
    %v4804 = vsel %vm377, %v4705, 0
    %4806 = vmatprep.subr.bf16.mxu0 %v4772
    %4807 = vmatpush1.bf16.msra.mxu0 %v4771
    %4808 = vmatprep.subr.bf16.mxu0 %v4780
    %4809 = vmatpush1.bf16.msra.mxu0 %v4779
    %4810 = vmatprep.subr.bf16.mxu0 0
    %4811 = vmatpush1.bf16.msra.mxu0 0
    %4812 = vmatprep.subr.bf16.mxu0 0
    %4813 = vmatpush1.bf16.msra.mxu0 0
    %4814 = vmatprep.subr.bf16.mxu0 0
    %4815 = vmatpush1.bf16.msra.mxu0 0
    %4816 = vmatprep.subr.bf16.mxu0 0
    %4817 = vmatpush1.bf16.msra.mxu0 0
    %4818 = vmatprep.subr.bf16.mxu0 0
    %4819 = vmatpush1.bf16.msra.mxu0 0
    %4820 = vmatprep.subr.bf16.mxu0 0
    %4821 = vmatpush1.bf16.msra.mxu0 0
    %4822 = vmatprep.subr.bf16.mxu0 0
    %4823 = vmatpush1.bf16.msra.mxu0 0
    %4824 = vmatprep.subr.bf16.mxu0 0
    %4825 = vmatpush1.bf16.msra.mxu0 0
    %4826 = vmatprep.subr.bf16.mxu0 0
    %4827 = vmatpush1.bf16.msra.mxu0 0
    %4828 = vmatprep.subr.bf16.mxu0 0
    %4829 = vmatpush1.bf16.msra.mxu0 0
    %4830 = vmatprep.subr.bf16.mxu0 0
    %4831 = vmatpush1.bf16.msra.mxu0 0
    %4832 = vmatprep.subr.bf16.mxu0 0
    %4833 = vmatpush1.bf16.msra.mxu0 0
    %4834 = vmatprep.subr.bf16.mxu0 0
    %4835 = vmatpush1.bf16.msra.mxu0 0
    %4836 = vmatprep.subr.bf16.mxu0 0
    %4837 = vmatpush1.bf16.msra.mxu0 0
    %4838 = vmatprep.mubr.bf16.mxu0 0
    %4839 = vmatmul.mubr.bf16.gmra.mrb[0].mxu0 %v4804
    %v4840 = vpop.f32.mrb[0].mxu0
    %v4841 = vadd.f32 0.0, %v4840
    %v4842 = vpop.f32.mrb[0].mxu0
    %v4843 = vadd.f32 0.0, %v4842
    %v4844 = vpop.f32.mrb[0].mxu0
    %v4845 = vpop.f32.mrb[0].mxu0
    %4846 = vdwg.mxu0
    %4847 = vmatprep.subr.bf16.mxu0 %v4774
    %4848 = vmatpush1.bf16.msra.mxu0 %v4773
    %4849 = vmatprep.subr.bf16.mxu0 %v4782
    %4850 = vmatpush1.bf16.msra.mxu0 %v4781
    %4851 = vmatprep.subr.bf16.mxu0 0
    %4852 = vmatpush1.bf16.msra.mxu0 0
    %4853 = vmatprep.subr.bf16.mxu0 0
    %4854 = vmatpush1.bf16.msra.mxu0 0
    %4855 = vmatprep.subr.bf16.mxu0 0
    %4856 = vmatpush1.bf16.msra.mxu0 0
    %4857 = vmatprep.subr.bf16.mxu0 0
    %4858 = vmatpush1.bf16.msra.mxu0 0
    %4859 = vmatprep.subr.bf16.mxu0 0
    %4860 = vmatpush1.bf16.msra.mxu0 0
    %4861 = vmatprep.subr.bf16.mxu0 0
    %4862 = vmatpush1.bf16.msra.mxu0 0
    %4863 = vmatprep.subr.bf16.mxu0 0
    %4864 = vmatpush1.bf16.msra.mxu0 0
    %4865 = vmatprep.subr.bf16.mxu0 0
    %4866 = vmatpush1.bf16.msra.mxu0 0
    %4867 = vmatprep.subr.bf16.mxu0 0
    %4868 = vmatpush1.bf16.msra.mxu0 0
    %4869 = vmatprep.subr.bf16.mxu0 0
    %4870 = vmatpush1.bf16.msra.mxu0 0
    %4871 = vmatprep.subr.bf16.mxu0 0
    %4872 = vmatpush1.bf16.msra.mxu0 0
    %4873 = vmatprep.subr.bf16.mxu0 0
    %4874 = vmatpush1.bf16.msra.mxu0 0
    %4875 = vmatprep.subr.bf16.mxu0 0
    %4876 = vmatpush1.bf16.msra.mxu0 0
    %4877 = vmatprep.subr.bf16.mxu0 0
    %4878 = vmatpush1.bf16.msra.mxu0 0
    %4879 = vmatprep.mubr.bf16.mxu0 0
    %4880 = vmatmul.mubr.bf16.gmra.mrb[0].mxu0 %v4804
    %v4881 = vpop.f32.mrb[0].mxu0
    %v4882 = vadd.f32 0.0, %v4881
    %v4883 = vpop.f32.mrb[0].mxu0
    %v4884 = vadd.f32 0.0, %v4883
    %v4885 = vpop.f32.mrb[0].mxu0
    %v4886 = vpop.f32.mrb[0].mxu0
    %4887 = vdwg.mxu0
    %4888 = vmatprep.subr.bf16.mxu0 %v4776
    %4889 = vmatpush1.bf16.msra.mxu0 %v4775
    %4890 = vmatprep.subr.bf16.mxu0 %v4784
    %4891 = vmatpush1.bf16.msra.mxu0 %v4783
    %4892 = vmatprep.subr.bf16.mxu0 0
    %4893 = vmatpush1.bf16.msra.mxu0 0
    %4894 = vmatprep.subr.bf16.mxu0 0
    %4895 = vmatpush1.bf16.msra.mxu0 0
    %4896 = vmatprep.subr.bf16.mxu0 0
    %4897 = vmatpush1.bf16.msra.mxu0 0
    %4898 = vmatprep.subr.bf16.mxu0 0
    %4899 = vmatpush1.bf16.msra.mxu0 0
    %4900 = vmatprep.subr.bf16.mxu0 0
    %4901 = vmatpush1.bf16.msra.mxu0 0
    %4902 = vmatprep.subr.bf16.mxu0 0
    %4903 = vmatpush1.bf16.msra.mxu0 0
    %4904 = vmatprep.subr.bf16.mxu0 0
    %4905 = vmatpush1.bf16.msra.mxu0 0
    %4906 = vmatprep.subr.bf16.mxu0 0
    %4907 = vmatpush1.bf16.msra.mxu0 0
    %4908 = vmatprep.subr.bf16.mxu0 0
    %4909 = vmatpush1.bf16.msra.mxu0 0
    %4910 = vmatprep.subr.bf16.mxu0 0
    %4911 = vmatpush1.bf16.msra.mxu0 0
    %4912 = vmatprep.subr.bf16.mxu0 0
    %4913 = vmatpush1.bf16.msra.mxu0 0
    %4914 = vmatprep.subr.bf16.mxu0 0
    %4915 = vmatpush1.bf16.msra.mxu0 0
    %4916 = vmatprep.subr.bf16.mxu0 0
    %4917 = vmatpush1.bf16.msra.mxu0 0
    %4918 = vmatprep.subr.bf16.mxu0 0
    %4919 = vmatpush1.bf16.msra.mxu0 0
    %4920 = vmatprep.mubr.bf16.mxu0 0
    %4921 = vmatmul.mubr.bf16.gmra.mrb[0].mxu0 %v4804
    %v4922 = vpop.f32.mrb[0].mxu0
    %v4923 = vadd.f32 0.0, %v4922
    %v4924 = vpop.f32.mrb[0].mxu0
    %v4925 = vadd.f32 0.0, %v4924
    %v4926 = vpop.f32.mrb[0].mxu0
    %v4927 = vpop.f32.mrb[0].mxu0
    %4928 = vdwg.mxu0
    %4929 = vmatprep.subr.bf16.mxu0 %v4778
    %4930 = vmatpush1.bf16.msra.mxu0 %v4777
    %4931 = vmatprep.subr.bf16.mxu0 %v4786
    %4932 = vmatpush1.bf16.msra.mxu0 %v4785
    %4933 = vmatprep.subr.bf16.mxu0 0
    %4934 = vmatpush1.bf16.msra.mxu0 0
    %4935 = vmatprep.subr.bf16.mxu0 0
    %4936 = vmatpush1.bf16.msra.mxu0 0
    %4937 = vmatprep.subr.bf16.mxu0 0
    %4938 = vmatpush1.bf16.msra.mxu0 0
    %4939 = vmatprep.subr.bf16.mxu0 0
    %4940 = vmatpush1.bf16.msra.mxu0 0
    %4941 = vmatprep.subr.bf16.mxu0 0
    %4942 = vmatpush1.bf16.msra.mxu0 0
    %4943 = vmatprep.subr.bf16.mxu0 0
    %4944 = vmatpush1.bf16.msra.mxu0 0
    %4945 = vmatprep.subr.bf16.mxu0 0
    %4946 = vmatpush1.bf16.msra.mxu0 0
    %4947 = vmatprep.subr.bf16.mxu0 0
    %4948 = vmatpush1.bf16.msra.mxu0 0
    %4949 = vmatprep.subr.bf16.mxu0 0
    %4950 = vmatpush1.bf16.msra.mxu0 0
    %4951 = vmatprep.subr.bf16.mxu0 0
    %4952 = vmatpush1.bf16.msra.mxu0 0
    %4953 = vmatprep.subr.bf16.mxu0 0
    %4954 = vmatpush1.bf16.msra.mxu0 0
    %4955 = vmatprep.subr.bf16.mxu0 0
    %4956 = vmatpush1.bf16.msra.mxu0 0
    %4957 = vmatprep.subr.bf16.mxu0 0
    %4958 = vmatpush1.bf16.msra.mxu0 0
    %4959 = vmatprep.subr.bf16.mxu0 0
    %4960 = vmatpush1.bf16.msra.mxu0 0
    %4961 = vmatprep.mubr.bf16.mxu0 0
    %4962 = vmatmul.mubr.bf16.gmra.mrb[0].mxu0 %v4804
    %v4963 = vpop.f32.mrb[0].mxu0
    %v4964 = vadd.f32 0.0, %v4963
    %v4965 = vpop.f32.mrb[0].mxu0
    %v4966 = vadd.f32 0.0, %v4965
    %v4967 = vpop.f32.mrb[0].mxu0
    %v4968 = vpop.f32.mrb[0].mxu0
    %4969 = vdwg.mxu0
    %v4970 = vadd.f32 %v4648, %v4841
    %v4971 = vadd.f32 %v4649, %v4843
    %v4972 = vadd.f32 %v4650, %v4882
    %v4973 = vadd.f32 %v4651, %v4884
    %v4974 = vadd.f32 %v4652, %v4923
    %v4975 = vadd.f32 %v4653, %v4925
    %v4976 = vadd.f32 %v4654, %v4964
    %v4977 = vadd.f32 %v4655, %v4966
    %4978 = vset.pattern.permute.xlu0 15
    %4979 = vperm.xlu0 %4978, %v104
    %v4980 = vpop.permute.xlu0 %4979
    %vm4981 = vcmp.eq.s32.totalorder %v119, %v4980
    %v4982 = vsel %vm4981, 1.0, 0.0
    %v4983 = vpack.c.bf16 %v4982, %v4982
    %v4985 = vsel %vm165, %v4983, 0
    %4987 = vmatprep.subr.bf16.mxu0 0
    %4988 = vmatpush1.bf16.msra.mxu0 %v152
    %4989 = vmatprep.subr.bf16.mxu0 0
    %4990 = vmatpush1.bf16.msra.mxu0 %v153
    %4991 = vmatprep.subr.bf16.mxu0 0
    %4992 = vmatpush1.bf16.msra.mxu0 %v154
    %4993 = vmatprep.subr.bf16.mxu0 0
    %4994 = vmatpush1.bf16.msra.mxu0 %v155
    %4995 = vmatprep.subr.bf16.mxu0 0
    %4996 = vmatpush1.bf16.msra.mxu0 %v156
    %4997 = vmatprep.subr.bf16.mxu0 0
    %4998 = vmatpush1.bf16.msra.mxu0 %v157
    %4999 = vmatprep.subr.bf16.mxu0 0
    %5000 = vmatpush1.bf16.msra.mxu0 %v171
    %5001 = vmatprep.subr.bf16.mxu0 0
    %5002 = vmatpush1.bf16.msra.mxu0 0
    %5003 = vmatprep.subr.bf16.mxu0 0
    %5004 = vmatpush1.bf16.msra.mxu0 0
    %5005 = vmatprep.subr.bf16.mxu0 0
    %5006 = vmatpush1.bf16.msra.mxu0 0
    %5007 = vmatprep.subr.bf16.mxu0 0
    %5008 = vmatpush1.bf16.msra.mxu0 0
    %5009 = vmatprep.subr.bf16.mxu0 0
    %5010 = vmatpush1.bf16.msra.mxu0 0
    %5011 = vmatprep.subr.bf16.mxu0 0
    %5012 = vmatpush1.bf16.msra.mxu0 0
    %5013 = vmatprep.subr.bf16.mxu0 0
    %5014 = vmatpush1.bf16.msra.mxu0 0
    %5015 = vmatprep.subr.bf16.mxu0 0
    %5016 = vmatpush1.bf16.msra.mxu0 0
    %5017 = vmatprep.subr.bf16.mxu0 0
    %5018 = vmatpush1.bf16.msra.mxu0 0
    %5019 = vmatprep.mubr.bf16.mxu0 0
    %5020 = vmatmul.mubr.bf16.gmra.mrb[0].mxu0 %v4985
    %v5021 = vpop.f32.mrb[0].mxu0
    %v5022 = vadd.f32 0.0, %v5021
    %v5023 = vpop.f32.mrb[0].mxu0
    %v5024 = vpop.f32.mrb[0].mxu0
    %v5025 = vpop.f32.mrb[0].mxu0
    %5026 = vdwg.mxu0
    %v5027 = vpack.c.bf16 %v5022, %v5022
    %s5028 = scalar_lea.vmem [#allocation4], 1920
    %v5029 = vld [vmem:[%s5028] sm:$0xff]
    %v5030 = vld [vmem:[%s5028 + $0x8] sm:$0xff]
    %v5031 = vld [vmem:[%s5028 + $0x10] sm:$0xff]
    %v5032 = vld [vmem:[%s5028 + $0x18] sm:$0xff]
    %v5033 = vld [vmem:[%s5028 + $0x20] sm:$0xff]
    %v5034 = vld [vmem:[%s5028 + $0x28] sm:$0xff]
    %v5035 = vld [vmem:[%s5028 + $0x30] sm:$0xff]
    %v5036 = vld [vmem:[%s5028 + $0x38] sm:$0xff]
    %v5037 = vld [vmem:[%s5028 + $0x40] sm:$0xff]
    %v5038 = vld [vmem:[%s5028 + $0x48] sm:$0xff]
    %v5039 = vld [vmem:[%s5028 + $0x50] sm:$0xff]
    %v5040 = vld [vmem:[%s5028 + $0x58] sm:$0xff]
    %v5041 = vld [vmem:[%s5028 + $0x60] sm:$0xff]
    %v5042 = vld [vmem:[%s5028 + $0x68] sm:$0xff]
    %v5043 = vld [vmem:[%s5028 + $0x70] sm:$0xff]
    %v5044 = vld [vmem:[%s5028 + $0x78] sm:$0xff]
    %v5061 = vunpack.c.l.b16 %v5029
    %v5062 = vunpack.c.h.b16 %v5029
    %v5063 = vunpack.c.l.b16 %v5030
    %v5064 = vunpack.c.h.b16 %v5030
    %v5065 = vunpack.c.l.b16 %v5031
    %v5066 = vunpack.c.h.b16 %v5031
    %v5067 = vunpack.c.l.b16 %v5032
    %v5068 = vunpack.c.h.b16 %v5032
    %v5069 = vunpack.c.l.b16 %v5033
    %v5070 = vunpack.c.h.b16 %v5033
    %v5071 = vunpack.c.l.b16 %v5034
    %v5072 = vunpack.c.h.b16 %v5034
    %v5073 = vunpack.c.l.b16 %v5035
    %v5074 = vunpack.c.h.b16 %v5035
    %v5075 = vunpack.c.l.b16 %v5036
    %v5076 = vunpack.c.h.b16 %v5036
    %v5077 = vunpack.c.l.b16 %v5037
    %v5078 = vunpack.c.h.b16 %v5037
    %v5079 = vunpack.c.l.b16 %v5038
    %v5080 = vunpack.c.h.b16 %v5038
    %v5081 = vunpack.c.l.b16 %v5039
    %v5082 = vunpack.c.h.b16 %v5039
    %v5083 = vunpack.c.l.b16 %v5040
    %v5084 = vunpack.c.h.b16 %v5040
    %v5085 = vunpack.c.l.b16 %v5041
    %v5086 = vunpack.c.h.b16 %v5041
    %v5087 = vunpack.c.l.b16 %v5042
    %v5088 = vunpack.c.h.b16 %v5042
    %v5089 = vunpack.c.l.b16 %v5043
    %v5090 = vunpack.c.h.b16 %v5043
    %v5091 = vunpack.c.l.b16 %v5044
    %v5092 = vunpack.c.h.b16 %v5044
    %v5093 = vpack.c.b16 %v5069, %v5061
    %v5094 = vpack.c.b16 %v5070, %v5062
    %v5095 = vpack.c.b16 %v5071, %v5063
    %v5096 = vpack.c.b16 %v5072, %v5064
    %v5097 = vpack.c.b16 %v5073, %v5065
    %v5098 = vpack.c.b16 %v5074, %v5066
    %v5099 = vpack.c.b16 %v5075, %v5067
    %v5100 = vpack.c.b16 %v5076, %v5068
    %v5101 = vpack.c.b16 %v5085, %v5077
    %v5102 = vpack.c.b16 %v5086, %v5078
    %v5103 = vpack.c.b16 %v5087, %v5079
    %v5104 = vpack.c.b16 %v5088, %v5080
    %v5105 = vpack.c.b16 %v5089, %v5081
    %v5106 = vpack.c.b16 %v5090, %v5082
    %v5107 = vpack.c.b16 %v5091, %v5083
    %v5108 = vpack.c.b16 %v5092, %v5084
    %v5126 = vsel %vm377, %v5027, 0
    %5128 = vmatprep.subr.bf16.mxu0 %v5094
    %5129 = vmatpush1.bf16.msra.mxu0 %v5093
    %5130 = vmatprep.subr.bf16.mxu0 %v5102
    %5131 = vmatpush1.bf16.msra.mxu0 %v5101
    %5132 = vmatprep.subr.bf16.mxu0 0
    %5133 = vmatpush1.bf16.msra.mxu0 0
    %5134 = vmatprep.subr.bf16.mxu0 0
    %5135 = vmatpush1.bf16.msra.mxu0 0
    %5136 = vmatprep.subr.bf16.mxu0 0
    %5137 = vmatpush1.bf16.msra.mxu0 0
    %5138 = vmatprep.subr.bf16.mxu0 0
    %5139 = vmatpush1.bf16.msra.mxu0 0
    %5140 = vmatprep.subr.bf16.mxu0 0
    %5141 = vmatpush1.bf16.msra.mxu0 0
    %5142 = vmatprep.subr.bf16.mxu0 0
    %5143 = vmatpush1.bf16.msra.mxu0 0
    %5144 = vmatprep.subr.bf16.mxu0 0
    %5145 = vmatpush1.bf16.msra.mxu0 0
    %5146 = vmatprep.subr.bf16.mxu0 0
    %5147 = vmatpush1.bf16.msra.mxu0 0
    %5148 = vmatprep.subr.bf16.mxu0 0
    %5149 = vmatpush1.bf16.msra.mxu0 0
    %5150 = vmatprep.subr.bf16.mxu0 0
    %5151 = vmatpush1.bf16.msra.mxu0 0
    %5152 = vmatprep.subr.bf16.mxu0 0
    %5153 = vmatpush1.bf16.msra.mxu0 0
    %5154 = vmatprep.subr.bf16.mxu0 0
    %5155 = vmatpush1.bf16.msra.mxu0 0
    %5156 = vmatprep.subr.bf16.mxu0 0
    %5157 = vmatpush1.bf16.msra.mxu0 0
    %5158 = vmatprep.subr.bf16.mxu0 0
    %5159 = vmatpush1.bf16.msra.mxu0 0
    %5160 = vmatprep.mubr.bf16.mxu0 0
    %5161 = vmatmul.mubr.bf16.gmra.mrb[0].mxu0 %v5126
    %v5162 = vpop.f32.mrb[0].mxu0
    %v5163 = vadd.f32 0.0, %v5162
    %v5164 = vpop.f32.mrb[0].mxu0
    %v5165 = vadd.f32 0.0, %v5164
    %v5166 = vpop.f32.mrb[0].mxu0
    %v5167 = vpop.f32.mrb[0].mxu0
    %5168 = vdwg.mxu0
    %5169 = vmatprep.subr.bf16.mxu0 %v5096
    %5170 = vmatpush1.bf16.msra.mxu0 %v5095
    %5171 = vmatprep.subr.bf16.mxu0 %v5104
    %5172 = vmatpush1.bf16.msra.mxu0 %v5103
    %5173 = vmatprep.subr.bf16.mxu0 0
    %5174 = vmatpush1.bf16.msra.mxu0 0
    %5175 = vmatprep.subr.bf16.mxu0 0
    %5176 = vmatpush1.bf16.msra.mxu0 0
    %5177 = vmatprep.subr.bf16.mxu0 0
    %5178 = vmatpush1.bf16.msra.mxu0 0
    %5179 = vmatprep.subr.bf16.mxu0 0
    %5180 = vmatpush1.bf16.msra.mxu0 0
    %5181 = vmatprep.subr.bf16.mxu0 0
    %5182 = vmatpush1.bf16.msra.mxu0 0
    %5183 = vmatprep.subr.bf16.mxu0 0
    %5184 = vmatpush1.bf16.msra.mxu0 0
    %5185 = vmatprep.subr.bf16.mxu0 0
    %5186 = vmatpush1.bf16.msra.mxu0 0
    %5187 = vmatprep.subr.bf16.mxu0 0
    %5188 = vmatpush1.bf16.msra.mxu0 0
    %5189 = vmatprep.subr.bf16.mxu0 0
    %5190 = vmatpush1.bf16.msra.mxu0 0
    %5191 = vmatprep.subr.bf16.mxu0 0
    %5192 = vmatpush1.bf16.msra.mxu0 0
    %5193 = vmatprep.subr.bf16.mxu0 0
    %5194 = vmatpush1.bf16.msra.mxu0 0
    %5195 = vmatprep.subr.bf16.mxu0 0
    %5196 = vmatpush1.bf16.msra.mxu0 0
    %5197 = vmatprep.subr.bf16.mxu0 0
    %5198 = vmatpush1.bf16.msra.mxu0 0
    %5199 = vmatprep.subr.bf16.mxu0 0
    %5200 = vmatpush1.bf16.msra.mxu0 0
    %5201 = vmatprep.mubr.bf16.mxu0 0
    %5202 = vmatmul.mubr.bf16.gmra.mrb[0].mxu0 %v5126
    %v5203 = vpop.f32.mrb[0].mxu0
    %v5204 = vadd.f32 0.0, %v5203
    %v5205 = vpop.f32.mrb[0].mxu0
    %v5206 = vadd.f32 0.0, %v5205
    %v5207 = vpop.f32.mrb[0].mxu0
    %v5208 = vpop.f32.mrb[0].mxu0
    %5209 = vdwg.mxu0
    %5210 = vmatprep.subr.bf16.mxu0 %v5098
    %5211 = vmatpush1.bf16.msra.mxu0 %v5097
    %5212 = vmatprep.subr.bf16.mxu0 %v5106
    %5213 = vmatpush1.bf16.msra.mxu0 %v5105
    %5214 = vmatprep.subr.bf16.mxu0 0
    %5215 = vmatpush1.bf16.msra.mxu0 0
    %5216 = vmatprep.subr.bf16.mxu0 0
    %5217 = vmatpush1.bf16.msra.mxu0 0
    %5218 = vmatprep.subr.bf16.mxu0 0
    %5219 = vmatpush1.bf16.msra.mxu0 0
    %5220 = vmatprep.subr.bf16.mxu0 0
    %5221 = vmatpush1.bf16.msra.mxu0 0
    %5222 = vmatprep.subr.bf16.mxu0 0
    %5223 = vmatpush1.bf16.msra.mxu0 0
    %5224 = vmatprep.subr.bf16.mxu0 0
    %5225 = vmatpush1.bf16.msra.mxu0 0
    %5226 = vmatprep.subr.bf16.mxu0 0
    %5227 = vmatpush1.bf16.msra.mxu0 0
    %5228 = vmatprep.subr.bf16.mxu0 0
    %5229 = vmatpush1.bf16.msra.mxu0 0
    %5230 = vmatprep.subr.bf16.mxu0 0
    %5231 = vmatpush1.bf16.msra.mxu0 0
    %5232 = vmatprep.subr.bf16.mxu0 0
    %5233 = vmatpush1.bf16.msra.mxu0 0
    %5234 = vmatprep.subr.bf16.mxu0 0
    %5235 = vmatpush1.bf16.msra.mxu0 0
    %5236 = vmatprep.subr.bf16.mxu0 0
    %5237 = vmatpush1.bf16.msra.mxu0 0
    %5238 = vmatprep.subr.bf16.mxu0 0
    %5239 = vmatpush1.bf16.msra.mxu0 0
    %5240 = vmatprep.subr.bf16.mxu0 0
    %5241 = vmatpush1.bf16.msra.mxu0 0
    %5242 = vmatprep.mubr.bf16.mxu0 0
    %5243 = vmatmul.mubr.bf16.gmra.mrb[0].mxu0 %v5126
    %v5244 = vpop.f32.mrb[0].mxu0
    %v5245 = vadd.f32 0.0, %v5244
    %v5246 = vpop.f32.mrb[0].mxu0
    %v5247 = vadd.f32 0.0, %v5246
    %v5248 = vpop.f32.mrb[0].mxu0
    %v5249 = vpop.f32.mrb[0].mxu0
    %5250 = vdwg.mxu0
    %5251 = vmatprep.subr.bf16.mxu0 %v5100
    %5252 = vmatpush1.bf16.msra.mxu0 %v5099
    %5253 = vmatprep.subr.bf16.mxu0 %v5108
    %5254 = vmatpush1.bf16.msra.mxu0 %v5107
    %5255 = vmatprep.subr.bf16.mxu0 0
    %5256 = vmatpush1.bf16.msra.mxu0 0
    %5257 = vmatprep.subr.bf16.mxu0 0
    %5258 = vmatpush1.bf16.msra.mxu0 0
    %5259 = vmatprep.subr.bf16.mxu0 0
    %5260 = vmatpush1.bf16.msra.mxu0 0
    %5261 = vmatprep.subr.bf16.mxu0 0
    %5262 = vmatpush1.bf16.msra.mxu0 0
    %5263 = vmatprep.subr.bf16.mxu0 0
    %5264 = vmatpush1.bf16.msra.mxu0 0
    %5265 = vmatprep.subr.bf16.mxu0 0
    %5266 = vmatpush1.bf16.msra.mxu0 0
    %5267 = vmatprep.subr.bf16.mxu0 0
    %5268 = vmatpush1.bf16.msra.mxu0 0
    %5269 = vmatprep.subr.bf16.mxu0 0
    %5270 = vmatpush1.bf16.msra.mxu0 0
    %5271 = vmatprep.subr.bf16.mxu0 0
    %5272 = vmatpush1.bf16.msra.mxu0 0
    %5273 = vmatprep.subr.bf16.mxu0 0
    %5274 = vmatpush1.bf16.msra.mxu0 0
    %5275 = vmatprep.subr.bf16.mxu0 0
    %5276 = vmatpush1.bf16.msra.mxu0 0
    %5277 = vmatprep.subr.bf16.mxu0 0
    %5278 = vmatpush1.bf16.msra.mxu0 0
    %5279 = vmatprep.subr.bf16.mxu0 0
    %5280 = vmatpush1.bf16.msra.mxu0 0
    %5281 = vmatprep.subr.bf16.mxu0 0
    %5282 = vmatpush1.bf16.msra.mxu0 0
    %5283 = vmatprep.mubr.bf16.mxu0 0
    %5284 = vmatmul.mubr.bf16.gmra.mrb[0].mxu0 %v5126
    %v5285 = vpop.f32.mrb[0].mxu0
    %v5286 = vadd.f32 0.0, %v5285
    %v5287 = vpop.f32.mrb[0].mxu0
    %v5288 = vadd.f32 0.0, %v5287
    %v5289 = vpop.f32.mrb[0].mxu0
    %v5290 = vpop.f32.mrb[0].mxu0
    %5291 = vdwg.mxu0
    %v5292 = vadd.f32 %v4970, %v5163
    %v5293 = vadd.f32 %v4971, %v5165
    %v5294 = vadd.f32 %v4972, %v5204
    %v5295 = vadd.f32 %v4973, %v5206
    %v5296 = vadd.f32 %v4974, %v5245
    %v5297 = vadd.f32 %v4975, %v5247
    %v5298 = vadd.f32 %v4976, %v5286
    %v5299 = vadd.f32 %v4977, %v5288
    %5300 = vset.pattern.permute.xlu0 16
    %5301 = vperm.xlu0 %5300, %v104
    %v5302 = vpop.permute.xlu0 %5301
    %vm5303 = vcmp.eq.s32.totalorder %v119, %v5302
    %v5304 = vsel %vm5303, 1.0, 0.0
    %v5305 = vpack.c.bf16 %v5304, %v5304
    %v5307 = vsel %vm165, %v5305, 0
    %5309 = vmatprep.subr.bf16.mxu0 0
    %5310 = vmatpush1.bf16.msra.mxu0 %v152
    %5311 = vmatprep.subr.bf16.mxu0 0
    %5312 = vmatpush1.bf16.msra.mxu0 %v153
    %5313 = vmatprep.subr.bf16.mxu0 0
    %5314 = vmatpush1.bf16.msra.mxu0 %v154
    %5315 = vmatprep.subr.bf16.mxu0 0
    %5316 = vmatpush1.bf16.msra.mxu0 %v155
    %5317 = vmatprep.subr.bf16.mxu0 0
    %5318 = vmatpush1.bf16.msra.mxu0 %v156
    %5319 = vmatprep.subr.bf16.mxu0 0
    %5320 = vmatpush1.bf16.msra.mxu0 %v157
    %5321 = vmatprep.subr.bf16.mxu0 0
    %5322 = vmatpush1.bf16.msra.mxu0 %v171
    %5323 = vmatprep.subr.bf16.mxu0 0
    %5324 = vmatpush1.bf16.msra.mxu0 0
    %5325 = vmatprep.subr.bf16.mxu0 0
    %5326 = vmatpush1.bf16.msra.mxu0 0
    %5327 = vmatprep.subr.bf16.mxu0 0
    %5328 = vmatpush1.bf16.msra.mxu0 0
    %5329 = vmatprep.subr.bf16.mxu0 0
    %5330 = vmatpush1.bf16.msra.mxu0 0
    %5331 = vmatprep.subr.bf16.mxu0 0
    %5332 = vmatpush1.bf16.msra.mxu0 0
    %5333 = vmatprep.subr.bf16.mxu0 0
    %5334 = vmatpush1.bf16.msra.mxu0 0
    %5335 = vmatprep.subr.bf16.mxu0 0
    %5336 = vmatpush1.bf16.msra.mxu0 0
    %5337 = vmatprep.subr.bf16.mxu0 0
    %5338 = vmatpush1.bf16.msra.mxu0 0
    %5339 = vmatprep.subr.bf16.mxu0 0
    %5340 = vmatpush1.bf16.msra.mxu0 0
    %5341 = vmatprep.mubr.bf16.mxu0 0
    %5342 = vmatmul.mubr.bf16.gmra.mrb[0].mxu0 %v5307
    %v5343 = vpop.f32.mrb[0].mxu0
    %v5344 = vadd.f32 0.0, %v5343
    %v5345 = vpop.f32.mrb[0].mxu0
    %v5346 = vpop.f32.mrb[0].mxu0
    %v5347 = vpop.f32.mrb[0].mxu0
    %5348 = vdwg.mxu0
    %v5349 = vpack.c.bf16 %v5344, %v5344
    %s5350 = scalar_lea.vmem [#allocation4], 2048
    %v5351 = vld [vmem:[%s5350] sm:$0xff]
    %v5352 = vld [vmem:[%s5350 + $0x8] sm:$0xff]
    %v5353 = vld [vmem:[%s5350 + $0x10] sm:$0xff]
    %v5354 = vld [vmem:[%s5350 + $0x18] sm:$0xff]
    %v5355 = vld [vmem:[%s5350 + $0x20] sm:$0xff]
    %v5356 = vld [vmem:[%s5350 + $0x28] sm:$0xff]
    %v5357 = vld [vmem:[%s5350 + $0x30] sm:$0xff]
    %v5358 = vld [vmem:[%s5350 + $0x38] sm:$0xff]
    %v5359 = vld [vmem:[%s5350 + $0x40] sm:$0xff]
    %v5360 = vld [vmem:[%s5350 + $0x48] sm:$0xff]
    %v5361 = vld [vmem:[%s5350 + $0x50] sm:$0xff]
    %v5362 = vld [vmem:[%s5350 + $0x58] sm:$0xff]
    %v5363 = vld [vmem:[%s5350 + $0x60] sm:$0xff]
    %v5364 = vld [vmem:[%s5350 + $0x68] sm:$0xff]
    %v5365 = vld [vmem:[%s5350 + $0x70] sm:$0xff]
    %v5366 = vld [vmem:[%s5350 + $0x78] sm:$0xff]
    %v5383 = vunpack.c.l.b16 %v5351
    %v5384 = vunpack.c.h.b16 %v5351
    %v5385 = vunpack.c.l.b16 %v5352
    %v5386 = vunpack.c.h.b16 %v5352
    %v5387 = vunpack.c.l.b16 %v5353
    %v5388 = vunpack.c.h.b16 %v5353
    %v5389 = vunpack.c.l.b16 %v5354
    %v5390 = vunpack.c.h.b16 %v5354
    %v5391 = vunpack.c.l.b16 %v5355
    %v5392 = vunpack.c.h.b16 %v5355
    %v5393 = vunpack.c.l.b16 %v5356
    %v5394 = vunpack.c.h.b16 %v5356
    %v5395 = vunpack.c.l.b16 %v5357
    %v5396 = vunpack.c.h.b16 %v5357
    %v5397 = vunpack.c.l.b16 %v5358
    %v5398 = vunpack.c.h.b16 %v5358
    %v5399 = vunpack.c.l.b16 %v5359
    %v5400 = vunpack.c.h.b16 %v5359
    %v5401 = vunpack.c.l.b16 %v5360
    %v5402 = vunpack.c.h.b16 %v5360
    %v5403 = vunpack.c.l.b16 %v5361
    %v5404 = vunpack.c.h.b16 %v5361
    %v5405 = vunpack.c.l.b16 %v5362
    %v5406 = vunpack.c.h.b16 %v5362
    %v5407 = vunpack.c.l.b16 %v5363
    %v5408 = vunpack.c.h.b16 %v5363
    %v5409 = vunpack.c.l.b16 %v5364
    %v5410 = vunpack.c.h.b16 %v5364
    %v5411 = vunpack.c.l.b16 %v5365
    %v5412 = vunpack.c.h.b16 %v5365
    %v5413 = vunpack.c.l.b16 %v5366
    %v5414 = vunpack.c.h.b16 %v5366
    %v5415 = vpack.c.b16 %v5391, %v5383
    %v5416 = vpack.c.b16 %v5392, %v5384
    %v5417 = vpack.c.b16 %v5393, %v5385
    %v5418 = vpack.c.b16 %v5394, %v5386
    %v5419 = vpack.c.b16 %v5395, %v5387
    %v5420 = vpack.c.b16 %v5396, %v5388
    %v5421 = vpack.c.b16 %v5397, %v5389
    %v5422 = vpack.c.b16 %v5398, %v5390
    %v5423 = vpack.c.b16 %v5407, %v5399
    %v5424 = vpack.c.b16 %v5408, %v5400
    %v5425 = vpack.c.b16 %v5409, %v5401
    %v5426 = vpack.c.b16 %v5410, %v5402
    %v5427 = vpack.c.b16 %v5411, %v5403
    %v5428 = vpack.c.b16 %v5412, %v5404
    %v5429 = vpack.c.b16 %v5413, %v5405
    %v5430 = vpack.c.b16 %v5414, %v5406
    %v5448 = vsel %vm377, %v5349, 0
    %5450 = vmatprep.subr.bf16.mxu0 %v5416
    %5451 = vmatpush1.bf16.msra.mxu0 %v5415
    %5452 = vmatprep.subr.bf16.mxu0 %v5424
    %5453 = vmatpush1.bf16.msra.mxu0 %v5423
    %5454 = vmatprep.subr.bf16.mxu0 0
    %5455 = vmatpush1.bf16.msra.mxu0 0
    %5456 = vmatprep.subr.bf16.mxu0 0
    %5457 = vmatpush1.bf16.msra.mxu0 0
    %5458 = vmatprep.subr.bf16.mxu0 0
    %5459 = vmatpush1.bf16.msra.mxu0 0
    %5460 = vmatprep.subr.bf16.mxu0 0
    %5461 = vmatpush1.bf16.msra.mxu0 0
    %5462 = vmatprep.subr.bf16.mxu0 0
    %5463 = vmatpush1.bf16.msra.mxu0 0
    %5464 = vmatprep.subr.bf16.mxu0 0
    %5465 = vmatpush1.bf16.msra.mxu0 0
    %5466 = vmatprep.subr.bf16.mxu0 0
    %5467 = vmatpush1.bf16.msra.mxu0 0
    %5468 = vmatprep.subr.bf16.mxu0 0
    %5469 = vmatpush1.bf16.msra.mxu0 0
    %5470 = vmatprep.subr.bf16.mxu0 0
    %5471 = vmatpush1.bf16.msra.mxu0 0
    %5472 = vmatprep.subr.bf16.mxu0 0
    %5473 = vmatpush1.bf16.msra.mxu0 0
    %5474 = vmatprep.subr.bf16.mxu0 0
    %5475 = vmatpush1.bf16.msra.mxu0 0
    %5476 = vmatprep.subr.bf16.mxu0 0
    %5477 = vmatpush1.bf16.msra.mxu0 0
    %5478 = vmatprep.subr.bf16.mxu0 0
    %5479 = vmatpush1.bf16.msra.mxu0 0
    %5480 = vmatprep.subr.bf16.mxu0 0
    %5481 = vmatpush1.bf16.msra.mxu0 0
    %5482 = vmatprep.mubr.bf16.mxu0 0
    %5483 = vmatmul.mubr.bf16.gmra.mrb[0].mxu0 %v5448
    %v5484 = vpop.f32.mrb[0].mxu0
    %v5485 = vadd.f32 0.0, %v5484
    %v5486 = vpop.f32.mrb[0].mxu0
    %v5487 = vadd.f32 0.0, %v5486
    %v5488 = vpop.f32.mrb[0].mxu0
    %v5489 = vpop.f32.mrb[0].mxu0
    %5490 = vdwg.mxu0
    %5491 = vmatprep.subr.bf16.mxu0 %v5418
    %5492 = vmatpush1.bf16.msra.mxu0 %v5417
    %5493 = vmatprep.subr.bf16.mxu0 %v5426
    %5494 = vmatpush1.bf16.msra.mxu0 %v5425
    %5495 = vmatprep.subr.bf16.mxu0 0
    %5496 = vmatpush1.bf16.msra.mxu0 0
    %5497 = vmatprep.subr.bf16.mxu0 0
    %5498 = vmatpush1.bf16.msra.mxu0 0
    %5499 = vmatprep.subr.bf16.mxu0 0
    %5500 = vmatpush1.bf16.msra.mxu0 0
    %5501 = vmatprep.subr.bf16.mxu0 0
    %5502 = vmatpush1.bf16.msra.mxu0 0
    %5503 = vmatprep.subr.bf16.mxu0 0
    %5504 = vmatpush1.bf16.msra.mxu0 0
    %5505 = vmatprep.subr.bf16.mxu0 0
    %5506 = vmatpush1.bf16.msra.mxu0 0
    %5507 = vmatprep.subr.bf16.mxu0 0
    %5508 = vmatpush1.bf16.msra.mxu0 0
    %5509 = vmatprep.subr.bf16.mxu0 0
    %5510 = vmatpush1.bf16.msra.mxu0 0
    %5511 = vmatprep.subr.bf16.mxu0 0
    %5512 = vmatpush1.bf16.msra.mxu0 0
    %5513 = vmatprep.subr.bf16.mxu0 0
    %5514 = vmatpush1.bf16.msra.mxu0 0
    %5515 = vmatprep.subr.bf16.mxu0 0
    %5516 = vmatpush1.bf16.msra.mxu0 0
    %5517 = vmatprep.subr.bf16.mxu0 0
    %5518 = vmatpush1.bf16.msra.mxu0 0
    %5519 = vmatprep.subr.bf16.mxu0 0
    %5520 = vmatpush1.bf16.msra.mxu0 0
    %5521 = vmatprep.subr.bf16.mxu0 0
    %5522 = vmatpush1.bf16.msra.mxu0 0
    %5523 = vmatprep.mubr.bf16.mxu0 0
    %5524 = vmatmul.mubr.bf16.gmra.mrb[0].mxu0 %v5448
    %v5525 = vpop.f32.mrb[0].mxu0
    %v5526 = vadd.f32 0.0, %v5525
    %v5527 = vpop.f32.mrb[0].mxu0
    %v5528 = vadd.f32 0.0, %v5527
    %v5529 = vpop.f32.mrb[0].mxu0
    %v5530 = vpop.f32.mrb[0].mxu0
    %5531 = vdwg.mxu0
    %5532 = vmatprep.subr.bf16.mxu0 %v5420
    %5533 = vmatpush1.bf16.msra.mxu0 %v5419
    %5534 = vmatprep.subr.bf16.mxu0 %v5428
    %5535 = vmatpush1.bf16.msra.mxu0 %v5427
    %5536 = vmatprep.subr.bf16.mxu0 0
    %5537 = vmatpush1.bf16.msra.mxu0 0
    %5538 = vmatprep.subr.bf16.mxu0 0
    %5539 = vmatpush1.bf16.msra.mxu0 0
    %5540 = vmatprep.subr.bf16.mxu0 0
    %5541 = vmatpush1.bf16.msra.mxu0 0
    %5542 = vmatprep.subr.bf16.mxu0 0
    %5543 = vmatpush1.bf16.msra.mxu0 0
    %5544 = vmatprep.subr.bf16.mxu0 0
    %5545 = vmatpush1.bf16.msra.mxu0 0
    %5546 = vmatprep.subr.bf16.mxu0 0
    %5547 = vmatpush1.bf16.msra.mxu0 0
    %5548 = vmatprep.subr.bf16.mxu0 0
    %5549 = vmatpush1.bf16.msra.mxu0 0
    %5550 = vmatprep.subr.bf16.mxu0 0
    %5551 = vmatpush1.bf16.msra.mxu0 0
    %5552 = vmatprep.subr.bf16.mxu0 0
    %5553 = vmatpush1.bf16.msra.mxu0 0
    %5554 = vmatprep.subr.bf16.mxu0 0
    %5555 = vmatpush1.bf16.msra.mxu0 0
    %5556 = vmatprep.subr.bf16.mxu0 0
    %5557 = vmatpush1.bf16.msra.mxu0 0
    %5558 = vmatprep.subr.bf16.mxu0 0
    %5559 = vmatpush1.bf16.msra.mxu0 0
    %5560 = vmatprep.subr.bf16.mxu0 0
    %5561 = vmatpush1.bf16.msra.mxu0 0
    %5562 = vmatprep.subr.bf16.mxu0 0
    %5563 = vmatpush1.bf16.msra.mxu0 0
    %5564 = vmatprep.mubr.bf16.mxu0 0
    %5565 = vmatmul.mubr.bf16.gmra.mrb[0].mxu0 %v5448
    %v5566 = vpop.f32.mrb[0].mxu0
    %v5567 = vadd.f32 0.0, %v5566
    %v5568 = vpop.f32.mrb[0].mxu0
    %v5569 = vadd.f32 0.0, %v5568
    %v5570 = vpop.f32.mrb[0].mxu0
    %v5571 = vpop.f32.mrb[0].mxu0
    %5572 = vdwg.mxu0
    %5573 = vmatprep.subr.bf16.mxu0 %v5422
    %5574 = vmatpush1.bf16.msra.mxu0 %v5421
    %5575 = vmatprep.subr.bf16.mxu0 %v5430
    %5576 = vmatpush1.bf16.msra.mxu0 %v5429
    %5577 = vmatprep.subr.bf16.mxu0 0
    %5578 = vmatpush1.bf16.msra.mxu0 0
    %5579 = vmatprep.subr.bf16.mxu0 0
    %5580 = vmatpush1.bf16.msra.mxu0 0
    %5581 = vmatprep.subr.bf16.mxu0 0
    %5582 = vmatpush1.bf16.msra.mxu0 0
    %5583 = vmatprep.subr.bf16.mxu0 0
    %5584 = vmatpush1.bf16.msra.mxu0 0
    %5585 = vmatprep.subr.bf16.mxu0 0
    %5586 = vmatpush1.bf16.msra.mxu0 0
    %5587 = vmatprep.subr.bf16.mxu0 0
    %5588 = vmatpush1.bf16.msra.mxu0 0
    %5589 = vmatprep.subr.bf16.mxu0 0
    %5590 = vmatpush1.bf16.msra.mxu0 0
    %5591 = vmatprep.subr.bf16.mxu0 0
    %5592 = vmatpush1.bf16.msra.mxu0 0
    %5593 = vmatprep.subr.bf16.mxu0 0
    %5594 = vmatpush1.bf16.msra.mxu0 0
    %5595 = vmatprep.subr.bf16.mxu0 0
    %5596 = vmatpush1.bf16.msra.mxu0 0
    %5597 = vmatprep.subr.bf16.mxu0 0
    %5598 = vmatpush1.bf16.msra.mxu0 0
    %5599 = vmatprep.subr.bf16.mxu0 0
    %5600 = vmatpush1.bf16.msra.mxu0 0
    %5601 = vmatprep.subr.bf16.mxu0 0
    %5602 = vmatpush1.bf16.msra.mxu0 0
    %5603 = vmatprep.subr.bf16.mxu0 0
    %5604 = vmatpush1.bf16.msra.mxu0 0
    %5605 = vmatprep.mubr.bf16.mxu0 0
    %5606 = vmatmul.mubr.bf16.gmra.mrb[0].mxu0 %v5448
    %v5607 = vpop.f32.mrb[0].mxu0
    %v5608 = vadd.f32 0.0, %v5607
    %v5609 = vpop.f32.mrb[0].mxu0
    %v5610 = vadd.f32 0.0, %v5609
    %v5611 = vpop.f32.mrb[0].mxu0
    %v5612 = vpop.f32.mrb[0].mxu0
    %5613 = vdwg.mxu0
    %v5614 = vadd.f32 %v5292, %v5485
    %v5615 = vadd.f32 %v5293, %v5487
    %v5616 = vadd.f32 %v5294, %v5526
    %v5617 = vadd.f32 %v5295, %v5528
    %v5618 = vadd.f32 %v5296, %v5567
    %v5619 = vadd.f32 %v5297, %v5569
    %v5620 = vadd.f32 %v5298, %v5608
    %v5621 = vadd.f32 %v5299, %v5610
    %5622 = vset.pattern.permute.xlu0 17
    %5623 = vperm.xlu0 %5622, %v104
    %v5624 = vpop.permute.xlu0 %5623
    %vm5625 = vcmp.eq.s32.totalorder %v119, %v5624
    %v5626 = vsel %vm5625, 1.0, 0.0
    %v5627 = vpack.c.bf16 %v5626, %v5626
    %v5629 = vsel %vm165, %v5627, 0
    %5631 = vmatprep.subr.bf16.mxu0 0
    %5632 = vmatpush1.bf16.msra.mxu0 %v152
    %5633 = vmatprep.subr.bf16.mxu0 0
    %5634 = vmatpush1.bf16.msra.mxu0 %v153
    %5635 = vmatprep.subr.bf16.mxu0 0
    %5636 = vmatpush1.bf16.msra.mxu0 %v154
    %5637 = vmatprep.subr.bf16.mxu0 0
    %5638 = vmatpush1.bf16.msra.mxu0 %v155
    %5639 = vmatprep.subr.bf16.mxu0 0
    %5640 = vmatpush1.bf16.msra.mxu0 %v156
    %5641 = vmatprep.subr.bf16.mxu0 0
    %5642 = vmatpush1.bf16.msra.mxu0 %v157
    %5643 = vmatprep.subr.bf16.mxu0 0
    %5644 = vmatpush1.bf16.msra.mxu0 %v171
    %5645 = vmatprep.subr.bf16.mxu0 0
    %5646 = vmatpush1.bf16.msra.mxu0 0
    %5647 = vmatprep.subr.bf16.mxu0 0
    %5648 = vmatpush1.bf16.msra.mxu0 0
    %5649 = vmatprep.subr.bf16.mxu0 0
    %5650 = vmatpush1.bf16.msra.mxu0 0
    %5651 = vmatprep.subr.bf16.mxu0 0
    %5652 = vmatpush1.bf16.msra.mxu0 0
    %5653 = vmatprep.subr.bf16.mxu0 0
    %5654 = vmatpush1.bf16.msra.mxu0 0
    %5655 = vmatprep.subr.bf16.mxu0 0
    %5656 = vmatpush1.bf16.msra.mxu0 0
    %5657 = vmatprep.subr.bf16.mxu0 0
    %5658 = vmatpush1.bf16.msra.mxu0 0
    %5659 = vmatprep.subr.bf16.mxu0 0
    %5660 = vmatpush1.bf16.msra.mxu0 0
    %5661 = vmatprep.subr.bf16.mxu0 0
    %5662 = vmatpush1.bf16.msra.mxu0 0
    %5663 = vmatprep.mubr.bf16.mxu0 0
    %5664 = vmatmul.mubr.bf16.gmra.mrb[0].mxu0 %v5629
    %v5665 = vpop.f32.mrb[0].mxu0
    %v5666 = vadd.f32 0.0, %v5665
    %v5667 = vpop.f32.mrb[0].mxu0
    %v5668 = vpop.f32.mrb[0].mxu0
    %v5669 = vpop.f32.mrb[0].mxu0
    %5670 = vdwg.mxu0
    %v5671 = vpack.c.bf16 %v5666, %v5666
    %s5672 = scalar_lea.vmem [#allocation4], 2176
    %v5673 = vld [vmem:[%s5672] sm:$0xff]
    %v5674 = vld [vmem:[%s5672 + $0x8] sm:$0xff]
    %v5675 = vld [vmem:[%s5672 + $0x10] sm:$0xff]
    %v5676 = vld [vmem:[%s5672 + $0x18] sm:$0xff]
    %v5677 = vld [vmem:[%s5672 + $0x20] sm:$0xff]
    %v5678 = vld [vmem:[%s5672 + $0x28] sm:$0xff]
    %v5679 = vld [vmem:[%s5672 + $0x30] sm:$0xff]
    %v5680 = vld [vmem:[%s5672 + $0x38] sm:$0xff]
    %v5681 = vld [vmem:[%s5672 + $0x40] sm:$0xff]
    %v5682 = vld [vmem:[%s5672 + $0x48] sm:$0xff]
    %v5683 = vld [vmem:[%s5672 + $0x50] sm:$0xff]
    %v5684 = vld [vmem:[%s5672 + $0x58] sm:$0xff]
    %v5685 = vld [vmem:[%s5672 + $0x60] sm:$0xff]
    %v5686 = vld [vmem:[%s5672 + $0x68] sm:$0xff]
    %v5687 = vld [vmem:[%s5672 + $0x70] sm:$0xff]
    %v5688 = vld [vmem:[%s5672 + $0x78] sm:$0xff]
    %v5705 = vunpack.c.l.b16 %v5673
    %v5706 = vunpack.c.h.b16 %v5673
    %v5707 = vunpack.c.l.b16 %v5674
    %v5708 = vunpack.c.h.b16 %v5674
    %v5709 = vunpack.c.l.b16 %v5675
    %v5710 = vunpack.c.h.b16 %v5675
    %v5711 = vunpack.c.l.b16 %v5676
    %v5712 = vunpack.c.h.b16 %v5676
    %v5713 = vunpack.c.l.b16 %v5677
    %v5714 = vunpack.c.h.b16 %v5677
    %v5715 = vunpack.c.l.b16 %v5678
    %v5716 = vunpack.c.h.b16 %v5678
    %v5717 = vunpack.c.l.b16 %v5679
    %v5718 = vunpack.c.h.b16 %v5679
    %v5719 = vunpack.c.l.b16 %v5680
    %v5720 = vunpack.c.h.b16 %v5680
    %v5721 = vunpack.c.l.b16 %v5681
    %v5722 = vunpack.c.h.b16 %v5681
    %v5723 = vunpack.c.l.b16 %v5682
    %v5724 = vunpack.c.h.b16 %v5682
    %v5725 = vunpack.c.l.b16 %v5683
    %v5726 = vunpack.c.h.b16 %v5683
    %v5727 = vunpack.c.l.b16 %v5684
    %v5728 = vunpack.c.h.b16 %v5684
    %v5729 = vunpack.c.l.b16 %v5685
    %v5730 = vunpack.c.h.b16 %v5685
    %v5731 = vunpack.c.l.b16 %v5686
    %v5732 = vunpack.c.h.b16 %v5686
    %v5733 = vunpack.c.l.b16 %v5687
    %v5734 = vunpack.c.h.b16 %v5687
    %v5735 = vunpack.c.l.b16 %v5688
    %v5736 = vunpack.c.h.b16 %v5688
    %v5737 = vpack.c.b16 %v5713, %v5705
    %v5738 = vpack.c.b16 %v5714, %v5706
    %v5739 = vpack.c.b16 %v5715, %v5707
    %v5740 = vpack.c.b16 %v5716, %v5708
    %v5741 = vpack.c.b16 %v5717, %v5709
    %v5742 = vpack.c.b16 %v5718, %v5710
    %v5743 = vpack.c.b16 %v5719, %v5711
    %v5744 = vpack.c.b16 %v5720, %v5712
    %v5745 = vpack.c.b16 %v5729, %v5721
    %v5746 = vpack.c.b16 %v5730, %v5722
    %v5747 = vpack.c.b16 %v5731, %v5723
    %v5748 = vpack.c.b16 %v5732, %v5724
    %v5749 = vpack.c.b16 %v5733, %v5725
    %v5750 = vpack.c.b16 %v5734, %v5726
    %v5751 = vpack.c.b16 %v5735, %v5727
    %v5752 = vpack.c.b16 %v5736, %v5728
    %v5770 = vsel %vm377, %v5671, 0
    %5772 = vmatprep.subr.bf16.mxu0 %v5738
    %5773 = vmatpush1.bf16.msra.mxu0 %v5737
    %5774 = vmatprep.subr.bf16.mxu0 %v5746
    %5775 = vmatpush1.bf16.msra.mxu0 %v5745
    %5776 = vmatprep.subr.bf16.mxu0 0
    %5777 = vmatpush1.bf16.msra.mxu0 0
    %5778 = vmatprep.subr.bf16.mxu0 0
    %5779 = vmatpush1.bf16.msra.mxu0 0
    %5780 = vmatprep.subr.bf16.mxu0 0
    %5781 = vmatpush1.bf16.msra.mxu0 0
    %5782 = vmatprep.subr.bf16.mxu0 0
    %5783 = vmatpush1.bf16.msra.mxu0 0
    %5784 = vmatprep.subr.bf16.mxu0 0
    %5785 = vmatpush1.bf16.msra.mxu0 0
    %5786 = vmatprep.subr.bf16.mxu0 0
    %5787 = vmatpush1.bf16.msra.mxu0 0
    %5788 = vmatprep.subr.bf16.mxu0 0
    %5789 = vmatpush1.bf16.msra.mxu0 0
    %5790 = vmatprep.subr.bf16.mxu0 0
    %5791 = vmatpush1.bf16.msra.mxu0 0
    %5792 = vmatprep.subr.bf16.mxu0 0
    %5793 = vmatpush1.bf16.msra.mxu0 0
    %5794 = vmatprep.subr.bf16.mxu0 0
    %5795 = vmatpush1.bf16.msra.mxu0 0
    %5796 = vmatprep.subr.bf16.mxu0 0
    %5797 = vmatpush1.bf16.msra.mxu0 0
    %5798 = vmatprep.subr.bf16.mxu0 0
    %5799 = vmatpush1.bf16.msra.mxu0 0
    %5800 = vmatprep.subr.bf16.mxu0 0
    %5801 = vmatpush1.bf16.msra.mxu0 0
    %5802 = vmatprep.subr.bf16.mxu0 0
    %5803 = vmatpush1.bf16.msra.mxu0 0
    %5804 = vmatprep.mubr.bf16.mxu0 0
    %5805 = vmatmul.mubr.bf16.gmra.mrb[0].mxu0 %v5770
    %v5806 = vpop.f32.mrb[0].mxu0
    %v5807 = vadd.f32 0.0, %v5806
    %v5808 = vpop.f32.mrb[0].mxu0
    %v5809 = vadd.f32 0.0, %v5808
    %v5810 = vpop.f32.mrb[0].mxu0
    %v5811 = vpop.f32.mrb[0].mxu0
    %5812 = vdwg.mxu0
    %5813 = vmatprep.subr.bf16.mxu0 %v5740
    %5814 = vmatpush1.bf16.msra.mxu0 %v5739
    %5815 = vmatprep.subr.bf16.mxu0 %v5748
    %5816 = vmatpush1.bf16.msra.mxu0 %v5747
    %5817 = vmatprep.subr.bf16.mxu0 0
    %5818 = vmatpush1.bf16.msra.mxu0 0
    %5819 = vmatprep.subr.bf16.mxu0 0
    %5820 = vmatpush1.bf16.msra.mxu0 0
    %5821 = vmatprep.subr.bf16.mxu0 0
    %5822 = vmatpush1.bf16.msra.mxu0 0
    %5823 = vmatprep.subr.bf16.mxu0 0
    %5824 = vmatpush1.bf16.msra.mxu0 0
    %5825 = vmatprep.subr.bf16.mxu0 0
    %5826 = vmatpush1.bf16.msra.mxu0 0
    %5827 = vmatprep.subr.bf16.mxu0 0
    %5828 = vmatpush1.bf16.msra.mxu0 0
    %5829 = vmatprep.subr.bf16.mxu0 0
    %5830 = vmatpush1.bf16.msra.mxu0 0
    %5831 = vmatprep.subr.bf16.mxu0 0
    %5832 = vmatpush1.bf16.msra.mxu0 0
    %5833 = vmatprep.subr.bf16.mxu0 0
    %5834 = vmatpush1.bf16.msra.mxu0 0
    %5835 = vmatprep.subr.bf16.mxu0 0
    %5836 = vmatpush1.bf16.msra.mxu0 0
    %5837 = vmatprep.subr.bf16.mxu0 0
    %5838 = vmatpush1.bf16.msra.mxu0 0
    %5839 = vmatprep.subr.bf16.mxu0 0
    %5840 = vmatpush1.bf16.msra.mxu0 0
    %5841 = vmatprep.subr.bf16.mxu0 0
    %5842 = vmatpush1.bf16.msra.mxu0 0
    %5843 = vmatprep.subr.bf16.mxu0 0
    %5844 = vmatpush1.bf16.msra.mxu0 0
    %5845 = vmatprep.mubr.bf16.mxu0 0
    %5846 = vmatmul.mubr.bf16.gmra.mrb[0].mxu0 %v5770
    %v5847 = vpop.f32.mrb[0].mxu0
    %v5848 = vadd.f32 0.0, %v5847
    %v5849 = vpop.f32.mrb[0].mxu0
    %v5850 = vadd.f32 0.0, %v5849
    %v5851 = vpop.f32.mrb[0].mxu0
    %v5852 = vpop.f32.mrb[0].mxu0
    %5853 = vdwg.mxu0
    %5854 = vmatprep.subr.bf16.mxu0 %v5742
    %5855 = vmatpush1.bf16.msra.mxu0 %v5741
    %5856 = vmatprep.subr.bf16.mxu0 %v5750
    %5857 = vmatpush1.bf16.msra.mxu0 %v5749
    %5858 = vmatprep.subr.bf16.mxu0 0
    %5859 = vmatpush1.bf16.msra.mxu0 0
    %5860 = vmatprep.subr.bf16.mxu0 0
    %5861 = vmatpush1.bf16.msra.mxu0 0
    %5862 = vmatprep.subr.bf16.mxu0 0
    %5863 = vmatpush1.bf16.msra.mxu0 0
    %5864 = vmatprep.subr.bf16.mxu0 0
    %5865 = vmatpush1.bf16.msra.mxu0 0
    %5866 = vmatprep.subr.bf16.mxu0 0
    %5867 = vmatpush1.bf16.msra.mxu0 0
    %5868 = vmatprep.subr.bf16.mxu0 0
    %5869 = vmatpush1.bf16.msra.mxu0 0
    %5870 = vmatprep.subr.bf16.mxu0 0
    %5871 = vmatpush1.bf16.msra.mxu0 0
    %5872 = vmatprep.subr.bf16.mxu0 0
    %5873 = vmatpush1.bf16.msra.mxu0 0
    %5874 = vmatprep.subr.bf16.mxu0 0
    %5875 = vmatpush1.bf16.msra.mxu0 0
    %5876 = vmatprep.subr.bf16.mxu0 0
    %5877 = vmatpush1.bf16.msra.mxu0 0
    %5878 = vmatprep.subr.bf16.mxu0 0
    %5879 = vmatpush1.bf16.msra.mxu0 0
    %5880 = vmatprep.subr.bf16.mxu0 0
    %5881 = vmatpush1.bf16.msra.mxu0 0
    %5882 = vmatprep.subr.bf16.mxu0 0
    %5883 = vmatpush1.bf16.msra.mxu0 0
    %5884 = vmatprep.subr.bf16.mxu0 0
    %5885 = vmatpush1.bf16.msra.mxu0 0
    %5886 = vmatprep.mubr.bf16.mxu0 0
    %5887 = vmatmul.mubr.bf16.gmra.mrb[0].mxu0 %v5770
    %v5888 = vpop.f32.mrb[0].mxu0
    %v5889 = vadd.f32 0.0, %v5888
    %v5890 = vpop.f32.mrb[0].mxu0
    %v5891 = vadd.f32 0.0, %v5890
    %v5892 = vpop.f32.mrb[0].mxu0
    %v5893 = vpop.f32.mrb[0].mxu0
    %5894 = vdwg.mxu0
    %5895 = vmatprep.subr.bf16.mxu0 %v5744
    %5896 = vmatpush1.bf16.msra.mxu0 %v5743
    %5897 = vmatprep.subr.bf16.mxu0 %v5752
    %5898 = vmatpush1.bf16.msra.mxu0 %v5751
    %5899 = vmatprep.subr.bf16.mxu0 0
    %5900 = vmatpush1.bf16.msra.mxu0 0
    %5901 = vmatprep.subr.bf16.mxu0 0
    %5902 = vmatpush1.bf16.msra.mxu0 0
    %5903 = vmatprep.subr.bf16.mxu0 0
    %5904 = vmatpush1.bf16.msra.mxu0 0
    %5905 = vmatprep.subr.bf16.mxu0 0
    %5906 = vmatpush1.bf16.msra.mxu0 0
    %5907 = vmatprep.subr.bf16.mxu0 0
    %5908 = vmatpush1.bf16.msra.mxu0 0
    %5909 = vmatprep.subr.bf16.mxu0 0
    %5910 = vmatpush1.bf16.msra.mxu0 0
    %5911 = vmatprep.subr.bf16.mxu0 0
    %5912 = vmatpush1.bf16.msra.mxu0 0
    %5913 = vmatprep.subr.bf16.mxu0 0
    %5914 = vmatpush1.bf16.msra.mxu0 0
    %5915 = vmatprep.subr.bf16.mxu0 0
    %5916 = vmatpush1.bf16.msra.mxu0 0
    %5917 = vmatprep.subr.bf16.mxu0 0
    %5918 = vmatpush1.bf16.msra.mxu0 0
    %5919 = vmatprep.subr.bf16.mxu0 0
    %5920 = vmatpush1.bf16.msra.mxu0 0
    %5921 = vmatprep.subr.bf16.mxu0 0
    %5922 = vmatpush1.bf16.msra.mxu0 0
    %5923 = vmatprep.subr.bf16.mxu0 0
    %5924 = vmatpush1.bf16.msra.mxu0 0
    %5925 = vmatprep.subr.bf16.mxu0 0
    %5926 = vmatpush1.bf16.msra.mxu0 0
    %5927 = vmatprep.mubr.bf16.mxu0 0
    %5928 = vmatmul.mubr.bf16.gmra.mrb[0].mxu0 %v5770
    %v5929 = vpop.f32.mrb[0].mxu0
    %v5930 = vadd.f32 0.0, %v5929
    %v5931 = vpop.f32.mrb[0].mxu0
    %v5932 = vadd.f32 0.0, %v5931
    %v5933 = vpop.f32.mrb[0].mxu0
    %v5934 = vpop.f32.mrb[0].mxu0
    %5935 = vdwg.mxu0
    %v5936 = vadd.f32 %v5614, %v5807
    %v5937 = vadd.f32 %v5615, %v5809
    %v5938 = vadd.f32 %v5616, %v5848
    %v5939 = vadd.f32 %v5617, %v5850
    %v5940 = vadd.f32 %v5618, %v5889
    %v5941 = vadd.f32 %v5619, %v5891
    %v5942 = vadd.f32 %v5620, %v5930
    %v5943 = vadd.f32 %v5621, %v5932
    %5944 = vset.pattern.permute.xlu0 18
    %5945 = vperm.xlu0 %5944, %v104
    %v5946 = vpop.permute.xlu0 %5945
    %vm5947 = vcmp.eq.s32.totalorder %v119, %v5946
    %v5948 = vsel %vm5947, 1.0, 0.0
    %v5949 = vpack.c.bf16 %v5948, %v5948
    %v5951 = vsel %vm165, %v5949, 0
    %5953 = vmatprep.subr.bf16.mxu0 0
    %5954 = vmatpush1.bf16.msra.mxu0 %v152
    %5955 = vmatprep.subr.bf16.mxu0 0
    %5956 = vmatpush1.bf16.msra.mxu0 %v153
    %5957 = vmatprep.subr.bf16.mxu0 0
    %5958 = vmatpush1.bf16.msra.mxu0 %v154
    %5959 = vmatprep.subr.bf16.mxu0 0
    %5960 = vmatpush1.bf16.msra.mxu0 %v155
    %5961 = vmatprep.subr.bf16.mxu0 0
    %5962 = vmatpush1.bf16.msra.mxu0 %v156
    %5963 = vmatprep.subr.bf16.mxu0 0
    %5964 = vmatpush1.bf16.msra.mxu0 %v157
    %5965 = vmatprep.subr.bf16.mxu0 0
    %5966 = vmatpush1.bf16.msra.mxu0 %v171
    %5967 = vmatprep.subr.bf16.mxu0 0
    %5968 = vmatpush1.bf16.msra.mxu0 0
    %5969 = vmatprep.subr.bf16.mxu0 0
    %5970 = vmatpush1.bf16.msra.mxu0 0
    %5971 = vmatprep.subr.bf16.mxu0 0
    %5972 = vmatpush1.bf16.msra.mxu0 0
    %5973 = vmatprep.subr.bf16.mxu0 0
    %5974 = vmatpush1.bf16.msra.mxu0 0
    %5975 = vmatprep.subr.bf16.mxu0 0
    %5976 = vmatpush1.bf16.msra.mxu0 0
    %5977 = vmatprep.subr.bf16.mxu0 0
    %5978 = vmatpush1.bf16.msra.mxu0 0
    %5979 = vmatprep.subr.bf16.mxu0 0
    %5980 = vmatpush1.bf16.msra.mxu0 0
    %5981 = vmatprep.subr.bf16.mxu0 0
    %5982 = vmatpush1.bf16.msra.mxu0 0
    %5983 = vmatprep.subr.bf16.mxu0 0
    %5984 = vmatpush1.bf16.msra.mxu0 0
    %5985 = vmatprep.mubr.bf16.mxu0 0
    %5986 = vmatmul.mubr.bf16.gmra.mrb[0].mxu0 %v5951
    %v5987 = vpop.f32.mrb[0].mxu0
    %v5988 = vadd.f32 0.0, %v5987
    %v5989 = vpop.f32.mrb[0].mxu0
    %v5990 = vpop.f32.mrb[0].mxu0
    %v5991 = vpop.f32.mrb[0].mxu0
    %5992 = vdwg.mxu0
    %v5993 = vpack.c.bf16 %v5988, %v5988
    %s5994 = scalar_lea.vmem [#allocation4], 2304
    %v5995 = vld [vmem:[%s5994] sm:$0xff]
    %v5996 = vld [vmem:[%s5994 + $0x8] sm:$0xff]
    %v5997 = vld [vmem:[%s5994 + $0x10] sm:$0xff]
    %v5998 = vld [vmem:[%s5994 + $0x18] sm:$0xff]
    %v5999 = vld [vmem:[%s5994 + $0x20] sm:$0xff]
    %v6000 = vld [vmem:[%s5994 + $0x28] sm:$0xff]
    %v6001 = vld [vmem:[%s5994 + $0x30] sm:$0xff]
    %v6002 = vld [vmem:[%s5994 + $0x38] sm:$0xff]
    %v6003 = vld [vmem:[%s5994 + $0x40] sm:$0xff]
    %v6004 = vld [vmem:[%s5994 + $0x48] sm:$0xff]
    %v6005 = vld [vmem:[%s5994 + $0x50] sm:$0xff]
    %v6006 = vld [vmem:[%s5994 + $0x58] sm:$0xff]
    %v6007 = vld [vmem:[%s5994 + $0x60] sm:$0xff]
    %v6008 = vld [vmem:[%s5994 + $0x68] sm:$0xff]
    %v6009 = vld [vmem:[%s5994 + $0x70] sm:$0xff]
    %v6010 = vld [vmem:[%s5994 + $0x78] sm:$0xff]
    %v6027 = vunpack.c.l.b16 %v5995
    %v6028 = vunpack.c.h.b16 %v5995
    %v6029 = vunpack.c.l.b16 %v5996
    %v6030 = vunpack.c.h.b16 %v5996
    %v6031 = vunpack.c.l.b16 %v5997
    %v6032 = vunpack.c.h.b16 %v5997
    %v6033 = vunpack.c.l.b16 %v5998
    %v6034 = vunpack.c.h.b16 %v5998
    %v6035 = vunpack.c.l.b16 %v5999
    %v6036 = vunpack.c.h.b16 %v5999
    %v6037 = vunpack.c.l.b16 %v6000
    %v6038 = vunpack.c.h.b16 %v6000
    %v6039 = vunpack.c.l.b16 %v6001
    %v6040 = vunpack.c.h.b16 %v6001
    %v6041 = vunpack.c.l.b16 %v6002
    %v6042 = vunpack.c.h.b16 %v6002
    %v6043 = vunpack.c.l.b16 %v6003
    %v6044 = vunpack.c.h.b16 %v6003
    %v6045 = vunpack.c.l.b16 %v6004
    %v6046 = vunpack.c.h.b16 %v6004
    %v6047 = vunpack.c.l.b16 %v6005
    %v6048 = vunpack.c.h.b16 %v6005
    %v6049 = vunpack.c.l.b16 %v6006
    %v6050 = vunpack.c.h.b16 %v6006
    %v6051 = vunpack.c.l.b16 %v6007
    %v6052 = vunpack.c.h.b16 %v6007
    %v6053 = vunpack.c.l.b16 %v6008
    %v6054 = vunpack.c.h.b16 %v6008
    %v6055 = vunpack.c.l.b16 %v6009
    %v6056 = vunpack.c.h.b16 %v6009
    %v6057 = vunpack.c.l.b16 %v6010
    %v6058 = vunpack.c.h.b16 %v6010
    %v6059 = vpack.c.b16 %v6035, %v6027
    %v6060 = vpack.c.b16 %v6036, %v6028
    %v6061 = vpack.c.b16 %v6037, %v6029
    %v6062 = vpack.c.b16 %v6038, %v6030
    %v6063 = vpack.c.b16 %v6039, %v6031
    %v6064 = vpack.c.b16 %v6040, %v6032
    %v6065 = vpack.c.b16 %v6041, %v6033
    %v6066 = vpack.c.b16 %v6042, %v6034
    %v6067 = vpack.c.b16 %v6051, %v6043
    %v6068 = vpack.c.b16 %v6052, %v6044
    %v6069 = vpack.c.b16 %v6053, %v6045
    %v6070 = vpack.c.b16 %v6054, %v6046
    %v6071 = vpack.c.b16 %v6055, %v6047
    %v6072 = vpack.c.b16 %v6056, %v6048
    %v6073 = vpack.c.b16 %v6057, %v6049
    %v6074 = vpack.c.b16 %v6058, %v6050
    %v6092 = vsel %vm377, %v5993, 0
    %6094 = vmatprep.subr.bf16.mxu0 %v6060
    %6095 = vmatpush1.bf16.msra.mxu0 %v6059
    %6096 = vmatprep.subr.bf16.mxu0 %v6068
    %6097 = vmatpush1.bf16.msra.mxu0 %v6067
    %6098 = vmatprep.subr.bf16.mxu0 0
    %6099 = vmatpush1.bf16.msra.mxu0 0
    %6100 = vmatprep.subr.bf16.mxu0 0
    %6101 = vmatpush1.bf16.msra.mxu0 0
    %6102 = vmatprep.subr.bf16.mxu0 0
    %6103 = vmatpush1.bf16.msra.mxu0 0
    %6104 = vmatprep.subr.bf16.mxu0 0
    %6105 = vmatpush1.bf16.msra.mxu0 0
    %6106 = vmatprep.subr.bf16.mxu0 0
    %6107 = vmatpush1.bf16.msra.mxu0 0
    %6108 = vmatprep.subr.bf16.mxu0 0
    %6109 = vmatpush1.bf16.msra.mxu0 0
    %6110 = vmatprep.subr.bf16.mxu0 0
    %6111 = vmatpush1.bf16.msra.mxu0 0
    %6112 = vmatprep.subr.bf16.mxu0 0
    %6113 = vmatpush1.bf16.msra.mxu0 0
    %6114 = vmatprep.subr.bf16.mxu0 0
    %6115 = vmatpush1.bf16.msra.mxu0 0
    %6116 = vmatprep.subr.bf16.mxu0 0
    %6117 = vmatpush1.bf16.msra.mxu0 0
    %6118 = vmatprep.subr.bf16.mxu0 0
    %6119 = vmatpush1.bf16.msra.mxu0 0
    %6120 = vmatprep.subr.bf16.mxu0 0
    %6121 = vmatpush1.bf16.msra.mxu0 0
    %6122 = vmatprep.subr.bf16.mxu0 0
    %6123 = vmatpush1.bf16.msra.mxu0 0
    %6124 = vmatprep.subr.bf16.mxu0 0
    %6125 = vmatpush1.bf16.msra.mxu0 0
    %6126 = vmatprep.mubr.bf16.mxu0 0
    %6127 = vmatmul.mubr.bf16.gmra.mrb[0].mxu0 %v6092
    %v6128 = vpop.f32.mrb[0].mxu0
    %v6129 = vadd.f32 0.0, %v6128
    %v6130 = vpop.f32.mrb[0].mxu0
    %v6131 = vadd.f32 0.0, %v6130
    %v6132 = vpop.f32.mrb[0].mxu0
    %v6133 = vpop.f32.mrb[0].mxu0
    %6134 = vdwg.mxu0
    %6135 = vmatprep.subr.bf16.mxu0 %v6062
    %6136 = vmatpush1.bf16.msra.mxu0 %v6061
    %6137 = vmatprep.subr.bf16.mxu0 %v6070
    %6138 = vmatpush1.bf16.msra.mxu0 %v6069
    %6139 = vmatprep.subr.bf16.mxu0 0
    %6140 = vmatpush1.bf16.msra.mxu0 0
    %6141 = vmatprep.subr.bf16.mxu0 0
    %6142 = vmatpush1.bf16.msra.mxu0 0
    %6143 = vmatprep.subr.bf16.mxu0 0
    %6144 = vmatpush1.bf16.msra.mxu0 0
    %6145 = vmatprep.subr.bf16.mxu0 0
    %6146 = vmatpush1.bf16.msra.mxu0 0
    %6147 = vmatprep.subr.bf16.mxu0 0
    %6148 = vmatpush1.bf16.msra.mxu0 0
    %6149 = vmatprep.subr.bf16.mxu0 0
    %6150 = vmatpush1.bf16.msra.mxu0 0
    %6151 = vmatprep.subr.bf16.mxu0 0
    %6152 = vmatpush1.bf16.msra.mxu0 0
    %6153 = vmatprep.subr.bf16.mxu0 0
    %6154 = vmatpush1.bf16.msra.mxu0 0
    %6155 = vmatprep.subr.bf16.mxu0 0
    %6156 = vmatpush1.bf16.msra.mxu0 0
    %6157 = vmatprep.subr.bf16.mxu0 0
    %6158 = vmatpush1.bf16.msra.mxu0 0
    %6159 = vmatprep.subr.bf16.mxu0 0
    %6160 = vmatpush1.bf16.msra.mxu0 0
    %6161 = vmatprep.subr.bf16.mxu0 0
    %6162 = vmatpush1.bf16.msra.mxu0 0
    %6163 = vmatprep.subr.bf16.mxu0 0
    %6164 = vmatpush1.bf16.msra.mxu0 0
    %6165 = vmatprep.subr.bf16.mxu0 0
    %6166 = vmatpush1.bf16.msra.mxu0 0
    %6167 = vmatprep.mubr.bf16.mxu0 0
    %6168 = vmatmul.mubr.bf16.gmra.mrb[0].mxu0 %v6092
    %v6169 = vpop.f32.mrb[0].mxu0
    %v6170 = vadd.f32 0.0, %v6169
    %v6171 = vpop.f32.mrb[0].mxu0
    %v6172 = vadd.f32 0.0, %v6171
    %v6173 = vpop.f32.mrb[0].mxu0
    %v6174 = vpop.f32.mrb[0].mxu0
    %6175 = vdwg.mxu0
    %6176 = vmatprep.subr.bf16.mxu0 %v6064
    %6177 = vmatpush1.bf16.msra.mxu0 %v6063
    %6178 = vmatprep.subr.bf16.mxu0 %v6072
    %6179 = vmatpush1.bf16.msra.mxu0 %v6071
    %6180 = vmatprep.subr.bf16.mxu0 0
    %6181 = vmatpush1.bf16.msra.mxu0 0
    %6182 = vmatprep.subr.bf16.mxu0 0
    %6183 = vmatpush1.bf16.msra.mxu0 0
    %6184 = vmatprep.subr.bf16.mxu0 0
    %6185 = vmatpush1.bf16.msra.mxu0 0
    %6186 = vmatprep.subr.bf16.mxu0 0
    %6187 = vmatpush1.bf16.msra.mxu0 0
    %6188 = vmatprep.subr.bf16.mxu0 0
    %6189 = vmatpush1.bf16.msra.mxu0 0
    %6190 = vmatprep.subr.bf16.mxu0 0
    %6191 = vmatpush1.bf16.msra.mxu0 0
    %6192 = vmatprep.subr.bf16.mxu0 0
    %6193 = vmatpush1.bf16.msra.mxu0 0
    %6194 = vmatprep.subr.bf16.mxu0 0
    %6195 = vmatpush1.bf16.msra.mxu0 0
    %6196 = vmatprep.subr.bf16.mxu0 0
    %6197 = vmatpush1.bf16.msra.mxu0 0
    %6198 = vmatprep.subr.bf16.mxu0 0
    %6199 = vmatpush1.bf16.msra.mxu0 0
    %6200 = vmatprep.subr.bf16.mxu0 0
    %6201 = vmatpush1.bf16.msra.mxu0 0
    %6202 = vmatprep.subr.bf16.mxu0 0
    %6203 = vmatpush1.bf16.msra.mxu0 0
    %6204 = vmatprep.subr.bf16.mxu0 0
    %6205 = vmatpush1.bf16.msra.mxu0 0
    %6206 = vmatprep.subr.bf16.mxu0 0
    %6207 = vmatpush1.bf16.msra.mxu0 0
    %6208 = vmatprep.mubr.bf16.mxu0 0
    %6209 = vmatmul.mubr.bf16.gmra.mrb[0].mxu0 %v6092
    %v6210 = vpop.f32.mrb[0].mxu0
    %v6211 = vadd.f32 0.0, %v6210
    %v6212 = vpop.f32.mrb[0].mxu0
    %v6213 = vadd.f32 0.0, %v6212
    %v6214 = vpop.f32.mrb[0].mxu0
    %v6215 = vpop.f32.mrb[0].mxu0
    %6216 = vdwg.mxu0
    %6217 = vmatprep.subr.bf16.mxu0 %v6066
    %6218 = vmatpush1.bf16.msra.mxu0 %v6065
    %6219 = vmatprep.subr.bf16.mxu0 %v6074
    %6220 = vmatpush1.bf16.msra.mxu0 %v6073
    %6221 = vmatprep.subr.bf16.mxu0 0
    %6222 = vmatpush1.bf16.msra.mxu0 0
    %6223 = vmatprep.subr.bf16.mxu0 0
    %6224 = vmatpush1.bf16.msra.mxu0 0
    %6225 = vmatprep.subr.bf16.mxu0 0
    %6226 = vmatpush1.bf16.msra.mxu0 0
    %6227 = vmatprep.subr.bf16.mxu0 0
    %6228 = vmatpush1.bf16.msra.mxu0 0
    %6229 = vmatprep.subr.bf16.mxu0 0
    %6230 = vmatpush1.bf16.msra.mxu0 0
    %6231 = vmatprep.subr.bf16.mxu0 0
    %6232 = vmatpush1.bf16.msra.mxu0 0
    %6233 = vmatprep.subr.bf16.mxu0 0
    %6234 = vmatpush1.bf16.msra.mxu0 0
    %6235 = vmatprep.subr.bf16.mxu0 0
    %6236 = vmatpush1.bf16.msra.mxu0 0
    %6237 = vmatprep.subr.bf16.mxu0 0
    %6238 = vmatpush1.bf16.msra.mxu0 0
    %6239 = vmatprep.subr.bf16.mxu0 0
    %6240 = vmatpush1.bf16.msra.mxu0 0
    %6241 = vmatprep.subr.bf16.mxu0 0
    %6242 = vmatpush1.bf16.msra.mxu0 0
    %6243 = vmatprep.subr.bf16.mxu0 0
    %6244 = vmatpush1.bf16.msra.mxu0 0
    %6245 = vmatprep.subr.bf16.mxu0 0
    %6246 = vmatpush1.bf16.msra.mxu0 0
    %6247 = vmatprep.subr.bf16.mxu0 0
    %6248 = vmatpush1.bf16.msra.mxu0 0
    %6249 = vmatprep.mubr.bf16.mxu0 0
    %6250 = vmatmul.mubr.bf16.gmra.mrb[0].mxu0 %v6092
    %v6251 = vpop.f32.mrb[0].mxu0
    %v6252 = vadd.f32 0.0, %v6251
    %v6253 = vpop.f32.mrb[0].mxu0
    %v6254 = vadd.f32 0.0, %v6253
    %v6255 = vpop.f32.mrb[0].mxu0
    %v6256 = vpop.f32.mrb[0].mxu0
    %6257 = vdwg.mxu0
    %v6258 = vadd.f32 %v5936, %v6129
    %v6259 = vadd.f32 %v5937, %v6131
    %v6260 = vadd.f32 %v5938, %v6170
    %v6261 = vadd.f32 %v5939, %v6172
    %v6262 = vadd.f32 %v5940, %v6211
    %v6263 = vadd.f32 %v5941, %v6213
    %v6264 = vadd.f32 %v5942, %v6252
    %v6265 = vadd.f32 %v5943, %v6254
    %6266 = vset.pattern.permute.xlu0 19
    %6267 = vperm.xlu0 %6266, %v104
    %v6268 = vpop.permute.xlu0 %6267
    %vm6269 = vcmp.eq.s32.totalorder %v119, %v6268
    %v6270 = vsel %vm6269, 1.0, 0.0
    %v6271 = vpack.c.bf16 %v6270, %v6270
    %v6273 = vsel %vm165, %v6271, 0
    %6275 = vmatprep.subr.bf16.mxu0 0
    %6276 = vmatpush1.bf16.msra.mxu0 %v152
    %6277 = vmatprep.subr.bf16.mxu0 0
    %6278 = vmatpush1.bf16.msra.mxu0 %v153
    %6279 = vmatprep.subr.bf16.mxu0 0
    %6280 = vmatpush1.bf16.msra.mxu0 %v154
    %6281 = vmatprep.subr.bf16.mxu0 0
    %6282 = vmatpush1.bf16.msra.mxu0 %v155
    %6283 = vmatprep.subr.bf16.mxu0 0
    %6284 = vmatpush1.bf16.msra.mxu0 %v156
    %6285 = vmatprep.subr.bf16.mxu0 0
    %6286 = vmatpush1.bf16.msra.mxu0 %v157
    %6287 = vmatprep.subr.bf16.mxu0 0
    %6288 = vmatpush1.bf16.msra.mxu0 %v171
    %6289 = vmatprep.subr.bf16.mxu0 0
    %6290 = vmatpush1.bf16.msra.mxu0 0
    %6291 = vmatprep.subr.bf16.mxu0 0
    %6292 = vmatpush1.bf16.msra.mxu0 0
    %6293 = vmatprep.subr.bf16.mxu0 0
    %6294 = vmatpush1.bf16.msra.mxu0 0
    %6295 = vmatprep.subr.bf16.mxu0 0
    %6296 = vmatpush1.bf16.msra.mxu0 0
    %6297 = vmatprep.subr.bf16.mxu0 0
    %6298 = vmatpush1.bf16.msra.mxu0 0
    %6299 = vmatprep.subr.bf16.mxu0 0
    %6300 = vmatpush1.bf16.msra.mxu0 0
    %6301 = vmatprep.subr.bf16.mxu0 0
    %6302 = vmatpush1.bf16.msra.mxu0 0
    %6303 = vmatprep.subr.bf16.mxu0 0
    %6304 = vmatpush1.bf16.msra.mxu0 0
    %6305 = vmatprep.subr.bf16.mxu0 0
    %6306 = vmatpush1.bf16.msra.mxu0 0
    %6307 = vmatprep.mubr.bf16.mxu0 0
    %6308 = vmatmul.mubr.bf16.gmra.mrb[0].mxu0 %v6273
    %v6309 = vpop.f32.mrb[0].mxu0
    %v6310 = vadd.f32 0.0, %v6309
    %v6311 = vpop.f32.mrb[0].mxu0
    %v6312 = vpop.f32.mrb[0].mxu0
    %v6313 = vpop.f32.mrb[0].mxu0
    %6314 = vdwg.mxu0
    %v6315 = vpack.c.bf16 %v6310, %v6310
    %s6316 = scalar_lea.vmem [#allocation4], 2432
    %v6317 = vld [vmem:[%s6316] sm:$0xff]
    %v6318 = vld [vmem:[%s6316 + $0x8] sm:$0xff]
    %v6319 = vld [vmem:[%s6316 + $0x10] sm:$0xff]
    %v6320 = vld [vmem:[%s6316 + $0x18] sm:$0xff]
    %v6321 = vld [vmem:[%s6316 + $0x20] sm:$0xff]
    %v6322 = vld [vmem:[%s6316 + $0x28] sm:$0xff]
    %v6323 = vld [vmem:[%s6316 + $0x30] sm:$0xff]
    %v6324 = vld [vmem:[%s6316 + $0x38] sm:$0xff]
    %v6325 = vld [vmem:[%s6316 + $0x40] sm:$0xff]
    %v6326 = vld [vmem:[%s6316 + $0x48] sm:$0xff]
    %v6327 = vld [vmem:[%s6316 + $0x50] sm:$0xff]
    %v6328 = vld [vmem:[%s6316 + $0x58] sm:$0xff]
    %v6329 = vld [vmem:[%s6316 + $0x60] sm:$0xff]
    %v6330 = vld [vmem:[%s6316 + $0x68] sm:$0xff]
    %v6331 = vld [vmem:[%s6316 + $0x70] sm:$0xff]
    %v6332 = vld [vmem:[%s6316 + $0x78] sm:$0xff]
    %v6349 = vunpack.c.l.b16 %v6317
    %v6350 = vunpack.c.h.b16 %v6317
    %v6351 = vunpack.c.l.b16 %v6318
    %v6352 = vunpack.c.h.b16 %v6318
    %v6353 = vunpack.c.l.b16 %v6319
    %v6354 = vunpack.c.h.b16 %v6319
    %v6355 = vunpack.c.l.b16 %v6320
    %v6356 = vunpack.c.h.b16 %v6320
    %v6357 = vunpack.c.l.b16 %v6321
    %v6358 = vunpack.c.h.b16 %v6321
    %v6359 = vunpack.c.l.b16 %v6322
    %v6360 = vunpack.c.h.b16 %v6322
    %v6361 = vunpack.c.l.b16 %v6323
    %v6362 = vunpack.c.h.b16 %v6323
    %v6363 = vunpack.c.l.b16 %v6324
    %v6364 = vunpack.c.h.b16 %v6324
    %v6365 = vunpack.c.l.b16 %v6325
    %v6366 = vunpack.c.h.b16 %v6325
    %v6367 = vunpack.c.l.b16 %v6326
    %v6368 = vunpack.c.h.b16 %v6326
    %v6369 = vunpack.c.l.b16 %v6327
    %v6370 = vunpack.c.h.b16 %v6327
    %v6371 = vunpack.c.l.b16 %v6328
    %v6372 = vunpack.c.h.b16 %v6328
    %v6373 = vunpack.c.l.b16 %v6329
    %v6374 = vunpack.c.h.b16 %v6329
    %v6375 = vunpack.c.l.b16 %v6330
    %v6376 = vunpack.c.h.b16 %v6330
    %v6377 = vunpack.c.l.b16 %v6331
    %v6378 = vunpack.c.h.b16 %v6331
    %v6379 = vunpack.c.l.b16 %v6332
    %v6380 = vunpack.c.h.b16 %v6332
    %v6381 = vpack.c.b16 %v6357, %v6349
    %v6382 = vpack.c.b16 %v6358, %v6350
    %v6383 = vpack.c.b16 %v6359, %v6351
    %v6384 = vpack.c.b16 %v6360, %v6352
    %v6385 = vpack.c.b16 %v6361, %v6353
    %v6386 = vpack.c.b16 %v6362, %v6354
    %v6387 = vpack.c.b16 %v6363, %v6355
    %v6388 = vpack.c.b16 %v6364, %v6356
    %v6389 = vpack.c.b16 %v6373, %v6365
    %v6390 = vpack.c.b16 %v6374, %v6366
    %v6391 = vpack.c.b16 %v6375, %v6367
    %v6392 = vpack.c.b16 %v6376, %v6368
    %v6393 = vpack.c.b16 %v6377, %v6369
    %v6394 = vpack.c.b16 %v6378, %v6370
    %v6395 = vpack.c.b16 %v6379, %v6371
    %v6396 = vpack.c.b16 %v6380, %v6372
    %v6414 = vsel %vm377, %v6315, 0
    %6416 = vmatprep.subr.bf16.mxu0 %v6382
    %6417 = vmatpush1.bf16.msra.mxu0 %v6381
    %6418 = vmatprep.subr.bf16.mxu0 %v6390
    %6419 = vmatpush1.bf16.msra.mxu0 %v6389
    %6420 = vmatprep.subr.bf16.mxu0 0
    %6421 = vmatpush1.bf16.msra.mxu0 0
    %6422 = vmatprep.subr.bf16.mxu0 0
    %6423 = vmatpush1.bf16.msra.mxu0 0
    %6424 = vmatprep.subr.bf16.mxu0 0
    %6425 = vmatpush1.bf16.msra.mxu0 0
    %6426 = vmatprep.subr.bf16.mxu0 0
    %6427 = vmatpush1.bf16.msra.mxu0 0
    %6428 = vmatprep.subr.bf16.mxu0 0
    %6429 = vmatpush1.bf16.msra.mxu0 0
    %6430 = vmatprep.subr.bf16.mxu0 0
    %6431 = vmatpush1.bf16.msra.mxu0 0
    %6432 = vmatprep.subr.bf16.mxu0 0
    %6433 = vmatpush1.bf16.msra.mxu0 0
    %6434 = vmatprep.subr.bf16.mxu0 0
    %6435 = vmatpush1.bf16.msra.mxu0 0
    %6436 = vmatprep.subr.bf16.mxu0 0
    %6437 = vmatpush1.bf16.msra.mxu0 0
    %6438 = vmatprep.subr.bf16.mxu0 0
    %6439 = vmatpush1.bf16.msra.mxu0 0
    %6440 = vmatprep.subr.bf16.mxu0 0
    %6441 = vmatpush1.bf16.msra.mxu0 0
    %6442 = vmatprep.subr.bf16.mxu0 0
    %6443 = vmatpush1.bf16.msra.mxu0 0
    %6444 = vmatprep.subr.bf16.mxu0 0
    %6445 = vmatpush1.bf16.msra.mxu0 0
    %6446 = vmatprep.subr.bf16.mxu0 0
    %6447 = vmatpush1.bf16.msra.mxu0 0
    %6448 = vmatprep.mubr.bf16.mxu0 0
    %6449 = vmatmul.mubr.bf16.gmra.mrb[0].mxu0 %v6414
    %v6450 = vpop.f32.mrb[0].mxu0
    %v6451 = vadd.f32 0.0, %v6450
    %v6452 = vpop.f32.mrb[0].mxu0
    %v6453 = vadd.f32 0.0, %v6452
    %v6454 = vpop.f32.mrb[0].mxu0
    %v6455 = vpop.f32.mrb[0].mxu0
    %6456 = vdwg.mxu0
    %6457 = vmatprep.subr.bf16.mxu0 %v6384
    %6458 = vmatpush1.bf16.msra.mxu0 %v6383
    %6459 = vmatprep.subr.bf16.mxu0 %v6392
    %6460 = vmatpush1.bf16.msra.mxu0 %v6391
    %6461 = vmatprep.subr.bf16.mxu0 0
    %6462 = vmatpush1.bf16.msra.mxu0 0
    %6463 = vmatprep.subr.bf16.mxu0 0
    %6464 = vmatpush1.bf16.msra.mxu0 0
    %6465 = vmatprep.subr.bf16.mxu0 0
    %6466 = vmatpush1.bf16.msra.mxu0 0
    %6467 = vmatprep.subr.bf16.mxu0 0
    %6468 = vmatpush1.bf16.msra.mxu0 0
    %6469 = vmatprep.subr.bf16.mxu0 0
    %6470 = vmatpush1.bf16.msra.mxu0 0
    %6471 = vmatprep.subr.bf16.mxu0 0
    %6472 = vmatpush1.bf16.msra.mxu0 0
    %6473 = vmatprep.subr.bf16.mxu0 0
    %6474 = vmatpush1.bf16.msra.mxu0 0
    %6475 = vmatprep.subr.bf16.mxu0 0
    %6476 = vmatpush1.bf16.msra.mxu0 0
    %6477 = vmatprep.subr.bf16.mxu0 0
    %6478 = vmatpush1.bf16.msra.mxu0 0
    %6479 = vmatprep.subr.bf16.mxu0 0
    %6480 = vmatpush1.bf16.msra.mxu0 0
    %6481 = vmatprep.subr.bf16.mxu0 0
    %6482 = vmatpush1.bf16.msra.mxu0 0
    %6483 = vmatprep.subr.bf16.mxu0 0
    %6484 = vmatpush1.bf16.msra.mxu0 0
    %6485 = vmatprep.subr.bf16.mxu0 0
    %6486 = vmatpush1.bf16.msra.mxu0 0
    %6487 = vmatprep.subr.bf16.mxu0 0
    %6488 = vmatpush1.bf16.msra.mxu0 0
    %6489 = vmatprep.mubr.bf16.mxu0 0
    %6490 = vmatmul.mubr.bf16.gmra.mrb[0].mxu0 %v6414
    %v6491 = vpop.f32.mrb[0].mxu0
    %v6492 = vadd.f32 0.0, %v6491
    %v6493 = vpop.f32.mrb[0].mxu0
    %v6494 = vadd.f32 0.0, %v6493
    %v6495 = vpop.f32.mrb[0].mxu0
    %v6496 = vpop.f32.mrb[0].mxu0
    %6497 = vdwg.mxu0
    %6498 = vmatprep.subr.bf16.mxu0 %v6386
    %6499 = vmatpush1.bf16.msra.mxu0 %v6385
    %6500 = vmatprep.subr.bf16.mxu0 %v6394
    %6501 = vmatpush1.bf16.msra.mxu0 %v6393
    %6502 = vmatprep.subr.bf16.mxu0 0
    %6503 = vmatpush1.bf16.msra.mxu0 0
    %6504 = vmatprep.subr.bf16.mxu0 0
    %6505 = vmatpush1.bf16.msra.mxu0 0
    %6506 = vmatprep.subr.bf16.mxu0 0
    %6507 = vmatpush1.bf16.msra.mxu0 0
    %6508 = vmatprep.subr.bf16.mxu0 0
    %6509 = vmatpush1.bf16.msra.mxu0 0
    %6510 = vmatprep.subr.bf16.mxu0 0
    %6511 = vmatpush1.bf16.msra.mxu0 0
    %6512 = vmatprep.subr.bf16.mxu0 0
    %6513 = vmatpush1.bf16.msra.mxu0 0
    %6514 = vmatprep.subr.bf16.mxu0 0
    %6515 = vmatpush1.bf16.msra.mxu0 0
    %6516 = vmatprep.subr.bf16.mxu0 0
    %6517 = vmatpush1.bf16.msra.mxu0 0
    %6518 = vmatprep.subr.bf16.mxu0 0
    %6519 = vmatpush1.bf16.msra.mxu0 0
    %6520 = vmatprep.subr.bf16.mxu0 0
    %6521 = vmatpush1.bf16.msra.mxu0 0
    %6522 = vmatprep.subr.bf16.mxu0 0
    %6523 = vmatpush1.bf16.msra.mxu0 0
    %6524 = vmatprep.subr.bf16.mxu0 0
    %6525 = vmatpush1.bf16.msra.mxu0 0
    %6526 = vmatprep.subr.bf16.mxu0 0
    %6527 = vmatpush1.bf16.msra.mxu0 0
    %6528 = vmatprep.subr.bf16.mxu0 0
    %6529 = vmatpush1.bf16.msra.mxu0 0
    %6530 = vmatprep.mubr.bf16.mxu0 0
    %6531 = vmatmul.mubr.bf16.gmra.mrb[0].mxu0 %v6414
    %v6532 = vpop.f32.mrb[0].mxu0
    %v6533 = vadd.f32 0.0, %v6532
    %v6534 = vpop.f32.mrb[0].mxu0
    %v6535 = vadd.f32 0.0, %v6534
    %v6536 = vpop.f32.mrb[0].mxu0
    %v6537 = vpop.f32.mrb[0].mxu0
    %6538 = vdwg.mxu0
    %6539 = vmatprep.subr.bf16.mxu0 %v6388
    %6540 = vmatpush1.bf16.msra.mxu0 %v6387
    %6541 = vmatprep.subr.bf16.mxu0 %v6396
    %6542 = vmatpush1.bf16.msra.mxu0 %v6395
    %6543 = vmatprep.subr.bf16.mxu0 0
    %6544 = vmatpush1.bf16.msra.mxu0 0
    %6545 = vmatprep.subr.bf16.mxu0 0
    %6546 = vmatpush1.bf16.msra.mxu0 0
    %6547 = vmatprep.subr.bf16.mxu0 0
    %6548 = vmatpush1.bf16.msra.mxu0 0
    %6549 = vmatprep.subr.bf16.mxu0 0
    %6550 = vmatpush1.bf16.msra.mxu0 0
    %6551 = vmatprep.subr.bf16.mxu0 0
    %6552 = vmatpush1.bf16.msra.mxu0 0
    %6553 = vmatprep.subr.bf16.mxu0 0
    %6554 = vmatpush1.bf16.msra.mxu0 0
    %6555 = vmatprep.subr.bf16.mxu0 0
    %6556 = vmatpush1.bf16.msra.mxu0 0
    %6557 = vmatprep.subr.bf16.mxu0 0
    %6558 = vmatpush1.bf16.msra.mxu0 0
    %6559 = vmatprep.subr.bf16.mxu0 0
    %6560 = vmatpush1.bf16.msra.mxu0 0
    %6561 = vmatprep.subr.bf16.mxu0 0
    %6562 = vmatpush1.bf16.msra.mxu0 0
    %6563 = vmatprep.subr.bf16.mxu0 0
    %6564 = vmatpush1.bf16.msra.mxu0 0
    %6565 = vmatprep.subr.bf16.mxu0 0
    %6566 = vmatpush1.bf16.msra.mxu0 0
    %6567 = vmatprep.subr.bf16.mxu0 0
    %6568 = vmatpush1.bf16.msra.mxu0 0
    %6569 = vmatprep.subr.bf16.mxu0 0
    %6570 = vmatpush1.bf16.msra.mxu0 0
    %6571 = vmatprep.mubr.bf16.mxu0 0
    %6572 = vmatmul.mubr.bf16.gmra.mrb[0].mxu0 %v6414
    %v6573 = vpop.f32.mrb[0].mxu0
    %v6574 = vadd.f32 0.0, %v6573
    %v6575 = vpop.f32.mrb[0].mxu0
    %v6576 = vadd.f32 0.0, %v6575
    %v6577 = vpop.f32.mrb[0].mxu0
    %v6578 = vpop.f32.mrb[0].mxu0
    %6579 = vdwg.mxu0
    %v6580 = vadd.f32 %v6258, %v6451
    %v6581 = vadd.f32 %v6259, %v6453
    %v6582 = vadd.f32 %v6260, %v6492
    %v6583 = vadd.f32 %v6261, %v6494
    %v6584 = vadd.f32 %v6262, %v6533
    %v6585 = vadd.f32 %v6263, %v6535
    %v6586 = vadd.f32 %v6264, %v6574
    %v6587 = vadd.f32 %v6265, %v6576
    %v6588 = vld [vmem:[#allocation6] sm:$0xff]
    %v6590 = vlaneseq
    %v6591 = vshrl.u32 %v6590, 7
    %v6592 = vsub.s32 0, %v6591
    %v6593 = vrot.slane %v6588, %v6592
    %v6594 = vlaneseq
    %v6595 = vshrl.u32 %v6594, 7
    %v6596 = vsub.s32 1, %v6595
    %v6597 = vrot.slane %v6588, %v6596
    %v6598 = vlaneseq
    %v6599 = vshrl.u32 %v6598, 7
    %v6600 = vsub.s32 2, %v6599
    %v6601 = vrot.slane %v6588, %v6600
    %v6602 = vlaneseq
    %v6603 = vshrl.u32 %v6602, 7
    %v6604 = vsub.s32 3, %v6603
    %v6605 = vrot.slane %v6588, %v6604
    %v6606 = vlaneseq
    %v6607 = vshrl.u32 %v6606, 7
    %v6608 = vsub.s32 4, %v6607
    %v6609 = vrot.slane %v6588, %v6608
    %v6610 = vlaneseq
    %v6611 = vshrl.u32 %v6610, 7
    %v6612 = vsub.s32 5, %v6611
    %v6613 = vrot.slane %v6588, %v6612
    %v6614 = vlaneseq
    %v6615 = vshrl.u32 %v6614, 7
    %v6616 = vsub.s32 6, %v6615
    %v6617 = vrot.slane %v6588, %v6616
    %v6618 = vlaneseq
    %v6619 = vshrl.u32 %v6618, 7
    %v6620 = vsub.s32 7, %v6619
    %v6621 = vrot.slane %v6588, %v6620
    %v6630 = vadd.f32 %v6580, %v6593
    %v6631 = vadd.f32 %v6581, %v6597
    %v6632 = vadd.f32 %v6582, %v6601
    %v6633 = vadd.f32 %v6583, %v6605
    %v6634 = vadd.f32 %v6584, %v6609
    %v6635 = vadd.f32 %v6585, %v6613
    %v6636 = vadd.f32 %v6586, %v6617
    %v6637 = vadd.f32 %v6587, %v6621
    %v6638 = vmax.f32 %v6630, 0.0
    %v6639 = vmax.f32 %v6631, 0.0
    %v6640 = vmax.f32 %v6632, 0.0
    %v6641 = vmax.f32 %v6633, 0.0
    %v6642 = vmax.f32 %v6634, 0.0
    %v6643 = vmax.f32 %v6635, 0.0
    %v6644 = vmax.f32 %v6636, 0.0
    %v6645 = vmax.f32 %v6637, 0.0
    %v6646 = vpack.c.bf16 %v6638, %v6638
    %v6647 = vpack.c.bf16 %v6639, %v6639
    %v6648 = vpack.c.bf16 %v6640, %v6640
    %v6649 = vpack.c.bf16 %v6641, %v6641
    %v6650 = vpack.c.bf16 %v6642, %v6642
    %v6651 = vpack.c.bf16 %v6643, %v6643
    %v6652 = vpack.c.bf16 %v6644, %v6644
    %v6653 = vpack.c.bf16 %v6645, %v6645
    %v6654 = vld [vmem:[#allocation7] sm:$0xf]
    %v6655 = vld [vmem:[#allocation7 + $0x4] sm:$0xf]
    %v6656 = vld [vmem:[#allocation7 + $0x8] sm:$0xf]
    %v6657 = vld [vmem:[#allocation7 + $0xc] sm:$0xf]
    %v6658 = vld [vmem:[#allocation7 + $0x10] sm:$0xf]
    %v6659 = vld [vmem:[#allocation7 + $0x14] sm:$0xf]
    %v6660 = vld [vmem:[#allocation7 + $0x18] sm:$0xf]
    %v6661 = vld [vmem:[#allocation7 + $0x1c] sm:$0xf]
    %v6662 = vld [vmem:[#allocation7 + $0x20] sm:$0xf]
    %v6663 = vld [vmem:[#allocation7 + $0x24] sm:$0xf]
    %v6664 = vld [vmem:[#allocation7 + $0x28] sm:$0xf]
    %v6665 = vld [vmem:[#allocation7 + $0x2c] sm:$0xf]
    %v6666 = vld [vmem:[#allocation7 + $0x30] sm:$0xf]
    %v6667 = vld [vmem:[#allocation7 + $0x34] sm:$0xf]
    %v6668 = vld [vmem:[#allocation7 + $0x38] sm:$0xf]
    %v6669 = vld [vmem:[#allocation7 + $0x3c] sm:$0xf]
    %v6670 = vld [vmem:[#allocation7 + $0x40] sm:$0xf]
    %v6671 = vld [vmem:[#allocation7 + $0x44] sm:$0xf]
    %v6672 = vld [vmem:[#allocation7 + $0x48] sm:$0xf]
    %v6673 = vld [vmem:[#allocation7 + $0x4c] sm:$0xf]
    %v6674 = vld [vmem:[#allocation7 + $0x50] sm:$0xf]
    %v6675 = vld [vmem:[#allocation7 + $0x54] sm:$0xf]
    %v6676 = vld [vmem:[#allocation7 + $0x58] sm:$0xf]
    %v6677 = vld [vmem:[#allocation7 + $0x5c] sm:$0xf]
    %v6678 = vld [vmem:[#allocation7 + $0x60] sm:$0xf]
    %v6679 = vld [vmem:[#allocation7 + $0x64] sm:$0xf]
    %v6680 = vld [vmem:[#allocation7 + $0x68] sm:$0xf]
    %v6681 = vld [vmem:[#allocation7 + $0x6c] sm:$0xf]
    %v6682 = vld [vmem:[#allocation7 + $0x70] sm:$0xf]
    %v6683 = vld [vmem:[#allocation7 + $0x74] sm:$0xf]
    %v6684 = vld [vmem:[#allocation7 + $0x78] sm:$0xf]
    %v6685 = vld [vmem:[#allocation7 + $0x7c] sm:$0xf]
    %v6686 = vld [vmem:[#allocation7 + $0x80] sm:$0xf]
    %v6687 = vld [vmem:[#allocation7 + $0x84] sm:$0xf]
    %v6688 = vld [vmem:[#allocation7 + $0x88] sm:$0xf]
    %v6689 = vld [vmem:[#allocation7 + $0x8c] sm:$0xf]
    %v6690 = vld [vmem:[#allocation7 + $0x90] sm:$0xf]
    %v6691 = vld [vmem:[#allocation7 + $0x94] sm:$0xf]
    %v6692 = vld [vmem:[#allocation7 + $0x98] sm:$0xf]
    %v6693 = vld [vmem:[#allocation7 + $0x9c] sm:$0xf]
    %v6694 = vld [vmem:[#allocation7 + $0xa0] sm:$0xf]
    %v6695 = vld [vmem:[#allocation7 + $0xa4] sm:$0xf]
    %v6696 = vld [vmem:[#allocation7 + $0xa8] sm:$0xf]
    %v6697 = vld [vmem:[#allocation7 + $0xac] sm:$0xf]
    %v6698 = vld [vmem:[#allocation7 + $0xb0] sm:$0xf]
    %v6699 = vld [vmem:[#allocation7 + $0xb4] sm:$0xf]
    %v6700 = vld [vmem:[#allocation7 + $0xb8] sm:$0xf]
    %v6701 = vld [vmem:[#allocation7 + $0xbc] sm:$0xf]
    %v6702 = vld [vmem:[#allocation7 + $0xc0] sm:$0xf]
    %v6703 = vld [vmem:[#allocation7 + $0xc4] sm:$0xf]
    %v6704 = vld [vmem:[#allocation7 + $0xc8] sm:$0xf]
    %v6705 = vld [vmem:[#allocation7 + $0xcc] sm:$0xf]
    %v6706 = vld [vmem:[#allocation7 + $0xd0] sm:$0xf]
    %v6707 = vld [vmem:[#allocation7 + $0xd4] sm:$0xf]
    %v6708 = vld [vmem:[#allocation7 + $0xd8] sm:$0xf]
    %v6709 = vld [vmem:[#allocation7 + $0xdc] sm:$0xf]
    %v6710 = vld [vmem:[#allocation7 + $0xe0] sm:$0xf]
    %v6711 = vld [vmem:[#allocation7 + $0xe4] sm:$0xf]
    %v6712 = vld [vmem:[#allocation7 + $0xe8] sm:$0xf]
    %v6713 = vld [vmem:[#allocation7 + $0xec] sm:$0xf]
    %v6714 = vld [vmem:[#allocation7 + $0xf0] sm:$0xf]
    %v6715 = vld [vmem:[#allocation7 + $0xf4] sm:$0xf]
    %v6716 = vld [vmem:[#allocation7 + $0xf8] sm:$0xf]
    %v6717 = vld [vmem:[#allocation7 + $0xfc] sm:$0xf]
    %v6718 = vld [vmem:[#allocation7 + $0x100] sm:$0xf]
    %v6719 = vld [vmem:[#allocation7 + $0x104] sm:$0xf]
    %v6720 = vld [vmem:[#allocation7 + $0x108] sm:$0xf]
    %v6721 = vld [vmem:[#allocation7 + $0x10c] sm:$0xf]
    %v6722 = vld [vmem:[#allocation7 + $0x110] sm:$0xf]
    %v6723 = vld [vmem:[#allocation7 + $0x114] sm:$0xf]
    %v6724 = vld [vmem:[#allocation7 + $0x118] sm:$0xf]
    %v6725 = vld [vmem:[#allocation7 + $0x11c] sm:$0xf]
    %v6726 = vld [vmem:[#allocation7 + $0x120] sm:$0xf]
    %v6727 = vld [vmem:[#allocation7 + $0x124] sm:$0xf]
    %v6728 = vld [vmem:[#allocation7 + $0x128] sm:$0xf]
    %v6729 = vld [vmem:[#allocation7 + $0x12c] sm:$0xf]
    %v6730 = vld [vmem:[#allocation7 + $0x130] sm:$0xf]
    %v6731 = vld [vmem:[#allocation7 + $0x134] sm:$0xf]
    %v6732 = vld [vmem:[#allocation7 + $0x138] sm:$0xf]
    %v6733 = vld [vmem:[#allocation7 + $0x13c] sm:$0xf]
    %v6734 = vld [vmem:[#allocation7 + $0x140] sm:$0xf]
    %v6735 = vld [vmem:[#allocation7 + $0x144] sm:$0xf]
    %v6736 = vld [vmem:[#allocation7 + $0x148] sm:$0xf]
    %v6737 = vld [vmem:[#allocation7 + $0x14c] sm:$0xf]
    %v6738 = vld [vmem:[#allocation7 + $0x150] sm:$0xf]
    %v6739 = vld [vmem:[#allocation7 + $0x154] sm:$0xf]
    %v6740 = vld [vmem:[#allocation7 + $0x158] sm:$0xf]
    %v6741 = vld [vmem:[#allocation7 + $0x15c] sm:$0xf]
    %v6742 = vld [vmem:[#allocation7 + $0x160] sm:$0xf]
    %v6743 = vld [vmem:[#allocation7 + $0x164] sm:$0xf]
    %v6744 = vld [vmem:[#allocation7 + $0x168] sm:$0xf]
    %v6745 = vld [vmem:[#allocation7 + $0x16c] sm:$0xf]
    %v6746 = vld [vmem:[#allocation7 + $0x170] sm:$0xf]
    %v6747 = vld [vmem:[#allocation7 + $0x174] sm:$0xf]
    %v6748 = vld [vmem:[#allocation7 + $0x178] sm:$0xf]
    %v6749 = vld [vmem:[#allocation7 + $0x17c] sm:$0xf]
    %v6750 = vld [vmem:[#allocation7 + $0x180] sm:$0xf]
    %v6751 = vld [vmem:[#allocation7 + $0x184] sm:$0xf]
    %v6752 = vld [vmem:[#allocation7 + $0x188] sm:$0xf]
    %v6753 = vld [vmem:[#allocation7 + $0x18c] sm:$0xf]
    %v6754 = vld [vmem:[#allocation7 + $0x190] sm:$0xf]
    %v6755 = vld [vmem:[#allocation7 + $0x194] sm:$0xf]
    %v6756 = vld [vmem:[#allocation7 + $0x198] sm:$0xf]
    %v6757 = vld [vmem:[#allocation7 + $0x19c] sm:$0xf]
    %v6758 = vld [vmem:[#allocation7 + $0x1a0] sm:$0xf]
    %v6759 = vld [vmem:[#allocation7 + $0x1a4] sm:$0xf]
    %v6760 = vld [vmem:[#allocation7 + $0x1a8] sm:$0xf]
    %v6761 = vld [vmem:[#allocation7 + $0x1ac] sm:$0xf]
    %v6762 = vld [vmem:[#allocation7 + $0x1b0] sm:$0xf]
    %v6763 = vld [vmem:[#allocation7 + $0x1b4] sm:$0xf]
    %v6764 = vld [vmem:[#allocation7 + $0x1b8] sm:$0xf]
    %v6765 = vld [vmem:[#allocation7 + $0x1bc] sm:$0xf]
    %v6766 = vld [vmem:[#allocation7 + $0x1c0] sm:$0xf]
    %v6767 = vld [vmem:[#allocation7 + $0x1c4] sm:$0xf]
    %v6768 = vld [vmem:[#allocation7 + $0x1c8] sm:$0xf]
    %v6769 = vld [vmem:[#allocation7 + $0x1cc] sm:$0xf]
    %v6770 = vld [vmem:[#allocation7 + $0x1d0] sm:$0xf]
    %v6771 = vld [vmem:[#allocation7 + $0x1d4] sm:$0xf]
    %v6772 = vld [vmem:[#allocation7 + $0x1d8] sm:$0xf]
    %v6773 = vld [vmem:[#allocation7 + $0x1dc] sm:$0xf]
    %v6774 = vld [vmem:[#allocation7 + $0x1e0] sm:$0xf]
    %v6775 = vld [vmem:[#allocation7 + $0x1e4] sm:$0xf]
    %v6776 = vld [vmem:[#allocation7 + $0x1e8] sm:$0xf]
    %v6777 = vld [vmem:[#allocation7 + $0x1ec] sm:$0xf]
    %v6778 = vld [vmem:[#allocation7 + $0x1f0] sm:$0xf]
    %v6779 = vld [vmem:[#allocation7 + $0x1f4] sm:$0xf]
    %v6780 = vld [vmem:[#allocation7 + $0x1f8] sm:$0xf]
    %v6781 = vld [vmem:[#allocation7 + $0x1fc] sm:$0xf]
    %v6782 = vld [vmem:[#allocation9] sm:$0x1]
    %v6784 = vlaneseq
    %v6785 = vshrl.u32 %v6784, 7
    %v6786 = vsub.s32 0, %v6785
    %v6787 = vrot.slane %v6782, %v6786
    %v6917 = vunpack.c.l.b16 %v6654
    %v6918 = vunpack.c.l.b16 %v6655
    %v6919 = vunpack.c.l.b16 %v6656
    %v6920 = vunpack.c.l.b16 %v6657
    %v6921 = vunpack.c.l.b16 %v6658
    %v6922 = vunpack.c.l.b16 %v6659
    %v6923 = vunpack.c.l.b16 %v6660
    %v6924 = vunpack.c.l.b16 %v6661
    %v6925 = vunpack.c.l.b16 %v6662
    %v6926 = vunpack.c.l.b16 %v6663
    %v6927 = vunpack.c.l.b16 %v6664
    %v6928 = vunpack.c.l.b16 %v6665
    %v6929 = vunpack.c.l.b16 %v6666
    %v6930 = vunpack.c.l.b16 %v6667
    %v6931 = vunpack.c.l.b16 %v6668
    %v6932 = vunpack.c.l.b16 %v6669
    %v6933 = vunpack.c.l.b16 %v6670
    %v6934 = vunpack.c.l.b16 %v6671
    %v6935 = vunpack.c.l.b16 %v6672
    %v6936 = vunpack.c.l.b16 %v6673
    %v6937 = vunpack.c.l.b16 %v6674
    %v6938 = vunpack.c.l.b16 %v6675
    %v6939 = vunpack.c.l.b16 %v6676
    %v6940 = vunpack.c.l.b16 %v6677
    %v6941 = vunpack.c.l.b16 %v6678
    %v6942 = vunpack.c.l.b16 %v6679
    %v6943 = vunpack.c.l.b16 %v6680
    %v6944 = vunpack.c.l.b16 %v6681
    %v6945 = vunpack.c.l.b16 %v6682
    %v6946 = vunpack.c.l.b16 %v6683
    %v6947 = vunpack.c.l.b16 %v6684
    %v6948 = vunpack.c.l.b16 %v6685
    %v6949 = vunpack.c.l.b16 %v6686
    %v6950 = vunpack.c.l.b16 %v6687
    %v6951 = vunpack.c.l.b16 %v6688
    %v6952 = vunpack.c.l.b16 %v6689
    %v6953 = vunpack.c.l.b16 %v6690
    %v6954 = vunpack.c.l.b16 %v6691
    %v6955 = vunpack.c.l.b16 %v6692
    %v6956 = vunpack.c.l.b16 %v6693
    %v6957 = vunpack.c.l.b16 %v6694
    %v6958 = vunpack.c.l.b16 %v6695
    %v6959 = vunpack.c.l.b16 %v6696
    %v6960 = vunpack.c.l.b16 %v6697
    %v6961 = vunpack.c.l.b16 %v6698
    %v6962 = vunpack.c.l.b16 %v6699
    %v6963 = vunpack.c.l.b16 %v6700
    %v6964 = vunpack.c.l.b16 %v6701
    %v6965 = vunpack.c.l.b16 %v6702
    %v6966 = vunpack.c.l.b16 %v6703
    %v6967 = vunpack.c.l.b16 %v6704
    %v6968 = vunpack.c.l.b16 %v6705
    %v6969 = vunpack.c.l.b16 %v6706
    %v6970 = vunpack.c.l.b16 %v6707
    %v6971 = vunpack.c.l.b16 %v6708
    %v6972 = vunpack.c.l.b16 %v6709
    %v6973 = vunpack.c.l.b16 %v6710
    %v6974 = vunpack.c.l.b16 %v6711
    %v6975 = vunpack.c.l.b16 %v6712
    %v6976 = vunpack.c.l.b16 %v6713
    %v6977 = vunpack.c.l.b16 %v6714
    %v6978 = vunpack.c.l.b16 %v6715
    %v6979 = vunpack.c.l.b16 %v6716
    %v6980 = vunpack.c.l.b16 %v6717
    %v6981 = vunpack.c.l.b16 %v6718
    %v6982 = vunpack.c.l.b16 %v6719
    %v6983 = vunpack.c.l.b16 %v6720
    %v6984 = vunpack.c.l.b16 %v6721
    %v6985 = vunpack.c.l.b16 %v6722
    %v6986 = vunpack.c.l.b16 %v6723
    %v6987 = vunpack.c.l.b16 %v6724
    %v6988 = vunpack.c.l.b16 %v6725
    %v6989 = vunpack.c.l.b16 %v6726
    %v6990 = vunpack.c.l.b16 %v6727
    %v6991 = vunpack.c.l.b16 %v6728
    %v6992 = vunpack.c.l.b16 %v6729
    %v6993 = vunpack.c.l.b16 %v6730
    %v6994 = vunpack.c.l.b16 %v6731
    %v6995 = vunpack.c.l.b16 %v6732
    %v6996 = vunpack.c.l.b16 %v6733
    %v6997 = vunpack.c.l.b16 %v6734
    %v6998 = vunpack.c.l.b16 %v6735
    %v6999 = vunpack.c.l.b16 %v6736
    %v7000 = vunpack.c.l.b16 %v6737
    %v7001 = vunpack.c.l.b16 %v6738
    %v7002 = vunpack.c.l.b16 %v6739
    %v7003 = vunpack.c.l.b16 %v6740
    %v7004 = vunpack.c.l.b16 %v6741
    %v7005 = vunpack.c.l.b16 %v6742
    %v7006 = vunpack.c.l.b16 %v6743
    %v7007 = vunpack.c.l.b16 %v6744
    %v7008 = vunpack.c.l.b16 %v6745
    %v7009 = vunpack.c.l.b16 %v6746
    %v7010 = vunpack.c.l.b16 %v6747
    %v7011 = vunpack.c.l.b16 %v6748
    %v7012 = vunpack.c.l.b16 %v6749
    %v7013 = vunpack.c.l.b16 %v6750
    %v7014 = vunpack.c.l.b16 %v6751
    %v7015 = vunpack.c.l.b16 %v6752
    %v7016 = vunpack.c.l.b16 %v6753
    %v7017 = vunpack.c.l.b16 %v6754
    %v7018 = vunpack.c.l.b16 %v6755
    %v7019 = vunpack.c.l.b16 %v6756
    %v7020 = vunpack.c.l.b16 %v6757
    %v7021 = vunpack.c.l.b16 %v6758
    %v7022 = vunpack.c.l.b16 %v6759
    %v7023 = vunpack.c.l.b16 %v6760
    %v7024 = vunpack.c.l.b16 %v6761
    %v7025 = vunpack.c.l.b16 %v6762
    %v7026 = vunpack.c.l.b16 %v6763
    %v7027 = vunpack.c.l.b16 %v6764
    %v7028 = vunpack.c.l.b16 %v6765
    %v7029 = vunpack.c.l.b16 %v6766
    %v7030 = vunpack.c.l.b16 %v6767
    %v7031 = vunpack.c.l.b16 %v6768
    %v7032 = vunpack.c.l.b16 %v6769
    %v7033 = vunpack.c.l.b16 %v6770
    %v7034 = vunpack.c.l.b16 %v6771
    %v7035 = vunpack.c.l.b16 %v6772
    %v7036 = vunpack.c.l.b16 %v6773
    %v7037 = vunpack.c.l.b16 %v6774
    %v7038 = vunpack.c.l.b16 %v6775
    %v7039 = vunpack.c.l.b16 %v6776
    %v7040 = vunpack.c.l.b16 %v6777
    %v7041 = vunpack.c.l.b16 %v6778
    %v7042 = vunpack.c.l.b16 %v6779
    %v7043 = vunpack.c.l.b16 %v6780
    %v7044 = vunpack.c.l.b16 %v6781
    %v7045 = vpack.c.b16 %v6918, %v6917
    %v7046 = vpack.c.b16 %v6920, %v6919
    %v7047 = vpack.c.b16 %v6922, %v6921
    %v7048 = vpack.c.b16 %v6924, %v6923
    %v7049 = vpack.c.b16 %v6926, %v6925
    %v7050 = vpack.c.b16 %v6928, %v6927
    %v7051 = vpack.c.b16 %v6930, %v6929
    %v7052 = vpack.c.b16 %v6932, %v6931
    %v7053 = vpack.c.b16 %v6934, %v6933
    %v7054 = vpack.c.b16 %v6936, %v6935
    %v7055 = vpack.c.b16 %v6938, %v6937
    %v7056 = vpack.c.b16 %v6940, %v6939
    %v7057 = vpack.c.b16 %v6942, %v6941
    %v7058 = vpack.c.b16 %v6944, %v6943
    %v7059 = vpack.c.b16 %v6946, %v6945
    %v7060 = vpack.c.b16 %v6948, %v6947
    %v7061 = vpack.c.b16 %v6950, %v6949
    %v7062 = vpack.c.b16 %v6952, %v6951
    %v7063 = vpack.c.b16 %v6954, %v6953
    %v7064 = vpack.c.b16 %v6956, %v6955
    %v7065 = vpack.c.b16 %v6958, %v6957
    %v7066 = vpack.c.b16 %v6960, %v6959
    %v7067 = vpack.c.b16 %v6962, %v6961
    %v7068 = vpack.c.b16 %v6964, %v6963
    %v7069 = vpack.c.b16 %v6966, %v6965
    %v7070 = vpack.c.b16 %v6968, %v6967
    %v7071 = vpack.c.b16 %v6970, %v6969
    %v7072 = vpack.c.b16 %v6972, %v6971
    %v7073 = vpack.c.b16 %v6974, %v6973
    %v7074 = vpack.c.b16 %v6976, %v6975
    %v7075 = vpack.c.b16 %v6978, %v6977
    %v7076 = vpack.c.b16 %v6980, %v6979
    %v7077 = vpack.c.b16 %v6982, %v6981
    %v7078 = vpack.c.b16 %v6984, %v6983
    %v7079 = vpack.c.b16 %v6986, %v6985
    %v7080 = vpack.c.b16 %v6988, %v6987
    %v7081 = vpack.c.b16 %v6990, %v6989
    %v7082 = vpack.c.b16 %v6992, %v6991
    %v7083 = vpack.c.b16 %v6994, %v6993
    %v7084 = vpack.c.b16 %v6996, %v6995
    %v7085 = vpack.c.b16 %v6998, %v6997
    %v7086 = vpack.c.b16 %v7000, %v6999
    %v7087 = vpack.c.b16 %v7002, %v7001
    %v7088 = vpack.c.b16 %v7004, %v7003
    %v7089 = vpack.c.b16 %v7006, %v7005
    %v7090 = vpack.c.b16 %v7008, %v7007
    %v7091 = vpack.c.b16 %v7010, %v7009
    %v7092 = vpack.c.b16 %v7012, %v7011
    %v7093 = vpack.c.b16 %v7014, %v7013
    %v7094 = vpack.c.b16 %v7016, %v7015
    %v7095 = vpack.c.b16 %v7018, %v7017
    %v7096 = vpack.c.b16 %v7020, %v7019
    %v7097 = vpack.c.b16 %v7022, %v7021
    %v7098 = vpack.c.b16 %v7024, %v7023
    %v7099 = vpack.c.b16 %v7026, %v7025
    %v7100 = vpack.c.b16 %v7028, %v7027
    %v7101 = vpack.c.b16 %v7030, %v7029
    %v7102 = vpack.c.b16 %v7032, %v7031
    %v7103 = vpack.c.b16 %v7034, %v7033
    %v7104 = vpack.c.b16 %v7036, %v7035
    %v7105 = vpack.c.b16 %v7038, %v7037
    %v7106 = vpack.c.b16 %v7040, %v7039
    %v7107 = vpack.c.b16 %v7042, %v7041
    %v7108 = vpack.c.b16 %v7044, %v7043
    %7173 = vmatprep.subr.bf16.mxu0 0
    %7174 = vmatpush1.bf16.msra.mxu0 %v7045
    %7175 = vmatprep.subr.bf16.mxu0 0
    %7176 = vmatpush1.bf16.msra.mxu0 %v7046
    %7177 = vmatprep.subr.bf16.mxu0 0
    %7178 = vmatpush1.bf16.msra.mxu0 %v7047
    %7179 = vmatprep.subr.bf16.mxu0 0
    %7180 = vmatpush1.bf16.msra.mxu0 %v7048
    %7181 = vmatprep.subr.bf16.mxu0 0
    %7182 = vmatpush1.bf16.msra.mxu0 %v7049
    %7183 = vmatprep.subr.bf16.mxu0 0
    %7184 = vmatpush1.bf16.msra.mxu0 %v7050
    %7185 = vmatprep.subr.bf16.mxu0 0
    %7186 = vmatpush1.bf16.msra.mxu0 %v7051
    %7187 = vmatprep.subr.bf16.mxu0 0
    %7188 = vmatpush1.bf16.msra.mxu0 %v7052
    %7189 = vmatprep.subr.bf16.mxu0 0
    %7190 = vmatpush1.bf16.msra.mxu0 %v7053
    %7191 = vmatprep.subr.bf16.mxu0 0
    %7192 = vmatpush1.bf16.msra.mxu0 %v7054
    %7193 = vmatprep.subr.bf16.mxu0 0
    %7194 = vmatpush1.bf16.msra.mxu0 %v7055
    %7195 = vmatprep.subr.bf16.mxu0 0
    %7196 = vmatpush1.bf16.msra.mxu0 %v7056
    %7197 = vmatprep.subr.bf16.mxu0 0
    %7198 = vmatpush1.bf16.msra.mxu0 %v7057
    %7199 = vmatprep.subr.bf16.mxu0 0
    %7200 = vmatpush1.bf16.msra.mxu0 %v7058
    %7201 = vmatprep.subr.bf16.mxu0 0
    %7202 = vmatpush1.bf16.msra.mxu0 %v7059
    %7203 = vmatprep.subr.bf16.mxu0 0
    %7204 = vmatpush1.bf16.msra.mxu0 %v7060
    %7205 = vmatprep.mubr.bf16.mxu0 %v6647
    %7206 = vmatmul.mubr.bf16.gmra.mrb[0].mxu0 %v6646
    %v7207 = vpop.f32.mrb[0].mxu0
    %v7208 = vadd.f32 %v6787, %v7207
    %v7209 = vpop.f32.mrb[0].mxu0
    %v7210 = vpop.f32.mrb[0].mxu0
    %v7211 = vpop.f32.mrb[0].mxu0
    %7212 = vdwg.mxu0
    %7213 = vmatprep.subr.bf16.mxu0 0
    %7214 = vmatpush1.bf16.msra.mxu0 %v7061
    %7215 = vmatprep.subr.bf16.mxu0 0
    %7216 = vmatpush1.bf16.msra.mxu0 %v7062
    %7217 = vmatprep.subr.bf16.mxu0 0
    %7218 = vmatpush1.bf16.msra.mxu0 %v7063
    %7219 = vmatprep.subr.bf16.mxu0 0
    %7220 = vmatpush1.bf16.msra.mxu0 %v7064
    %7221 = vmatprep.subr.bf16.mxu0 0
    %7222 = vmatpush1.bf16.msra.mxu0 %v7065
    %7223 = vmatprep.subr.bf16.mxu0 0
    %7224 = vmatpush1.bf16.msra.mxu0 %v7066
    %7225 = vmatprep.subr.bf16.mxu0 0
    %7226 = vmatpush1.bf16.msra.mxu0 %v7067
    %7227 = vmatprep.subr.bf16.mxu0 0
    %7228 = vmatpush1.bf16.msra.mxu0 %v7068
    %7229 = vmatprep.subr.bf16.mxu0 0
    %7230 = vmatpush1.bf16.msra.mxu0 %v7069
    %7231 = vmatprep.subr.bf16.mxu0 0
    %7232 = vmatpush1.bf16.msra.mxu0 %v7070
    %7233 = vmatprep.subr.bf16.mxu0 0
    %7234 = vmatpush1.bf16.msra.mxu0 %v7071
    %7235 = vmatprep.subr.bf16.mxu0 0
    %7236 = vmatpush1.bf16.msra.mxu0 %v7072
    %7237 = vmatprep.subr.bf16.mxu0 0
    %7238 = vmatpush1.bf16.msra.mxu0 %v7073
    %7239 = vmatprep.subr.bf16.mxu0 0
    %7240 = vmatpush1.bf16.msra.mxu0 %v7074
    %7241 = vmatprep.subr.bf16.mxu0 0
    %7242 = vmatpush1.bf16.msra.mxu0 %v7075
    %7243 = vmatprep.subr.bf16.mxu0 0
    %7244 = vmatpush1.bf16.msra.mxu0 %v7076
    %7245 = vmatprep.mubr.bf16.mxu0 %v6649
    %7246 = vmatmul.mubr.bf16.gmra.mrb[0].mxu0 %v6648
    %v7247 = vpop.f32.mrb[0].mxu0
    %v7248 = vadd.f32 %v7208, %v7247
    %v7249 = vpop.f32.mrb[0].mxu0
    %v7250 = vpop.f32.mrb[0].mxu0
    %v7251 = vpop.f32.mrb[0].mxu0
    %7252 = vdwg.mxu0
    %7253 = vmatprep.subr.bf16.mxu0 0
    %7254 = vmatpush1.bf16.msra.mxu0 %v7077
    %7255 = vmatprep.subr.bf16.mxu0 0
    %7256 = vmatpush1.bf16.msra.mxu0 %v7078
    %7257 = vmatprep.subr.bf16.mxu0 0
    %7258 = vmatpush1.bf16.msra.mxu0 %v7079
    %7259 = vmatprep.subr.bf16.mxu0 0
    %7260 = vmatpush1.bf16.msra.mxu0 %v7080
    %7261 = vmatprep.subr.bf16.mxu0 0
    %7262 = vmatpush1.bf16.msra.mxu0 %v7081
    %7263 = vmatprep.subr.bf16.mxu0 0
    %7264 = vmatpush1.bf16.msra.mxu0 %v7082
    %7265 = vmatprep.subr.bf16.mxu0 0
    %7266 = vmatpush1.bf16.msra.mxu0 %v7083
    %7267 = vmatprep.subr.bf16.mxu0 0
    %7268 = vmatpush1.bf16.msra.mxu0 %v7084
    %7269 = vmatprep.subr.bf16.mxu0 0
    %7270 = vmatpush1.bf16.msra.mxu0 %v7085
    %7271 = vmatprep.subr.bf16.mxu0 0
    %7272 = vmatpush1.bf16.msra.mxu0 %v7086
    %7273 = vmatprep.subr.bf16.mxu0 0
    %7274 = vmatpush1.bf16.msra.mxu0 %v7087
    %7275 = vmatprep.subr.bf16.mxu0 0
    %7276 = vmatpush1.bf16.msra.mxu0 %v7088
    %7277 = vmatprep.subr.bf16.mxu0 0
    %7278 = vmatpush1.bf16.msra.mxu0 %v7089
    %7279 = vmatprep.subr.bf16.mxu0 0
    %7280 = vmatpush1.bf16.msra.mxu0 %v7090
    %7281 = vmatprep.subr.bf16.mxu0 0
    %7282 = vmatpush1.bf16.msra.mxu0 %v7091
    %7283 = vmatprep.subr.bf16.mxu0 0
    %7284 = vmatpush1.bf16.msra.mxu0 %v7092
    %7285 = vmatprep.mubr.bf16.mxu0 %v6651
    %7286 = vmatmul.mubr.bf16.gmra.mrb[0].mxu0 %v6650
    %v7287 = vpop.f32.mrb[0].mxu0
    %v7288 = vadd.f32 %v7248, %v7287
    %v7289 = vpop.f32.mrb[0].mxu0
    %v7290 = vpop.f32.mrb[0].mxu0
    %v7291 = vpop.f32.mrb[0].mxu0
    %7292 = vdwg.mxu0
    %7293 = vmatprep.subr.bf16.mxu0 0
    %7294 = vmatpush1.bf16.msra.mxu0 %v7093
    %7295 = vmatprep.subr.bf16.mxu0 0
    %7296 = vmatpush1.bf16.msra.mxu0 %v7094
    %7297 = vmatprep.subr.bf16.mxu0 0
    %7298 = vmatpush1.bf16.msra.mxu0 %v7095
    %7299 = vmatprep.subr.bf16.mxu0 0
    %7300 = vmatpush1.bf16.msra.mxu0 %v7096
    %7301 = vmatprep.subr.bf16.mxu0 0
    %7302 = vmatpush1.bf16.msra.mxu0 %v7097
    %7303 = vmatprep.subr.bf16.mxu0 0
    %7304 = vmatpush1.bf16.msra.mxu0 %v7098
    %7305 = vmatprep.subr.bf16.mxu0 0
    %7306 = vmatpush1.bf16.msra.mxu0 %v7099
    %7307 = vmatprep.subr.bf16.mxu0 0
    %7308 = vmatpush1.bf16.msra.mxu0 %v7100
    %7309 = vmatprep.subr.bf16.mxu0 0
    %7310 = vmatpush1.bf16.msra.mxu0 %v7101
    %7311 = vmatprep.subr.bf16.mxu0 0
    %7312 = vmatpush1.bf16.msra.mxu0 %v7102
    %7313 = vmatprep.subr.bf16.mxu0 0
    %7314 = vmatpush1.bf16.msra.mxu0 %v7103
    %7315 = vmatprep.subr.bf16.mxu0 0
    %7316 = vmatpush1.bf16.msra.mxu0 %v7104
    %7317 = vmatprep.subr.bf16.mxu0 0
    %7318 = vmatpush1.bf16.msra.mxu0 %v7105
    %7319 = vmatprep.subr.bf16.mxu0 0
    %7320 = vmatpush1.bf16.msra.mxu0 %v7106
    %7321 = vmatprep.subr.bf16.mxu0 0
    %7322 = vmatpush1.bf16.msra.mxu0 %v7107
    %7323 = vmatprep.subr.bf16.mxu0 0
    %7324 = vmatpush1.bf16.msra.mxu0 %v7108
    %7325 = vmatprep.mubr.bf16.mxu0 %v6653
    %7326 = vmatmul.mubr.bf16.gmra.mrb[0].mxu0 %v6652
    %v7327 = vpop.f32.mrb[0].mxu0
    %v7328 = vadd.f32 %v7288, %v7327
    %v7329 = vpop.f32.mrb[0].mxu0
    %v7330 = vpop.f32.mrb[0].mxu0
    %v7331 = vpop.f32.mrb[0].mxu0
    %7332 = vdwg.mxu0
    %v7333 = vmax.f32 %v7328, 0.0
    %v7334 = vpack.c.bf16 %v7333, %v7333
    %v7335 = vld [vmem:[%s6] sm:$0xf]
    %v7336 = vld [vmem:[%s6 + $0x4] sm:$0xf]
    %v7337 = vld [vmem:[%s6 + $0x8] sm:$0xf]
    %v7338 = vld [vmem:[%s6 + $0xc] sm:$0xf]
    %v7339 = vld [vmem:[%s6 + $0x10] sm:$0xf]
    %v7340 = vld [vmem:[%s6 + $0x14] sm:$0xf]
    %v7341 = vld [vmem:[%s6 + $0x18] sm:$0xf]
    %v7342 = vld [vmem:[%s6 + $0x1c] sm:$0xf]
    %v7343 = vld [vmem:[%s6 + $0x20] sm:$0xf]
    %v7344 = vld [vmem:[%s6 + $0x24] sm:$0xf]
    %v7345 = vld [vmem:[%s6 + $0x28] sm:$0xf]
    %v7346 = vld [vmem:[%s6 + $0x2c] sm:$0xf]
    %v7347 = vld [vmem:[%s6 + $0x30] sm:$0xf]
    %v7348 = vld [vmem:[%s6 + $0x34] sm:$0xf]
    %v7349 = vld [vmem:[%s6 + $0x38] sm:$0xf]
    %v7350 = vld [vmem:[%s6 + $0x3c] sm:$0xf]
    %v7351 = vld [vmem:[#allocation10] sm:$0x1]
    %v7353 = vlaneseq
    %v7354 = vshrl.u32 %v7353, 7
    %v7355 = vsub.s32 0, %v7354
    %v7356 = vrot.slane %v7351, %v7355
    %v7374 = vunpack.c.l.b16 %v7335
    %v7375 = vunpack.c.l.b16 %v7336
    %v7376 = vunpack.c.l.b16 %v7337
    %v7377 = vunpack.c.l.b16 %v7338
    %v7378 = vunpack.c.l.b16 %v7339
    %v7379 = vunpack.c.l.b16 %v7340
    %v7380 = vunpack.c.l.b16 %v7341
    %v7381 = vunpack.c.l.b16 %v7342
    %v7382 = vunpack.c.l.b16 %v7343
    %v7383 = vunpack.c.l.b16 %v7344
    %v7384 = vunpack.c.l.b16 %v7345
    %v7385 = vunpack.c.l.b16 %v7346
    %v7386 = vunpack.c.l.b16 %v7347
    %v7387 = vunpack.c.l.b16 %v7348
    %v7388 = vunpack.c.l.b16 %v7349
    %v7389 = vunpack.c.l.b16 %v7350
    %v7390 = vpack.c.b16 %v7375, %v7374
    %v7391 = vpack.c.b16 %v7377, %v7376
    %v7392 = vpack.c.b16 %v7379, %v7378
    %v7393 = vpack.c.b16 %v7381, %v7380
    %v7394 = vpack.c.b16 %v7383, %v7382
    %v7395 = vpack.c.b16 %v7385, %v7384
    %v7396 = vpack.c.b16 %v7387, %v7386
    %v7397 = vpack.c.b16 %v7389, %v7388
    %7406 = vmatprep.subr.bf16.mxu0 0
    %7407 = vmatpush1.bf16.msra.mxu0 %v7390
    %7408 = vmatprep.subr.bf16.mxu0 0
    %7409 = vmatpush1.bf16.msra.mxu0 %v7391
    %7410 = vmatprep.subr.bf16.mxu0 0
    %7411 = vmatpush1.bf16.msra.mxu0 %v7392
    %7412 = vmatprep.subr.bf16.mxu0 0
    %7413 = vmatpush1.bf16.msra.mxu0 %v7393
    %7414 = vmatprep.subr.bf16.mxu0 0
    %7415 = vmatpush1.bf16.msra.mxu0 %v7394
    %7416 = vmatprep.subr.bf16.mxu0 0
    %7417 = vmatpush1.bf16.msra.mxu0 %v7395
    %7418 = vmatprep.subr.bf16.mxu0 0
    %7419 = vmatpush1.bf16.msra.mxu0 %v7396
    %7420 = vmatprep.subr.bf16.mxu0 0
    %7421 = vmatpush1.bf16.msra.mxu0 %v7397
    %7422 = vmatprep.subr.bf16.mxu0 0
    %7423 = vmatpush1.bf16.msra.mxu0 0
    %7424 = vmatprep.subr.bf16.mxu0 0
    %7425 = vmatpush1.bf16.msra.mxu0 0
    %7426 = vmatprep.subr.bf16.mxu0 0
    %7427 = vmatpush1.bf16.msra.mxu0 0
    %7428 = vmatprep.subr.bf16.mxu0 0
    %7429 = vmatpush1.bf16.msra.mxu0 0
    %7430 = vmatprep.subr.bf16.mxu0 0
    %7431 = vmatpush1.bf16.msra.mxu0 0
    %7432 = vmatprep.subr.bf16.mxu0 0
    %7433 = vmatpush1.bf16.msra.mxu0 0
    %7434 = vmatprep.subr.bf16.mxu0 0
    %7435 = vmatpush1.bf16.msra.mxu0 0
    %7436 = vmatprep.subr.bf16.mxu0 0
    %7437 = vmatpush1.bf16.msra.mxu0 0
    %7438 = vmatprep.mubr.bf16.mxu0 0
    %7439 = vmatmul.mubr.bf16.gmra.mrb[0].mxu0 %v7334
    %v7440 = vpop.f32.mrb[0].mxu0
    %v7441 = vadd.f32 %v7356, %v7440
    %v7442 = vpop.f32.mrb[0].mxu0
    %v7443 = vpop.f32.mrb[0].mxu0
    %v7444 = vpop.f32.mrb[0].mxu0
    %7445 = vdwg.mxu0
    %vm7446 = vcmask 31744
    %7447 = vst.msk [vmem:[%s8] sm:$0xff] %vm7446, %v7441
    // Predicated region
    $region58: #{text_classification_forward.1} parent=1 // pred_check
      _
    $region59: #{text_classification_forward.1} parent=1 // pred_check_branch
      %7449 = sbr.rel (0) target = $region61
    $region60: #{text_classification_forward.1} parent=1 // pred_region
      _
    $region61: #{text_classification_forward.1} parent=1 // pred_fallthru
      _
    // Predicated region
    $region62: #{text_classification_forward.1} parent=1 // pred_check
      _
    $region63: #{text_classification_forward.1} parent=1 // pred_check_branch
      %7451 = sbr.rel (0) target = $region65
    $region64: #{text_classification_forward.1} parent=1 // pred_region
      _
    $region65: #{text_classification_forward.1} parent=1 // pred_fallthru
      _
    %7452 = vsyncpa [#allocation3], 1
    %7453 = vsyncpa [#allocation5], 1
    %7454 = vsyncpa [#allocation8], 1
    %7455 = vsyncpa [#allocation11], 1

</llo_original>
